<compile_context>
chip_gen: v7x
topology: tpu7x:2x2x1
jax: 0.10.0
libtpu: 0.0.40
codegen_flags: <defaults>
</compile_context>

<pallas_src>
import numpy as np
import jax
import jax.numpy as jnp
from jax.experimental import pallas as pl
from jax.experimental.pallas import tpu as pltpu

KH = KW = 3
PAD = 1
LANE = 128


def basic_block_kernel(x_ref, w1_ref, s1_ref, b1_ref, w2_ref, s2_ref, b2_ref,
                       o_ref, pad_ref, col_ref):
    # x_ref  : (1, H, W, Cp) f32       unpadded input tile (one batch element), Cp % 128 == 0
    # w*_ref : (KH, KW*Cp, Cp) bf16    per-kh flattened HWIO weights
    # s*/b*  : (1, Cp) f32             folded BN scale / bias
    # o_ref  : (1, H, W, Cp) f32
    # pad_ref: (H+2, W+2, Cp) bf16     VMEM scratch: spatially padded conv operand
    # col_ref: (H, W, KW*Cp) bf16      VMEM scratch: per-kh im2col staging buffer (reused)
    H, W, Cp = o_ref.shape[1], o_ref.shape[2], o_ref.shape[3]

    # Zero only the 1-pixel halo border; the interior is fully overwritten below every step.
    # Done every grid step (cheap): conditioning on program_id(0)==0 would break on megacore
    # parts where each TensorCore owns a private scratch copy but only one core sees step 0.
    pad_ref[0:PAD, :, :] = jnp.zeros((PAD, W + 2 * PAD, Cp), jnp.bfloat16)
    pad_ref[H + PAD:H + 2 * PAD, :, :] = jnp.zeros((PAD, W + 2 * PAD, Cp), jnp.bfloat16)
    pad_ref[PAD:H + PAD, 0:PAD, :] = jnp.zeros((H, PAD, Cp), jnp.bfloat16)
    pad_ref[PAD:H + PAD, W + PAD:W + 2 * PAD, :] = jnp.zeros((H, PAD, Cp), jnp.bfloat16)

    def conv3x3(w_ref):
        # Per kh: three lane-aligned channel-offset tap copies (bf16 -> bf16, no cast, no
        # strided repack) into the (H, W, 3*Cp) staging buffer, then one K = 3*Cp bf16 MXU
        # matmul accumulated in f32.
        acc = None
        for kh in range(KH):
            for kw in range(KW):
                col_ref[:, :, kw * Cp:(kw + 1) * Cp] = pad_ref[kh:kh + H, kw:kw + W, :]
            part = jnp.dot(col_ref[...].reshape(H * W, KW * Cp), w_ref[kh],
                           preferred_element_type=jnp.float32)
            acc = part if acc is None else acc + part
        return acc

    # Write the input into the padded operand, casting to bf16 exactly once.
    pad_ref[PAD:PAD + H, PAD:PAD + W, :] = x_ref[0].astype(jnp.bfloat16)

    # ---- conv1 (3x3, stride 1, pad 1) + BN1 + ReLU ----
    out1 = jnp.maximum(conv3x3(w1_ref) * s1_ref[0] + b1_ref[0], 0.0)

    # Reuse the same padded scratch for conv2's operand (halo border stays zero).
    pad_ref[PAD:PAD + H, PAD:PAD + W, :] = out1.reshape(H, W, Cp).astype(jnp.bfloat16)

    # ---- conv2 (3x3, stride 1, pad 1) + BN2 ----
    out2 = conv3x3(w2_ref) * s2_ref[0] + b2_ref[0]

    # ---- residual add (downsample is None -> identity); re-read x_ref here so no f32 copy of
    # the input stays live across both convs.  NOTE: spec module has no ReLU after the add.
    o_ref[0] = out2.reshape(H, W, Cp) + x_ref[0]


def _round_up(v, m):
    return (v + m - 1) // m * m


def basic_block(x_nhwc, w1, s1, b1, w2, s2, b2):
    """x_nhwc: (N, H, W, C) float32. Returns (N, H, W, C) float32."""
    N, H, W, C = x_nhwc.shape
    Co = w1.shape[-1]
    assert C == Co, "identity residual (stride=1, downsample=None) requires inplanes == planes"

    # Lane-dense channels: pad to a multiple of 128 (no-op when C % 128 == 0).
    Cp = _round_up(C, LANE)
    pc = Cp - C

    xp = jnp.pad(x_nhwc, ((0, 0), (0, 0), (0, 0), (0, pc))) if pc else x_nhwc

    def prep_w(w):                                   # (3,3,C,C) -> (KH, KW*Cp, Cp) bf16
        if pc:
            w = jnp.pad(w, ((0, 0), (0, 0), (0, pc), (0, pc)))
        return w.reshape(KH, KW * Cp, Cp).astype(jnp.bfloat16)

    def prep_v(v):                                   # (C,) -> (1, Cp) f32
        if pc:
            v = jnp.pad(v, ((0, pc),))
        return v.reshape(1, Cp).astype(jnp.float32)

    w1f, w2f = prep_w(w1), prep_w(w2)
    s1p, b1p, s2p, b2p = prep_v(s1), prep_v(b1), prep_v(s2), prep_v(b2)

    flops = 2 * N * 2 * (H * W) * (KH * KW * Cp) * Cp            # two 3x3 convs, 2 flops/MAC
    bytes_accessed = (xp.size + N * H * W * Cp) * 4 + (w1f.size + w2f.size) * 2

    out = pl.pallas_call(
        basic_block_kernel,
        out_shape=jax.ShapeDtypeStruct((N, H, W, Cp), jnp.float32),
        grid_spec=pltpu.PrefetchScalarGridSpec(
            num_scalar_prefetch=0,
            grid=(N,),
            in_specs=[
                pl.BlockSpec((1, H, W, Cp), lambda n: (n, 0, 0, 0)),
                pl.BlockSpec((KH, KW * Cp, Cp), lambda n: (0, 0, 0)),
                pl.BlockSpec((1, Cp), lambda n: (0, 0)),
                pl.BlockSpec((1, Cp), lambda n: (0, 0)),
                pl.BlockSpec((KH, KW * Cp, Cp), lambda n: (0, 0, 0)),
                pl.BlockSpec((1, Cp), lambda n: (0, 0)),
                pl.BlockSpec((1, Cp), lambda n: (0, 0)),
            ],
            out_specs=pl.BlockSpec((1, H, W, Cp), lambda n: (n, 0, 0, 0)),
            scratch_shapes=[
                pltpu.VMEM((H + 2 * PAD, W + 2 * PAD, Cp), jnp.bfloat16),
                pltpu.VMEM((H, W, KW * Cp), jnp.bfloat16),
            ],
        ),
        compiler_params=pltpu.CompilerParams(
            dimension_semantics=("parallel",),
            vmem_limit_bytes=48 * 1024 * 1024),
        cost_estimate=pl.CostEstimate(flops=flops, transcendentals=0,
                                      bytes_accessed=bytes_accessed),
    )(xp, w1f, s1p, b1p, w2f, s2p, b2p)

    return out[..., :C] if pc else out


def reference(x, w1, s1, b1, w2, s2, b2):
    """Plain-JAX NHWC reference with the kernel's bf16-operand / f32-accumulate precision."""
    def conv(v, w):
        return jax.lax.conv_general_dilated(
            v.astype(jnp.bfloat16), w.astype(jnp.bfloat16),
            window_strides=(1, 1), padding=((PAD, PAD), (PAD, PAD)),
            dimension_numbers=("NHWC", "HWIO", "NHWC"),
            preferred_element_type=jnp.float32)
    out = jnp.maximum(conv(x, w1) * s1 + b1, 0.0)
    out = conv(out, w2) * s2 + b2
    return out + x


def fold_bn(gamma, beta, mean, var, eps=1e-5):
    scale = gamma / jnp.sqrt(var + eps)
    bias = beta - mean * scale
    return scale, bias


if __name__ == "__main__":
    N, H, W = 2, 16, 16
    inplanes = planes = 64  # downsample=None, stride=1 requires inplanes == planes

    key = jax.random.PRNGKey(0)
    keys = jax.random.split(key, 11)

    x = jax.random.normal(keys[0], (N, H, W, inplanes), jnp.float32)

    # conv weights (HWIO), no bias (bias=False in convbn)
    w1 = jax.random.normal(keys[1], (KH, KW, inplanes, planes), jnp.float32) * 0.05
    w2 = jax.random.normal(keys[2], (KH, KW, planes, planes), jnp.float32) * 0.05

    # BatchNorm parameters (eval-mode running stats), folded to scale/bias
    g1 = 1.0 + 0.1 * jax.random.normal(keys[3], (planes,), jnp.float32)
    be1 = 0.1 * jax.random.normal(keys[4], (planes,), jnp.float32)
    m1 = 0.1 * jax.random.normal(keys[5], (planes,), jnp.float32)
    v1 = jax.random.uniform(keys[6], (planes,), jnp.float32, 0.5, 1.5)
    g2 = 1.0 + 0.1 * jax.random.normal(keys[7], (planes,), jnp.float32)
    be2 = 0.1 * jax.random.normal(keys[8], (planes,), jnp.float32)
    m2 = 0.1 * jax.random.normal(keys[9], (planes,), jnp.float32)
    v2 = jax.random.uniform(keys[10], (planes,), jnp.float32, 0.5, 1.5)

    s1, b1 = fold_bn(g1, be1, m1, v1)
    s2, b2 = fold_bn(g2, be2, m2, v2)

    out = basic_block(x, w1, s1, b1, w2, s2, b2)
    out = jax.block_until_ready(out)

    ref = jax.block_until_ready(reference(x, w1, s1, b1, w2, s2, b2))
    assert out.shape == (N, H, W, planes)
    err = float(np.max(np.abs(np.asarray(out) - np.asarray(ref))))
    assert np.allclose(np.asarray(out), np.asarray(ref), rtol=1e-2, atol=1e-2), (
        "mismatch vs reference: max abs err = %g" % err)

    print("KERNEL_OK")
</pallas_src>

<mosaic_0001>
module attributes {stable_mosaic.version = 11 : i64} {
  func.func @basic_block_kernel(%arg0: i32, %arg1: memref<1x16x16x128xf32, #tpu.memory_space<vmem>>, %arg2: memref<3x384x128xbf16, #tpu.memory_space<vmem>>, %arg3: memref<1x128xf32, #tpu.memory_space<vmem>>, %arg4: memref<1x128xf32, #tpu.memory_space<vmem>>, %arg5: memref<3x384x128xbf16, #tpu.memory_space<vmem>>, %arg6: memref<1x128xf32, #tpu.memory_space<vmem>>, %arg7: memref<1x128xf32, #tpu.memory_space<vmem>>, %arg8: memref<1x16x16x128xf32, #tpu.memory_space<vmem>>, %arg9: memref<18x18x128xbf16, #tpu.memory_space<vmem>>, %arg10: memref<16x16x384xbf16, #tpu.memory_space<vmem>>) attributes {dimension_semantics = [#tpu.dimension_semantics<parallel>], iteration_bounds = array<i64: 2>, scalar_prefetch = 0 : i64, scratch_operands = 2 : i64, tpu.core_type = #tpu.core_type<tc>, window_params = [{transform_indices = @transform_0, window_bounds = array<i64: 1, 16, 16, 128>}, {pipeline_mode = #tpu.pipeline_mode<synchronous>, transform_indices = @transform_1, window_bounds = array<i64: 3, 384, 128>}, {pipeline_mode = #tpu.pipeline_mode<synchronous>, transform_indices = @transform_2, window_bounds = array<i64: 1, 128>}, {pipeline_mode = #tpu.pipeline_mode<synchronous>, transform_indices = @transform_3, window_bounds = array<i64: 1, 128>}, {pipeline_mode = #tpu.pipeline_mode<synchronous>, transform_indices = @transform_4, window_bounds = array<i64: 3, 384, 128>}, {pipeline_mode = #tpu.pipeline_mode<synchronous>, transform_indices = @transform_5, window_bounds = array<i64: 1, 128>}, {pipeline_mode = #tpu.pipeline_mode<synchronous>, transform_indices = @transform_6, window_bounds = array<i64: 1, 128>}, {transform_indices = @transform_7, window_bounds = array<i64: 1, 16, 16, 128>}]} {
    %cst = arith.constant 0.000000e+00 : bf16
    %0 = vector.broadcast %cst : bf16 to vector<1x18x128xbf16>
    %c0 = arith.constant 0 : index
    %c0_0 = arith.constant 0 : index
    %c0_1 = arith.constant 0 : index
    %1 = vector.load %arg9[%c0, %c0_0, %c0_1] : memref<18x18x128xbf16, #tpu.memory_space<vmem>>, vector<1x18x128xbf16>
    tpu.vector_store %arg9[%c0, %c0_0, %c0_1], %0 {strides = array<i32>} : memref<18x18x128xbf16, #tpu.memory_space<vmem>>, vector<1x18x128xbf16>,
    %cst_2 = arith.constant 0.000000e+00 : bf16
    %2 = vector.broadcast %cst_2 : bf16 to vector<1x18x128xbf16>
    %c17 = arith.constant 17 : index
    %c0_3 = arith.constant 0 : index
    %c0_4 = arith.constant 0 : index
    %3 = vector.load %arg9[%c17, %c0_3, %c0_4] : memref<18x18x128xbf16, #tpu.memory_space<vmem>>, vector<1x18x128xbf16>
    tpu.vector_store %arg9[%c17, %c0_3, %c0_4], %2 {strides = array<i32>} : memref<18x18x128xbf16, #tpu.memory_space<vmem>>, vector<1x18x128xbf16>,
    %cst_5 = arith.constant 0.000000e+00 : bf16
    %4 = vector.broadcast %cst_5 : bf16 to vector<16x1x128xbf16>
    %c1 = arith.constant 1 : index
    %c0_6 = arith.constant 0 : index
    %c0_7 = arith.constant 0 : index
    %5 = vector.load %arg9[%c1, %c0_6, %c0_7] : memref<18x18x128xbf16, #tpu.memory_space<vmem>>, vector<16x1x128xbf16>
    tpu.vector_store %arg9[%c1, %c0_6, %c0_7], %4 {strides = array<i32>} : memref<18x18x128xbf16, #tpu.memory_space<vmem>>, vector<16x1x128xbf16>,
    %cst_8 = arith.constant 0.000000e+00 : bf16
    %6 = vector.broadcast %cst_8 : bf16 to vector<16x1x128xbf16>
    %c1_9 = arith.constant 1 : index
    %c17_10 = arith.constant 17 : index
    %c0_11 = arith.constant 0 : index
    %7 = vector.load %arg9[%c1_9, %c17_10, %c0_11] : memref<18x18x128xbf16, #tpu.memory_space<vmem>>, vector<16x1x128xbf16>
    tpu.vector_store %arg9[%c1_9, %c17_10, %c0_11], %6 {strides = array<i32>} : memref<18x18x128xbf16, #tpu.memory_space<vmem>>, vector<16x1x128xbf16>,
    %c0_12 = arith.constant 0 : index
    %c0_13 = arith.constant 0 : index
    %c0_14 = arith.constant 0 : index
    %c0_15 = arith.constant 0 : index
    %8 = vector.load %arg1[%c0_12, %c0_13, %c0_14, %c0_15] : memref<1x16x16x128xf32, #tpu.memory_space<vmem>>, vector<1x16x16x128xf32>
    %9 = vector.shape_cast %8 : vector<1x16x16x128xf32> to vector<16x16x128xf32>
    %10 = arith.truncf %9 : vector<16x16x128xf32> to vector<16x16x128xbf16>
    %c1_16 = arith.constant 1 : index
    %c1_17 = arith.constant 1 : index
    %c0_18 = arith.constant 0 : index
    %11 = vector.load %arg9[%c1_16, %c1_17, %c0_18] : memref<18x18x128xbf16, #tpu.memory_space<vmem>>, vector<16x16x128xbf16>
    tpu.vector_store %arg9[%c1_16, %c1_17, %c0_18], %10 {strides = array<i32>} : memref<18x18x128xbf16, #tpu.memory_space<vmem>>, vector<16x16x128xbf16>,
    %c0_19 = arith.constant 0 : index
    %c0_20 = arith.constant 0 : index
    %c0_21 = arith.constant 0 : index
    %12 = vector.load %arg9[%c0_19, %c0_20, %c0_21] : memref<18x18x128xbf16, #tpu.memory_space<vmem>>, vector<16x16x128xbf16>
    %c0_22 = arith.constant 0 : index
    %c0_23 = arith.constant 0 : index
    %c0_24 = arith.constant 0 : index
    %13 = vector.load %arg10[%c0_22, %c0_23, %c0_24] : memref<16x16x384xbf16, #tpu.memory_space<vmem>>, vector<16x16x128xbf16>
    tpu.vector_store %arg10[%c0_22, %c0_23, %c0_24], %12 {strides = array<i32>} : memref<16x16x384xbf16, #tpu.memory_space<vmem>>, vector<16x16x128xbf16>,
    %c0_25 = arith.constant 0 : index
    %c1_26 = arith.constant 1 : index
    %c0_27 = arith.constant 0 : index
    %14 = vector.load %arg9[%c0_25, %c1_26, %c0_27] : memref<18x18x128xbf16, #tpu.memory_space<vmem>>, vector<16x16x128xbf16>
    %c0_28 = arith.constant 0 : index
    %c0_29 = arith.constant 0 : index
    %c128 = arith.constant 128 : index
    %15 = vector.load %arg10[%c0_28, %c0_29, %c128] : memref<16x16x384xbf16, #tpu.memory_space<vmem>>, vector<16x16x128xbf16>
    tpu.vector_store %arg10[%c0_28, %c0_29, %c128], %14 {strides = array<i32>} : memref<16x16x384xbf16, #tpu.memory_space<vmem>>, vector<16x16x128xbf16>,
    %c0_30 = arith.constant 0 : index
    %c2 = arith.constant 2 : index
    %c0_31 = arith.constant 0 : index
    %16 = vector.load %arg9[%c0_30, %c2, %c0_31] : memref<18x18x128xbf16, #tpu.memory_space<vmem>>, vector<16x16x128xbf16>
    %c0_32 = arith.constant 0 : index
    %c0_33 = arith.constant 0 : index
    %c256 = arith.constant 256 : index
    %17 = vector.load %arg10[%c0_32, %c0_33, %c256] : memref<16x16x384xbf16, #tpu.memory_space<vmem>>, vector<16x16x128xbf16>
    tpu.vector_store %arg10[%c0_32, %c0_33, %c256], %16 {strides = array<i32>} : memref<16x16x384xbf16, #tpu.memory_space<vmem>>, vector<16x16x128xbf16>,
    %c0_34 = arith.constant 0 : index
    %c0_35 = arith.constant 0 : index
    %c0_36 = arith.constant 0 : index
    %18 = vector.load %arg10[%c0_34, %c0_35, %c0_36] : memref<16x16x384xbf16, #tpu.memory_space<vmem>>, vector<16x16x384xbf16>
    %19 = vector.shape_cast %18 : vector<16x16x384xbf16> to vector<256x384xbf16>
    %c0_37 = arith.constant 0 : index
    %c0_38 = arith.constant 0 : index
    %c0_39 = arith.constant 0 : index
    %20 = vector.load %arg2[%c0_37, %c0_38, %c0_39] : memref<3x384x128xbf16, #tpu.memory_space<vmem>>, vector<1x384x128xbf16>
    %21 = vector.shape_cast %20 : vector<1x384x128xbf16> to vector<384x128xbf16>
    %cst_40 = arith.constant dense<0.000000e+00> : vector<256x128xf32>
    %22 = tpu.matmul %19, %21, %cst_40 {dimension_numbers = #tpu.dot_dimension_numbers<[1], [0], [0], [1], [0, 0, 1, 1], [], []>} : vector<256x384xbf16>, vector<384x128xbf16>, vector<256x128xf32> -> vector<256x128xf32>
    %c1_41 = arith.constant 1 : index
    %c0_42 = arith.constant 0 : index
    %c0_43 = arith.constant 0 : index
    %23 = vector.load %arg9[%c1_41, %c0_42, %c0_43] : memref<18x18x128xbf16, #tpu.memory_space<vmem>>, vector<16x16x128xbf16>
    %c0_44 = arith.constant 0 : index
    %c0_45 = arith.constant 0 : index
    %c0_46 = arith.constant 0 : index
    %24 = vector.load %arg10[%c0_44, %c0_45, %c0_46] : memref<16x16x384xbf16, #tpu.memory_space<vmem>>, vector<16x16x128xbf16>
    tpu.vector_store %arg10[%c0_44, %c0_45, %c0_46], %23 {strides = array<i32>} : memref<16x16x384xbf16, #tpu.memory_space<vmem>>, vector<16x16x128xbf16>,
    %c1_47 = arith.constant 1 : index
    %c1_48 = arith.constant 1 : index
    %c0_49 = arith.constant 0 : index
    %25 = vector.load %arg9[%c1_47, %c1_48, %c0_49] : memref<18x18x128xbf16, #tpu.memory_space<vmem>>, vector<16x16x128xbf16>
    %c0_50 = arith.constant 0 : index
    %c0_51 = arith.constant 0 : index
    %c128_52 = arith.constant 128 : index
    %26 = vector.load %arg10[%c0_50, %c0_51, %c128_52] : memref<16x16x384xbf16, #tpu.memory_space<vmem>>, vector<16x16x128xbf16>
    tpu.vector_store %arg10[%c0_50, %c0_51, %c128_52], %25 {strides = array<i32>} : memref<16x16x384xbf16, #tpu.memory_space<vmem>>, vector<16x16x128xbf16>,
    %c1_53 = arith.constant 1 : index
    %c2_54 = arith.constant 2 : index
    %c0_55 = arith.constant 0 : index
    %27 = vector.load %arg9[%c1_53, %c2_54, %c0_55] : memref<18x18x128xbf16, #tpu.memory_space<vmem>>, vector<16x16x128xbf16>
    %c0_56 = arith.constant 0 : index
    %c0_57 = arith.constant 0 : index
    %c256_58 = arith.constant 256 : index
    %28 = vector.load %arg10[%c0_56, %c0_57, %c256_58] : memref<16x16x384xbf16, #tpu.memory_space<vmem>>, vector<16x16x128xbf16>
    tpu.vector_store %arg10[%c0_56, %c0_57, %c256_58], %27 {strides = array<i32>} : memref<16x16x384xbf16, #tpu.memory_space<vmem>>, vector<16x16x128xbf16>,
    %c0_59 = arith.constant 0 : index
    %c0_60 = arith.constant 0 : index
    %c0_61 = arith.constant 0 : index
    %29 = vector.load %arg10[%c0_59, %c0_60, %c0_61] : memref<16x16x384xbf16, #tpu.memory_space<vmem>>, vector<16x16x384xbf16>
    %30 = vector.shape_cast %29 : vector<16x16x384xbf16> to vector<256x384xbf16>
    %c1_62 = arith.constant 1 : index
    %c0_63 = arith.constant 0 : index
    %c0_64 = arith.constant 0 : index
    %31 = vector.load %arg2[%c1_62, %c0_63, %c0_64] : memref<3x384x128xbf16, #tpu.memory_space<vmem>>, vector<1x384x128xbf16>
    %32 = vector.shape_cast %31 : vector<1x384x128xbf16> to vector<384x128xbf16>
    %cst_65 = arith.constant dense<0.000000e+00> : vector<256x128xf32>
    %33 = tpu.matmul %30, %32, %cst_65 {dimension_numbers = #tpu.dot_dimension_numbers<[1], [0], [0], [1], [0, 0, 1, 1], [], []>} : vector<256x384xbf16>, vector<384x128xbf16>, vector<256x128xf32> -> vector<256x128xf32>
    %34 = arith.addf %22, %33 : vector<256x128xf32>
    %c2_66 = arith.constant 2 : index
    %c0_67 = arith.constant 0 : index
    %c0_68 = arith.constant 0 : index
    %35 = vector.load %arg9[%c2_66, %c0_67, %c0_68] : memref<18x18x128xbf16, #tpu.memory_space<vmem>>, vector<16x16x128xbf16>
    %c0_69 = arith.constant 0 : index
    %c0_70 = arith.constant 0 : index
    %c0_71 = arith.constant 0 : index
    %36 = vector.load %arg10[%c0_69, %c0_70, %c0_71] : memref<16x16x384xbf16, #tpu.memory_space<vmem>>, vector<16x16x128xbf16>
    tpu.vector_store %arg10[%c0_69, %c0_70, %c0_71], %35 {strides = array<i32>} : memref<16x16x384xbf16, #tpu.memory_space<vmem>>, vector<16x16x128xbf16>,
    %c2_72 = arith.constant 2 : index
    %c1_73 = arith.constant 1 : index
    %c0_74 = arith.constant 0 : index
    %37 = vector.load %arg9[%c2_72, %c1_73, %c0_74] : memref<18x18x128xbf16, #tpu.memory_space<vmem>>, vector<16x16x128xbf16>
    %c0_75 = arith.constant 0 : index
    %c0_76 = arith.constant 0 : index
    %c128_77 = arith.constant 128 : index
    %38 = vector.load %arg10[%c0_75, %c0_76, %c128_77] : memref<16x16x384xbf16, #tpu.memory_space<vmem>>, vector<16x16x128xbf16>
    tpu.vector_store %arg10[%c0_75, %c0_76, %c128_77], %37 {strides = array<i32>} : memref<16x16x384xbf16, #tpu.memory_space<vmem>>, vector<16x16x128xbf16>,
    %c2_78 = arith.constant 2 : index
    %c2_79 = arith.constant 2 : index
    %c0_80 = arith.constant 0 : index
    %39 = vector.load %arg9[%c2_78, %c2_79, %c0_80] : memref<18x18x128xbf16, #tpu.memory_space<vmem>>, vector<16x16x128xbf16>
    %c0_81 = arith.constant 0 : index
    %c0_82 = arith.constant 0 : index
    %c256_83 = arith.constant 256 : index
    %40 = vector.load %arg10[%c0_81, %c0_82, %c256_83] : memref<16x16x384xbf16, #tpu.memory_space<vmem>>, vector<16x16x128xbf16>
    tpu.vector_store %arg10[%c0_81, %c0_82, %c256_83], %39 {strides = array<i32>} : memref<16x16x384xbf16, #tpu.memory_space<vmem>>, vector<16x16x128xbf16>,
    %c0_84 = arith.constant 0 : index
    %c0_85 = arith.constant 0 : index
    %c0_86 = arith.constant 0 : index
    %41 = vector.load %arg10[%c0_84, %c0_85, %c0_86] : memref<16x16x384xbf16, #tpu.memory_space<vmem>>, vector<16x16x384xbf16>
    %42 = vector.shape_cast %41 : vector<16x16x384xbf16> to vector<256x384xbf16>
    %c2_87 = arith.constant 2 : index
    %c0_88 = arith.constant 0 : index
    %c0_89 = arith.constant 0 : index
    %43 = vector.load %arg2[%c2_87, %c0_88, %c0_89] : memref<3x384x128xbf16, #tpu.memory_space<vmem>>, vector<1x384x128xbf16>
    %44 = vector.shape_cast %43 : vector<1x384x128xbf16> to vector<384x128xbf16>
    %cst_90 = arith.constant dense<0.000000e+00> : vector<256x128xf32>
    %45 = tpu.matmul %42, %44, %cst_90 {dimension_numbers = #tpu.dot_dimension_numbers<[1], [0], [0], [1], [0, 0, 1, 1], [], []>} : vector<256x384xbf16>, vector<384x128xbf16>, vector<256x128xf32> -> vector<256x128xf32>
    %46 = arith.addf %34, %45 : vector<256x128xf32>
    %c0_91 = arith.constant 0 : index
    %c0_92 = arith.constant 0 : index
    %47 = vector.load %arg3[%c0_91, %c0_92] : memref<1x128xf32, #tpu.memory_space<vmem>>, vector<1x128xf32>
    %48 = vector.shape_cast %47 : vector<1x128xf32> to vector<128xf32>
    %49 = vector.shape_cast %48 : vector<128xf32> to vector<1x128xf32>
    %50 = vector.broadcast %49 : vector<1x128xf32> to vector<256x128xf32>
    %51 = arith.mulf %46, %50 : vector<256x128xf32>
    %c0_93 = arith.constant 0 : index
    %c0_94 = arith.constant 0 : index
    %52 = vector.load %arg4[%c0_93, %c0_94] : memref<1x128xf32, #tpu.memory_space<vmem>>, vector<1x128xf32>
    %53 = vector.shape_cast %52 : vector<1x128xf32> to vector<128xf32>
    %54 = vector.shape_cast %53 : vector<128xf32> to vector<1x128xf32>
    %55 = vector.broadcast %54 : vector<1x128xf32> to vector<256x128xf32>
    %56 = arith.addf %51, %55 : vector<256x128xf32>
    %cst_95 = arith.constant 0.000000e+00 : f32
    %57 = vector.broadcast %cst_95 : f32 to vector<256x128xf32>
    %58 = arith.maximumf %56, %57 : vector<256x128xf32>
    %59 = vector.shape_cast %58 : vector<256x128xf32> to vector<16x16x128xf32>
    %60 = arith.truncf %59 : vector<16x16x128xf32> to vector<16x16x128xbf16>
    %c1_96 = arith.constant 1 : index
    %c1_97 = arith.constant 1 : index
    %c0_98 = arith.constant 0 : index
    %61 = vector.load %arg9[%c1_96, %c1_97, %c0_98] : memref<18x18x128xbf16, #tpu.memory_space<vmem>>, vector<16x16x128xbf16>
    tpu.vector_store %arg9[%c1_96, %c1_97, %c0_98], %60 {strides = array<i32>} : memref<18x18x128xbf16, #tpu.memory_space<vmem>>, vector<16x16x128xbf16>,
    %c0_99 = arith.constant 0 : index
    %c0_100 = arith.constant 0 : index
    %c0_101 = arith.constant 0 : index
    %62 = vector.load %arg9[%c0_99, %c0_100, %c0_101] : memref<18x18x128xbf16, #tpu.memory_space<vmem>>, vector<16x16x128xbf16>
    %c0_102 = arith.constant 0 : index
    %c0_103 = arith.constant 0 : index
    %c0_104 = arith.constant 0 : index
    %63 = vector.load %arg10[%c0_102, %c0_103, %c0_104] : memref<16x16x384xbf16, #tpu.memory_space<vmem>>, vector<16x16x128xbf16>
    tpu.vector_store %arg10[%c0_102, %c0_103, %c0_104], %62 {strides = array<i32>} : memref<16x16x384xbf16, #tpu.memory_space<vmem>>, vector<16x16x128xbf16>,
    %c0_105 = arith.constant 0 : index
    %c1_106 = arith.constant 1 : index
    %c0_107 = arith.constant 0 : index
    %64 = vector.load %arg9[%c0_105, %c1_106, %c0_107] : memref<18x18x128xbf16, #tpu.memory_space<vmem>>, vector<16x16x128xbf16>
    %c0_108 = arith.constant 0 : index
    %c0_109 = arith.constant 0 : index
    %c128_110 = arith.constant 128 : index
    %65 = vector.load %arg10[%c0_108, %c0_109, %c128_110] : memref<16x16x384xbf16, #tpu.memory_space<vmem>>, vector<16x16x128xbf16>
    tpu.vector_store %arg10[%c0_108, %c0_109, %c128_110], %64 {strides = array<i32>} : memref<16x16x384xbf16, #tpu.memory_space<vmem>>, vector<16x16x128xbf16>,
    %c0_111 = arith.constant 0 : index
    %c2_112 = arith.constant 2 : index
    %c0_113 = arith.constant 0 : index
    %66 = vector.load %arg9[%c0_111, %c2_112, %c0_113] : memref<18x18x128xbf16, #tpu.memory_space<vmem>>, vector<16x16x128xbf16>
    %c0_114 = arith.constant 0 : index
    %c0_115 = arith.constant 0 : index
    %c256_116 = arith.constant 256 : index
    %67 = vector.load %arg10[%c0_114, %c0_115, %c256_116] : memref<16x16x384xbf16, #tpu.memory_space<vmem>>, vector<16x16x128xbf16>
    tpu.vector_store %arg10[%c0_114, %c0_115, %c256_116], %66 {strides = array<i32>} : memref<16x16x384xbf16, #tpu.memory_space<vmem>>, vector<16x16x128xbf16>,
    %c0_117 = arith.constant 0 : index
    %c0_118 = arith.constant 0 : index
    %c0_119 = arith.constant 0 : index
    %68 = vector.load %arg10[%c0_117, %c0_118, %c0_119] : memref<16x16x384xbf16, #tpu.memory_space<vmem>>, vector<16x16x384xbf16>
    %69 = vector.shape_cast %68 : vector<16x16x384xbf16> to vector<256x384xbf16>
    %c0_120 = arith.constant 0 : index
    %c0_121 = arith.constant 0 : index
    %c0_122 = arith.constant 0 : index
    %70 = vector.load %arg5[%c0_120, %c0_121, %c0_122] : memref<3x384x128xbf16, #tpu.memory_space<vmem>>, vector<1x384x128xbf16>
    %71 = vector.shape_cast %70 : vector<1x384x128xbf16> to vector<384x128xbf16>
    %cst_123 = arith.constant dense<0.000000e+00> : vector<256x128xf32>
    %72 = tpu.matmul %69, %71, %cst_123 {dimension_numbers = #tpu.dot_dimension_numbers<[1], [0], [0], [1], [0, 0, 1, 1], [], []>} : vector<256x384xbf16>, vector<384x128xbf16>, vector<256x128xf32> -> vector<256x128xf32>
    %c1_124 = arith.constant 1 : index
    %c0_125 = arith.constant 0 : index
    %c0_126 = arith.constant 0 : index
    %73 = vector.load %arg9[%c1_124, %c0_125, %c0_126] : memref<18x18x128xbf16, #tpu.memory_space<vmem>>, vector<16x16x128xbf16>
    %c0_127 = arith.constant 0 : index
    %c0_128 = arith.constant 0 : index
    %c0_129 = arith.constant 0 : index
    %74 = vector.load %arg10[%c0_127, %c0_128, %c0_129] : memref<16x16x384xbf16, #tpu.memory_space<vmem>>, vector<16x16x128xbf16>
    tpu.vector_store %arg10[%c0_127, %c0_128, %c0_129], %73 {strides = array<i32>} : memref<16x16x384xbf16, #tpu.memory_space<vmem>>, vector<16x16x128xbf16>,
    %c1_130 = arith.constant 1 : index
    %c1_131 = arith.constant 1 : index
    %c0_132 = arith.constant 0 : index
    %75 = vector.load %arg9[%c1_130, %c1_131, %c0_132] : memref<18x18x128xbf16, #tpu.memory_space<vmem>>, vector<16x16x128xbf16>
    %c0_133 = arith.constant 0 : index
    %c0_134 = arith.constant 0 : index
    %c128_135 = arith.constant 128 : index
    %76 = vector.load %arg10[%c0_133, %c0_134, %c128_135] : memref<16x16x384xbf16, #tpu.memory_space<vmem>>, vector<16x16x128xbf16>
    tpu.vector_store %arg10[%c0_133, %c0_134, %c128_135], %75 {strides = array<i32>} : memref<16x16x384xbf16, #tpu.memory_space<vmem>>, vector<16x16x128xbf16>,
    %c1_136 = arith.constant 1 : index
    %c2_137 = arith.constant 2 : index
    %c0_138 = arith.constant 0 : index
    %77 = vector.load %arg9[%c1_136, %c2_137, %c0_138] : memref<18x18x128xbf16, #tpu.memory_space<vmem>>, vector<16x16x128xbf16>
    %c0_139 = arith.constant 0 : index
    %c0_140 = arith.constant 0 : index
    %c256_141 = arith.constant 256 : index
    %78 = vector.load %arg10[%c0_139, %c0_140, %c256_141] : memref<16x16x384xbf16, #tpu.memory_space<vmem>>, vector<16x16x128xbf16>
    tpu.vector_store %arg10[%c0_139, %c0_140, %c256_141], %77 {strides = array<i32>} : memref<16x16x384xbf16, #tpu.memory_space<vmem>>, vector<16x16x128xbf16>,
    %c0_142 = arith.constant 0 : index
    %c0_143 = arith.constant 0 : index
    %c0_144 = arith.constant 0 : index
    %79 = vector.load %arg10[%c0_142, %c0_143, %c0_144] : memref<16x16x384xbf16, #tpu.memory_space<vmem>>, vector<16x16x384xbf16>
    %80 = vector.shape_cast %79 : vector<16x16x384xbf16> to vector<256x384xbf16>
    %c1_145 = arith.constant 1 : index
    %c0_146 = arith.constant 0 : index
    %c0_147 = arith.constant 0 : index
    %81 = vector.load %arg5[%c1_145, %c0_146, %c0_147] : memref<3x384x128xbf16, #tpu.memory_space<vmem>>, vector<1x384x128xbf16>
    %82 = vector.shape_cast %81 : vector<1x384x128xbf16> to vector<384x128xbf16>
    %cst_148 = arith.constant dense<0.000000e+00> : vector<256x128xf32>
    %83 = tpu.matmul %80, %82, %cst_148 {dimension_numbers = #tpu.dot_dimension_numbers<[1], [0], [0], [1], [0, 0, 1, 1], [], []>} : vector<256x384xbf16>, vector<384x128xbf16>, vector<256x128xf32> -> vector<256x128xf32>
    %84 = arith.addf %72, %83 : vector<256x128xf32>
    %c2_149 = arith.constant 2 : index
    %c0_150 = arith.constant 0 : index
    %c0_151 = arith.constant 0 : index
    %85 = vector.load %arg9[%c2_149, %c0_150, %c0_151] : memref<18x18x128xbf16, #tpu.memory_space<vmem>>, vector<16x16x128xbf16>
    %c0_152 = arith.constant 0 : index
    %c0_153 = arith.constant 0 : index
    %c0_154 = arith.constant 0 : index
    %86 = vector.load %arg10[%c0_152, %c0_153, %c0_154] : memref<16x16x384xbf16, #tpu.memory_space<vmem>>, vector<16x16x128xbf16>
    tpu.vector_store %arg10[%c0_152, %c0_153, %c0_154], %85 {strides = array<i32>} : memref<16x16x384xbf16, #tpu.memory_space<vmem>>, vector<16x16x128xbf16>,
    %c2_155 = arith.constant 2 : index
    %c1_156 = arith.constant 1 : index
    %c0_157 = arith.constant 0 : index
    %87 = vector.load %arg9[%c2_155, %c1_156, %c0_157] : memref<18x18x128xbf16, #tpu.memory_space<vmem>>, vector<16x16x128xbf16>
    %c0_158 = arith.constant 0 : index
    %c0_159 = arith.constant 0 : index
    %c128_160 = arith.constant 128 : index
    %88 = vector.load %arg10[%c0_158, %c0_159, %c128_160] : memref<16x16x384xbf16, #tpu.memory_space<vmem>>, vector<16x16x128xbf16>
    tpu.vector_store %arg10[%c0_158, %c0_159, %c128_160], %87 {strides = array<i32>} : memref<16x16x384xbf16, #tpu.memory_space<vmem>>, vector<16x16x128xbf16>,
    %c2_161 = arith.constant 2 : index
    %c2_162 = arith.constant 2 : index
    %c0_163 = arith.constant 0 : index
    %89 = vector.load %arg9[%c2_161, %c2_162, %c0_163] : memref<18x18x128xbf16, #tpu.memory_space<vmem>>, vector<16x16x128xbf16>
    %c0_164 = arith.constant 0 : index
    %c0_165 = arith.constant 0 : index
    %c256_166 = arith.constant 256 : index
    %90 = vector.load %arg10[%c0_164, %c0_165, %c256_166] : memref<16x16x384xbf16, #tpu.memory_space<vmem>>, vector<16x16x128xbf16>
    tpu.vector_store %arg10[%c0_164, %c0_165, %c256_166], %89 {strides = array<i32>} : memref<16x16x384xbf16, #tpu.memory_space<vmem>>, vector<16x16x128xbf16>,
    %c0_167 = arith.constant 0 : index
    %c0_168 = arith.constant 0 : index
    %c0_169 = arith.constant 0 : index
    %91 = vector.load %arg10[%c0_167, %c0_168, %c0_169] : memref<16x16x384xbf16, #tpu.memory_space<vmem>>, vector<16x16x384xbf16>
    %92 = vector.shape_cast %91 : vector<16x16x384xbf16> to vector<256x384xbf16>
    %c2_170 = arith.constant 2 : index
    %c0_171 = arith.constant 0 : index
    %c0_172 = arith.constant 0 : index
    %93 = vector.load %arg5[%c2_170, %c0_171, %c0_172] : memref<3x384x128xbf16, #tpu.memory_space<vmem>>, vector<1x384x128xbf16>
    %94 = vector.shape_cast %93 : vector<1x384x128xbf16> to vector<384x128xbf16>
    %cst_173 = arith.constant dense<0.000000e+00> : vector<256x128xf32>
    %95 = tpu.matmul %92, %94, %cst_173 {dimension_numbers = #tpu.dot_dimension_numbers<[1], [0], [0], [1], [0, 0, 1, 1], [], []>} : vector<256x384xbf16>, vector<384x128xbf16>, vector<256x128xf32> -> vector<256x128xf32>
    %96 = arith.addf %84, %95 : vector<256x128xf32>
    %c0_174 = arith.constant 0 : index
    %c0_175 = arith.constant 0 : index
    %97 = vector.load %arg6[%c0_174, %c0_175] : memref<1x128xf32, #tpu.memory_space<vmem>>, vector<1x128xf32>
    %98 = vector.shape_cast %97 : vector<1x128xf32> to vector<128xf32>
    %99 = vector.shape_cast %98 : vector<128xf32> to vector<1x128xf32>
    %100 = vector.broadcast %99 : vector<1x128xf32> to vector<256x128xf32>
    %101 = arith.mulf %96, %100 : vector<256x128xf32>
    %c0_176 = arith.constant 0 : index
    %c0_177 = arith.constant 0 : index
    %102 = vector.load %arg7[%c0_176, %c0_177] : memref<1x128xf32, #tpu.memory_space<vmem>>, vector<1x128xf32>
    %103 = vector.shape_cast %102 : vector<1x128xf32> to vector<128xf32>
    %104 = vector.shape_cast %103 : vector<128xf32> to vector<1x128xf32>
    %105 = vector.broadcast %104 : vector<1x128xf32> to vector<256x128xf32>
    %106 = arith.addf %101, %105 : vector<256x128xf32>
    %107 = vector.shape_cast %106 : vector<256x128xf32> to vector<16x16x128xf32>
    %c0_178 = arith.constant 0 : index
    %c0_179 = arith.constant 0 : index
    %c0_180 = arith.constant 0 : index
    %c0_181 = arith.constant 0 : index
    %108 = vector.load %arg1[%c0_178, %c0_179, %c0_180, %c0_181] : memref<1x16x16x128xf32, #tpu.memory_space<vmem>>, vector<1x16x16x128xf32>
    %109 = vector.shape_cast %108 : vector<1x16x16x128xf32> to vector<16x16x128xf32>
    %110 = arith.addf %107, %109 : vector<16x16x128xf32>
    %c0_182 = arith.constant 0 : index
    %c0_183 = arith.constant 0 : index
    %c0_184 = arith.constant 0 : index
    %c0_185 = arith.constant 0 : index
    %111 = vector.load %arg8[%c0_182, %c0_183, %c0_184, %c0_185] : memref<1x16x16x128xf32, #tpu.memory_space<vmem>>, vector<1x16x16x128xf32>
    %112 = vector.shape_cast %111 : vector<1x16x16x128xf32> to vector<16x16x128xf32>
    %113 = vector.shape_cast %110 : vector<16x16x128xf32> to vector<1x16x16x128xf32>
    tpu.vector_store %arg8[%c0_182, %c0_183, %c0_184, %c0_185], %113 {strides = array<i32>} : memref<1x16x16x128xf32, #tpu.memory_space<vmem>>, vector<1x16x16x128xf32>,
    return
  }
  func.func @transform_0(%arg0: i32) -> (i32, i32, i32, i32) {
    %c0_i32 = arith.constant 0 : i32
    %c0_i32_0 = arith.constant 0 : i32
    %c0_i32_1 = arith.constant 0 : i32
    %c0_i32_2 = arith.constant 0 : i32
    return %arg0, %c0_i32, %c0_i32_0, %c0_i32_1 : i32, i32, i32, i32
  }
  func.func @transform_1(%arg0: i32) -> (i32, i32, i32) {
    %c0_i32 = arith.constant 0 : i32
    %c0_i32_0 = arith.constant 0 : i32
    %c0_i32_1 = arith.constant 0 : i32
    %c0_i32_2 = arith.constant 0 : i32
    return %c0_i32, %c0_i32_0, %c0_i32_1 : i32, i32, i32
  }
  func.func @transform_2(%arg0: i32) -> (i32, i32) {
    %c0_i32 = arith.constant 0 : i32
    %c0_i32_0 = arith.constant 0 : i32
    %c0_i32_1 = arith.constant 0 : i32
    return %c0_i32, %c0_i32_0 : i32, i32
  }
  func.func @transform_3(%arg0: i32) -> (i32, i32) {
    %c0_i32 = arith.constant 0 : i32
    %c0_i32_0 = arith.constant 0 : i32
    %c0_i32_1 = arith.constant 0 : i32
    return %c0_i32, %c0_i32_0 : i32, i32
  }
  func.func @transform_4(%arg0: i32) -> (i32, i32, i32) {
    %c0_i32 = arith.constant 0 : i32
    %c0_i32_0 = arith.constant 0 : i32
    %c0_i32_1 = arith.constant 0 : i32
    %c0_i32_2 = arith.constant 0 : i32
    return %c0_i32, %c0_i32_0, %c0_i32_1 : i32, i32, i32
  }
  func.func @transform_5(%arg0: i32) -> (i32, i32) {
    %c0_i32 = arith.constant 0 : i32
    %c0_i32_0 = arith.constant 0 : i32
    %c0_i32_1 = arith.constant 0 : i32
    return %c0_i32, %c0_i32_0 : i32, i32
  }
  func.func @transform_6(%arg0: i32) -> (i32, i32) {
    %c0_i32 = arith.constant 0 : i32
    %c0_i32_0 = arith.constant 0 : i32
    %c0_i32_1 = arith.constant 0 : i32
    return %c0_i32, %c0_i32_0 : i32, i32
  }
  func.func @transform_7(%arg0: i32) -> (i32, i32, i32, i32) {
    %c0_i32 = arith.constant 0 : i32
    %c0_i32_0 = arith.constant 0 : i32
    %c0_i32_1 = arith.constant 0 : i32
    %c0_i32_2 = arith.constant 0 : i32
    return %arg0, %c0_i32, %c0_i32_0, %c0_i32_1 : i32, i32, i32, i32
  }
}

</mosaic_0001>

<llo_original>
// kernel: tpu_custom_call.1
$region0: #{tpu_custom_call.1}
  #allocation0 [shape = 'u32[]', space=smem, size = 0x4, offset = 0x4, fixed_abs, tag = 'smem constant byte address 0x4 - core index']
  #allocation1 [shape = 'u32[144,128]{1,0:T(1,128)}', space=vmem, size = 0x12000, scoped, tag = 'internal scratch']
  #allocation2 [shape = 'bf16[18,18,128]{2,1,0:T(8,128)(2,1)}', space=vmem, size = 0x1b000, scoped, tag = 'scratch operand']
  #allocation3 [shape = 'bf16[16,16,384]{2,1,0:T(16,128)(2,1)}', space=vmem, size = 0x30000, scoped, tag = 'scratch operand']
  %s0 = inlined_call_operand.hbm [shape: f32[2,16,16,128], index: 0, kind: input, shape index: {}]
  %s1 = inlined_call_operand.hbm [shape: bf16[3,384,128], index: 1, kind: input, shape index: {}]
  %s2 = inlined_call_operand.vmem [shape: f32[1,128], index: 2, kind: input, shape index: {}]
  %s3 = inlined_call_operand.vmem [shape: f32[1,128], index: 3, kind: input, shape index: {}]
  %s4 = inlined_call_operand.hbm [shape: bf16[3,384,128], index: 4, kind: input, shape index: {}]
  %s5 = inlined_call_operand.vmem [shape: f32[1,128], index: 5, kind: input, shape index: {}]
  %s6 = inlined_call_operand.vmem [shape: f32[1,128], index: 6, kind: input, shape index: {}]
  %s7 = inlined_call_operand.hbm [shape: f32[2,16,16,128], index: 7, kind: output, shape index: {}]
  %s8 = sld [smem:[#allocation0]]
  $region73: #{tpu_custom_call.1} parent=0
    _
  %s10 = ssub.s32 1, %s8
  %s11 = scalar_select 0, %s10, %s8
  $region1: #{tpu_custom_call.1} parent=0
    #allocation4 [shape = 'u8[262144]{0}', space=vmem, size = 0x40000, scoped, tag = 'input window, operand 0']
    #allocation5 [shape = 's32[2]{0}', space=sflag, size = 0x8, scoped, tag = 'scoped memory for tpu_custom_call.1']
    #allocation6 [shape = 's32[2]{0}', space=sflag, size = 0x8, scoped, tag = 'scoped memory for tpu_custom_call.1']
    #allocation7 [shape = 'u8[294912]{0}', space=vmem, size = 0x48000, scoped, tag = 'input window, operand 1, single buffered']
    #allocation8 [shape = 's32[1]{0}', space=sflag, size = 0x4, scoped, tag = 'scoped memory for tpu_custom_call.1']
    #allocation9 [shape = 'u8[294912]{0}', space=vmem, size = 0x48000, scoped, tag = 'input window, operand 4, single buffered']
    #allocation10 [shape = 'u8[262144]{0}', space=vmem, size = 0x40000, scoped, tag = 'output window, operand 0']
    %12 = vsyncpa [#allocation5], 0
    %s13 = scalar_lea.sflag [#allocation5], 1
    %14 = vsyncpa %s13, 0
    %15 = vsyncpa [#allocation8], 0
    %16 = vsyncpa [#allocation6], 0
    %s17 = scalar_lea.sflag [#allocation6], 1
    %18 = vsyncpa %s17, 0
    loop: start=0, step=1, limit=4
    $region2: #{tpu_custom_call.1} parent=1 // loop_pre_header
      _
    $region3: #{tpu_custom_call.1} parent=1 // loop_header
      %s20 = sphi 0, %s24
      %p21 = scmp.ge.s32.totalorder %s20, 4
      %s30 = sphi 0, %s32
      %s33 = sphi 0, %s30
      %s34 = sphi 0, %s33
      %s50 = sphi 0, %s34
      %s54 = sphi 0, %s54
      %s56 = sphi 0, %s54
      %s57 = sphi 0, %s56
      %s71 = sphi 0, %s57
      %s75 = sphi 0, %s75
      %s77 = sphi 0, %s75
      %s78 = sphi 0, %s77
      %s92 = sphi 0, %s78
      %s96 = sphi 0, %s96
      %s98 = sphi 0, %s96
      %s99 = sphi 0, %s98
      %s113 = sphi 0, %s99
      %s117 = sphi 0, %s117
      %s119 = sphi 0, %s117
      %s120 = sphi 0, %s119
      %s134 = sphi 0, %s120
      %s138 = sphi 0, %s138
      %s140 = sphi 0, %s138
      %s141 = sphi 0, %s140
      %s155 = sphi 0, %s141
      %s159 = sphi 0, %s159
      %s161 = sphi 0, %s159
      %s162 = sphi 0, %s161
      %s176 = sphi 0, %s162
      %s182 = sphi 0, %s184
      %s185 = sphi 0, %s182
      %s186 = sphi 0, %s185
      %s202 = sphi 0, %s186
    $region4: #{tpu_custom_call.1} parent=1 // loop_header_branch
      %23 = sbr.rel (%p21) target = $region8
    $region5: #{tpu_custom_call.1} parent=1 // loop_body
      %s25 = ssub.s32 %s20, 1
      %s26 = ssub.s32 %s20, 2
      %s27 = sadd.s32 %s20, 1
      %s28 = ssub.s32 %s20, %s27
      %p29 = scmp.eq.s32.totalorder %s28, 0
      %s31 = sadd.s32 %s30, 1
      %s32 = scalar_select %p29, %s30, %s31
      %p35 = pneg %p29
      %p36 = scmp.eq.s32.totalorder %s20, 1
      %p37 = por %p35, %p36
      %p38 = scmp.ne.s32.totalorder %s30, %s33
      %p39 = scmp.eq.s32.totalorder %s20, 0
      %p40 = por %p38, %p39
      %p41 = scmp.ne.s32.totalorder %s30, %s33
      %p42 = scmp.eq.s32.totalorder %s25, 1
      %p43 = por %p41, %p42
      %p44 = scmp.ne.s32.totalorder %s33, %s34
      %p45 = scmp.eq.s32.totalorder %s25, 0
      %p46 = por %p44, %p45
      %p47 = scmp.ne.s32.totalorder %s33, %s34
      %p48 = scmp.eq.s32.totalorder %s26, 1
      %p49 = por %p47, %p48
      %p51 = scmp.ne.s32.totalorder %s34, %s50
      %p52 = scmp.eq.s32.totalorder %s26, 0
      %p53 = por %p51, %p52
      %s55 = sadd.s32 %s54, 1
      %p58 = scmp.eq.s32.totalorder %s20, 1
      %p59 = scmp.ne.s32.totalorder %s54, %s56
      %p60 = scmp.eq.s32.totalorder %s20, 0
      %p61 = por %p59, %p60
      %p62 = scmp.ne.s32.totalorder %s54, %s56
      %p63 = scmp.eq.s32.totalorder %s25, 1
      %p64 = por %p62, %p63
      %p65 = scmp.ne.s32.totalorder %s56, %s57
      %p66 = scmp.eq.s32.totalorder %s25, 0
      %p67 = por %p65, %p66
      %p68 = scmp.ne.s32.totalorder %s56, %s57
      %p69 = scmp.eq.s32.totalorder %s26, 1
      %p70 = por %p68, %p69
      %p72 = scmp.ne.s32.totalorder %s57, %s71
      %p73 = scmp.eq.s32.totalorder %s26, 0
      %p74 = por %p72, %p73
      %s76 = sadd.s32 %s75, 1
      %p79 = scmp.eq.s32.totalorder %s20, 1
      %p80 = scmp.ne.s32.totalorder %s75, %s77
      %p81 = scmp.eq.s32.totalorder %s20, 0
      %p82 = por %p80, %p81
      %p83 = scmp.ne.s32.totalorder %s75, %s77
      %p84 = scmp.eq.s32.totalorder %s25, 1
      %p85 = por %p83, %p84
      %p86 = scmp.ne.s32.totalorder %s77, %s78
      %p87 = scmp.eq.s32.totalorder %s25, 0
      %p88 = por %p86, %p87
      %p89 = scmp.ne.s32.totalorder %s77, %s78
      %p90 = scmp.eq.s32.totalorder %s26, 1
      %p91 = por %p89, %p90
      %p93 = scmp.ne.s32.totalorder %s78, %s92
      %p94 = scmp.eq.s32.totalorder %s26, 0
      %p95 = por %p93, %p94
      %s97 = sadd.s32 %s96, 1
      %p100 = scmp.eq.s32.totalorder %s20, 1
      %p101 = scmp.ne.s32.totalorder %s96, %s98
      %p102 = scmp.eq.s32.totalorder %s20, 0
      %p103 = por %p101, %p102
      %p104 = scmp.ne.s32.totalorder %s96, %s98
      %p105 = scmp.eq.s32.totalorder %s25, 1
      %p106 = por %p104, %p105
      %p107 = scmp.ne.s32.totalorder %s98, %s99
      %p108 = scmp.eq.s32.totalorder %s25, 0
      %p109 = por %p107, %p108
      %p110 = scmp.ne.s32.totalorder %s98, %s99
      %p111 = scmp.eq.s32.totalorder %s26, 1
      %p112 = por %p110, %p111
      %p114 = scmp.ne.s32.totalorder %s99, %s113
      %p115 = scmp.eq.s32.totalorder %s26, 0
      %p116 = por %p114, %p115
      %s118 = sadd.s32 %s117, 1
      %p121 = scmp.eq.s32.totalorder %s20, 1
      %p122 = scmp.ne.s32.totalorder %s117, %s119
      %p123 = scmp.eq.s32.totalorder %s20, 0
      %p124 = por %p122, %p123
      %p125 = scmp.ne.s32.totalorder %s117, %s119
      %p126 = scmp.eq.s32.totalorder %s25, 1
      %p127 = por %p125, %p126
      %p128 = scmp.ne.s32.totalorder %s119, %s120
      %p129 = scmp.eq.s32.totalorder %s25, 0
      %p130 = por %p128, %p129
      %p131 = scmp.ne.s32.totalorder %s119, %s120
      %p132 = scmp.eq.s32.totalorder %s26, 1
      %p133 = por %p131, %p132
      %p135 = scmp.ne.s32.totalorder %s120, %s134
      %p136 = scmp.eq.s32.totalorder %s26, 0
      %p137 = por %p135, %p136
      %s139 = sadd.s32 %s138, 1
      %p142 = scmp.eq.s32.totalorder %s20, 1
      %p143 = scmp.ne.s32.totalorder %s138, %s140
      %p144 = scmp.eq.s32.totalorder %s20, 0
      %p145 = por %p143, %p144
      %p146 = scmp.ne.s32.totalorder %s138, %s140
      %p147 = scmp.eq.s32.totalorder %s25, 1
      %p148 = por %p146, %p147
      %p149 = scmp.ne.s32.totalorder %s140, %s141
      %p150 = scmp.eq.s32.totalorder %s25, 0
      %p151 = por %p149, %p150
      %p152 = scmp.ne.s32.totalorder %s140, %s141
      %p153 = scmp.eq.s32.totalorder %s26, 1
      %p154 = por %p152, %p153
      %p156 = scmp.ne.s32.totalorder %s141, %s155
      %p157 = scmp.eq.s32.totalorder %s26, 0
      %p158 = por %p156, %p157
      %s160 = sadd.s32 %s159, 1
      %p163 = scmp.eq.s32.totalorder %s20, 1
      %p164 = scmp.ne.s32.totalorder %s159, %s161
      %p165 = scmp.eq.s32.totalorder %s20, 0
      %p166 = por %p164, %p165
      %p167 = scmp.ne.s32.totalorder %s159, %s161
      %p168 = scmp.eq.s32.totalorder %s25, 1
      %p169 = por %p167, %p168
      %p170 = scmp.ne.s32.totalorder %s161, %s162
      %p171 = scmp.eq.s32.totalorder %s25, 0
      %p172 = por %p170, %p171
      %p173 = scmp.ne.s32.totalorder %s161, %s162
      %p174 = scmp.eq.s32.totalorder %s26, 1
      %p175 = por %p173, %p174
      %p177 = scmp.ne.s32.totalorder %s162, %s176
      %p178 = scmp.eq.s32.totalorder %s26, 0
      %p179 = por %p177, %p178
      %s180 = ssub.s32 %s20, %s27
      %p181 = scmp.eq.s32.totalorder %s180, 0
      %s183 = sadd.s32 %s182, 1
      %s184 = scalar_select %p181, %s182, %s183
      %p187 = pneg %p181
      %p188 = scmp.eq.s32.totalorder %s20, 1
      %p189 = por %p187, %p188
      %p190 = scmp.ne.s32.totalorder %s182, %s185
      %p191 = scmp.eq.s32.totalorder %s20, 0
      %p192 = por %p190, %p191
      %p193 = scmp.ne.s32.totalorder %s182, %s185
      %p194 = scmp.eq.s32.totalorder %s25, 1
      %p195 = por %p193, %p194
      %p196 = scmp.ne.s32.totalorder %s185, %s186
      %p197 = scmp.eq.s32.totalorder %s25, 0
      %p198 = por %p196, %p197
      %p199 = scmp.ne.s32.totalorder %s185, %s186
      %p200 = scmp.eq.s32.totalorder %s26, 1
      %p201 = por %p199, %p200
      %p203 = scmp.ne.s32.totalorder %s186, %s202
      %p204 = scmp.eq.s32.totalorder %s26, 0
      %p205 = por %p203, %p204
      %p206 = scmp.le.s32.totalorder 1, %s20
      %p207 = scmp.lt.s32.totalorder %s20, 3
      %p208 = pnand %p206, %p207
      %p209 = pneg %p208
      // Predicated region
      $region9: #{tpu_custom_call.1} parent=5 // pred_check
        _
      $region10: #{tpu_custom_call.1} parent=5 // pred_check_branch
        %211 = sbr.rel (%p208) target = $region12
      $region11: #{tpu_custom_call.1} parent=5 // pred_region
        %s212 = ssub.s32 %s20, 1
        // Predicated region
        $region13: #{tpu_custom_call.1} parent=11 // pred_check
          %p213 = pneg %p67
        $region14: #{tpu_custom_call.1} parent=11 // pred_check_branch
          %215 = sbr.rel (%p213) target = $region16
        $region15: #{tpu_custom_call.1} parent=11 // pred_region
          %s217 = ssub.s32 9216, 9216
          %218 = vsyncadd [#allocation8], %s217
          %s219 = sshll.u32 [#allocation7], 4
          %s220 = int_to_ptr.vmem [resolvable:$true] %s219
          %225 = dma.hbm_to_vmem [thread:$0]  %s1, 9216, %s220, [#allocation8], 64, 64, 4
        $region16: #{tpu_custom_call.1} parent=11 // pred_fallthru
          _
        // Predicated region
        $region17: #{tpu_custom_call.1} parent=11 // pred_check
          %p226 = pneg %p88
        $region18: #{tpu_custom_call.1} parent=11 // pred_check_branch
          %228 = sbr.rel (%p226) target = $region20
        $region19: #{tpu_custom_call.1} parent=11 // pred_region
          _
        $region20: #{tpu_custom_call.1} parent=11 // pred_fallthru
          _
        // Predicated region
        $region21: #{tpu_custom_call.1} parent=11 // pred_check
          %p229 = pneg %p109
        $region22: #{tpu_custom_call.1} parent=11 // pred_check_branch
          %231 = sbr.rel (%p229) target = $region24
        $region23: #{tpu_custom_call.1} parent=11 // pred_region
          _
        $region24: #{tpu_custom_call.1} parent=11 // pred_fallthru
          _
        // Predicated region
        $region25: #{tpu_custom_call.1} parent=11 // pred_check
          %p232 = pneg %p130
        $region26: #{tpu_custom_call.1} parent=11 // pred_check_branch
          %234 = sbr.rel (%p232) target = $region28
        $region27: #{tpu_custom_call.1} parent=11 // pred_region
          %s236 = ssub.s32 9216, 9216
          %237 = vsyncadd [#allocation8], %s236
          %s238 = sshll.u32 [#allocation9], 4
          %s239 = int_to_ptr.vmem [resolvable:$true] %s238
          %244 = dma.hbm_to_vmem [thread:$0]  %s4, 9216, %s239, [#allocation8], 64, 64, 4
        $region28: #{tpu_custom_call.1} parent=11 // pred_fallthru
          _
        // Predicated region
        $region29: #{tpu_custom_call.1} parent=11 // pred_check
          %p245 = pneg %p151
        $region30: #{tpu_custom_call.1} parent=11 // pred_check_branch
          %247 = sbr.rel (%p245) target = $region32
        $region31: #{tpu_custom_call.1} parent=11 // pred_region
          _
        $region32: #{tpu_custom_call.1} parent=11 // pred_fallthru
          _
        // Predicated region
        $region33: #{tpu_custom_call.1} parent=11 // pred_check
          %p248 = pneg %p172
        $region34: #{tpu_custom_call.1} parent=11 // pred_check_branch
          %250 = sbr.rel (%p248) target = $region36
        $region35: #{tpu_custom_call.1} parent=11 // pred_region
          _
        $region36: #{tpu_custom_call.1} parent=11 // pred_fallthru
          _
      $region12: #{tpu_custom_call.1} parent=5 // pred_fallthru
        _
      %p251 = scmp.lt.s32.totalorder %s20, 2
      // Predicated region
      $region37: #{tpu_custom_call.1} parent=5 // pred_check
        %p252 = pneg %p251
      $region38: #{tpu_custom_call.1} parent=5 // pred_check_branch
        %254 = sbr.rel (%p252) target = $region40
      $region39: #{tpu_custom_call.1} parent=5 // pred_region
        // Predicated region
        $region41: #{tpu_custom_call.1} parent=39 // pred_check
          %p255 = pneg %p40
        $region42: #{tpu_custom_call.1} parent=39 // pred_check_branch
          %257 = sbr.rel (%p255) target = $region44
        $region43: #{tpu_custom_call.1} parent=39 // pred_region
          %s258 = sand.u32 %s30, 1
          %s259 = scalar_lea.sflag [#allocation5], %s258
          %s260 = sand.u32 %s30, 1
          %s261 = smul.addr %s260, 256
          %s262 = scalar_lea.vmem [#allocation4], %s261
          %s264 = ssub.s32 4096, 4096
          %265 = vsyncadd %s259, %s264
          %s266 = smul.addr %s20, 32
          %s267 = smul.addr %s266, 128
          %s268 = scalar_lea.hbm %s0, %s267
          %s269 = sshll.u32 %s262, 4
          %s270 = int_to_ptr.vmem [resolvable:$true] %s269
          %275 = dma.hbm_to_vmem [thread:$0]  %s268, 4096, %s270, %s259, 128, 128, 8
        $region44: #{tpu_custom_call.1} parent=39 // pred_fallthru
          _
      $region40: #{tpu_custom_call.1} parent=5 // pred_fallthru
        _
      %p276 = scmp.le.s32.totalorder 1, %s20
      %p277 = scmp.lt.s32.totalorder %s20, 3
      %p278 = pnand %p276, %p277
      %p279 = pneg %p278
      // Predicated region
      $region45: #{tpu_custom_call.1} parent=5 // pred_check
        _
      $region46: #{tpu_custom_call.1} parent=5 // pred_check_branch
        %281 = sbr.rel (%p278) target = $region48
      $region47: #{tpu_custom_call.1} parent=5 // pred_region
        %s282 = ssub.s32 %s20, 1
        %s283 = sand.u32 %s33, 1
        %s284 = scalar_lea.sflag [#allocation5], %s283
        %s285 = sand.u32 %s33, 1
        %s286 = smul.addr %s285, 256
        %s287 = scalar_lea.vmem [#allocation4], %s286
        // Predicated region
        $region49: #{tpu_custom_call.1} parent=47 // pred_check
          %p288 = pneg %p46
        $region50: #{tpu_custom_call.1} parent=47 // pred_check_branch
          %290 = sbr.rel (%p288) target = $region52
        $region51: #{tpu_custom_call.1} parent=47 // pred_region
          %291 = dma.done %s284, 4096
        $region52: #{tpu_custom_call.1} parent=47 // pred_fallthru
          _
        // Predicated region
        $region53: #{tpu_custom_call.1} parent=47 // pred_check
          %p292 = pneg %p67
        $region54: #{tpu_custom_call.1} parent=47 // pred_check_branch
          %294 = sbr.rel (%p292) target = $region56
        $region55: #{tpu_custom_call.1} parent=47 // pred_region
          %295 = dma.done [#allocation8], 9216
        $region56: #{tpu_custom_call.1} parent=47 // pred_fallthru
          _
        // Predicated region
        $region57: #{tpu_custom_call.1} parent=47 // pred_check
          %p296 = pneg %p130
        $region58: #{tpu_custom_call.1} parent=47 // pred_check_branch
          %298 = sbr.rel (%p296) target = $region60
        $region59: #{tpu_custom_call.1} parent=47 // pred_region
          %299 = dma.done [#allocation8], 9216
        $region60: #{tpu_custom_call.1} parent=47 // pred_fallthru
          _
        %s300 = sand.u32 %s33, 1
        %s301 = scalar_lea.sflag [#allocation5], %s300
        %s302 = sand.u32 %s33, 1
        %s303 = smul.addr %s302, 256
        %s304 = scalar_lea.vmem [#allocation4], %s303
        %p305 = pneg %p46
        %p306 = pneg %p43
        %p307 = pneg %p67
        %p308 = pneg %p64
        %p309 = pneg %p88
        %p310 = pneg %p85
        %p311 = pneg %p109
        %p312 = pneg %p106
        %p313 = pneg %p130
        %p314 = pneg %p127
        %p315 = pneg %p151
        %p316 = pneg %p148
        %p317 = pneg %p172
        %p318 = pneg %p169
        %p319 = pneg %p198
        %p320 = pneg %p195
        %s321 = sand.u32 %s185, 1
        %s322 = scalar_lea.sflag [#allocation6], %s321
        %s323 = sand.u32 %s185, 1
        %s324 = smul.addr %s323, 256
        %s325 = scalar_lea.vmem [#allocation10], %s324
        %327 = vst [vmem:[#allocation2] sm:$0xf] 0
        %328 = vst [vmem:[#allocation2 + $0x4] sm:$0xf] 0
        %329 = vst [vmem:[#allocation2 + $0x8] sm:$0x1] 0
        %s330 = scalar_lea.vmem [#allocation2], 204
        %331 = vst [vmem:[%s330] sm:$0xf] 0
        %332 = vst [vmem:[%s330 + $0x4] sm:$0xf] 0
        %333 = vst [vmem:[%s330 + $0x8] sm:$0x1] 0
        %s334 = scalar_lea.vmem [#allocation2], 12
        %vm335 = vcmask 1040384
        %vm336 = vsmask.f32 256
        %vm337 = vmand %vm335, %vm336
        %v338 = vld [vmem:[%s334] sm:$0x1]
        %v339 = vsel %vm337, 0, %v338
        %340 = vst [vmem:[%s334] sm:$0x1] %v339
        %v341 = vld [vmem:[%s334 + $0xc] sm:$0x1]
        %v342 = vsel %vm337, 0, %v341
        %343 = vst [vmem:[%s334 + $0xc] sm:$0x1] %v342
        %v344 = vld [vmem:[%s334 + $0x18] sm:$0x1]
        %v345 = vsel %vm337, 0, %v344
        %346 = vst [vmem:[%s334 + $0x18] sm:$0x1] %v345
        %v347 = vld [vmem:[%s334 + $0x24] sm:$0x1]
        %v348 = vsel %vm337, 0, %v347
        %349 = vst [vmem:[%s334 + $0x24] sm:$0x1] %v348
        %v350 = vld [vmem:[%s334 + $0x30] sm:$0x1]
        %v351 = vsel %vm337, 0, %v350
        %352 = vst [vmem:[%s334 + $0x30] sm:$0x1] %v351
        %v353 = vld [vmem:[%s334 + $0x3c] sm:$0x1]
        %v354 = vsel %vm337, 0, %v353
        %355 = vst [vmem:[%s334 + $0x3c] sm:$0x1] %v354
        %v356 = vld [vmem:[%s334 + $0x48] sm:$0x1]
        %v357 = vsel %vm337, 0, %v356
        %358 = vst [vmem:[%s334 + $0x48] sm:$0x1] %v357
        %v359 = vld [vmem:[%s334 + $0x54] sm:$0x1]
        %v360 = vsel %vm337, 0, %v359
        %361 = vst [vmem:[%s334 + $0x54] sm:$0x1] %v360
        %v362 = vld [vmem:[%s334 + $0x60] sm:$0x1]
        %v363 = vsel %vm337, 0, %v362
        %364 = vst [vmem:[%s334 + $0x60] sm:$0x1] %v363
        %v365 = vld [vmem:[%s334 + $0x6c] sm:$0x1]
        %v366 = vsel %vm337, 0, %v365
        %367 = vst [vmem:[%s334 + $0x6c] sm:$0x1] %v366
        %v368 = vld [vmem:[%s334 + $0x78] sm:$0x1]
        %v369 = vsel %vm337, 0, %v368
        %370 = vst [vmem:[%s334 + $0x78] sm:$0x1] %v369
        %v371 = vld [vmem:[%s334 + $0x84] sm:$0x1]
        %v372 = vsel %vm337, 0, %v371
        %373 = vst [vmem:[%s334 + $0x84] sm:$0x1] %v372
        %v374 = vld [vmem:[%s334 + $0x90] sm:$0x1]
        %v375 = vsel %vm337, 0, %v374
        %376 = vst [vmem:[%s334 + $0x90] sm:$0x1] %v375
        %v377 = vld [vmem:[%s334 + $0x9c] sm:$0x1]
        %v378 = vsel %vm337, 0, %v377
        %379 = vst [vmem:[%s334 + $0x9c] sm:$0x1] %v378
        %v380 = vld [vmem:[%s334 + $0xa8] sm:$0x1]
        %v381 = vsel %vm337, 0, %v380
        %382 = vst [vmem:[%s334 + $0xa8] sm:$0x1] %v381
        %v383 = vld [vmem:[%s334 + $0xb4] sm:$0x1]
        %v384 = vsel %vm337, 0, %v383
        %385 = vst [vmem:[%s334 + $0xb4] sm:$0x1] %v384
        %vm386 = vsmask.f32 7938
        %vm387 = vmand %vm335, %vm386
        %v388 = vld [vmem:[%s334 + $0x8] sm:$0x1]
        %v389 = vsel %vm387, 0, %v388
        %390 = vst [vmem:[%s334 + $0x8] sm:$0x1] %v389
        %v391 = vld [vmem:[%s334 + $0x14] sm:$0x1]
        %v392 = vsel %vm387, 0, %v391
        %393 = vst [vmem:[%s334 + $0x14] sm:$0x1] %v392
        %v394 = vld [vmem:[%s334 + $0x20] sm:$0x1]
        %v395 = vsel %vm387, 0, %v394
        %396 = vst [vmem:[%s334 + $0x20] sm:$0x1] %v395
        %v397 = vld [vmem:[%s334 + $0x2c] sm:$0x1]
        %v398 = vsel %vm387, 0, %v397
        %399 = vst [vmem:[%s334 + $0x2c] sm:$0x1] %v398
        %v400 = vld [vmem:[%s334 + $0x38] sm:$0x1]
        %v401 = vsel %vm387, 0, %v400
        %402 = vst [vmem:[%s334 + $0x38] sm:$0x1] %v401
        %v403 = vld [vmem:[%s334 + $0x44] sm:$0x1]
        %v404 = vsel %vm387, 0, %v403
        %405 = vst [vmem:[%s334 + $0x44] sm:$0x1] %v404
        %v406 = vld [vmem:[%s334 + $0x50] sm:$0x1]
        %v407 = vsel %vm387, 0, %v406
        %408 = vst [vmem:[%s334 + $0x50] sm:$0x1] %v407
        %v409 = vld [vmem:[%s334 + $0x5c] sm:$0x1]
        %v410 = vsel %vm387, 0, %v409
        %411 = vst [vmem:[%s334 + $0x5c] sm:$0x1] %v410
        %v412 = vld [vmem:[%s334 + $0x68] sm:$0x1]
        %v413 = vsel %vm387, 0, %v412
        %414 = vst [vmem:[%s334 + $0x68] sm:$0x1] %v413
        %v415 = vld [vmem:[%s334 + $0x74] sm:$0x1]
        %v416 = vsel %vm387, 0, %v415
        %417 = vst [vmem:[%s334 + $0x74] sm:$0x1] %v416
        %v418 = vld [vmem:[%s334 + $0x80] sm:$0x1]
        %v419 = vsel %vm387, 0, %v418
        %420 = vst [vmem:[%s334 + $0x80] sm:$0x1] %v419
        %v421 = vld [vmem:[%s334 + $0x8c] sm:$0x1]
        %v422 = vsel %vm387, 0, %v421
        %423 = vst [vmem:[%s334 + $0x8c] sm:$0x1] %v422
        %v424 = vld [vmem:[%s334 + $0x98] sm:$0x1]
        %v425 = vsel %vm387, 0, %v424
        %426 = vst [vmem:[%s334 + $0x98] sm:$0x1] %v425
        %v427 = vld [vmem:[%s334 + $0xa4] sm:$0x1]
        %v428 = vsel %vm387, 0, %v427
        %429 = vst [vmem:[%s334 + $0xa4] sm:$0x1] %v428
        %v430 = vld [vmem:[%s334 + $0xb0] sm:$0x1]
        %v431 = vsel %vm387, 0, %v430
        %432 = vst [vmem:[%s334 + $0xb0] sm:$0x1] %v431
        %v433 = vld [vmem:[%s334 + $0xbc] sm:$0x1]
        %v434 = vsel %vm387, 0, %v433
        %435 = vst [vmem:[%s334 + $0xbc] sm:$0x1] %v434
        %v436 = vld [vmem:[%s287] sm:$0xff]
        %v437 = vld [vmem:[%s287 + $0x8] sm:$0xff]
        %v438 = vld [vmem:[%s287 + $0x10] sm:$0xff]
        %v439 = vld [vmem:[%s287 + $0x18] sm:$0xff]
        %v440 = vld [vmem:[%s287 + $0x20] sm:$0xff]
        %v441 = vld [vmem:[%s287 + $0x28] sm:$0xff]
        %v442 = vld [vmem:[%s287 + $0x30] sm:$0xff]
        %v443 = vld [vmem:[%s287 + $0x38] sm:$0xff]
        %v444 = vld [vmem:[%s287 + $0x40] sm:$0xff]
        %v445 = vld [vmem:[%s287 + $0x48] sm:$0xff]
        %v446 = vld [vmem:[%s287 + $0x50] sm:$0xff]
        %v447 = vld [vmem:[%s287 + $0x58] sm:$0xff]
        %v448 = vld [vmem:[%s287 + $0x60] sm:$0xff]
        %v449 = vld [vmem:[%s287 + $0x68] sm:$0xff]
        %v450 = vld [vmem:[%s287 + $0x70] sm:$0xff]
        %v451 = vld [vmem:[%s287 + $0x78] sm:$0xff]
        %v452 = vld [vmem:[%s287 + $0x80] sm:$0xff]
        %v453 = vld [vmem:[%s287 + $0x88] sm:$0xff]
        %v454 = vld [vmem:[%s287 + $0x90] sm:$0xff]
        %v455 = vld [vmem:[%s287 + $0x98] sm:$0xff]
        %v456 = vld [vmem:[%s287 + $0xa0] sm:$0xff]
        %v457 = vld [vmem:[%s287 + $0xa8] sm:$0xff]
        %v458 = vld [vmem:[%s287 + $0xb0] sm:$0xff]
        %v459 = vld [vmem:[%s287 + $0xb8] sm:$0xff]
        %v460 = vld [vmem:[%s287 + $0xc0] sm:$0xff]
        %v461 = vld [vmem:[%s287 + $0xc8] sm:$0xff]
        %v462 = vld [vmem:[%s287 + $0xd0] sm:$0xff]
        %v463 = vld [vmem:[%s287 + $0xd8] sm:$0xff]
        %v464 = vld [vmem:[%s287 + $0xe0] sm:$0xff]
        %v465 = vld [vmem:[%s287 + $0xe8] sm:$0xff]
        %v466 = vld [vmem:[%s287 + $0xf0] sm:$0xff]
        %v467 = vld [vmem:[%s287 + $0xf8] sm:$0xff]
        %v468 = vpack.c.bf16 %v437, %v436
        %v469 = vpack.c.bf16 %v439, %v438
        %v470 = vpack.c.bf16 %v441, %v440
        %v471 = vpack.c.bf16 %v443, %v442
        %v472 = vpack.c.bf16 %v445, %v444
        %v473 = vpack.c.bf16 %v447, %v446
        %v474 = vpack.c.bf16 %v449, %v448
        %v475 = vpack.c.bf16 %v451, %v450
        %v476 = vpack.c.bf16 %v453, %v452
        %v477 = vpack.c.bf16 %v455, %v454
        %v478 = vpack.c.bf16 %v457, %v456
        %v479 = vpack.c.bf16 %v459, %v458
        %v480 = vpack.c.bf16 %v461, %v460
        %v481 = vpack.c.bf16 %v463, %v462
        %v482 = vpack.c.bf16 %v465, %v464
        %v483 = vpack.c.bf16 %v467, %v466
        %v500 = vunpack.c.l.b16 %v468
        %v501 = vunpack.c.h.b16 %v468
        %v502 = vunpack.c.l.b16 %v469
        %v503 = vunpack.c.h.b16 %v469
        %v504 = vunpack.c.l.b16 %v470
        %v505 = vunpack.c.h.b16 %v470
        %v506 = vunpack.c.l.b16 %v471
        %v507 = vunpack.c.h.b16 %v471
        %v508 = vunpack.c.l.b16 %v472
        %v509 = vunpack.c.h.b16 %v472
        %v510 = vunpack.c.l.b16 %v473
        %v511 = vunpack.c.h.b16 %v473
        %v512 = vunpack.c.l.b16 %v474
        %v513 = vunpack.c.h.b16 %v474
        %v514 = vunpack.c.l.b16 %v475
        %v515 = vunpack.c.h.b16 %v475
        %v516 = vunpack.c.l.b16 %v476
        %v517 = vunpack.c.h.b16 %v476
        %v518 = vunpack.c.l.b16 %v477
        %v519 = vunpack.c.h.b16 %v477
        %v520 = vunpack.c.l.b16 %v478
        %v521 = vunpack.c.h.b16 %v478
        %v522 = vunpack.c.l.b16 %v479
        %v523 = vunpack.c.h.b16 %v479
        %v524 = vunpack.c.l.b16 %v480
        %v525 = vunpack.c.h.b16 %v480
        %v526 = vunpack.c.l.b16 %v481
        %v527 = vunpack.c.h.b16 %v481
        %v528 = vunpack.c.l.b16 %v482
        %v529 = vunpack.c.h.b16 %v482
        %v530 = vunpack.c.l.b16 %v483
        %v531 = vunpack.c.h.b16 %v483
        %v532 = vpack.c.b16 %v500, %v500
        %v533 = vpack.c.b16 %v501, %v501
        %v534 = vpack.c.b16 %v502, %v502
        %v535 = vpack.c.b16 %v503, %v503
        %v536 = vpack.c.b16 %v504, %v504
        %v537 = vpack.c.b16 %v505, %v505
        %v538 = vpack.c.b16 %v506, %v506
        %v539 = vpack.c.b16 %v507, %v507
        %v540 = vpack.c.b16 %v508, %v508
        %v541 = vpack.c.b16 %v509, %v509
        %v542 = vpack.c.b16 %v510, %v510
        %v543 = vpack.c.b16 %v511, %v511
        %v544 = vpack.c.b16 %v512, %v512
        %v545 = vpack.c.b16 %v513, %v513
        %v546 = vpack.c.b16 %v514, %v514
        %v547 = vpack.c.b16 %v515, %v515
        %v548 = vpack.c.b16 %v516, %v516
        %v549 = vpack.c.b16 %v517, %v517
        %v550 = vpack.c.b16 %v518, %v518
        %v551 = vpack.c.b16 %v519, %v519
        %v552 = vpack.c.b16 %v520, %v520
        %v553 = vpack.c.b16 %v521, %v521
        %v554 = vpack.c.b16 %v522, %v522
        %v555 = vpack.c.b16 %v523, %v523
        %v556 = vpack.c.b16 %v524, %v524
        %v557 = vpack.c.b16 %v525, %v525
        %v558 = vpack.c.b16 %v526, %v526
        %v559 = vpack.c.b16 %v527, %v527
        %v560 = vpack.c.b16 %v528, %v528
        %v561 = vpack.c.b16 %v529, %v529
        %v562 = vpack.c.b16 %v530, %v530
        %v563 = vpack.c.b16 %v531, %v531
        %vm564 = vsmask.f32 4368
        %vm565 = vmor %vm336, %vm564
        %v567 = vshrl.u32 %v532, 16
        %v569 = vrot.slane %v567, 7
        %v570 = vshll.u32 %v532, 16
        %v572 = vor.u32 %v569, %v570
        %v573 = vrot.slane %v569, 4
        %v575 = vshrl.u32 %v533, 16
        %v577 = vrot.slane %v575, 7
        %v578 = vshll.u32 %v533, 16
        %v580 = vor.u32 %v577, %v578
        %v581 = vsel %vm565, %v573, %v580
        %v582 = vrot.slane %v577, 4
        %v584 = vshrl.u32 %v534, 16
        %v586 = vrot.slane %v584, 7
        %v587 = vshll.u32 %v534, 16
        %v589 = vor.u32 %v586, %v587
        %v590 = vrot.slane %v586, 4
        %v592 = vshrl.u32 %v535, 16
        %v594 = vrot.slane %v592, 7
        %v595 = vshll.u32 %v535, 16
        %v597 = vor.u32 %v594, %v595
        %v598 = vsel %vm565, %v590, %v597
        %v599 = vrot.slane %v594, 4
        %v601 = vshrl.u32 %v536, 16
        %v603 = vrot.slane %v601, 7
        %v604 = vshll.u32 %v536, 16
        %v606 = vor.u32 %v603, %v604
        %v607 = vrot.slane %v603, 4
        %v609 = vshrl.u32 %v537, 16
        %v611 = vrot.slane %v609, 7
        %v612 = vshll.u32 %v537, 16
        %v614 = vor.u32 %v611, %v612
        %v615 = vsel %vm565, %v607, %v614
        %v616 = vrot.slane %v611, 4
        %v618 = vshrl.u32 %v538, 16
        %v620 = vrot.slane %v618, 7
        %v621 = vshll.u32 %v538, 16
        %v623 = vor.u32 %v620, %v621
        %v624 = vrot.slane %v620, 4
        %v626 = vshrl.u32 %v539, 16
        %v628 = vrot.slane %v626, 7
        %v629 = vshll.u32 %v539, 16
        %v631 = vor.u32 %v628, %v629
        %v632 = vsel %vm565, %v624, %v631
        %v633 = vrot.slane %v628, 4
        %v635 = vshrl.u32 %v540, 16
        %v637 = vrot.slane %v635, 7
        %v638 = vshll.u32 %v540, 16
        %v640 = vor.u32 %v637, %v638
        %v641 = vrot.slane %v637, 4
        %v643 = vshrl.u32 %v541, 16
        %v645 = vrot.slane %v643, 7
        %v646 = vshll.u32 %v541, 16
        %v648 = vor.u32 %v645, %v646
        %v649 = vsel %vm565, %v641, %v648
        %v650 = vrot.slane %v645, 4
        %v652 = vshrl.u32 %v542, 16
        %v654 = vrot.slane %v652, 7
        %v655 = vshll.u32 %v542, 16
        %v657 = vor.u32 %v654, %v655
        %v658 = vrot.slane %v654, 4
        %v660 = vshrl.u32 %v543, 16
        %v662 = vrot.slane %v660, 7
        %v663 = vshll.u32 %v543, 16
        %v665 = vor.u32 %v662, %v663
        %v666 = vsel %vm565, %v658, %v665
        %v667 = vrot.slane %v662, 4
        %v669 = vshrl.u32 %v544, 16
        %v671 = vrot.slane %v669, 7
        %v672 = vshll.u32 %v544, 16
        %v674 = vor.u32 %v671, %v672
        %v675 = vrot.slane %v671, 4
        %v677 = vshrl.u32 %v545, 16
        %v679 = vrot.slane %v677, 7
        %v680 = vshll.u32 %v545, 16
        %v682 = vor.u32 %v679, %v680
        %v683 = vsel %vm565, %v675, %v682
        %v684 = vrot.slane %v679, 4
        %v686 = vshrl.u32 %v546, 16
        %v688 = vrot.slane %v686, 7
        %v689 = vshll.u32 %v546, 16
        %v691 = vor.u32 %v688, %v689
        %v692 = vrot.slane %v688, 4
        %v694 = vshrl.u32 %v547, 16
        %v696 = vrot.slane %v694, 7
        %v697 = vshll.u32 %v547, 16
        %v699 = vor.u32 %v696, %v697
        %v700 = vsel %vm565, %v692, %v699
        %v701 = vrot.slane %v696, 4
        %v703 = vshrl.u32 %v548, 16
        %v705 = vrot.slane %v703, 7
        %v706 = vshll.u32 %v548, 16
        %v708 = vor.u32 %v705, %v706
        %v709 = vrot.slane %v705, 4
        %v711 = vshrl.u32 %v549, 16
        %v713 = vrot.slane %v711, 7
        %v714 = vshll.u32 %v549, 16
        %v716 = vor.u32 %v713, %v714
        %v717 = vsel %vm565, %v709, %v716
        %v718 = vrot.slane %v713, 4
        %v720 = vshrl.u32 %v550, 16
        %v722 = vrot.slane %v720, 7
        %v723 = vshll.u32 %v550, 16
        %v725 = vor.u32 %v722, %v723
        %v726 = vrot.slane %v722, 4
        %v728 = vshrl.u32 %v551, 16
        %v730 = vrot.slane %v728, 7
        %v731 = vshll.u32 %v551, 16
        %v733 = vor.u32 %v730, %v731
        %v734 = vsel %vm565, %v726, %v733
        %v735 = vrot.slane %v730, 4
        %v737 = vshrl.u32 %v552, 16
        %v739 = vrot.slane %v737, 7
        %v740 = vshll.u32 %v552, 16
        %v742 = vor.u32 %v739, %v740
        %v743 = vrot.slane %v739, 4
        %v745 = vshrl.u32 %v553, 16
        %v747 = vrot.slane %v745, 7
        %v748 = vshll.u32 %v553, 16
        %v750 = vor.u32 %v747, %v748
        %v751 = vsel %vm565, %v743, %v750
        %v752 = vrot.slane %v747, 4
        %v754 = vshrl.u32 %v554, 16
        %v756 = vrot.slane %v754, 7
        %v757 = vshll.u32 %v554, 16
        %v759 = vor.u32 %v756, %v757
        %v760 = vrot.slane %v756, 4
        %v762 = vshrl.u32 %v555, 16
        %v764 = vrot.slane %v762, 7
        %v765 = vshll.u32 %v555, 16
        %v767 = vor.u32 %v764, %v765
        %v768 = vsel %vm565, %v760, %v767
        %v769 = vrot.slane %v764, 4
        %v771 = vshrl.u32 %v556, 16
        %v773 = vrot.slane %v771, 7
        %v774 = vshll.u32 %v556, 16
        %v776 = vor.u32 %v773, %v774
        %v777 = vrot.slane %v773, 4
        %v779 = vshrl.u32 %v557, 16
        %v781 = vrot.slane %v779, 7
        %v782 = vshll.u32 %v557, 16
        %v784 = vor.u32 %v781, %v782
        %v785 = vsel %vm565, %v777, %v784
        %v786 = vrot.slane %v781, 4
        %v788 = vshrl.u32 %v558, 16
        %v790 = vrot.slane %v788, 7
        %v791 = vshll.u32 %v558, 16
        %v793 = vor.u32 %v790, %v791
        %v794 = vrot.slane %v790, 4
        %v796 = vshrl.u32 %v559, 16
        %v798 = vrot.slane %v796, 7
        %v799 = vshll.u32 %v559, 16
        %v801 = vor.u32 %v798, %v799
        %v802 = vsel %vm565, %v794, %v801
        %v803 = vrot.slane %v798, 4
        %v805 = vshrl.u32 %v560, 16
        %v807 = vrot.slane %v805, 7
        %v808 = vshll.u32 %v560, 16
        %v810 = vor.u32 %v807, %v808
        %v811 = vrot.slane %v807, 4
        %v813 = vshrl.u32 %v561, 16
        %v815 = vrot.slane %v813, 7
        %v816 = vshll.u32 %v561, 16
        %v818 = vor.u32 %v815, %v816
        %v819 = vsel %vm565, %v811, %v818
        %v820 = vrot.slane %v815, 4
        %v822 = vshrl.u32 %v562, 16
        %v824 = vrot.slane %v822, 7
        %v825 = vshll.u32 %v562, 16
        %v827 = vor.u32 %v824, %v825
        %v828 = vrot.slane %v824, 4
        %v830 = vshrl.u32 %v563, 16
        %v832 = vrot.slane %v830, 7
        %v833 = vshll.u32 %v563, 16
        %v835 = vor.u32 %v832, %v833
        %v836 = vsel %vm565, %v828, %v835
        %v837 = vrot.slane %v832, 4
        %vm886 = vcmask 1043456
        %vm887 = vmand %vm886, %vm386
        %v888 = vld [vmem:[%s334] sm:$0xf]
        %v889 = vsel %vm887, %v572, %v888
        %890 = vst [vmem:[%s334] sm:$0xf] %v889
        %891 = vst [vmem:[%s334 + $0x4] sm:$0xf] %v581
        %v892 = vld [vmem:[%s334 + $0x8] sm:$0x1]
        %v893 = vsel %vm337, %v582, %v892
        %894 = vst [vmem:[%s334 + $0x8] sm:$0x1] %v893
        %v895 = vld [vmem:[%s334 + $0xc] sm:$0xf]
        %v896 = vsel %vm887, %v589, %v895
        %897 = vst [vmem:[%s334 + $0xc] sm:$0xf] %v896
        %898 = vst [vmem:[%s334 + $0x10] sm:$0xf] %v598
        %v899 = vld [vmem:[%s334 + $0x14] sm:$0x1]
        %v900 = vsel %vm337, %v599, %v899
        %901 = vst [vmem:[%s334 + $0x14] sm:$0x1] %v900
        %v902 = vld [vmem:[%s334 + $0x18] sm:$0xf]
        %v903 = vsel %vm887, %v606, %v902
        %904 = vst [vmem:[%s334 + $0x18] sm:$0xf] %v903
        %905 = vst [vmem:[%s334 + $0x1c] sm:$0xf] %v615
        %v906 = vld [vmem:[%s334 + $0x20] sm:$0x1]
        %v907 = vsel %vm337, %v616, %v906
        %908 = vst [vmem:[%s334 + $0x20] sm:$0x1] %v907
        %v909 = vld [vmem:[%s334 + $0x24] sm:$0xf]
        %v910 = vsel %vm887, %v623, %v909
        %911 = vst [vmem:[%s334 + $0x24] sm:$0xf] %v910
        %912 = vst [vmem:[%s334 + $0x28] sm:$0xf] %v632
        %v913 = vld [vmem:[%s334 + $0x2c] sm:$0x1]
        %v914 = vsel %vm337, %v633, %v913
        %915 = vst [vmem:[%s334 + $0x2c] sm:$0x1] %v914
        %v916 = vld [vmem:[%s334 + $0x30] sm:$0xf]
        %v917 = vsel %vm887, %v640, %v916
        %918 = vst [vmem:[%s334 + $0x30] sm:$0xf] %v917
        %919 = vst [vmem:[%s334 + $0x34] sm:$0xf] %v649
        %v920 = vld [vmem:[%s334 + $0x38] sm:$0x1]
        %v921 = vsel %vm337, %v650, %v920
        %922 = vst [vmem:[%s334 + $0x38] sm:$0x1] %v921
        %v923 = vld [vmem:[%s334 + $0x3c] sm:$0xf]
        %v924 = vsel %vm887, %v657, %v923
        %925 = vst [vmem:[%s334 + $0x3c] sm:$0xf] %v924
        %926 = vst [vmem:[%s334 + $0x40] sm:$0xf] %v666
        %v927 = vld [vmem:[%s334 + $0x44] sm:$0x1]
        %v928 = vsel %vm337, %v667, %v927
        %929 = vst [vmem:[%s334 + $0x44] sm:$0x1] %v928
        %v930 = vld [vmem:[%s334 + $0x48] sm:$0xf]
        %v931 = vsel %vm887, %v674, %v930
        %932 = vst [vmem:[%s334 + $0x48] sm:$0xf] %v931
        %933 = vst [vmem:[%s334 + $0x4c] sm:$0xf] %v683
        %v934 = vld [vmem:[%s334 + $0x50] sm:$0x1]
        %v935 = vsel %vm337, %v684, %v934
        %936 = vst [vmem:[%s334 + $0x50] sm:$0x1] %v935
        %v937 = vld [vmem:[%s334 + $0x54] sm:$0xf]
        %v938 = vsel %vm887, %v691, %v937
        %939 = vst [vmem:[%s334 + $0x54] sm:$0xf] %v938
        %940 = vst [vmem:[%s334 + $0x58] sm:$0xf] %v700
        %v941 = vld [vmem:[%s334 + $0x5c] sm:$0x1]
        %v942 = vsel %vm337, %v701, %v941
        %943 = vst [vmem:[%s334 + $0x5c] sm:$0x1] %v942
        %v944 = vld [vmem:[%s334 + $0x60] sm:$0xf]
        %v945 = vsel %vm887, %v708, %v944
        %946 = vst [vmem:[%s334 + $0x60] sm:$0xf] %v945
        %947 = vst [vmem:[%s334 + $0x64] sm:$0xf] %v717
        %v948 = vld [vmem:[%s334 + $0x68] sm:$0x1]
        %v949 = vsel %vm337, %v718, %v948
        %950 = vst [vmem:[%s334 + $0x68] sm:$0x1] %v949
        %v951 = vld [vmem:[%s334 + $0x6c] sm:$0xf]
        %v952 = vsel %vm887, %v725, %v951
        %953 = vst [vmem:[%s334 + $0x6c] sm:$0xf] %v952
        %954 = vst [vmem:[%s334 + $0x70] sm:$0xf] %v734
        %v955 = vld [vmem:[%s334 + $0x74] sm:$0x1]
        %v956 = vsel %vm337, %v735, %v955
        %957 = vst [vmem:[%s334 + $0x74] sm:$0x1] %v956
        %v958 = vld [vmem:[%s334 + $0x78] sm:$0xf]
        %v959 = vsel %vm887, %v742, %v958
        %960 = vst [vmem:[%s334 + $0x78] sm:$0xf] %v959
        %961 = vst [vmem:[%s334 + $0x7c] sm:$0xf] %v751
        %v962 = vld [vmem:[%s334 + $0x80] sm:$0x1]
        %v963 = vsel %vm337, %v752, %v962
        %964 = vst [vmem:[%s334 + $0x80] sm:$0x1] %v963
        %v965 = vld [vmem:[%s334 + $0x84] sm:$0xf]
        %v966 = vsel %vm887, %v759, %v965
        %967 = vst [vmem:[%s334 + $0x84] sm:$0xf] %v966
        %968 = vst [vmem:[%s334 + $0x88] sm:$0xf] %v768
        %v969 = vld [vmem:[%s334 + $0x8c] sm:$0x1]
        %v970 = vsel %vm337, %v769, %v969
        %971 = vst [vmem:[%s334 + $0x8c] sm:$0x1] %v970
        %v972 = vld [vmem:[%s334 + $0x90] sm:$0xf]
        %v973 = vsel %vm887, %v776, %v972
        %974 = vst [vmem:[%s334 + $0x90] sm:$0xf] %v973
        %975 = vst [vmem:[%s334 + $0x94] sm:$0xf] %v785
        %v976 = vld [vmem:[%s334 + $0x98] sm:$0x1]
        %v977 = vsel %vm337, %v786, %v976
        %978 = vst [vmem:[%s334 + $0x98] sm:$0x1] %v977
        %v979 = vld [vmem:[%s334 + $0x9c] sm:$0xf]
        %v980 = vsel %vm887, %v793, %v979
        %981 = vst [vmem:[%s334 + $0x9c] sm:$0xf] %v980
        %982 = vst [vmem:[%s334 + $0xa0] sm:$0xf] %v802
        %v983 = vld [vmem:[%s334 + $0xa4] sm:$0x1]
        %v984 = vsel %vm337, %v803, %v983
        %985 = vst [vmem:[%s334 + $0xa4] sm:$0x1] %v984
        %v986 = vld [vmem:[%s334 + $0xa8] sm:$0xf]
        %v987 = vsel %vm887, %v810, %v986
        %988 = vst [vmem:[%s334 + $0xa8] sm:$0xf] %v987
        %989 = vst [vmem:[%s334 + $0xac] sm:$0xf] %v819
        %v990 = vld [vmem:[%s334 + $0xb0] sm:$0x1]
        %v991 = vsel %vm337, %v820, %v990
        %992 = vst [vmem:[%s334 + $0xb0] sm:$0x1] %v991
        %v993 = vld [vmem:[%s334 + $0xb4] sm:$0xf]
        %v994 = vsel %vm887, %v827, %v993
        %995 = vst [vmem:[%s334 + $0xb4] sm:$0xf] %v994
        %996 = vst [vmem:[%s334 + $0xb8] sm:$0xf] %v836
        %v997 = vld [vmem:[%s334 + $0xbc] sm:$0x1]
        %v998 = vsel %vm337, %v837, %v997
        %999 = vst [vmem:[%s334 + $0xbc] sm:$0x1] %v998
        %v1000 = vld [vmem:[#allocation2] sm:$0xf]
        %v1001 = vld [vmem:[#allocation2 + $0x4] sm:$0xf]
        %v1002 = vld [vmem:[#allocation2 + $0xc] sm:$0xf]
        %v1003 = vld [vmem:[#allocation2 + $0x10] sm:$0xf]
        %v1004 = vld [vmem:[#allocation2 + $0x18] sm:$0xf]
        %v1005 = vld [vmem:[#allocation2 + $0x1c] sm:$0xf]
        %v1006 = vld [vmem:[#allocation2 + $0x24] sm:$0xf]
        %v1007 = vld [vmem:[#allocation2 + $0x28] sm:$0xf]
        %v1008 = vld [vmem:[#allocation2 + $0x30] sm:$0xf]
        %v1009 = vld [vmem:[#allocation2 + $0x34] sm:$0xf]
        %v1010 = vld [vmem:[#allocation2 + $0x3c] sm:$0xf]
        %v1011 = vld [vmem:[#allocation2 + $0x40] sm:$0xf]
        %v1012 = vld [vmem:[#allocation2 + $0x48] sm:$0xf]
        %v1013 = vld [vmem:[#allocation2 + $0x4c] sm:$0xf]
        %v1014 = vld [vmem:[#allocation2 + $0x54] sm:$0xf]
        %v1015 = vld [vmem:[#allocation2 + $0x58] sm:$0xf]
        %v1016 = vld [vmem:[#allocation2 + $0x60] sm:$0xf]
        %v1017 = vld [vmem:[#allocation2 + $0x64] sm:$0xf]
        %v1018 = vld [vmem:[#allocation2 + $0x6c] sm:$0xf]
        %v1019 = vld [vmem:[#allocation2 + $0x70] sm:$0xf]
        %v1020 = vld [vmem:[#allocation2 + $0x78] sm:$0xf]
        %v1021 = vld [vmem:[#allocation2 + $0x7c] sm:$0xf]
        %v1022 = vld [vmem:[#allocation2 + $0x84] sm:$0xf]
        %v1023 = vld [vmem:[#allocation2 + $0x88] sm:$0xf]
        %v1024 = vld [vmem:[#allocation2 + $0x90] sm:$0xf]
        %v1025 = vld [vmem:[#allocation2 + $0x94] sm:$0xf]
        %v1026 = vld [vmem:[#allocation2 + $0x9c] sm:$0xf]
        %v1027 = vld [vmem:[#allocation2 + $0xa0] sm:$0xf]
        %v1028 = vld [vmem:[#allocation2 + $0xa8] sm:$0xf]
        %v1029 = vld [vmem:[#allocation2 + $0xac] sm:$0xf]
        %v1030 = vld [vmem:[#allocation2 + $0xb4] sm:$0xf]
        %v1031 = vld [vmem:[#allocation2 + $0xb8] sm:$0xf]
        %v1064 = vunpack.c.l.b16 %v1000
        %v1065 = vunpack.c.l.b16 %v1001
        %v1066 = vunpack.c.l.b16 %v1002
        %v1067 = vunpack.c.l.b16 %v1003
        %v1068 = vunpack.c.l.b16 %v1004
        %v1069 = vunpack.c.l.b16 %v1005
        %v1070 = vunpack.c.l.b16 %v1006
        %v1071 = vunpack.c.l.b16 %v1007
        %v1072 = vunpack.c.l.b16 %v1008
        %v1073 = vunpack.c.l.b16 %v1009
        %v1074 = vunpack.c.l.b16 %v1010
        %v1075 = vunpack.c.l.b16 %v1011
        %v1076 = vunpack.c.l.b16 %v1012
        %v1077 = vunpack.c.l.b16 %v1013
        %v1078 = vunpack.c.l.b16 %v1014
        %v1079 = vunpack.c.l.b16 %v1015
        %v1080 = vunpack.c.l.b16 %v1016
        %v1081 = vunpack.c.l.b16 %v1017
        %v1082 = vunpack.c.l.b16 %v1018
        %v1083 = vunpack.c.l.b16 %v1019
        %v1084 = vunpack.c.l.b16 %v1020
        %v1085 = vunpack.c.l.b16 %v1021
        %v1086 = vunpack.c.l.b16 %v1022
        %v1087 = vunpack.c.l.b16 %v1023
        %v1088 = vunpack.c.l.b16 %v1024
        %v1089 = vunpack.c.l.b16 %v1025
        %v1090 = vunpack.c.l.b16 %v1026
        %v1091 = vunpack.c.l.b16 %v1027
        %v1092 = vunpack.c.l.b16 %v1028
        %v1093 = vunpack.c.l.b16 %v1029
        %v1094 = vunpack.c.l.b16 %v1030
        %v1095 = vunpack.c.l.b16 %v1031
        %v1096 = vpack.c.b16 %v1065, %v1064
        %v1097 = vpack.c.b16 %v1067, %v1066
        %v1098 = vpack.c.b16 %v1069, %v1068
        %v1099 = vpack.c.b16 %v1071, %v1070
        %v1100 = vpack.c.b16 %v1073, %v1072
        %v1101 = vpack.c.b16 %v1075, %v1074
        %v1102 = vpack.c.b16 %v1077, %v1076
        %v1103 = vpack.c.b16 %v1079, %v1078
        %v1104 = vpack.c.b16 %v1081, %v1080
        %v1105 = vpack.c.b16 %v1083, %v1082
        %v1106 = vpack.c.b16 %v1085, %v1084
        %v1107 = vpack.c.b16 %v1087, %v1086
        %v1108 = vpack.c.b16 %v1089, %v1088
        %v1109 = vpack.c.b16 %v1091, %v1090
        %v1110 = vpack.c.b16 %v1093, %v1092
        %v1111 = vpack.c.b16 %v1095, %v1094
        %1128 = vst [vmem:[#allocation3] sm:$0xff] %v1096
        %1129 = vst [vmem:[#allocation3 + $0x18] sm:$0xff] %v1097
        %1130 = vst [vmem:[#allocation3 + $0x30] sm:$0xff] %v1098
        %1131 = vst [vmem:[#allocation3 + $0x48] sm:$0xff] %v1099
        %1132 = vst [vmem:[#allocation3 + $0x60] sm:$0xff] %v1100
        %1133 = vst [vmem:[#allocation3 + $0x78] sm:$0xff] %v1101
        %1134 = vst [vmem:[#allocation3 + $0x90] sm:$0xff] %v1102
        %1135 = vst [vmem:[#allocation3 + $0xa8] sm:$0xff] %v1103
        %1136 = vst [vmem:[#allocation3 + $0xc0] sm:$0xff] %v1104
        %1137 = vst [vmem:[#allocation3 + $0xd8] sm:$0xff] %v1105
        %1138 = vst [vmem:[#allocation3 + $0xf0] sm:$0xff] %v1106
        %1139 = vst [vmem:[#allocation3 + $0x108] sm:$0xff] %v1107
        %1140 = vst [vmem:[#allocation3 + $0x120] sm:$0xff] %v1108
        %1141 = vst [vmem:[#allocation3 + $0x138] sm:$0xff] %v1109
        %1142 = vst [vmem:[#allocation3 + $0x150] sm:$0xff] %v1110
        %1143 = vst [vmem:[#allocation3 + $0x168] sm:$0xff] %v1111
        %v1144 = vld [vmem:[#allocation2] sm:$0xf]
        %v1145 = vld [vmem:[#allocation2 + $0x4] sm:$0xf]
        %v1146 = vld [vmem:[#allocation2 + $0x8] sm:$0x1]
        %v1147 = vld [vmem:[#allocation2 + $0xc] sm:$0xf]
        %v1148 = vld [vmem:[#allocation2 + $0x10] sm:$0xf]
        %v1149 = vld [vmem:[#allocation2 + $0x14] sm:$0x1]
        %v1150 = vld [vmem:[#allocation2 + $0x18] sm:$0xf]
        %v1151 = vld [vmem:[#allocation2 + $0x1c] sm:$0xf]
        %v1152 = vld [vmem:[#allocation2 + $0x20] sm:$0x1]
        %v1153 = vld [vmem:[#allocation2 + $0x24] sm:$0xf]
        %v1154 = vld [vmem:[#allocation2 + $0x28] sm:$0xf]
        %v1155 = vld [vmem:[#allocation2 + $0x2c] sm:$0x1]
        %v1156 = vld [vmem:[#allocation2 + $0x30] sm:$0xf]
        %v1157 = vld [vmem:[#allocation2 + $0x34] sm:$0xf]
        %v1158 = vld [vmem:[#allocation2 + $0x38] sm:$0x1]
        %v1159 = vld [vmem:[#allocation2 + $0x3c] sm:$0xf]
        %v1160 = vld [vmem:[#allocation2 + $0x40] sm:$0xf]
        %v1161 = vld [vmem:[#allocation2 + $0x44] sm:$0x1]
        %v1162 = vld [vmem:[#allocation2 + $0x48] sm:$0xf]
        %v1163 = vld [vmem:[#allocation2 + $0x4c] sm:$0xf]
        %v1164 = vld [vmem:[#allocation2 + $0x50] sm:$0x1]
        %v1165 = vld [vmem:[#allocation2 + $0x54] sm:$0xf]
        %v1166 = vld [vmem:[#allocation2 + $0x58] sm:$0xf]
        %v1167 = vld [vmem:[#allocation2 + $0x5c] sm:$0x1]
        %v1168 = vld [vmem:[#allocation2 + $0x60] sm:$0xf]
        %v1169 = vld [vmem:[#allocation2 + $0x64] sm:$0xf]
        %v1170 = vld [vmem:[#allocation2 + $0x68] sm:$0x1]
        %v1171 = vld [vmem:[#allocation2 + $0x6c] sm:$0xf]
        %v1172 = vld [vmem:[#allocation2 + $0x70] sm:$0xf]
        %v1173 = vld [vmem:[#allocation2 + $0x74] sm:$0x1]
        %v1174 = vld [vmem:[#allocation2 + $0x78] sm:$0xf]
        %v1175 = vld [vmem:[#allocation2 + $0x7c] sm:$0xf]
        %v1176 = vld [vmem:[#allocation2 + $0x80] sm:$0x1]
        %v1177 = vld [vmem:[#allocation2 + $0x84] sm:$0xf]
        %v1178 = vld [vmem:[#allocation2 + $0x88] sm:$0xf]
        %v1179 = vld [vmem:[#allocation2 + $0x8c] sm:$0x1]
        %v1180 = vld [vmem:[#allocation2 + $0x90] sm:$0xf]
        %v1181 = vld [vmem:[#allocation2 + $0x94] sm:$0xf]
        %v1182 = vld [vmem:[#allocation2 + $0x98] sm:$0x1]
        %v1183 = vld [vmem:[#allocation2 + $0x9c] sm:$0xf]
        %v1184 = vld [vmem:[#allocation2 + $0xa0] sm:$0xf]
        %v1185 = vld [vmem:[#allocation2 + $0xa4] sm:$0x1]
        %v1186 = vld [vmem:[#allocation2 + $0xa8] sm:$0xf]
        %v1187 = vld [vmem:[#allocation2 + $0xac] sm:$0xf]
        %v1188 = vld [vmem:[#allocation2 + $0xb0] sm:$0x1]
        %v1189 = vld [vmem:[#allocation2 + $0xb4] sm:$0xf]
        %v1190 = vld [vmem:[#allocation2 + $0xb8] sm:$0xf]
        %v1191 = vld [vmem:[#allocation2 + $0xbc] sm:$0x1]
        %v1240 = vunpack.c.l.b16 %v1144
        %v1241 = vunpack.c.l.b16 %v1145
        %v1242 = vunpack.c.l.b16 %v1146
        %v1243 = vunpack.c.l.b16 %v1147
        %v1244 = vunpack.c.l.b16 %v1148
        %v1245 = vunpack.c.l.b16 %v1149
        %v1246 = vunpack.c.l.b16 %v1150
        %v1247 = vunpack.c.l.b16 %v1151
        %v1248 = vunpack.c.l.b16 %v1152
        %v1249 = vunpack.c.l.b16 %v1153
        %v1250 = vunpack.c.l.b16 %v1154
        %v1251 = vunpack.c.l.b16 %v1155
        %v1252 = vunpack.c.l.b16 %v1156
        %v1253 = vunpack.c.l.b16 %v1157
        %v1254 = vunpack.c.l.b16 %v1158
        %v1255 = vunpack.c.l.b16 %v1159
        %v1256 = vunpack.c.l.b16 %v1160
        %v1257 = vunpack.c.l.b16 %v1161
        %v1258 = vunpack.c.l.b16 %v1162
        %v1259 = vunpack.c.l.b16 %v1163
        %v1260 = vunpack.c.l.b16 %v1164
        %v1261 = vunpack.c.l.b16 %v1165
        %v1262 = vunpack.c.l.b16 %v1166
        %v1263 = vunpack.c.l.b16 %v1167
        %v1264 = vunpack.c.l.b16 %v1168
        %v1265 = vunpack.c.l.b16 %v1169
        %v1266 = vunpack.c.l.b16 %v1170
        %v1267 = vunpack.c.l.b16 %v1171
        %v1268 = vunpack.c.l.b16 %v1172
        %v1269 = vunpack.c.l.b16 %v1173
        %v1270 = vunpack.c.l.b16 %v1174
        %v1271 = vunpack.c.l.b16 %v1175
        %v1272 = vunpack.c.l.b16 %v1176
        %v1273 = vunpack.c.l.b16 %v1177
        %v1274 = vunpack.c.l.b16 %v1178
        %v1275 = vunpack.c.l.b16 %v1179
        %v1276 = vunpack.c.l.b16 %v1180
        %v1277 = vunpack.c.l.b16 %v1181
        %v1278 = vunpack.c.l.b16 %v1182
        %v1279 = vunpack.c.l.b16 %v1183
        %v1280 = vunpack.c.l.b16 %v1184
        %v1281 = vunpack.c.l.b16 %v1185
        %v1282 = vunpack.c.l.b16 %v1186
        %v1283 = vunpack.c.l.b16 %v1187
        %v1284 = vunpack.c.l.b16 %v1188
        %v1285 = vunpack.c.l.b16 %v1189
        %v1286 = vunpack.c.l.b16 %v1190
        %v1287 = vunpack.c.l.b16 %v1191
        %v1288 = vpack.c.b16 %v1241, %v1240
        %v1289 = vpack.c.b16 %v1242, %v1242
        %v1290 = vpack.c.b16 %v1244, %v1243
        %v1291 = vpack.c.b16 %v1245, %v1245
        %v1292 = vpack.c.b16 %v1247, %v1246
        %v1293 = vpack.c.b16 %v1248, %v1248
        %v1294 = vpack.c.b16 %v1250, %v1249
        %v1295 = vpack.c.b16 %v1251, %v1251
        %v1296 = vpack.c.b16 %v1253, %v1252
        %v1297 = vpack.c.b16 %v1254, %v1254
        %v1298 = vpack.c.b16 %v1256, %v1255
        %v1299 = vpack.c.b16 %v1257, %v1257
        %v1300 = vpack.c.b16 %v1259, %v1258
        %v1301 = vpack.c.b16 %v1260, %v1260
        %v1302 = vpack.c.b16 %v1262, %v1261
        %v1303 = vpack.c.b16 %v1263, %v1263
        %v1304 = vpack.c.b16 %v1265, %v1264
        %v1305 = vpack.c.b16 %v1266, %v1266
        %v1306 = vpack.c.b16 %v1268, %v1267
        %v1307 = vpack.c.b16 %v1269, %v1269
        %v1308 = vpack.c.b16 %v1271, %v1270
        %v1309 = vpack.c.b16 %v1272, %v1272
        %v1310 = vpack.c.b16 %v1274, %v1273
        %v1311 = vpack.c.b16 %v1275, %v1275
        %v1312 = vpack.c.b16 %v1277, %v1276
        %v1313 = vpack.c.b16 %v1278, %v1278
        %v1314 = vpack.c.b16 %v1280, %v1279
        %v1315 = vpack.c.b16 %v1281, %v1281
        %v1316 = vpack.c.b16 %v1283, %v1282
        %v1317 = vpack.c.b16 %v1284, %v1284
        %v1318 = vpack.c.b16 %v1286, %v1285
        %v1319 = vpack.c.b16 %v1287, %v1287
        %vm1320 = vsmask.f32 7424
        %v1322 = vshrl.u32 %v1288, 16
        %v1324 = vshll.u32 %v1288, 16
        %v1326 = vrot.slane %v1324, 1
        %v1327 = vor.u32 %v1322, %v1326
        %v1329 = vshll.u32 %v1289, 16
        %v1331 = vrot.slane %v1329, 1
        %v1332 = vsel %vm1320, %v1327, %v1331
        %v1334 = vshrl.u32 %v1290, 16
        %v1336 = vshll.u32 %v1290, 16
        %v1338 = vrot.slane %v1336, 1
        %v1339 = vor.u32 %v1334, %v1338
        %v1341 = vshll.u32 %v1291, 16
        %v1343 = vrot.slane %v1341, 1
        %v1344 = vsel %vm1320, %v1339, %v1343
        %v1346 = vshrl.u32 %v1292, 16
        %v1348 = vshll.u32 %v1292, 16
        %v1350 = vrot.slane %v1348, 1
        %v1351 = vor.u32 %v1346, %v1350
        %v1353 = vshll.u32 %v1293, 16
        %v1355 = vrot.slane %v1353, 1
        %v1356 = vsel %vm1320, %v1351, %v1355
        %v1358 = vshrl.u32 %v1294, 16
        %v1360 = vshll.u32 %v1294, 16
        %v1362 = vrot.slane %v1360, 1
        %v1363 = vor.u32 %v1358, %v1362
        %v1365 = vshll.u32 %v1295, 16
        %v1367 = vrot.slane %v1365, 1
        %v1368 = vsel %vm1320, %v1363, %v1367
        %v1370 = vshrl.u32 %v1296, 16
        %v1372 = vshll.u32 %v1296, 16
        %v1374 = vrot.slane %v1372, 1
        %v1375 = vor.u32 %v1370, %v1374
        %v1377 = vshll.u32 %v1297, 16
        %v1379 = vrot.slane %v1377, 1
        %v1380 = vsel %vm1320, %v1375, %v1379
        %v1382 = vshrl.u32 %v1298, 16
        %v1384 = vshll.u32 %v1298, 16
        %v1386 = vrot.slane %v1384, 1
        %v1387 = vor.u32 %v1382, %v1386
        %v1389 = vshll.u32 %v1299, 16
        %v1391 = vrot.slane %v1389, 1
        %v1392 = vsel %vm1320, %v1387, %v1391
        %v1394 = vshrl.u32 %v1300, 16
        %v1396 = vshll.u32 %v1300, 16
        %v1398 = vrot.slane %v1396, 1
        %v1399 = vor.u32 %v1394, %v1398
        %v1401 = vshll.u32 %v1301, 16
        %v1403 = vrot.slane %v1401, 1
        %v1404 = vsel %vm1320, %v1399, %v1403
        %v1406 = vshrl.u32 %v1302, 16
        %v1408 = vshll.u32 %v1302, 16
        %v1410 = vrot.slane %v1408, 1
        %v1411 = vor.u32 %v1406, %v1410
        %v1413 = vshll.u32 %v1303, 16
        %v1415 = vrot.slane %v1413, 1
        %v1416 = vsel %vm1320, %v1411, %v1415
        %v1418 = vshrl.u32 %v1304, 16
        %v1420 = vshll.u32 %v1304, 16
        %v1422 = vrot.slane %v1420, 1
        %v1423 = vor.u32 %v1418, %v1422
        %v1425 = vshll.u32 %v1305, 16
        %v1427 = vrot.slane %v1425, 1
        %v1428 = vsel %vm1320, %v1423, %v1427
        %v1430 = vshrl.u32 %v1306, 16
        %v1432 = vshll.u32 %v1306, 16
        %v1434 = vrot.slane %v1432, 1
        %v1435 = vor.u32 %v1430, %v1434
        %v1437 = vshll.u32 %v1307, 16
        %v1439 = vrot.slane %v1437, 1
        %v1440 = vsel %vm1320, %v1435, %v1439
        %v1442 = vshrl.u32 %v1308, 16
        %v1444 = vshll.u32 %v1308, 16
        %v1446 = vrot.slane %v1444, 1
        %v1447 = vor.u32 %v1442, %v1446
        %v1449 = vshll.u32 %v1309, 16
        %v1451 = vrot.slane %v1449, 1
        %v1452 = vsel %vm1320, %v1447, %v1451
        %v1454 = vshrl.u32 %v1310, 16
        %v1456 = vshll.u32 %v1310, 16
        %v1458 = vrot.slane %v1456, 1
        %v1459 = vor.u32 %v1454, %v1458
        %v1461 = vshll.u32 %v1311, 16
        %v1463 = vrot.slane %v1461, 1
        %v1464 = vsel %vm1320, %v1459, %v1463
        %v1466 = vshrl.u32 %v1312, 16
        %v1468 = vshll.u32 %v1312, 16
        %v1470 = vrot.slane %v1468, 1
        %v1471 = vor.u32 %v1466, %v1470
        %v1473 = vshll.u32 %v1313, 16
        %v1475 = vrot.slane %v1473, 1
        %v1476 = vsel %vm1320, %v1471, %v1475
        %v1478 = vshrl.u32 %v1314, 16
        %v1480 = vshll.u32 %v1314, 16
        %v1482 = vrot.slane %v1480, 1
        %v1483 = vor.u32 %v1478, %v1482
        %v1485 = vshll.u32 %v1315, 16
        %v1487 = vrot.slane %v1485, 1
        %v1488 = vsel %vm1320, %v1483, %v1487
        %v1490 = vshrl.u32 %v1316, 16
        %v1492 = vshll.u32 %v1316, 16
        %v1494 = vrot.slane %v1492, 1
        %v1495 = vor.u32 %v1490, %v1494
        %v1497 = vshll.u32 %v1317, 16
        %v1499 = vrot.slane %v1497, 1
        %v1500 = vsel %vm1320, %v1495, %v1499
        %v1502 = vshrl.u32 %v1318, 16
        %v1504 = vshll.u32 %v1318, 16
        %v1506 = vrot.slane %v1504, 1
        %v1507 = vor.u32 %v1502, %v1506
        %v1509 = vshll.u32 %v1319, 16
        %v1511 = vrot.slane %v1509, 1
        %v1512 = vsel %vm1320, %v1507, %v1511
        %1529 = vst [vmem:[#allocation3 + $0x8] sm:$0xff] %v1332
        %1530 = vst [vmem:[#allocation3 + $0x20] sm:$0xff] %v1344
        %1531 = vst [vmem:[#allocation3 + $0x38] sm:$0xff] %v1356
        %1532 = vst [vmem:[#allocation3 + $0x50] sm:$0xff] %v1368
        %1533 = vst [vmem:[#allocation3 + $0x68] sm:$0xff] %v1380
        %1534 = vst [vmem:[#allocation3 + $0x80] sm:$0xff] %v1392
        %1535 = vst [vmem:[#allocation3 + $0x98] sm:$0xff] %v1404
        %1536 = vst [vmem:[#allocation3 + $0xb0] sm:$0xff] %v1416
        %1537 = vst [vmem:[#allocation3 + $0xc8] sm:$0xff] %v1428
        %1538 = vst [vmem:[#allocation3 + $0xe0] sm:$0xff] %v1440
        %1539 = vst [vmem:[#allocation3 + $0xf8] sm:$0xff] %v1452
        %1540 = vst [vmem:[#allocation3 + $0x110] sm:$0xff] %v1464
        %1541 = vst [vmem:[#allocation3 + $0x128] sm:$0xff] %v1476
        %1542 = vst [vmem:[#allocation3 + $0x140] sm:$0xff] %v1488
        %1543 = vst [vmem:[#allocation3 + $0x158] sm:$0xff] %v1500
        %1544 = vst [vmem:[#allocation3 + $0x170] sm:$0xff] %v1512
        %v1545 = vld [vmem:[#allocation2] sm:$0xe]
        %v1546 = vld [vmem:[#allocation2 + $0x4] sm:$0xf]
        %v1547 = vld [vmem:[#allocation2 + $0x8] sm:$0x1]
        %v1548 = vld [vmem:[#allocation2 + $0xc] sm:$0xe]
        %v1549 = vld [vmem:[#allocation2 + $0x10] sm:$0xf]
        %v1550 = vld [vmem:[#allocation2 + $0x14] sm:$0x1]
        %v1551 = vld [vmem:[#allocation2 + $0x18] sm:$0xe]
        %v1552 = vld [vmem:[#allocation2 + $0x1c] sm:$0xf]
        %v1553 = vld [vmem:[#allocation2 + $0x20] sm:$0x1]
        %v1554 = vld [vmem:[#allocation2 + $0x24] sm:$0xe]
        %v1555 = vld [vmem:[#allocation2 + $0x28] sm:$0xf]
        %v1556 = vld [vmem:[#allocation2 + $0x2c] sm:$0x1]
        %v1557 = vld [vmem:[#allocation2 + $0x30] sm:$0xe]
        %v1558 = vld [vmem:[#allocation2 + $0x34] sm:$0xf]
        %v1559 = vld [vmem:[#allocation2 + $0x38] sm:$0x1]
        %v1560 = vld [vmem:[#allocation2 + $0x3c] sm:$0xe]
        %v1561 = vld [vmem:[#allocation2 + $0x40] sm:$0xf]
        %v1562 = vld [vmem:[#allocation2 + $0x44] sm:$0x1]
        %v1563 = vld [vmem:[#allocation2 + $0x48] sm:$0xe]
        %v1564 = vld [vmem:[#allocation2 + $0x4c] sm:$0xf]
        %v1565 = vld [vmem:[#allocation2 + $0x50] sm:$0x1]
        %v1566 = vld [vmem:[#allocation2 + $0x54] sm:$0xe]
        %v1567 = vld [vmem:[#allocation2 + $0x58] sm:$0xf]
        %v1568 = vld [vmem:[#allocation2 + $0x5c] sm:$0x1]
        %v1569 = vld [vmem:[#allocation2 + $0x60] sm:$0xe]
        %v1570 = vld [vmem:[#allocation2 + $0x64] sm:$0xf]
        %v1571 = vld [vmem:[#allocation2 + $0x68] sm:$0x1]
        %v1572 = vld [vmem:[#allocation2 + $0x6c] sm:$0xe]
        %v1573 = vld [vmem:[#allocation2 + $0x70] sm:$0xf]
        %v1574 = vld [vmem:[#allocation2 + $0x74] sm:$0x1]
        %v1575 = vld [vmem:[#allocation2 + $0x78] sm:$0xe]
        %v1576 = vld [vmem:[#allocation2 + $0x7c] sm:$0xf]
        %v1577 = vld [vmem:[#allocation2 + $0x80] sm:$0x1]
        %v1578 = vld [vmem:[#allocation2 + $0x84] sm:$0xe]
        %v1579 = vld [vmem:[#allocation2 + $0x88] sm:$0xf]
        %v1580 = vld [vmem:[#allocation2 + $0x8c] sm:$0x1]
        %v1581 = vld [vmem:[#allocation2 + $0x90] sm:$0xe]
        %v1582 = vld [vmem:[#allocation2 + $0x94] sm:$0xf]
        %v1583 = vld [vmem:[#allocation2 + $0x98] sm:$0x1]
        %v1584 = vld [vmem:[#allocation2 + $0x9c] sm:$0xe]
        %v1585 = vld [vmem:[#allocation2 + $0xa0] sm:$0xf]
        %v1586 = vld [vmem:[#allocation2 + $0xa4] sm:$0x1]
        %v1587 = vld [vmem:[#allocation2 + $0xa8] sm:$0xe]
        %v1588 = vld [vmem:[#allocation2 + $0xac] sm:$0xf]
        %v1589 = vld [vmem:[#allocation2 + $0xb0] sm:$0x1]
        %v1590 = vld [vmem:[#allocation2 + $0xb4] sm:$0xe]
        %v1591 = vld [vmem:[#allocation2 + $0xb8] sm:$0xf]
        %v1592 = vld [vmem:[#allocation2 + $0xbc] sm:$0x1]
        %v1641 = vunpack.c.l.b16 %v1545
        %v1642 = vunpack.c.l.b16 %v1546
        %v1643 = vunpack.c.l.b16 %v1547
        %v1644 = vunpack.c.l.b16 %v1548
        %v1645 = vunpack.c.l.b16 %v1549
        %v1646 = vunpack.c.l.b16 %v1550
        %v1647 = vunpack.c.l.b16 %v1551
        %v1648 = vunpack.c.l.b16 %v1552
        %v1649 = vunpack.c.l.b16 %v1553
        %v1650 = vunpack.c.l.b16 %v1554
        %v1651 = vunpack.c.l.b16 %v1555
        %v1652 = vunpack.c.l.b16 %v1556
        %v1653 = vunpack.c.l.b16 %v1557
        %v1654 = vunpack.c.l.b16 %v1558
        %v1655 = vunpack.c.l.b16 %v1559
        %v1656 = vunpack.c.l.b16 %v1560
        %v1657 = vunpack.c.l.b16 %v1561
        %v1658 = vunpack.c.l.b16 %v1562
        %v1659 = vunpack.c.l.b16 %v1563
        %v1660 = vunpack.c.l.b16 %v1564
        %v1661 = vunpack.c.l.b16 %v1565
        %v1662 = vunpack.c.l.b16 %v1566
        %v1663 = vunpack.c.l.b16 %v1567
        %v1664 = vunpack.c.l.b16 %v1568
        %v1665 = vunpack.c.l.b16 %v1569
        %v1666 = vunpack.c.l.b16 %v1570
        %v1667 = vunpack.c.l.b16 %v1571
        %v1668 = vunpack.c.l.b16 %v1572
        %v1669 = vunpack.c.l.b16 %v1573
        %v1670 = vunpack.c.l.b16 %v1574
        %v1671 = vunpack.c.l.b16 %v1575
        %v1672 = vunpack.c.l.b16 %v1576
        %v1673 = vunpack.c.l.b16 %v1577
        %v1674 = vunpack.c.l.b16 %v1578
        %v1675 = vunpack.c.l.b16 %v1579
        %v1676 = vunpack.c.l.b16 %v1580
        %v1677 = vunpack.c.l.b16 %v1581
        %v1678 = vunpack.c.l.b16 %v1582
        %v1679 = vunpack.c.l.b16 %v1583
        %v1680 = vunpack.c.l.b16 %v1584
        %v1681 = vunpack.c.l.b16 %v1585
        %v1682 = vunpack.c.l.b16 %v1586
        %v1683 = vunpack.c.l.b16 %v1587
        %v1684 = vunpack.c.l.b16 %v1588
        %v1685 = vunpack.c.l.b16 %v1589
        %v1686 = vunpack.c.l.b16 %v1590
        %v1687 = vunpack.c.l.b16 %v1591
        %v1688 = vunpack.c.l.b16 %v1592
        %v1689 = vpack.c.b16 %v1642, %v1641
        %v1690 = vpack.c.b16 %v1643, %v1643
        %v1691 = vpack.c.b16 %v1645, %v1644
        %v1692 = vpack.c.b16 %v1646, %v1646
        %v1693 = vpack.c.b16 %v1648, %v1647
        %v1694 = vpack.c.b16 %v1649, %v1649
        %v1695 = vpack.c.b16 %v1651, %v1650
        %v1696 = vpack.c.b16 %v1652, %v1652
        %v1697 = vpack.c.b16 %v1654, %v1653
        %v1698 = vpack.c.b16 %v1655, %v1655
        %v1699 = vpack.c.b16 %v1657, %v1656
        %v1700 = vpack.c.b16 %v1658, %v1658
        %v1701 = vpack.c.b16 %v1660, %v1659
        %v1702 = vpack.c.b16 %v1661, %v1661
        %v1703 = vpack.c.b16 %v1663, %v1662
        %v1704 = vpack.c.b16 %v1664, %v1664
        %v1705 = vpack.c.b16 %v1666, %v1665
        %v1706 = vpack.c.b16 %v1667, %v1667
        %v1707 = vpack.c.b16 %v1669, %v1668
        %v1708 = vpack.c.b16 %v1670, %v1670
        %v1709 = vpack.c.b16 %v1672, %v1671
        %v1710 = vpack.c.b16 %v1673, %v1673
        %v1711 = vpack.c.b16 %v1675, %v1674
        %v1712 = vpack.c.b16 %v1676, %v1676
        %v1713 = vpack.c.b16 %v1678, %v1677
        %v1714 = vpack.c.b16 %v1679, %v1679
        %v1715 = vpack.c.b16 %v1681, %v1680
        %v1716 = vpack.c.b16 %v1682, %v1682
        %v1717 = vpack.c.b16 %v1684, %v1683
        %v1718 = vpack.c.b16 %v1685, %v1685
        %v1719 = vpack.c.b16 %v1687, %v1686
        %v1720 = vpack.c.b16 %v1688, %v1688
        %vm1721 = vcmask 1046528
        %v1722 = vrot.slane %v1689, 1
        %v1723 = vrot.slane %v1690, 1
        %v1724 = vsel %vm1721, %v1722, %v1723
        %v1725 = vrot.slane %v1691, 1
        %v1726 = vrot.slane %v1692, 1
        %v1727 = vsel %vm1721, %v1725, %v1726
        %v1728 = vrot.slane %v1693, 1
        %v1729 = vrot.slane %v1694, 1
        %v1730 = vsel %vm1721, %v1728, %v1729
        %v1731 = vrot.slane %v1695, 1
        %v1732 = vrot.slane %v1696, 1
        %v1733 = vsel %vm1721, %v1731, %v1732
        %v1734 = vrot.slane %v1697, 1
        %v1735 = vrot.slane %v1698, 1
        %v1736 = vsel %vm1721, %v1734, %v1735
        %v1737 = vrot.slane %v1699, 1
        %v1738 = vrot.slane %v1700, 1
        %v1739 = vsel %vm1721, %v1737, %v1738
        %v1740 = vrot.slane %v1701, 1
        %v1741 = vrot.slane %v1702, 1
        %v1742 = vsel %vm1721, %v1740, %v1741
        %v1743 = vrot.slane %v1703, 1
        %v1744 = vrot.slane %v1704, 1
        %v1745 = vsel %vm1721, %v1743, %v1744
        %v1746 = vrot.slane %v1705, 1
        %v1747 = vrot.slane %v1706, 1
        %v1748 = vsel %vm1721, %v1746, %v1747
        %v1749 = vrot.slane %v1707, 1
        %v1750 = vrot.slane %v1708, 1
        %v1751 = vsel %vm1721, %v1749, %v1750
        %v1752 = vrot.slane %v1709, 1
        %v1753 = vrot.slane %v1710, 1
        %v1754 = vsel %vm1721, %v1752, %v1753
        %v1755 = vrot.slane %v1711, 1
        %v1756 = vrot.slane %v1712, 1
        %v1757 = vsel %vm1721, %v1755, %v1756
        %v1758 = vrot.slane %v1713, 1
        %v1759 = vrot.slane %v1714, 1
        %v1760 = vsel %vm1721, %v1758, %v1759
        %v1761 = vrot.slane %v1715, 1
        %v1762 = vrot.slane %v1716, 1
        %v1763 = vsel %vm1721, %v1761, %v1762
        %v1764 = vrot.slane %v1717, 1
        %v1765 = vrot.slane %v1718, 1
        %v1766 = vsel %vm1721, %v1764, %v1765
        %v1767 = vrot.slane %v1719, 1
        %v1768 = vrot.slane %v1720, 1
        %v1769 = vsel %vm1721, %v1767, %v1768
        %1786 = vst [vmem:[#allocation3 + $0x10] sm:$0xff] %v1724
        %1787 = vst [vmem:[#allocation3 + $0x28] sm:$0xff] %v1727
        %1788 = vst [vmem:[#allocation3 + $0x40] sm:$0xff] %v1730
        %1789 = vst [vmem:[#allocation3 + $0x58] sm:$0xff] %v1733
        %1790 = vst [vmem:[#allocation3 + $0x70] sm:$0xff] %v1736
        %1791 = vst [vmem:[#allocation3 + $0x88] sm:$0xff] %v1739
        %1792 = vst [vmem:[#allocation3 + $0xa0] sm:$0xff] %v1742
        %1793 = vst [vmem:[#allocation3 + $0xb8] sm:$0xff] %v1745
        %1794 = vst [vmem:[#allocation3 + $0xd0] sm:$0xff] %v1748
        %1795 = vst [vmem:[#allocation3 + $0xe8] sm:$0xff] %v1751
        %1796 = vst [vmem:[#allocation3 + $0x100] sm:$0xff] %v1754
        %1797 = vst [vmem:[#allocation3 + $0x118] sm:$0xff] %v1757
        %1798 = vst [vmem:[#allocation3 + $0x130] sm:$0xff] %v1760
        %1799 = vst [vmem:[#allocation3 + $0x148] sm:$0xff] %v1763
        %1800 = vst [vmem:[#allocation3 + $0x160] sm:$0xff] %v1766
        %1801 = vst [vmem:[#allocation3 + $0x178] sm:$0xff] %v1769
        %v1802 = vld [vmem:[#allocation3] sm:$0xff]
        %v1803 = vld [vmem:[#allocation3 + $0x8] sm:$0xff]
        %v1804 = vld [vmem:[#allocation3 + $0x10] sm:$0xff]
        %v1805 = vld [vmem:[#allocation3 + $0x18] sm:$0xff]
        %v1806 = vld [vmem:[#allocation3 + $0x20] sm:$0xff]
        %v1807 = vld [vmem:[#allocation3 + $0x28] sm:$0xff]
        %v1808 = vld [vmem:[#allocation3 + $0x30] sm:$0xff]
        %v1809 = vld [vmem:[#allocation3 + $0x38] sm:$0xff]
        %v1810 = vld [vmem:[#allocation3 + $0x40] sm:$0xff]
        %v1811 = vld [vmem:[#allocation3 + $0x48] sm:$0xff]
        %v1812 = vld [vmem:[#allocation3 + $0x50] sm:$0xff]
        %v1813 = vld [vmem:[#allocation3 + $0x58] sm:$0xff]
        %v1814 = vld [vmem:[#allocation3 + $0x60] sm:$0xff]
        %v1815 = vld [vmem:[#allocation3 + $0x68] sm:$0xff]
        %v1816 = vld [vmem:[#allocation3 + $0x70] sm:$0xff]
        %v1817 = vld [vmem:[#allocation3 + $0x78] sm:$0xff]
        %v1818 = vld [vmem:[#allocation3 + $0x80] sm:$0xff]
        %v1819 = vld [vmem:[#allocation3 + $0x88] sm:$0xff]
        %v1820 = vld [vmem:[#allocation3 + $0x90] sm:$0xff]
        %v1821 = vld [vmem:[#allocation3 + $0x98] sm:$0xff]
        %v1822 = vld [vmem:[#allocation3 + $0xa0] sm:$0xff]
        %v1823 = vld [vmem:[#allocation3 + $0xa8] sm:$0xff]
        %v1824 = vld [vmem:[#allocation3 + $0xb0] sm:$0xff]
        %v1825 = vld [vmem:[#allocation3 + $0xb8] sm:$0xff]
        %v1826 = vld [vmem:[#allocation3 + $0xc0] sm:$0xff]
        %v1827 = vld [vmem:[#allocation3 + $0xc8] sm:$0xff]
        %v1828 = vld [vmem:[#allocation3 + $0xd0] sm:$0xff]
        %v1829 = vld [vmem:[#allocation3 + $0xd8] sm:$0xff]
        %v1830 = vld [vmem:[#allocation3 + $0xe0] sm:$0xff]
        %v1831 = vld [vmem:[#allocation3 + $0xe8] sm:$0xff]
        %v1832 = vld [vmem:[#allocation3 + $0xf0] sm:$0xff]
        %v1833 = vld [vmem:[#allocation3 + $0xf8] sm:$0xff]
        %v1834 = vld [vmem:[#allocation3 + $0x100] sm:$0xff]
        %v1835 = vld [vmem:[#allocation3 + $0x108] sm:$0xff]
        %v1836 = vld [vmem:[#allocation3 + $0x110] sm:$0xff]
        %v1837 = vld [vmem:[#allocation3 + $0x118] sm:$0xff]
        %v1838 = vld [vmem:[#allocation3 + $0x120] sm:$0xff]
        %v1839 = vld [vmem:[#allocation3 + $0x128] sm:$0xff]
        %v1840 = vld [vmem:[#allocation3 + $0x130] sm:$0xff]
        %v1841 = vld [vmem:[#allocation3 + $0x138] sm:$0xff]
        %v1842 = vld [vmem:[#allocation3 + $0x140] sm:$0xff]
        %v1843 = vld [vmem:[#allocation3 + $0x148] sm:$0xff]
        %v1844 = vld [vmem:[#allocation3 + $0x150] sm:$0xff]
        %v1845 = vld [vmem:[#allocation3 + $0x158] sm:$0xff]
        %v1846 = vld [vmem:[#allocation3 + $0x160] sm:$0xff]
        %v1847 = vld [vmem:[#allocation3 + $0x168] sm:$0xff]
        %v1848 = vld [vmem:[#allocation3 + $0x170] sm:$0xff]
        %v1849 = vld [vmem:[#allocation3 + $0x178] sm:$0xff]
        %v1850 = vld [vmem:[#allocation7] sm:$0xf]
        %v1851 = vld [vmem:[#allocation7 + $0x4] sm:$0xf]
        %v1852 = vld [vmem:[#allocation7 + $0x8] sm:$0xf]
        %v1853 = vld [vmem:[#allocation7 + $0xc] sm:$0xf]
        %v1854 = vld [vmem:[#allocation7 + $0x10] sm:$0xf]
        %v1855 = vld [vmem:[#allocation7 + $0x14] sm:$0xf]
        %v1856 = vld [vmem:[#allocation7 + $0x18] sm:$0xf]
        %v1857 = vld [vmem:[#allocation7 + $0x1c] sm:$0xf]
        %v1858 = vld [vmem:[#allocation7 + $0x20] sm:$0xf]
        %v1859 = vld [vmem:[#allocation7 + $0x24] sm:$0xf]
        %v1860 = vld [vmem:[#allocation7 + $0x28] sm:$0xf]
        %v1861 = vld [vmem:[#allocation7 + $0x2c] sm:$0xf]
        %v1862 = vld [vmem:[#allocation7 + $0x30] sm:$0xf]
        %v1863 = vld [vmem:[#allocation7 + $0x34] sm:$0xf]
        %v1864 = vld [vmem:[#allocation7 + $0x38] sm:$0xf]
        %v1865 = vld [vmem:[#allocation7 + $0x3c] sm:$0xf]
        %v1866 = vld [vmem:[#allocation7 + $0x40] sm:$0xf]
        %v1867 = vld [vmem:[#allocation7 + $0x44] sm:$0xf]
        %v1868 = vld [vmem:[#allocation7 + $0x48] sm:$0xf]
        %v1869 = vld [vmem:[#allocation7 + $0x4c] sm:$0xf]
        %v1870 = vld [vmem:[#allocation7 + $0x50] sm:$0xf]
        %v1871 = vld [vmem:[#allocation7 + $0x54] sm:$0xf]
        %v1872 = vld [vmem:[#allocation7 + $0x58] sm:$0xf]
        %v1873 = vld [vmem:[#allocation7 + $0x5c] sm:$0xf]
        %v1874 = vld [vmem:[#allocation7 + $0x60] sm:$0xf]
        %v1875 = vld [vmem:[#allocation7 + $0x64] sm:$0xf]
        %v1876 = vld [vmem:[#allocation7 + $0x68] sm:$0xf]
        %v1877 = vld [vmem:[#allocation7 + $0x6c] sm:$0xf]
        %v1878 = vld [vmem:[#allocation7 + $0x70] sm:$0xf]
        %v1879 = vld [vmem:[#allocation7 + $0x74] sm:$0xf]
        %v1880 = vld [vmem:[#allocation7 + $0x78] sm:$0xf]
        %v1881 = vld [vmem:[#allocation7 + $0x7c] sm:$0xf]
        %v1882 = vld [vmem:[#allocation7 + $0x80] sm:$0xf]
        %v1883 = vld [vmem:[#allocation7 + $0x84] sm:$0xf]
        %v1884 = vld [vmem:[#allocation7 + $0x88] sm:$0xf]
        %v1885 = vld [vmem:[#allocation7 + $0x8c] sm:$0xf]
        %v1886 = vld [vmem:[#allocation7 + $0x90] sm:$0xf]
        %v1887 = vld [vmem:[#allocation7 + $0x94] sm:$0xf]
        %v1888 = vld [vmem:[#allocation7 + $0x98] sm:$0xf]
        %v1889 = vld [vmem:[#allocation7 + $0x9c] sm:$0xf]
        %v1890 = vld [vmem:[#allocation7 + $0xa0] sm:$0xf]
        %v1891 = vld [vmem:[#allocation7 + $0xa4] sm:$0xf]
        %v1892 = vld [vmem:[#allocation7 + $0xa8] sm:$0xf]
        %v1893 = vld [vmem:[#allocation7 + $0xac] sm:$0xf]
        %v1894 = vld [vmem:[#allocation7 + $0xb0] sm:$0xf]
        %v1895 = vld [vmem:[#allocation7 + $0xb4] sm:$0xf]
        %v1896 = vld [vmem:[#allocation7 + $0xb8] sm:$0xf]
        %v1897 = vld [vmem:[#allocation7 + $0xbc] sm:$0xf]
        %v1898 = vld [vmem:[%s334] sm:$0xf]
        %v1899 = vld [vmem:[%s334 + $0x4] sm:$0xf]
        %v1900 = vld [vmem:[%s334 + $0xc] sm:$0xf]
        %v1901 = vld [vmem:[%s334 + $0x10] sm:$0xf]
        %v1902 = vld [vmem:[%s334 + $0x18] sm:$0xf]
        %v1903 = vld [vmem:[%s334 + $0x1c] sm:$0xf]
        %v1904 = vld [vmem:[%s334 + $0x24] sm:$0xf]
        %v1905 = vld [vmem:[%s334 + $0x28] sm:$0xf]
        %v1906 = vld [vmem:[%s334 + $0x30] sm:$0xf]
        %v1907 = vld [vmem:[%s334 + $0x34] sm:$0xf]
        %v1908 = vld [vmem:[%s334 + $0x3c] sm:$0xf]
        %v1909 = vld [vmem:[%s334 + $0x40] sm:$0xf]
        %v1910 = vld [vmem:[%s334 + $0x48] sm:$0xf]
        %v1911 = vld [vmem:[%s334 + $0x4c] sm:$0xf]
        %v1912 = vld [vmem:[%s334 + $0x54] sm:$0xf]
        %v1913 = vld [vmem:[%s334 + $0x58] sm:$0xf]
        %v1914 = vld [vmem:[%s334 + $0x60] sm:$0xf]
        %v1915 = vld [vmem:[%s334 + $0x64] sm:$0xf]
        %v1916 = vld [vmem:[%s334 + $0x6c] sm:$0xf]
        %v1917 = vld [vmem:[%s334 + $0x70] sm:$0xf]
        %v1918 = vld [vmem:[%s334 + $0x78] sm:$0xf]
        %v1919 = vld [vmem:[%s334 + $0x7c] sm:$0xf]
        %v1920 = vld [vmem:[%s334 + $0x84] sm:$0xf]
        %v1921 = vld [vmem:[%s334 + $0x88] sm:$0xf]
        %v1922 = vld [vmem:[%s334 + $0x90] sm:$0xf]
        %v1923 = vld [vmem:[%s334 + $0x94] sm:$0xf]
        %v1924 = vld [vmem:[%s334 + $0x9c] sm:$0xf]
        %v1925 = vld [vmem:[%s334 + $0xa0] sm:$0xf]
        %v1926 = vld [vmem:[%s334 + $0xa8] sm:$0xf]
        %v1927 = vld [vmem:[%s334 + $0xac] sm:$0xf]
        %v1928 = vld [vmem:[%s334 + $0xb4] sm:$0xf]
        %v1929 = vld [vmem:[%s334 + $0xb8] sm:$0xf]
        %v1962 = vunpack.c.l.b16 %v1898
        %v1963 = vunpack.c.l.b16 %v1899
        %v1964 = vunpack.c.l.b16 %v1900
        %v1965 = vunpack.c.l.b16 %v1901
        %v1966 = vunpack.c.l.b16 %v1902
        %v1967 = vunpack.c.l.b16 %v1903
        %v1968 = vunpack.c.l.b16 %v1904
        %v1969 = vunpack.c.l.b16 %v1905
        %v1970 = vunpack.c.l.b16 %v1906
        %v1971 = vunpack.c.l.b16 %v1907
        %v1972 = vunpack.c.l.b16 %v1908
        %v1973 = vunpack.c.l.b16 %v1909
        %v1974 = vunpack.c.l.b16 %v1910
        %v1975 = vunpack.c.l.b16 %v1911
        %v1976 = vunpack.c.l.b16 %v1912
        %v1977 = vunpack.c.l.b16 %v1913
        %v1978 = vunpack.c.l.b16 %v1914
        %v1979 = vunpack.c.l.b16 %v1915
        %v1980 = vunpack.c.l.b16 %v1916
        %v1981 = vunpack.c.l.b16 %v1917
        %v1982 = vunpack.c.l.b16 %v1918
        %v1983 = vunpack.c.l.b16 %v1919
        %v1984 = vunpack.c.l.b16 %v1920
        %v1985 = vunpack.c.l.b16 %v1921
        %v1986 = vunpack.c.l.b16 %v1922
        %v1987 = vunpack.c.l.b16 %v1923
        %v1988 = vunpack.c.l.b16 %v1924
        %v1989 = vunpack.c.l.b16 %v1925
        %v1990 = vunpack.c.l.b16 %v1926
        %v1991 = vunpack.c.l.b16 %v1927
        %v1992 = vunpack.c.l.b16 %v1928
        %v1993 = vunpack.c.l.b16 %v1929
        %v1994 = vpack.c.b16 %v1963, %v1962
        %v1995 = vpack.c.b16 %v1965, %v1964
        %v1996 = vpack.c.b16 %v1967, %v1966
        %v1997 = vpack.c.b16 %v1969, %v1968
        %v1998 = vpack.c.b16 %v1971, %v1970
        %v1999 = vpack.c.b16 %v1973, %v1972
        %v2000 = vpack.c.b16 %v1975, %v1974
        %v2001 = vpack.c.b16 %v1977, %v1976
        %v2002 = vpack.c.b16 %v1979, %v1978
        %v2003 = vpack.c.b16 %v1981, %v1980
        %v2004 = vpack.c.b16 %v1983, %v1982
        %v2005 = vpack.c.b16 %v1985, %v1984
        %v2006 = vpack.c.b16 %v1987, %v1986
        %v2007 = vpack.c.b16 %v1989, %v1988
        %v2008 = vpack.c.b16 %v1991, %v1990
        %v2009 = vpack.c.b16 %v1993, %v1992
        %2026 = vst [vmem:[#allocation3] sm:$0xff] %v1994
        %2027 = vst [vmem:[#allocation3 + $0x18] sm:$0xff] %v1995
        %2028 = vst [vmem:[#allocation3 + $0x30] sm:$0xff] %v1996
        %2029 = vst [vmem:[#allocation3 + $0x48] sm:$0xff] %v1997
        %2030 = vst [vmem:[#allocation3 + $0x60] sm:$0xff] %v1998
        %2031 = vst [vmem:[#allocation3 + $0x78] sm:$0xff] %v1999
        %2032 = vst [vmem:[#allocation3 + $0x90] sm:$0xff] %v2000
        %2033 = vst [vmem:[#allocation3 + $0xa8] sm:$0xff] %v2001
        %2034 = vst [vmem:[#allocation3 + $0xc0] sm:$0xff] %v2002
        %2035 = vst [vmem:[#allocation3 + $0xd8] sm:$0xff] %v2003
        %2036 = vst [vmem:[#allocation3 + $0xf0] sm:$0xff] %v2004
        %2037 = vst [vmem:[#allocation3 + $0x108] sm:$0xff] %v2005
        %2038 = vst [vmem:[#allocation3 + $0x120] sm:$0xff] %v2006
        %2039 = vst [vmem:[#allocation3 + $0x138] sm:$0xff] %v2007
        %2040 = vst [vmem:[#allocation3 + $0x150] sm:$0xff] %v2008
        %2041 = vst [vmem:[#allocation3 + $0x168] sm:$0xff] %v2009
        %v2042 = vld [vmem:[%s334] sm:$0xf]
        %v2043 = vld [vmem:[%s334 + $0x4] sm:$0xf]
        %v2044 = vld [vmem:[%s334 + $0x8] sm:$0x1]
        %v2045 = vld [vmem:[%s334 + $0xc] sm:$0xf]
        %v2046 = vld [vmem:[%s334 + $0x10] sm:$0xf]
        %v2047 = vld [vmem:[%s334 + $0x14] sm:$0x1]
        %v2048 = vld [vmem:[%s334 + $0x18] sm:$0xf]
        %v2049 = vld [vmem:[%s334 + $0x1c] sm:$0xf]
        %v2050 = vld [vmem:[%s334 + $0x20] sm:$0x1]
        %v2051 = vld [vmem:[%s334 + $0x24] sm:$0xf]
        %v2052 = vld [vmem:[%s334 + $0x28] sm:$0xf]
        %v2053 = vld [vmem:[%s334 + $0x2c] sm:$0x1]
        %v2054 = vld [vmem:[%s334 + $0x30] sm:$0xf]
        %v2055 = vld [vmem:[%s334 + $0x34] sm:$0xf]
        %v2056 = vld [vmem:[%s334 + $0x38] sm:$0x1]
        %v2057 = vld [vmem:[%s334 + $0x3c] sm:$0xf]
        %v2058 = vld [vmem:[%s334 + $0x40] sm:$0xf]
        %v2059 = vld [vmem:[%s334 + $0x44] sm:$0x1]
        %v2060 = vld [vmem:[%s334 + $0x48] sm:$0xf]
        %v2061 = vld [vmem:[%s334 + $0x4c] sm:$0xf]
        %v2062 = vld [vmem:[%s334 + $0x50] sm:$0x1]
        %v2063 = vld [vmem:[%s334 + $0x54] sm:$0xf]
        %v2064 = vld [vmem:[%s334 + $0x58] sm:$0xf]
        %v2065 = vld [vmem:[%s334 + $0x5c] sm:$0x1]
        %v2066 = vld [vmem:[%s334 + $0x60] sm:$0xf]
        %v2067 = vld [vmem:[%s334 + $0x64] sm:$0xf]
        %v2068 = vld [vmem:[%s334 + $0x68] sm:$0x1]
        %v2069 = vld [vmem:[%s334 + $0x6c] sm:$0xf]
        %v2070 = vld [vmem:[%s334 + $0x70] sm:$0xf]
        %v2071 = vld [vmem:[%s334 + $0x74] sm:$0x1]
        %v2072 = vld [vmem:[%s334 + $0x78] sm:$0xf]
        %v2073 = vld [vmem:[%s334 + $0x7c] sm:$0xf]
        %v2074 = vld [vmem:[%s334 + $0x80] sm:$0x1]
        %v2075 = vld [vmem:[%s334 + $0x84] sm:$0xf]
        %v2076 = vld [vmem:[%s334 + $0x88] sm:$0xf]
        %v2077 = vld [vmem:[%s334 + $0x8c] sm:$0x1]
        %v2078 = vld [vmem:[%s334 + $0x90] sm:$0xf]
        %v2079 = vld [vmem:[%s334 + $0x94] sm:$0xf]
        %v2080 = vld [vmem:[%s334 + $0x98] sm:$0x1]
        %v2081 = vld [vmem:[%s334 + $0x9c] sm:$0xf]
        %v2082 = vld [vmem:[%s334 + $0xa0] sm:$0xf]
        %v2083 = vld [vmem:[%s334 + $0xa4] sm:$0x1]
        %v2084 = vld [vmem:[%s334 + $0xa8] sm:$0xf]
        %v2085 = vld [vmem:[%s334 + $0xac] sm:$0xf]
        %v2086 = vld [vmem:[%s334 + $0xb0] sm:$0x1]
        %v2087 = vld [vmem:[%s334 + $0xb4] sm:$0xf]
        %v2088 = vld [vmem:[%s334 + $0xb8] sm:$0xf]
        %v2089 = vld [vmem:[%s334 + $0xbc] sm:$0x1]
        %v2138 = vunpack.c.l.b16 %v2042
        %v2139 = vunpack.c.l.b16 %v2043
        %v2140 = vunpack.c.l.b16 %v2044
        %v2141 = vunpack.c.l.b16 %v2045
        %v2142 = vunpack.c.l.b16 %v2046
        %v2143 = vunpack.c.l.b16 %v2047
        %v2144 = vunpack.c.l.b16 %v2048
        %v2145 = vunpack.c.l.b16 %v2049
        %v2146 = vunpack.c.l.b16 %v2050
        %v2147 = vunpack.c.l.b16 %v2051
        %v2148 = vunpack.c.l.b16 %v2052
        %v2149 = vunpack.c.l.b16 %v2053
        %v2150 = vunpack.c.l.b16 %v2054
        %v2151 = vunpack.c.l.b16 %v2055
        %v2152 = vunpack.c.l.b16 %v2056
        %v2153 = vunpack.c.l.b16 %v2057
        %v2154 = vunpack.c.l.b16 %v2058
        %v2155 = vunpack.c.l.b16 %v2059
        %v2156 = vunpack.c.l.b16 %v2060
        %v2157 = vunpack.c.l.b16 %v2061
        %v2158 = vunpack.c.l.b16 %v2062
        %v2159 = vunpack.c.l.b16 %v2063
        %v2160 = vunpack.c.l.b16 %v2064
        %v2161 = vunpack.c.l.b16 %v2065
        %v2162 = vunpack.c.l.b16 %v2066
        %v2163 = vunpack.c.l.b16 %v2067
        %v2164 = vunpack.c.l.b16 %v2068
        %v2165 = vunpack.c.l.b16 %v2069
        %v2166 = vunpack.c.l.b16 %v2070
        %v2167 = vunpack.c.l.b16 %v2071
        %v2168 = vunpack.c.l.b16 %v2072
        %v2169 = vunpack.c.l.b16 %v2073
        %v2170 = vunpack.c.l.b16 %v2074
        %v2171 = vunpack.c.l.b16 %v2075
        %v2172 = vunpack.c.l.b16 %v2076
        %v2173 = vunpack.c.l.b16 %v2077
        %v2174 = vunpack.c.l.b16 %v2078
        %v2175 = vunpack.c.l.b16 %v2079
        %v2176 = vunpack.c.l.b16 %v2080
        %v2177 = vunpack.c.l.b16 %v2081
        %v2178 = vunpack.c.l.b16 %v2082
        %v2179 = vunpack.c.l.b16 %v2083
        %v2180 = vunpack.c.l.b16 %v2084
        %v2181 = vunpack.c.l.b16 %v2085
        %v2182 = vunpack.c.l.b16 %v2086
        %v2183 = vunpack.c.l.b16 %v2087
        %v2184 = vunpack.c.l.b16 %v2088
        %v2185 = vunpack.c.l.b16 %v2089
        %v2186 = vpack.c.b16 %v2139, %v2138
        %v2187 = vpack.c.b16 %v2140, %v2140
        %v2188 = vpack.c.b16 %v2142, %v2141
        %v2189 = vpack.c.b16 %v2143, %v2143
        %v2190 = vpack.c.b16 %v2145, %v2144
        %v2191 = vpack.c.b16 %v2146, %v2146
        %v2192 = vpack.c.b16 %v2148, %v2147
        %v2193 = vpack.c.b16 %v2149, %v2149
        %v2194 = vpack.c.b16 %v2151, %v2150
        %v2195 = vpack.c.b16 %v2152, %v2152
        %v2196 = vpack.c.b16 %v2154, %v2153
        %v2197 = vpack.c.b16 %v2155, %v2155
        %v2198 = vpack.c.b16 %v2157, %v2156
        %v2199 = vpack.c.b16 %v2158, %v2158
        %v2200 = vpack.c.b16 %v2160, %v2159
        %v2201 = vpack.c.b16 %v2161, %v2161
        %v2202 = vpack.c.b16 %v2163, %v2162
        %v2203 = vpack.c.b16 %v2164, %v2164
        %v2204 = vpack.c.b16 %v2166, %v2165
        %v2205 = vpack.c.b16 %v2167, %v2167
        %v2206 = vpack.c.b16 %v2169, %v2168
        %v2207 = vpack.c.b16 %v2170, %v2170
        %v2208 = vpack.c.b16 %v2172, %v2171
        %v2209 = vpack.c.b16 %v2173, %v2173
        %v2210 = vpack.c.b16 %v2175, %v2174
        %v2211 = vpack.c.b16 %v2176, %v2176
        %v2212 = vpack.c.b16 %v2178, %v2177
        %v2213 = vpack.c.b16 %v2179, %v2179
        %v2214 = vpack.c.b16 %v2181, %v2180
        %v2215 = vpack.c.b16 %v2182, %v2182
        %v2216 = vpack.c.b16 %v2184, %v2183
        %v2217 = vpack.c.b16 %v2185, %v2185
        %v2219 = vshrl.u32 %v2186, 16
        %v2221 = vshll.u32 %v2186, 16
        %v2223 = vrot.slane %v2221, 1
        %v2224 = vor.u32 %v2219, %v2223
        %v2226 = vshll.u32 %v2187, 16
        %v2228 = vrot.slane %v2226, 1
        %v2229 = vsel %vm1320, %v2224, %v2228
        %v2231 = vshrl.u32 %v2188, 16
        %v2233 = vshll.u32 %v2188, 16
        %v2235 = vrot.slane %v2233, 1
        %v2236 = vor.u32 %v2231, %v2235
        %v2238 = vshll.u32 %v2189, 16
        %v2240 = vrot.slane %v2238, 1
        %v2241 = vsel %vm1320, %v2236, %v2240
        %v2243 = vshrl.u32 %v2190, 16
        %v2245 = vshll.u32 %v2190, 16
        %v2247 = vrot.slane %v2245, 1
        %v2248 = vor.u32 %v2243, %v2247
        %v2250 = vshll.u32 %v2191, 16
        %v2252 = vrot.slane %v2250, 1
        %v2253 = vsel %vm1320, %v2248, %v2252
        %v2255 = vshrl.u32 %v2192, 16
        %v2257 = vshll.u32 %v2192, 16
        %v2259 = vrot.slane %v2257, 1
        %v2260 = vor.u32 %v2255, %v2259
        %v2262 = vshll.u32 %v2193, 16
        %v2264 = vrot.slane %v2262, 1
        %v2265 = vsel %vm1320, %v2260, %v2264
        %v2267 = vshrl.u32 %v2194, 16
        %v2269 = vshll.u32 %v2194, 16
        %v2271 = vrot.slane %v2269, 1
        %v2272 = vor.u32 %v2267, %v2271
        %v2274 = vshll.u32 %v2195, 16
        %v2276 = vrot.slane %v2274, 1
        %v2277 = vsel %vm1320, %v2272, %v2276
        %v2279 = vshrl.u32 %v2196, 16
        %v2281 = vshll.u32 %v2196, 16
        %v2283 = vrot.slane %v2281, 1
        %v2284 = vor.u32 %v2279, %v2283
        %v2286 = vshll.u32 %v2197, 16
        %v2288 = vrot.slane %v2286, 1
        %v2289 = vsel %vm1320, %v2284, %v2288
        %v2291 = vshrl.u32 %v2198, 16
        %v2293 = vshll.u32 %v2198, 16
        %v2295 = vrot.slane %v2293, 1
        %v2296 = vor.u32 %v2291, %v2295
        %v2298 = vshll.u32 %v2199, 16
        %v2300 = vrot.slane %v2298, 1
        %v2301 = vsel %vm1320, %v2296, %v2300
        %v2303 = vshrl.u32 %v2200, 16
        %v2305 = vshll.u32 %v2200, 16
        %v2307 = vrot.slane %v2305, 1
        %v2308 = vor.u32 %v2303, %v2307
        %v2310 = vshll.u32 %v2201, 16
        %v2312 = vrot.slane %v2310, 1
        %v2313 = vsel %vm1320, %v2308, %v2312
        %v2315 = vshrl.u32 %v2202, 16
        %v2317 = vshll.u32 %v2202, 16
        %v2319 = vrot.slane %v2317, 1
        %v2320 = vor.u32 %v2315, %v2319
        %v2322 = vshll.u32 %v2203, 16
        %v2324 = vrot.slane %v2322, 1
        %v2325 = vsel %vm1320, %v2320, %v2324
        %v2327 = vshrl.u32 %v2204, 16
        %v2329 = vshll.u32 %v2204, 16
        %v2331 = vrot.slane %v2329, 1
        %v2332 = vor.u32 %v2327, %v2331
        %v2334 = vshll.u32 %v2205, 16
        %v2336 = vrot.slane %v2334, 1
        %v2337 = vsel %vm1320, %v2332, %v2336
        %v2339 = vshrl.u32 %v2206, 16
        %v2341 = vshll.u32 %v2206, 16
        %v2343 = vrot.slane %v2341, 1
        %v2344 = vor.u32 %v2339, %v2343
        %v2346 = vshll.u32 %v2207, 16
        %v2348 = vrot.slane %v2346, 1
        %v2349 = vsel %vm1320, %v2344, %v2348
        %v2351 = vshrl.u32 %v2208, 16
        %v2353 = vshll.u32 %v2208, 16
        %v2355 = vrot.slane %v2353, 1
        %v2356 = vor.u32 %v2351, %v2355
        %v2358 = vshll.u32 %v2209, 16
        %v2360 = vrot.slane %v2358, 1
        %v2361 = vsel %vm1320, %v2356, %v2360
        %v2363 = vshrl.u32 %v2210, 16
        %v2365 = vshll.u32 %v2210, 16
        %v2367 = vrot.slane %v2365, 1
        %v2368 = vor.u32 %v2363, %v2367
        %v2370 = vshll.u32 %v2211, 16
        %v2372 = vrot.slane %v2370, 1
        %v2373 = vsel %vm1320, %v2368, %v2372
        %v2375 = vshrl.u32 %v2212, 16
        %v2377 = vshll.u32 %v2212, 16
        %v2379 = vrot.slane %v2377, 1
        %v2380 = vor.u32 %v2375, %v2379
        %v2382 = vshll.u32 %v2213, 16
        %v2384 = vrot.slane %v2382, 1
        %v2385 = vsel %vm1320, %v2380, %v2384
        %v2387 = vshrl.u32 %v2214, 16
        %v2389 = vshll.u32 %v2214, 16
        %v2391 = vrot.slane %v2389, 1
        %v2392 = vor.u32 %v2387, %v2391
        %v2394 = vshll.u32 %v2215, 16
        %v2396 = vrot.slane %v2394, 1
        %v2397 = vsel %vm1320, %v2392, %v2396
        %v2399 = vshrl.u32 %v2216, 16
        %v2401 = vshll.u32 %v2216, 16
        %v2403 = vrot.slane %v2401, 1
        %v2404 = vor.u32 %v2399, %v2403
        %v2406 = vshll.u32 %v2217, 16
        %v2408 = vrot.slane %v2406, 1
        %v2409 = vsel %vm1320, %v2404, %v2408
        %2426 = vst [vmem:[#allocation3 + $0x8] sm:$0xff] %v2229
        %2427 = vst [vmem:[#allocation3 + $0x20] sm:$0xff] %v2241
        %2428 = vst [vmem:[#allocation3 + $0x38] sm:$0xff] %v2253
        %2429 = vst [vmem:[#allocation3 + $0x50] sm:$0xff] %v2265
        %2430 = vst [vmem:[#allocation3 + $0x68] sm:$0xff] %v2277
        %2431 = vst [vmem:[#allocation3 + $0x80] sm:$0xff] %v2289
        %2432 = vst [vmem:[#allocation3 + $0x98] sm:$0xff] %v2301
        %2433 = vst [vmem:[#allocation3 + $0xb0] sm:$0xff] %v2313
        %2434 = vst [vmem:[#allocation3 + $0xc8] sm:$0xff] %v2325
        %2435 = vst [vmem:[#allocation3 + $0xe0] sm:$0xff] %v2337
        %2436 = vst [vmem:[#allocation3 + $0xf8] sm:$0xff] %v2349
        %2437 = vst [vmem:[#allocation3 + $0x110] sm:$0xff] %v2361
        %2438 = vst [vmem:[#allocation3 + $0x128] sm:$0xff] %v2373
        %2439 = vst [vmem:[#allocation3 + $0x140] sm:$0xff] %v2385
        %2440 = vst [vmem:[#allocation3 + $0x158] sm:$0xff] %v2397
        %2441 = vst [vmem:[#allocation3 + $0x170] sm:$0xff] %v2409
        %v2442 = vld [vmem:[%s334] sm:$0xe]
        %v2443 = vld [vmem:[%s334 + $0x4] sm:$0xf]
        %v2444 = vld [vmem:[%s334 + $0x8] sm:$0x1]
        %v2445 = vld [vmem:[%s334 + $0xc] sm:$0xe]
        %v2446 = vld [vmem:[%s334 + $0x10] sm:$0xf]
        %v2447 = vld [vmem:[%s334 + $0x14] sm:$0x1]
        %v2448 = vld [vmem:[%s334 + $0x18] sm:$0xe]
        %v2449 = vld [vmem:[%s334 + $0x1c] sm:$0xf]
        %v2450 = vld [vmem:[%s334 + $0x20] sm:$0x1]
        %v2451 = vld [vmem:[%s334 + $0x24] sm:$0xe]
        %v2452 = vld [vmem:[%s334 + $0x28] sm:$0xf]
        %v2453 = vld [vmem:[%s334 + $0x2c] sm:$0x1]
        %v2454 = vld [vmem:[%s334 + $0x30] sm:$0xe]
        %v2455 = vld [vmem:[%s334 + $0x34] sm:$0xf]
        %v2456 = vld [vmem:[%s334 + $0x38] sm:$0x1]
        %v2457 = vld [vmem:[%s334 + $0x3c] sm:$0xe]
        %v2458 = vld [vmem:[%s334 + $0x40] sm:$0xf]
        %v2459 = vld [vmem:[%s334 + $0x44] sm:$0x1]
        %v2460 = vld [vmem:[%s334 + $0x48] sm:$0xe]
        %v2461 = vld [vmem:[%s334 + $0x4c] sm:$0xf]
        %v2462 = vld [vmem:[%s334 + $0x50] sm:$0x1]
        %v2463 = vld [vmem:[%s334 + $0x54] sm:$0xe]
        %v2464 = vld [vmem:[%s334 + $0x58] sm:$0xf]
        %v2465 = vld [vmem:[%s334 + $0x5c] sm:$0x1]
        %v2466 = vld [vmem:[%s334 + $0x60] sm:$0xe]
        %v2467 = vld [vmem:[%s334 + $0x64] sm:$0xf]
        %v2468 = vld [vmem:[%s334 + $0x68] sm:$0x1]
        %v2469 = vld [vmem:[%s334 + $0x6c] sm:$0xe]
        %v2470 = vld [vmem:[%s334 + $0x70] sm:$0xf]
        %v2471 = vld [vmem:[%s334 + $0x74] sm:$0x1]
        %v2472 = vld [vmem:[%s334 + $0x78] sm:$0xe]
        %v2473 = vld [vmem:[%s334 + $0x7c] sm:$0xf]
        %v2474 = vld [vmem:[%s334 + $0x80] sm:$0x1]
        %v2475 = vld [vmem:[%s334 + $0x84] sm:$0xe]
        %v2476 = vld [vmem:[%s334 + $0x88] sm:$0xf]
        %v2477 = vld [vmem:[%s334 + $0x8c] sm:$0x1]
        %v2478 = vld [vmem:[%s334 + $0x90] sm:$0xe]
        %v2479 = vld [vmem:[%s334 + $0x94] sm:$0xf]
        %v2480 = vld [vmem:[%s334 + $0x98] sm:$0x1]
        %v2481 = vld [vmem:[%s334 + $0x9c] sm:$0xe]
        %v2482 = vld [vmem:[%s334 + $0xa0] sm:$0xf]
        %v2483 = vld [vmem:[%s334 + $0xa4] sm:$0x1]
        %v2484 = vld [vmem:[%s334 + $0xa8] sm:$0xe]
        %v2485 = vld [vmem:[%s334 + $0xac] sm:$0xf]
        %v2486 = vld [vmem:[%s334 + $0xb0] sm:$0x1]
        %v2487 = vld [vmem:[%s334 + $0xb4] sm:$0xe]
        %v2488 = vld [vmem:[%s334 + $0xb8] sm:$0xf]
        %v2489 = vld [vmem:[%s334 + $0xbc] sm:$0x1]
        %v2538 = vunpack.c.l.b16 %v2442
        %v2539 = vunpack.c.l.b16 %v2443
        %v2540 = vunpack.c.l.b16 %v2444
        %v2541 = vunpack.c.l.b16 %v2445
        %v2542 = vunpack.c.l.b16 %v2446
        %v2543 = vunpack.c.l.b16 %v2447
        %v2544 = vunpack.c.l.b16 %v2448
        %v2545 = vunpack.c.l.b16 %v2449
        %v2546 = vunpack.c.l.b16 %v2450
        %v2547 = vunpack.c.l.b16 %v2451
        %v2548 = vunpack.c.l.b16 %v2452
        %v2549 = vunpack.c.l.b16 %v2453
        %v2550 = vunpack.c.l.b16 %v2454
        %v2551 = vunpack.c.l.b16 %v2455
        %v2552 = vunpack.c.l.b16 %v2456
        %v2553 = vunpack.c.l.b16 %v2457
        %v2554 = vunpack.c.l.b16 %v2458
        %v2555 = vunpack.c.l.b16 %v2459
        %v2556 = vunpack.c.l.b16 %v2460
        %v2557 = vunpack.c.l.b16 %v2461
        %v2558 = vunpack.c.l.b16 %v2462
        %v2559 = vunpack.c.l.b16 %v2463
        %v2560 = vunpack.c.l.b16 %v2464
        %v2561 = vunpack.c.l.b16 %v2465
        %v2562 = vunpack.c.l.b16 %v2466
        %v2563 = vunpack.c.l.b16 %v2467
        %v2564 = vunpack.c.l.b16 %v2468
        %v2565 = vunpack.c.l.b16 %v2469
        %v2566 = vunpack.c.l.b16 %v2470
        %v2567 = vunpack.c.l.b16 %v2471
        %v2568 = vunpack.c.l.b16 %v2472
        %v2569 = vunpack.c.l.b16 %v2473
        %v2570 = vunpack.c.l.b16 %v2474
        %v2571 = vunpack.c.l.b16 %v2475
        %v2572 = vunpack.c.l.b16 %v2476
        %v2573 = vunpack.c.l.b16 %v2477
        %v2574 = vunpack.c.l.b16 %v2478
        %v2575 = vunpack.c.l.b16 %v2479
        %v2576 = vunpack.c.l.b16 %v2480
        %v2577 = vunpack.c.l.b16 %v2481
        %v2578 = vunpack.c.l.b16 %v2482
        %v2579 = vunpack.c.l.b16 %v2483
        %v2580 = vunpack.c.l.b16 %v2484
        %v2581 = vunpack.c.l.b16 %v2485
        %v2582 = vunpack.c.l.b16 %v2486
        %v2583 = vunpack.c.l.b16 %v2487
        %v2584 = vunpack.c.l.b16 %v2488
        %v2585 = vunpack.c.l.b16 %v2489
        %v2586 = vpack.c.b16 %v2539, %v2538
        %v2587 = vpack.c.b16 %v2540, %v2540
        %v2588 = vpack.c.b16 %v2542, %v2541
        %v2589 = vpack.c.b16 %v2543, %v2543
        %v2590 = vpack.c.b16 %v2545, %v2544
        %v2591 = vpack.c.b16 %v2546, %v2546
        %v2592 = vpack.c.b16 %v2548, %v2547
        %v2593 = vpack.c.b16 %v2549, %v2549
        %v2594 = vpack.c.b16 %v2551, %v2550
        %v2595 = vpack.c.b16 %v2552, %v2552
        %v2596 = vpack.c.b16 %v2554, %v2553
        %v2597 = vpack.c.b16 %v2555, %v2555
        %v2598 = vpack.c.b16 %v2557, %v2556
        %v2599 = vpack.c.b16 %v2558, %v2558
        %v2600 = vpack.c.b16 %v2560, %v2559
        %v2601 = vpack.c.b16 %v2561, %v2561
        %v2602 = vpack.c.b16 %v2563, %v2562
        %v2603 = vpack.c.b16 %v2564, %v2564
        %v2604 = vpack.c.b16 %v2566, %v2565
        %v2605 = vpack.c.b16 %v2567, %v2567
        %v2606 = vpack.c.b16 %v2569, %v2568
        %v2607 = vpack.c.b16 %v2570, %v2570
        %v2608 = vpack.c.b16 %v2572, %v2571
        %v2609 = vpack.c.b16 %v2573, %v2573
        %v2610 = vpack.c.b16 %v2575, %v2574
        %v2611 = vpack.c.b16 %v2576, %v2576
        %v2612 = vpack.c.b16 %v2578, %v2577
        %v2613 = vpack.c.b16 %v2579, %v2579
        %v2614 = vpack.c.b16 %v2581, %v2580
        %v2615 = vpack.c.b16 %v2582, %v2582
        %v2616 = vpack.c.b16 %v2584, %v2583
        %v2617 = vpack.c.b16 %v2585, %v2585
        %v2618 = vrot.slane %v2586, 1
        %v2619 = vrot.slane %v2587, 1
        %v2620 = vsel %vm1721, %v2618, %v2619
        %v2621 = vrot.slane %v2588, 1
        %v2622 = vrot.slane %v2589, 1
        %v2623 = vsel %vm1721, %v2621, %v2622
        %v2624 = vrot.slane %v2590, 1
        %v2625 = vrot.slane %v2591, 1
        %v2626 = vsel %vm1721, %v2624, %v2625
        %v2627 = vrot.slane %v2592, 1
        %v2628 = vrot.slane %v2593, 1
        %v2629 = vsel %vm1721, %v2627, %v2628
        %v2630 = vrot.slane %v2594, 1
        %v2631 = vrot.slane %v2595, 1
        %v2632 = vsel %vm1721, %v2630, %v2631
        %v2633 = vrot.slane %v2596, 1
        %v2634 = vrot.slane %v2597, 1
        %v2635 = vsel %vm1721, %v2633, %v2634
        %v2636 = vrot.slane %v2598, 1
        %v2637 = vrot.slane %v2599, 1
        %v2638 = vsel %vm1721, %v2636, %v2637
        %v2639 = vrot.slane %v2600, 1
        %v2640 = vrot.slane %v2601, 1
        %v2641 = vsel %vm1721, %v2639, %v2640
        %v2642 = vrot.slane %v2602, 1
        %v2643 = vrot.slane %v2603, 1
        %v2644 = vsel %vm1721, %v2642, %v2643
        %v2645 = vrot.slane %v2604, 1
        %v2646 = vrot.slane %v2605, 1
        %v2647 = vsel %vm1721, %v2645, %v2646
        %v2648 = vrot.slane %v2606, 1
        %v2649 = vrot.slane %v2607, 1
        %v2650 = vsel %vm1721, %v2648, %v2649
        %v2651 = vrot.slane %v2608, 1
        %v2652 = vrot.slane %v2609, 1
        %v2653 = vsel %vm1721, %v2651, %v2652
        %v2654 = vrot.slane %v2610, 1
        %v2655 = vrot.slane %v2611, 1
        %v2656 = vsel %vm1721, %v2654, %v2655
        %v2657 = vrot.slane %v2612, 1
        %v2658 = vrot.slane %v2613, 1
        %v2659 = vsel %vm1721, %v2657, %v2658
        %v2660 = vrot.slane %v2614, 1
        %v2661 = vrot.slane %v2615, 1
        %v2662 = vsel %vm1721, %v2660, %v2661
        %v2663 = vrot.slane %v2616, 1
        %v2664 = vrot.slane %v2617, 1
        %v2665 = vsel %vm1721, %v2663, %v2664
        %2682 = vst [vmem:[#allocation3 + $0x10] sm:$0xff] %v2620
        %2683 = vst [vmem:[#allocation3 + $0x28] sm:$0xff] %v2623
        %2684 = vst [vmem:[#allocation3 + $0x40] sm:$0xff] %v2626
        %2685 = vst [vmem:[#allocation3 + $0x58] sm:$0xff] %v2629
        %2686 = vst [vmem:[#allocation3 + $0x70] sm:$0xff] %v2632
        %2687 = vst [vmem:[#allocation3 + $0x88] sm:$0xff] %v2635
        %2688 = vst [vmem:[#allocation3 + $0xa0] sm:$0xff] %v2638
        %2689 = vst [vmem:[#allocation3 + $0xb8] sm:$0xff] %v2641
        %2690 = vst [vmem:[#allocation3 + $0xd0] sm:$0xff] %v2644
        %2691 = vst [vmem:[#allocation3 + $0xe8] sm:$0xff] %v2647
        %2692 = vst [vmem:[#allocation3 + $0x100] sm:$0xff] %v2650
        %2693 = vst [vmem:[#allocation3 + $0x118] sm:$0xff] %v2653
        %2694 = vst [vmem:[#allocation3 + $0x130] sm:$0xff] %v2656
        %2695 = vst [vmem:[#allocation3 + $0x148] sm:$0xff] %v2659
        %2696 = vst [vmem:[#allocation3 + $0x160] sm:$0xff] %v2662
        %2697 = vst [vmem:[#allocation3 + $0x178] sm:$0xff] %v2665
        %v2698 = vld [vmem:[#allocation3] sm:$0xff]
        %v2699 = vld [vmem:[#allocation3 + $0x8] sm:$0xff]
        %v2700 = vld [vmem:[#allocation3 + $0x10] sm:$0xff]
        %v2701 = vld [vmem:[#allocation3 + $0x18] sm:$0xff]
        %v2702 = vld [vmem:[#allocation3 + $0x20] sm:$0xff]
        %v2703 = vld [vmem:[#allocation3 + $0x28] sm:$0xff]
        %v2704 = vld [vmem:[#allocation3 + $0x30] sm:$0xff]
        %v2705 = vld [vmem:[#allocation3 + $0x38] sm:$0xff]
        %v2706 = vld [vmem:[#allocation3 + $0x40] sm:$0xff]
        %v2707 = vld [vmem:[#allocation3 + $0x48] sm:$0xff]
        %v2708 = vld [vmem:[#allocation3 + $0x50] sm:$0xff]
        %v2709 = vld [vmem:[#allocation3 + $0x58] sm:$0xff]
        %v2710 = vld [vmem:[#allocation3 + $0x60] sm:$0xff]
        %v2711 = vld [vmem:[#allocation3 + $0x68] sm:$0xff]
        %v2712 = vld [vmem:[#allocation3 + $0x70] sm:$0xff]
        %v2713 = vld [vmem:[#allocation3 + $0x78] sm:$0xff]
        %v2714 = vld [vmem:[#allocation3 + $0x80] sm:$0xff]
        %v2715 = vld [vmem:[#allocation3 + $0x88] sm:$0xff]
        %v2716 = vld [vmem:[#allocation3 + $0x90] sm:$0xff]
        %v2717 = vld [vmem:[#allocation3 + $0x98] sm:$0xff]
        %v2718 = vld [vmem:[#allocation3 + $0xa0] sm:$0xff]
        %v2719 = vld [vmem:[#allocation3 + $0xa8] sm:$0xff]
        %v2720 = vld [vmem:[#allocation3 + $0xb0] sm:$0xff]
        %v2721 = vld [vmem:[#allocation3 + $0xb8] sm:$0xff]
        %v2722 = vld [vmem:[#allocation3 + $0xc0] sm:$0xff]
        %v2723 = vld [vmem:[#allocation3 + $0xc8] sm:$0xff]
        %v2724 = vld [vmem:[#allocation3 + $0xd0] sm:$0xff]
        %v2725 = vld [vmem:[#allocation3 + $0xd8] sm:$0xff]
        %v2726 = vld [vmem:[#allocation3 + $0xe0] sm:$0xff]
        %v2727 = vld [vmem:[#allocation3 + $0xe8] sm:$0xff]
        %v2728 = vld [vmem:[#allocation3 + $0xf0] sm:$0xff]
        %v2729 = vld [vmem:[#allocation3 + $0xf8] sm:$0xff]
        %v2730 = vld [vmem:[#allocation3 + $0x100] sm:$0xff]
        %v2731 = vld [vmem:[#allocation3 + $0x108] sm:$0xff]
        %v2732 = vld [vmem:[#allocation3 + $0x110] sm:$0xff]
        %v2733 = vld [vmem:[#allocation3 + $0x118] sm:$0xff]
        %v2734 = vld [vmem:[#allocation3 + $0x120] sm:$0xff]
        %v2735 = vld [vmem:[#allocation3 + $0x128] sm:$0xff]
        %v2736 = vld [vmem:[#allocation3 + $0x130] sm:$0xff]
        %v2737 = vld [vmem:[#allocation3 + $0x138] sm:$0xff]
        %v2738 = vld [vmem:[#allocation3 + $0x140] sm:$0xff]
        %v2739 = vld [vmem:[#allocation3 + $0x148] sm:$0xff]
        %v2740 = vld [vmem:[#allocation3 + $0x150] sm:$0xff]
        %v2741 = vld [vmem:[#allocation3 + $0x158] sm:$0xff]
        %v2742 = vld [vmem:[#allocation3 + $0x160] sm:$0xff]
        %v2743 = vld [vmem:[#allocation3 + $0x168] sm:$0xff]
        %v2744 = vld [vmem:[#allocation3 + $0x170] sm:$0xff]
        %v2745 = vld [vmem:[#allocation3 + $0x178] sm:$0xff]
        %s2746 = scalar_lea.vmem [#allocation7], 192
        %v2747 = vld [vmem:[%s2746] sm:$0xf]
        %v2748 = vld [vmem:[%s2746 + $0x4] sm:$0xf]
        %v2749 = vld [vmem:[%s2746 + $0x8] sm:$0xf]
        %v2750 = vld [vmem:[%s2746 + $0xc] sm:$0xf]
        %v2751 = vld [vmem:[%s2746 + $0x10] sm:$0xf]
        %v2752 = vld [vmem:[%s2746 + $0x14] sm:$0xf]
        %v2753 = vld [vmem:[%s2746 + $0x18] sm:$0xf]
        %v2754 = vld [vmem:[%s2746 + $0x1c] sm:$0xf]
        %v2755 = vld [vmem:[%s2746 + $0x20] sm:$0xf]
        %v2756 = vld [vmem:[%s2746 + $0x24] sm:$0xf]
        %v2757 = vld [vmem:[%s2746 + $0x28] sm:$0xf]
        %v2758 = vld [vmem:[%s2746 + $0x2c] sm:$0xf]
        %v2759 = vld [vmem:[%s2746 + $0x30] sm:$0xf]
        %v2760 = vld [vmem:[%s2746 + $0x34] sm:$0xf]
        %v2761 = vld [vmem:[%s2746 + $0x38] sm:$0xf]
        %v2762 = vld [vmem:[%s2746 + $0x3c] sm:$0xf]
        %v2763 = vld [vmem:[%s2746 + $0x40] sm:$0xf]
        %v2764 = vld [vmem:[%s2746 + $0x44] sm:$0xf]
        %v2765 = vld [vmem:[%s2746 + $0x48] sm:$0xf]
        %v2766 = vld [vmem:[%s2746 + $0x4c] sm:$0xf]
        %v2767 = vld [vmem:[%s2746 + $0x50] sm:$0xf]
        %v2768 = vld [vmem:[%s2746 + $0x54] sm:$0xf]
        %v2769 = vld [vmem:[%s2746 + $0x58] sm:$0xf]
        %v2770 = vld [vmem:[%s2746 + $0x5c] sm:$0xf]
        %v2771 = vld [vmem:[%s2746 + $0x60] sm:$0xf]
        %v2772 = vld [vmem:[%s2746 + $0x64] sm:$0xf]
        %v2773 = vld [vmem:[%s2746 + $0x68] sm:$0xf]
        %v2774 = vld [vmem:[%s2746 + $0x6c] sm:$0xf]
        %v2775 = vld [vmem:[%s2746 + $0x70] sm:$0xf]
        %v2776 = vld [vmem:[%s2746 + $0x74] sm:$0xf]
        %v2777 = vld [vmem:[%s2746 + $0x78] sm:$0xf]
        %v2778 = vld [vmem:[%s2746 + $0x7c] sm:$0xf]
        %v2779 = vld [vmem:[%s2746 + $0x80] sm:$0xf]
        %v2780 = vld [vmem:[%s2746 + $0x84] sm:$0xf]
        %v2781 = vld [vmem:[%s2746 + $0x88] sm:$0xf]
        %v2782 = vld [vmem:[%s2746 + $0x8c] sm:$0xf]
        %v2783 = vld [vmem:[%s2746 + $0x90] sm:$0xf]
        %v2784 = vld [vmem:[%s2746 + $0x94] sm:$0xf]
        %v2785 = vld [vmem:[%s2746 + $0x98] sm:$0xf]
        %v2786 = vld [vmem:[%s2746 + $0x9c] sm:$0xf]
        %v2787 = vld [vmem:[%s2746 + $0xa0] sm:$0xf]
        %v2788 = vld [vmem:[%s2746 + $0xa4] sm:$0xf]
        %v2789 = vld [vmem:[%s2746 + $0xa8] sm:$0xf]
        %v2790 = vld [vmem:[%s2746 + $0xac] sm:$0xf]
        %v2791 = vld [vmem:[%s2746 + $0xb0] sm:$0xf]
        %v2792 = vld [vmem:[%s2746 + $0xb4] sm:$0xf]
        %v2793 = vld [vmem:[%s2746 + $0xb8] sm:$0xf]
        %v2794 = vld [vmem:[%s2746 + $0xbc] sm:$0xf]
        %v2843 = vunpack.c.l.b16 %v2747
        %v2844 = vunpack.c.l.b16 %v2748
        %v2845 = vunpack.c.l.b16 %v2749
        %v2846 = vunpack.c.l.b16 %v2750
        %v2847 = vunpack.c.l.b16 %v2751
        %v2848 = vunpack.c.l.b16 %v2752
        %v2849 = vunpack.c.l.b16 %v2753
        %v2850 = vunpack.c.l.b16 %v2754
        %v2851 = vunpack.c.l.b16 %v2755
        %v2852 = vunpack.c.l.b16 %v2756
        %v2853 = vunpack.c.l.b16 %v2757
        %v2854 = vunpack.c.l.b16 %v2758
        %v2855 = vunpack.c.l.b16 %v2759
        %v2856 = vunpack.c.l.b16 %v2760
        %v2857 = vunpack.c.l.b16 %v2761
        %v2858 = vunpack.c.l.b16 %v2762
        %v2859 = vunpack.c.l.b16 %v2763
        %v2860 = vunpack.c.l.b16 %v2764
        %v2861 = vunpack.c.l.b16 %v2765
        %v2862 = vunpack.c.l.b16 %v2766
        %v2863 = vunpack.c.l.b16 %v2767
        %v2864 = vunpack.c.l.b16 %v2768
        %v2865 = vunpack.c.l.b16 %v2769
        %v2866 = vunpack.c.l.b16 %v2770
        %v2867 = vunpack.c.l.b16 %v2771
        %v2868 = vunpack.c.l.b16 %v2772
        %v2869 = vunpack.c.l.b16 %v2773
        %v2870 = vunpack.c.l.b16 %v2774
        %v2871 = vunpack.c.l.b16 %v2775
        %v2872 = vunpack.c.l.b16 %v2776
        %v2873 = vunpack.c.l.b16 %v2777
        %v2874 = vunpack.c.l.b16 %v2778
        %v2875 = vunpack.c.l.b16 %v2779
        %v2876 = vunpack.c.l.b16 %v2780
        %v2877 = vunpack.c.l.b16 %v2781
        %v2878 = vunpack.c.l.b16 %v2782
        %v2879 = vunpack.c.l.b16 %v2783
        %v2880 = vunpack.c.l.b16 %v2784
        %v2881 = vunpack.c.l.b16 %v2785
        %v2882 = vunpack.c.l.b16 %v2786
        %v2883 = vunpack.c.l.b16 %v2787
        %v2884 = vunpack.c.l.b16 %v2788
        %v2885 = vunpack.c.l.b16 %v2789
        %v2886 = vunpack.c.l.b16 %v2790
        %v2887 = vunpack.c.l.b16 %v2791
        %v2888 = vunpack.c.l.b16 %v2792
        %v2889 = vunpack.c.l.b16 %v2793
        %v2890 = vunpack.c.l.b16 %v2794
        %v2891 = vpack.c.b16 %v2844, %v2843
        %v2892 = vpack.c.b16 %v2846, %v2845
        %v2893 = vpack.c.b16 %v2848, %v2847
        %v2894 = vpack.c.b16 %v2850, %v2849
        %v2895 = vpack.c.b16 %v2852, %v2851
        %v2896 = vpack.c.b16 %v2854, %v2853
        %v2897 = vpack.c.b16 %v2856, %v2855
        %v2898 = vpack.c.b16 %v2858, %v2857
        %v2899 = vpack.c.b16 %v2860, %v2859
        %v2900 = vpack.c.b16 %v2862, %v2861
        %v2901 = vpack.c.b16 %v2864, %v2863
        %v2902 = vpack.c.b16 %v2866, %v2865
        %v2903 = vpack.c.b16 %v2868, %v2867
        %v2904 = vpack.c.b16 %v2870, %v2869
        %v2905 = vpack.c.b16 %v2872, %v2871
        %v2906 = vpack.c.b16 %v2874, %v2873
        %v2907 = vpack.c.b16 %v2876, %v2875
        %v2908 = vpack.c.b16 %v2878, %v2877
        %v2909 = vpack.c.b16 %v2880, %v2879
        %v2910 = vpack.c.b16 %v2882, %v2881
        %v2911 = vpack.c.b16 %v2884, %v2883
        %v2912 = vpack.c.b16 %v2886, %v2885
        %v2913 = vpack.c.b16 %v2888, %v2887
        %v2914 = vpack.c.b16 %v2890, %v2889
        %2939 = vmatprep.subr.bf16.mxu0 0
        %2940 = vmatpush1.bf16.msra.mxu0 %v2891
        %2941 = vmatprep.subr.bf16.mxu0 0
        %2942 = vmatpush1.bf16.msra.mxu0 %v2892
        %2943 = vmatprep.subr.bf16.mxu0 0
        %2944 = vmatpush1.bf16.msra.mxu0 %v2893
        %2945 = vmatprep.subr.bf16.mxu0 0
        %2946 = vmatpush1.bf16.msra.mxu0 %v2894
        %2947 = vmatprep.subr.bf16.mxu0 0
        %2948 = vmatpush1.bf16.msra.mxu0 %v2895
        %2949 = vmatprep.subr.bf16.mxu0 0
        %2950 = vmatpush1.bf16.msra.mxu0 %v2896
        %2951 = vmatprep.subr.bf16.mxu0 0
        %2952 = vmatpush1.bf16.msra.mxu0 %v2897
        %2953 = vmatprep.subr.bf16.mxu0 0
        %2954 = vmatpush1.bf16.msra.mxu0 %v2898
        %2955 = vmatprep.subr.bf16.mxu0 0
        %2956 = vmatpush1.bf16.msra.mxu0 %v2899
        %2957 = vmatprep.subr.bf16.mxu0 0
        %2958 = vmatpush1.bf16.msra.mxu0 %v2900
        %2959 = vmatprep.subr.bf16.mxu0 0
        %2960 = vmatpush1.bf16.msra.mxu0 %v2901
        %2961 = vmatprep.subr.bf16.mxu0 0
        %2962 = vmatpush1.bf16.msra.mxu0 %v2902
        %2963 = vmatprep.subr.bf16.mxu0 0
        %2964 = vmatpush1.bf16.msra.mxu0 %v2903
        %2965 = vmatprep.subr.bf16.mxu0 0
        %2966 = vmatpush1.bf16.msra.mxu0 %v2904
        %2967 = vmatprep.subr.bf16.mxu0 0
        %2968 = vmatpush1.bf16.msra.mxu0 %v2905
        %2969 = vmatprep.subr.bf16.mxu0 0
        %2970 = vmatpush1.bf16.msra.mxu0 %v2906
        %2971 = vmatprep.mubr.bf16.mxu0 %v2699
        %2972 = vmatmul.mubr.bf16.gmra.mrb[0].mxu0 %v2698
        %v2973 = vpop.f32.mrb[0].mxu0
        %v2974 = vadd.f32 0.0, %v2973
        %v2975 = vpop.f32.mrb[0].mxu0
        %v2976 = vpop.f32.mrb[0].mxu0
        %v2977 = vadd.f32 0.0, %v2976
        %v2978 = vpop.f32.mrb[0].mxu0
        %2979 = vmatprep.mubr.bf16.mxu0 %v2702
        %2980 = vmatmul.mubr.bf16.gmra.mrb[0].mxu0 %v2701
        %v2981 = vpop.f32.mrb[0].mxu0
        %v2982 = vadd.f32 0.0, %v2981
        %v2983 = vpop.f32.mrb[0].mxu0
        %v2984 = vpop.f32.mrb[0].mxu0
        %v2985 = vadd.f32 0.0, %v2984
        %v2986 = vpop.f32.mrb[0].mxu0
        %2987 = vmatprep.mubr.bf16.mxu0 %v2705
        %2988 = vmatmul.mubr.bf16.gmra.mrb[0].mxu0 %v2704
        %v2989 = vpop.f32.mrb[0].mxu0
        %v2990 = vadd.f32 0.0, %v2989
        %v2991 = vpop.f32.mrb[0].mxu0
        %v2992 = vpop.f32.mrb[0].mxu0
        %v2993 = vadd.f32 0.0, %v2992
        %v2994 = vpop.f32.mrb[0].mxu0
        %2995 = vmatprep.mubr.bf16.mxu0 %v2708
        %2996 = vmatmul.mubr.bf16.gmra.mrb[0].mxu0 %v2707
        %v2997 = vpop.f32.mrb[0].mxu0
        %v2998 = vadd.f32 0.0, %v2997
        %v2999 = vpop.f32.mrb[0].mxu0
        %v3000 = vpop.f32.mrb[0].mxu0
        %v3001 = vadd.f32 0.0, %v3000
        %v3002 = vpop.f32.mrb[0].mxu0
        %3003 = vmatprep.mubr.bf16.mxu0 %v2711
        %3004 = vmatmul.mubr.bf16.gmra.mrb[0].mxu0 %v2710
        %v3005 = vpop.f32.mrb[0].mxu0
        %v3006 = vadd.f32 0.0, %v3005
        %v3007 = vpop.f32.mrb[0].mxu0
        %v3008 = vpop.f32.mrb[0].mxu0
        %v3009 = vadd.f32 0.0, %v3008
        %v3010 = vpop.f32.mrb[0].mxu0
        %3011 = vmatprep.mubr.bf16.mxu0 %v2714
        %3012 = vmatmul.mubr.bf16.gmra.mrb[0].mxu0 %v2713
        %v3013 = vpop.f32.mrb[0].mxu0
        %v3014 = vadd.f32 0.0, %v3013
        %v3015 = vpop.f32.mrb[0].mxu0
        %v3016 = vpop.f32.mrb[0].mxu0
        %v3017 = vadd.f32 0.0, %v3016
        %v3018 = vpop.f32.mrb[0].mxu0
        %3019 = vmatprep.mubr.bf16.mxu0 %v2717
        %3020 = vmatmul.mubr.bf16.gmra.mrb[0].mxu0 %v2716
        %v3021 = vpop.f32.mrb[0].mxu0
        %v3022 = vadd.f32 0.0, %v3021
        %v3023 = vpop.f32.mrb[0].mxu0
        %v3024 = vpop.f32.mrb[0].mxu0
        %v3025 = vadd.f32 0.0, %v3024
        %v3026 = vpop.f32.mrb[0].mxu0
        %3027 = vmatprep.mubr.bf16.mxu0 %v2720
        %3028 = vmatmul.mubr.bf16.gmra.mrb[0].mxu0 %v2719
        %v3029 = vpop.f32.mrb[0].mxu0
        %v3030 = vadd.f32 0.0, %v3029
        %v3031 = vpop.f32.mrb[0].mxu0
        %v3032 = vpop.f32.mrb[0].mxu0
        %v3033 = vadd.f32 0.0, %v3032
        %v3034 = vpop.f32.mrb[0].mxu0
        %3035 = vmatprep.mubr.bf16.mxu0 %v2723
        %3036 = vmatmul.mubr.bf16.gmra.mrb[0].mxu0 %v2722
        %v3037 = vpop.f32.mrb[0].mxu0
        %v3038 = vadd.f32 0.0, %v3037
        %v3039 = vpop.f32.mrb[0].mxu0
        %v3040 = vpop.f32.mrb[0].mxu0
        %v3041 = vadd.f32 0.0, %v3040
        %v3042 = vpop.f32.mrb[0].mxu0
        %3043 = vmatprep.mubr.bf16.mxu0 %v2726
        %3044 = vmatmul.mubr.bf16.gmra.mrb[0].mxu0 %v2725
        %v3045 = vpop.f32.mrb[0].mxu0
        %v3046 = vadd.f32 0.0, %v3045
        %v3047 = vpop.f32.mrb[0].mxu0
        %v3048 = vpop.f32.mrb[0].mxu0
        %v3049 = vadd.f32 0.0, %v3048
        %v3050 = vpop.f32.mrb[0].mxu0
        %3051 = vmatprep.mubr.bf16.mxu0 %v2729
        %3052 = vmatmul.mubr.bf16.gmra.mrb[0].mxu0 %v2728
        %v3053 = vpop.f32.mrb[0].mxu0
        %v3054 = vadd.f32 0.0, %v3053
        %v3055 = vpop.f32.mrb[0].mxu0
        %v3056 = vpop.f32.mrb[0].mxu0
        %v3057 = vadd.f32 0.0, %v3056
        %v3058 = vpop.f32.mrb[0].mxu0
        %3059 = vmatprep.mubr.bf16.mxu0 %v2732
        %3060 = vmatmul.mubr.bf16.gmra.mrb[0].mxu0 %v2731
        %v3061 = vpop.f32.mrb[0].mxu0
        %v3062 = vadd.f32 0.0, %v3061
        %v3063 = vpop.f32.mrb[0].mxu0
        %v3064 = vpop.f32.mrb[0].mxu0
        %v3065 = vadd.f32 0.0, %v3064
        %v3066 = vpop.f32.mrb[0].mxu0
        %3067 = vmatprep.mubr.bf16.mxu0 %v2735
        %3068 = vmatmul.mubr.bf16.gmra.mrb[0].mxu0 %v2734
        %v3069 = vpop.f32.mrb[0].mxu0
        %v3070 = vadd.f32 0.0, %v3069
        %v3071 = vpop.f32.mrb[0].mxu0
        %v3072 = vpop.f32.mrb[0].mxu0
        %v3073 = vadd.f32 0.0, %v3072
        %v3074 = vpop.f32.mrb[0].mxu0
        %3075 = vmatprep.mubr.bf16.mxu0 %v2738
        %3076 = vmatmul.mubr.bf16.gmra.mrb[0].mxu0 %v2737
        %v3077 = vpop.f32.mrb[0].mxu0
        %v3078 = vadd.f32 0.0, %v3077
        %v3079 = vpop.f32.mrb[0].mxu0
        %v3080 = vpop.f32.mrb[0].mxu0
        %v3081 = vadd.f32 0.0, %v3080
        %v3082 = vpop.f32.mrb[0].mxu0
        %3083 = vmatprep.mubr.bf16.mxu0 %v2741
        %3084 = vmatmul.mubr.bf16.gmra.mrb[0].mxu0 %v2740
        %v3085 = vpop.f32.mrb[0].mxu0
        %v3086 = vadd.f32 0.0, %v3085
        %v3087 = vpop.f32.mrb[0].mxu0
        %v3088 = vpop.f32.mrb[0].mxu0
        %v3089 = vadd.f32 0.0, %v3088
        %v3090 = vpop.f32.mrb[0].mxu0
        %3091 = vmatprep.mubr.bf16.mxu0 %v2744
        %3092 = vmatmul.mubr.bf16.gmra.mrb[0].mxu0 %v2743
        %v3093 = vpop.f32.mrb[0].mxu0
        %v3094 = vadd.f32 0.0, %v3093
        %v3095 = vpop.f32.mrb[0].mxu0
        %v3096 = vpop.f32.mrb[0].mxu0
        %v3097 = vadd.f32 0.0, %v3096
        %v3098 = vpop.f32.mrb[0].mxu0
        %3099 = vdwg.mxu0
        %3100 = vmatprep.subr.bf16.mxu0 0
        %3101 = vmatpush1.bf16.msra.mxu0 %v2907
        %3102 = vmatprep.subr.bf16.mxu0 0
        %3103 = vmatpush1.bf16.msra.mxu0 %v2908
        %3104 = vmatprep.subr.bf16.mxu0 0
        %3105 = vmatpush1.bf16.msra.mxu0 %v2909
        %3106 = vmatprep.subr.bf16.mxu0 0
        %3107 = vmatpush1.bf16.msra.mxu0 %v2910
        %3108 = vmatprep.subr.bf16.mxu0 0
        %3109 = vmatpush1.bf16.msra.mxu0 %v2911
        %3110 = vmatprep.subr.bf16.mxu0 0
        %3111 = vmatpush1.bf16.msra.mxu0 %v2912
        %3112 = vmatprep.subr.bf16.mxu0 0
        %3113 = vmatpush1.bf16.msra.mxu0 %v2913
        %3114 = vmatprep.subr.bf16.mxu0 0
        %3115 = vmatpush1.bf16.msra.mxu0 %v2914
        %3116 = vmatprep.subr.bf16.mxu0 0
        %3117 = vmatpush1.bf16.msra.mxu0 0
        %3118 = vmatprep.subr.bf16.mxu0 0
        %3119 = vmatpush1.bf16.msra.mxu0 0
        %3120 = vmatprep.subr.bf16.mxu0 0
        %3121 = vmatpush1.bf16.msra.mxu0 0
        %3122 = vmatprep.subr.bf16.mxu0 0
        %3123 = vmatpush1.bf16.msra.mxu0 0
        %3124 = vmatprep.subr.bf16.mxu0 0
        %3125 = vmatpush1.bf16.msra.mxu0 0
        %3126 = vmatprep.subr.bf16.mxu0 0
        %3127 = vmatpush1.bf16.msra.mxu0 0
        %3128 = vmatprep.subr.bf16.mxu0 0
        %3129 = vmatpush1.bf16.msra.mxu0 0
        %3130 = vmatprep.subr.bf16.mxu0 0
        %3131 = vmatpush1.bf16.msra.mxu0 0
        %3132 = vmatprep.mubr.bf16.mxu0 0
        %3133 = vmatmul.mubr.bf16.gmra.mrb[0].mxu0 %v2700
        %v3134 = vpop.f32.mrb[0].mxu0
        %v3135 = vadd.f32 %v2974, %v3134
        %v3136 = vpop.f32.mrb[0].mxu0
        %v3137 = vpop.f32.mrb[0].mxu0
        %v3138 = vadd.f32 %v2977, %v3137
        %v3139 = vpop.f32.mrb[0].mxu0
        %3140 = vmatprep.mubr.bf16.mxu0 0
        %3141 = vmatmul.mubr.bf16.gmra.mrb[0].mxu0 %v2703
        %v3142 = vpop.f32.mrb[0].mxu0
        %v3143 = vadd.f32 %v2982, %v3142
        %v3144 = vpop.f32.mrb[0].mxu0
        %v3145 = vpop.f32.mrb[0].mxu0
        %v3146 = vadd.f32 %v2985, %v3145
        %v3147 = vpop.f32.mrb[0].mxu0
        %3148 = vmatprep.mubr.bf16.mxu0 0
        %3149 = vmatmul.mubr.bf16.gmra.mrb[0].mxu0 %v2706
        %v3150 = vpop.f32.mrb[0].mxu0
        %v3151 = vadd.f32 %v2990, %v3150
        %v3152 = vpop.f32.mrb[0].mxu0
        %v3153 = vpop.f32.mrb[0].mxu0
        %v3154 = vadd.f32 %v2993, %v3153
        %v3155 = vpop.f32.mrb[0].mxu0
        %3156 = vmatprep.mubr.bf16.mxu0 0
        %3157 = vmatmul.mubr.bf16.gmra.mrb[0].mxu0 %v2709
        %v3158 = vpop.f32.mrb[0].mxu0
        %v3159 = vadd.f32 %v2998, %v3158
        %v3160 = vpop.f32.mrb[0].mxu0
        %v3161 = vpop.f32.mrb[0].mxu0
        %v3162 = vadd.f32 %v3001, %v3161
        %v3163 = vpop.f32.mrb[0].mxu0
        %3164 = vmatprep.mubr.bf16.mxu0 0
        %3165 = vmatmul.mubr.bf16.gmra.mrb[0].mxu0 %v2712
        %v3166 = vpop.f32.mrb[0].mxu0
        %v3167 = vadd.f32 %v3006, %v3166
        %v3168 = vpop.f32.mrb[0].mxu0
        %v3169 = vpop.f32.mrb[0].mxu0
        %v3170 = vadd.f32 %v3009, %v3169
        %v3171 = vpop.f32.mrb[0].mxu0
        %3172 = vmatprep.mubr.bf16.mxu0 0
        %3173 = vmatmul.mubr.bf16.gmra.mrb[0].mxu0 %v2715
        %v3174 = vpop.f32.mrb[0].mxu0
        %v3175 = vadd.f32 %v3014, %v3174
        %v3176 = vpop.f32.mrb[0].mxu0
        %v3177 = vpop.f32.mrb[0].mxu0
        %v3178 = vadd.f32 %v3017, %v3177
        %v3179 = vpop.f32.mrb[0].mxu0
        %3180 = vmatprep.mubr.bf16.mxu0 0
        %3181 = vmatmul.mubr.bf16.gmra.mrb[0].mxu0 %v2718
        %v3182 = vpop.f32.mrb[0].mxu0
        %v3183 = vadd.f32 %v3022, %v3182
        %v3184 = vpop.f32.mrb[0].mxu0
        %v3185 = vpop.f32.mrb[0].mxu0
        %v3186 = vadd.f32 %v3025, %v3185
        %v3187 = vpop.f32.mrb[0].mxu0
        %3188 = vmatprep.mubr.bf16.mxu0 0
        %3189 = vmatmul.mubr.bf16.gmra.mrb[0].mxu0 %v2721
        %v3190 = vpop.f32.mrb[0].mxu0
        %v3191 = vadd.f32 %v3030, %v3190
        %v3192 = vpop.f32.mrb[0].mxu0
        %v3193 = vpop.f32.mrb[0].mxu0
        %v3194 = vadd.f32 %v3033, %v3193
        %v3195 = vpop.f32.mrb[0].mxu0
        %3196 = vmatprep.mubr.bf16.mxu0 0
        %3197 = vmatmul.mubr.bf16.gmra.mrb[0].mxu0 %v2724
        %v3198 = vpop.f32.mrb[0].mxu0
        %v3199 = vadd.f32 %v3038, %v3198
        %v3200 = vpop.f32.mrb[0].mxu0
        %v3201 = vpop.f32.mrb[0].mxu0
        %v3202 = vadd.f32 %v3041, %v3201
        %v3203 = vpop.f32.mrb[0].mxu0
        %3204 = vmatprep.mubr.bf16.mxu0 0
        %3205 = vmatmul.mubr.bf16.gmra.mrb[0].mxu0 %v2727
        %v3206 = vpop.f32.mrb[0].mxu0
        %v3207 = vadd.f32 %v3046, %v3206
        %v3208 = vpop.f32.mrb[0].mxu0
        %v3209 = vpop.f32.mrb[0].mxu0
        %v3210 = vadd.f32 %v3049, %v3209
        %v3211 = vpop.f32.mrb[0].mxu0
        %3212 = vmatprep.mubr.bf16.mxu0 0
        %3213 = vmatmul.mubr.bf16.gmra.mrb[0].mxu0 %v2730
        %v3214 = vpop.f32.mrb[0].mxu0
        %v3215 = vadd.f32 %v3054, %v3214
        %v3216 = vpop.f32.mrb[0].mxu0
        %v3217 = vpop.f32.mrb[0].mxu0
        %v3218 = vadd.f32 %v3057, %v3217
        %v3219 = vpop.f32.mrb[0].mxu0
        %3220 = vmatprep.mubr.bf16.mxu0 0
        %3221 = vmatmul.mubr.bf16.gmra.mrb[0].mxu0 %v2733
        %v3222 = vpop.f32.mrb[0].mxu0
        %v3223 = vadd.f32 %v3062, %v3222
        %v3224 = vpop.f32.mrb[0].mxu0
        %v3225 = vpop.f32.mrb[0].mxu0
        %v3226 = vadd.f32 %v3065, %v3225
        %v3227 = vpop.f32.mrb[0].mxu0
        %3228 = vmatprep.mubr.bf16.mxu0 0
        %3229 = vmatmul.mubr.bf16.gmra.mrb[0].mxu0 %v2736
        %v3230 = vpop.f32.mrb[0].mxu0
        %v3231 = vadd.f32 %v3070, %v3230
        %v3232 = vpop.f32.mrb[0].mxu0
        %v3233 = vpop.f32.mrb[0].mxu0
        %v3234 = vadd.f32 %v3073, %v3233
        %v3235 = vpop.f32.mrb[0].mxu0
        %3236 = vmatprep.mubr.bf16.mxu0 0
        %3237 = vmatmul.mubr.bf16.gmra.mrb[0].mxu0 %v2739
        %v3238 = vpop.f32.mrb[0].mxu0
        %v3239 = vadd.f32 %v3078, %v3238
        %v3240 = vpop.f32.mrb[0].mxu0
        %v3241 = vpop.f32.mrb[0].mxu0
        %v3242 = vadd.f32 %v3081, %v3241
        %v3243 = vpop.f32.mrb[0].mxu0
        %3244 = vmatprep.mubr.bf16.mxu0 0
        %3245 = vmatmul.mubr.bf16.gmra.mrb[0].mxu0 %v2742
        %v3246 = vpop.f32.mrb[0].mxu0
        %v3247 = vadd.f32 %v3086, %v3246
        %v3248 = vpop.f32.mrb[0].mxu0
        %v3249 = vpop.f32.mrb[0].mxu0
        %v3250 = vadd.f32 %v3089, %v3249
        %v3251 = vpop.f32.mrb[0].mxu0
        %3252 = vmatprep.mubr.bf16.mxu0 0
        %3253 = vmatmul.mubr.bf16.gmra.mrb[0].mxu0 %v2745
        %v3254 = vpop.f32.mrb[0].mxu0
        %v3255 = vadd.f32 %v3094, %v3254
        %v3256 = vpop.f32.mrb[0].mxu0
        %v3257 = vpop.f32.mrb[0].mxu0
        %v3258 = vadd.f32 %v3097, %v3257
        %v3259 = vpop.f32.mrb[0].mxu0
        %3260 = vdwg.mxu0
        %v3309 = vunpack.c.l.b16 %v1850
        %v3310 = vunpack.c.l.b16 %v1851
        %v3311 = vunpack.c.l.b16 %v1852
        %v3312 = vunpack.c.l.b16 %v1853
        %v3313 = vunpack.c.l.b16 %v1854
        %v3314 = vunpack.c.l.b16 %v1855
        %v3315 = vunpack.c.l.b16 %v1856
        %v3316 = vunpack.c.l.b16 %v1857
        %v3317 = vunpack.c.l.b16 %v1858
        %v3318 = vunpack.c.l.b16 %v1859
        %v3319 = vunpack.c.l.b16 %v1860
        %v3320 = vunpack.c.l.b16 %v1861
        %v3321 = vunpack.c.l.b16 %v1862
        %v3322 = vunpack.c.l.b16 %v1863
        %v3323 = vunpack.c.l.b16 %v1864
        %v3324 = vunpack.c.l.b16 %v1865
        %v3325 = vunpack.c.l.b16 %v1866
        %v3326 = vunpack.c.l.b16 %v1867
        %v3327 = vunpack.c.l.b16 %v1868
        %v3328 = vunpack.c.l.b16 %v1869
        %v3329 = vunpack.c.l.b16 %v1870
        %v3330 = vunpack.c.l.b16 %v1871
        %v3331 = vunpack.c.l.b16 %v1872
        %v3332 = vunpack.c.l.b16 %v1873
        %v3333 = vunpack.c.l.b16 %v1874
        %v3334 = vunpack.c.l.b16 %v1875
        %v3335 = vunpack.c.l.b16 %v1876
        %v3336 = vunpack.c.l.b16 %v1877
        %v3337 = vunpack.c.l.b16 %v1878
        %v3338 = vunpack.c.l.b16 %v1879
        %v3339 = vunpack.c.l.b16 %v1880
        %v3340 = vunpack.c.l.b16 %v1881
        %v3341 = vunpack.c.l.b16 %v1882
        %v3342 = vunpack.c.l.b16 %v1883
        %v3343 = vunpack.c.l.b16 %v1884
        %v3344 = vunpack.c.l.b16 %v1885
        %v3345 = vunpack.c.l.b16 %v1886
        %v3346 = vunpack.c.l.b16 %v1887
        %v3347 = vunpack.c.l.b16 %v1888
        %v3348 = vunpack.c.l.b16 %v1889
        %v3349 = vunpack.c.l.b16 %v1890
        %v3350 = vunpack.c.l.b16 %v1891
        %v3351 = vunpack.c.l.b16 %v1892
        %v3352 = vunpack.c.l.b16 %v1893
        %v3353 = vunpack.c.l.b16 %v1894
        %v3354 = vunpack.c.l.b16 %v1895
        %v3355 = vunpack.c.l.b16 %v1896
        %v3356 = vunpack.c.l.b16 %v1897
        %v3357 = vpack.c.b16 %v3310, %v3309
        %v3358 = vpack.c.b16 %v3312, %v3311
        %v3359 = vpack.c.b16 %v3314, %v3313
        %v3360 = vpack.c.b16 %v3316, %v3315
        %v3361 = vpack.c.b16 %v3318, %v3317
        %v3362 = vpack.c.b16 %v3320, %v3319
        %v3363 = vpack.c.b16 %v3322, %v3321
        %v3364 = vpack.c.b16 %v3324, %v3323
        %v3365 = vpack.c.b16 %v3326, %v3325
        %v3366 = vpack.c.b16 %v3328, %v3327
        %v3367 = vpack.c.b16 %v3330, %v3329
        %v3368 = vpack.c.b16 %v3332, %v3331
        %v3369 = vpack.c.b16 %v3334, %v3333
        %v3370 = vpack.c.b16 %v3336, %v3335
        %v3371 = vpack.c.b16 %v3338, %v3337
        %v3372 = vpack.c.b16 %v3340, %v3339
        %v3373 = vpack.c.b16 %v3342, %v3341
        %v3374 = vpack.c.b16 %v3344, %v3343
        %v3375 = vpack.c.b16 %v3346, %v3345
        %v3376 = vpack.c.b16 %v3348, %v3347
        %v3377 = vpack.c.b16 %v3350, %v3349
        %v3378 = vpack.c.b16 %v3352, %v3351
        %v3379 = vpack.c.b16 %v3354, %v3353
        %v3380 = vpack.c.b16 %v3356, %v3355
        %3405 = vmatprep.subr.bf16.mxu0 0
        %3406 = vmatpush1.bf16.msra.mxu0 %v3357
        %3407 = vmatprep.subr.bf16.mxu0 0
        %3408 = vmatpush1.bf16.msra.mxu0 %v3358
        %3409 = vmatprep.subr.bf16.mxu0 0
        %3410 = vmatpush1.bf16.msra.mxu0 %v3359
        %3411 = vmatprep.subr.bf16.mxu0 0
        %3412 = vmatpush1.bf16.msra.mxu0 %v3360
        %3413 = vmatprep.subr.bf16.mxu0 0
        %3414 = vmatpush1.bf16.msra.mxu0 %v3361
        %3415 = vmatprep.subr.bf16.mxu0 0
        %3416 = vmatpush1.bf16.msra.mxu0 %v3362
        %3417 = vmatprep.subr.bf16.mxu0 0
        %3418 = vmatpush1.bf16.msra.mxu0 %v3363
        %3419 = vmatprep.subr.bf16.mxu0 0
        %3420 = vmatpush1.bf16.msra.mxu0 %v3364
        %3421 = vmatprep.subr.bf16.mxu0 0
        %3422 = vmatpush1.bf16.msra.mxu0 %v3365
        %3423 = vmatprep.subr.bf16.mxu0 0
        %3424 = vmatpush1.bf16.msra.mxu0 %v3366
        %3425 = vmatprep.subr.bf16.mxu0 0
        %3426 = vmatpush1.bf16.msra.mxu0 %v3367
        %3427 = vmatprep.subr.bf16.mxu0 0
        %3428 = vmatpush1.bf16.msra.mxu0 %v3368
        %3429 = vmatprep.subr.bf16.mxu0 0
        %3430 = vmatpush1.bf16.msra.mxu0 %v3369
        %3431 = vmatprep.subr.bf16.mxu0 0
        %3432 = vmatpush1.bf16.msra.mxu0 %v3370
        %3433 = vmatprep.subr.bf16.mxu0 0
        %3434 = vmatpush1.bf16.msra.mxu0 %v3371
        %3435 = vmatprep.subr.bf16.mxu0 0
        %3436 = vmatpush1.bf16.msra.mxu0 %v3372
        %3437 = vmatprep.mubr.bf16.mxu0 %v1803
        %3438 = vmatmul.mubr.bf16.gmra.mrb[0].mxu0 %v1802
        %v3439 = vpop.f32.mrb[0].mxu0
        %v3440 = vadd.f32 %v3135, %v3439
        %v3441 = vpop.f32.mrb[0].mxu0
        %v3442 = vpop.f32.mrb[0].mxu0
        %v3443 = vadd.f32 %v3138, %v3442
        %v3444 = vpop.f32.mrb[0].mxu0
        %3445 = vmatprep.mubr.bf16.mxu0 %v1806
        %3446 = vmatmul.mubr.bf16.gmra.mrb[0].mxu0 %v1805
        %v3447 = vpop.f32.mrb[0].mxu0
        %v3448 = vadd.f32 %v3143, %v3447
        %v3449 = vpop.f32.mrb[0].mxu0
        %v3450 = vpop.f32.mrb[0].mxu0
        %v3451 = vadd.f32 %v3146, %v3450
        %v3452 = vpop.f32.mrb[0].mxu0
        %3453 = vmatprep.mubr.bf16.mxu0 %v1809
        %3454 = vmatmul.mubr.bf16.gmra.mrb[0].mxu0 %v1808
        %v3455 = vpop.f32.mrb[0].mxu0
        %v3456 = vadd.f32 %v3151, %v3455
        %v3457 = vpop.f32.mrb[0].mxu0
        %v3458 = vpop.f32.mrb[0].mxu0
        %v3459 = vadd.f32 %v3154, %v3458
        %v3460 = vpop.f32.mrb[0].mxu0
        %3461 = vmatprep.mubr.bf16.mxu0 %v1812
        %3462 = vmatmul.mubr.bf16.gmra.mrb[0].mxu0 %v1811
        %v3463 = vpop.f32.mrb[0].mxu0
        %v3464 = vadd.f32 %v3159, %v3463
        %v3465 = vpop.f32.mrb[0].mxu0
        %v3466 = vpop.f32.mrb[0].mxu0
        %v3467 = vadd.f32 %v3162, %v3466
        %v3468 = vpop.f32.mrb[0].mxu0
        %3469 = vmatprep.mubr.bf16.mxu0 %v1815
        %3470 = vmatmul.mubr.bf16.gmra.mrb[0].mxu0 %v1814
        %v3471 = vpop.f32.mrb[0].mxu0
        %v3472 = vadd.f32 %v3167, %v3471
        %v3473 = vpop.f32.mrb[0].mxu0
        %v3474 = vpop.f32.mrb[0].mxu0
        %v3475 = vadd.f32 %v3170, %v3474
        %v3476 = vpop.f32.mrb[0].mxu0
        %3477 = vmatprep.mubr.bf16.mxu0 %v1818
        %3478 = vmatmul.mubr.bf16.gmra.mrb[0].mxu0 %v1817
        %v3479 = vpop.f32.mrb[0].mxu0
        %v3480 = vadd.f32 %v3175, %v3479
        %v3481 = vpop.f32.mrb[0].mxu0
        %v3482 = vpop.f32.mrb[0].mxu0
        %v3483 = vadd.f32 %v3178, %v3482
        %v3484 = vpop.f32.mrb[0].mxu0
        %3485 = vmatprep.mubr.bf16.mxu0 %v1821
        %3486 = vmatmul.mubr.bf16.gmra.mrb[0].mxu0 %v1820
        %v3487 = vpop.f32.mrb[0].mxu0
        %v3488 = vadd.f32 %v3183, %v3487
        %v3489 = vpop.f32.mrb[0].mxu0
        %v3490 = vpop.f32.mrb[0].mxu0
        %v3491 = vadd.f32 %v3186, %v3490
        %v3492 = vpop.f32.mrb[0].mxu0
        %3493 = vmatprep.mubr.bf16.mxu0 %v1824
        %3494 = vmatmul.mubr.bf16.gmra.mrb[0].mxu0 %v1823
        %v3495 = vpop.f32.mrb[0].mxu0
        %v3496 = vadd.f32 %v3191, %v3495
        %v3497 = vpop.f32.mrb[0].mxu0
        %v3498 = vpop.f32.mrb[0].mxu0
        %v3499 = vadd.f32 %v3194, %v3498
        %v3500 = vpop.f32.mrb[0].mxu0
        %3501 = vmatprep.mubr.bf16.mxu0 %v1827
        %3502 = vmatmul.mubr.bf16.gmra.mrb[0].mxu0 %v1826
        %v3503 = vpop.f32.mrb[0].mxu0
        %v3504 = vadd.f32 %v3199, %v3503
        %v3505 = vpop.f32.mrb[0].mxu0
        %v3506 = vpop.f32.mrb[0].mxu0
        %v3507 = vadd.f32 %v3202, %v3506
        %v3508 = vpop.f32.mrb[0].mxu0
        %3509 = vmatprep.mubr.bf16.mxu0 %v1830
        %3510 = vmatmul.mubr.bf16.gmra.mrb[0].mxu0 %v1829
        %v3511 = vpop.f32.mrb[0].mxu0
        %v3512 = vadd.f32 %v3207, %v3511
        %v3513 = vpop.f32.mrb[0].mxu0
        %v3514 = vpop.f32.mrb[0].mxu0
        %v3515 = vadd.f32 %v3210, %v3514
        %v3516 = vpop.f32.mrb[0].mxu0
        %3517 = vmatprep.mubr.bf16.mxu0 %v1833
        %3518 = vmatmul.mubr.bf16.gmra.mrb[0].mxu0 %v1832
        %v3519 = vpop.f32.mrb[0].mxu0
        %v3520 = vadd.f32 %v3215, %v3519
        %v3521 = vpop.f32.mrb[0].mxu0
        %v3522 = vpop.f32.mrb[0].mxu0
        %v3523 = vadd.f32 %v3218, %v3522
        %v3524 = vpop.f32.mrb[0].mxu0
        %3525 = vmatprep.mubr.bf16.mxu0 %v1836
        %3526 = vmatmul.mubr.bf16.gmra.mrb[0].mxu0 %v1835
        %v3527 = vpop.f32.mrb[0].mxu0
        %v3528 = vadd.f32 %v3223, %v3527
        %v3529 = vpop.f32.mrb[0].mxu0
        %v3530 = vpop.f32.mrb[0].mxu0
        %v3531 = vadd.f32 %v3226, %v3530
        %v3532 = vpop.f32.mrb[0].mxu0
        %3533 = vmatprep.mubr.bf16.mxu0 %v1839
        %3534 = vmatmul.mubr.bf16.gmra.mrb[0].mxu0 %v1838
        %v3535 = vpop.f32.mrb[0].mxu0
        %v3536 = vadd.f32 %v3231, %v3535
        %v3537 = vpop.f32.mrb[0].mxu0
        %v3538 = vpop.f32.mrb[0].mxu0
        %v3539 = vadd.f32 %v3234, %v3538
        %v3540 = vpop.f32.mrb[0].mxu0
        %3541 = vmatprep.mubr.bf16.mxu0 %v1842
        %3542 = vmatmul.mubr.bf16.gmra.mrb[0].mxu0 %v1841
        %v3543 = vpop.f32.mrb[0].mxu0
        %v3544 = vadd.f32 %v3239, %v3543
        %v3545 = vpop.f32.mrb[0].mxu0
        %v3546 = vpop.f32.mrb[0].mxu0
        %v3547 = vadd.f32 %v3242, %v3546
        %v3548 = vpop.f32.mrb[0].mxu0
        %3549 = vmatprep.mubr.bf16.mxu0 %v1845
        %3550 = vmatmul.mubr.bf16.gmra.mrb[0].mxu0 %v1844
        %v3551 = vpop.f32.mrb[0].mxu0
        %v3552 = vadd.f32 %v3247, %v3551
        %v3553 = vpop.f32.mrb[0].mxu0
        %v3554 = vpop.f32.mrb[0].mxu0
        %v3555 = vadd.f32 %v3250, %v3554
        %v3556 = vpop.f32.mrb[0].mxu0
        %3557 = vmatprep.mubr.bf16.mxu0 %v1848
        %3558 = vmatmul.mubr.bf16.gmra.mrb[0].mxu0 %v1847
        %v3559 = vpop.f32.mrb[0].mxu0
        %v3560 = vadd.f32 %v3255, %v3559
        %v3561 = vpop.f32.mrb[0].mxu0
        %v3562 = vpop.f32.mrb[0].mxu0
        %v3563 = vadd.f32 %v3258, %v3562
        %v3564 = vpop.f32.mrb[0].mxu0
        %3565 = vdwg.mxu0
        %3566 = vmatprep.subr.bf16.mxu0 0
        %3567 = vmatpush1.bf16.msra.mxu0 %v3373
        %3568 = vmatprep.subr.bf16.mxu0 0
        %3569 = vmatpush1.bf16.msra.mxu0 %v3374
        %3570 = vmatprep.subr.bf16.mxu0 0
        %3571 = vmatpush1.bf16.msra.mxu0 %v3375
        %3572 = vmatprep.subr.bf16.mxu0 0
        %3573 = vmatpush1.bf16.msra.mxu0 %v3376
        %3574 = vmatprep.subr.bf16.mxu0 0
        %3575 = vmatpush1.bf16.msra.mxu0 %v3377
        %3576 = vmatprep.subr.bf16.mxu0 0
        %3577 = vmatpush1.bf16.msra.mxu0 %v3378
        %3578 = vmatprep.subr.bf16.mxu0 0
        %3579 = vmatpush1.bf16.msra.mxu0 %v3379
        %3580 = vmatprep.subr.bf16.mxu0 0
        %3581 = vmatpush1.bf16.msra.mxu0 %v3380
        %3582 = vmatprep.subr.bf16.mxu0 0
        %3583 = vmatpush1.bf16.msra.mxu0 0
        %3584 = vmatprep.subr.bf16.mxu0 0
        %3585 = vmatpush1.bf16.msra.mxu0 0
        %3586 = vmatprep.subr.bf16.mxu0 0
        %3587 = vmatpush1.bf16.msra.mxu0 0
        %3588 = vmatprep.subr.bf16.mxu0 0
        %3589 = vmatpush1.bf16.msra.mxu0 0
        %3590 = vmatprep.subr.bf16.mxu0 0
        %3591 = vmatpush1.bf16.msra.mxu0 0
        %3592 = vmatprep.subr.bf16.mxu0 0
        %3593 = vmatpush1.bf16.msra.mxu0 0
        %3594 = vmatprep.subr.bf16.mxu0 0
        %3595 = vmatpush1.bf16.msra.mxu0 0
        %3596 = vmatprep.subr.bf16.mxu0 0
        %3597 = vmatpush1.bf16.msra.mxu0 0
        %3598 = vmatprep.mubr.bf16.mxu0 0
        %3599 = vmatmul.mubr.bf16.gmra.mrb[0].mxu0 %v1804
        %v3600 = vpop.f32.mrb[0].mxu0
        %v3601 = vadd.f32 %v3440, %v3600
        %v3602 = vpop.f32.mrb[0].mxu0
        %v3603 = vpop.f32.mrb[0].mxu0
        %v3604 = vadd.f32 %v3443, %v3603
        %v3605 = vpop.f32.mrb[0].mxu0
        %3606 = vmatprep.mubr.bf16.mxu0 0
        %3607 = vmatmul.mubr.bf16.gmra.mrb[0].mxu0 %v1807
        %v3608 = vpop.f32.mrb[0].mxu0
        %v3609 = vadd.f32 %v3448, %v3608
        %v3610 = vpop.f32.mrb[0].mxu0
        %v3611 = vpop.f32.mrb[0].mxu0
        %v3612 = vadd.f32 %v3451, %v3611
        %v3613 = vpop.f32.mrb[0].mxu0
        %3614 = vmatprep.mubr.bf16.mxu0 0
        %3615 = vmatmul.mubr.bf16.gmra.mrb[0].mxu0 %v1810
        %v3616 = vpop.f32.mrb[0].mxu0
        %v3617 = vadd.f32 %v3456, %v3616
        %v3618 = vpop.f32.mrb[0].mxu0
        %v3619 = vpop.f32.mrb[0].mxu0
        %v3620 = vadd.f32 %v3459, %v3619
        %v3621 = vpop.f32.mrb[0].mxu0
        %3622 = vmatprep.mubr.bf16.mxu0 0
        %3623 = vmatmul.mubr.bf16.gmra.mrb[0].mxu0 %v1813
        %v3624 = vpop.f32.mrb[0].mxu0
        %v3625 = vadd.f32 %v3464, %v3624
        %v3626 = vpop.f32.mrb[0].mxu0
        %v3627 = vpop.f32.mrb[0].mxu0
        %v3628 = vadd.f32 %v3467, %v3627
        %v3629 = vpop.f32.mrb[0].mxu0
        %3630 = vmatprep.mubr.bf16.mxu0 0
        %3631 = vmatmul.mubr.bf16.gmra.mrb[0].mxu0 %v1816
        %v3632 = vpop.f32.mrb[0].mxu0
        %v3633 = vadd.f32 %v3472, %v3632
        %v3634 = vpop.f32.mrb[0].mxu0
        %v3635 = vpop.f32.mrb[0].mxu0
        %v3636 = vadd.f32 %v3475, %v3635
        %v3637 = vpop.f32.mrb[0].mxu0
        %3638 = vmatprep.mubr.bf16.mxu0 0
        %3639 = vmatmul.mubr.bf16.gmra.mrb[0].mxu0 %v1819
        %v3640 = vpop.f32.mrb[0].mxu0
        %v3641 = vadd.f32 %v3480, %v3640
        %v3642 = vpop.f32.mrb[0].mxu0
        %v3643 = vpop.f32.mrb[0].mxu0
        %v3644 = vadd.f32 %v3483, %v3643
        %v3645 = vpop.f32.mrb[0].mxu0
        %3646 = vmatprep.mubr.bf16.mxu0 0
        %3647 = vmatmul.mubr.bf16.gmra.mrb[0].mxu0 %v1822
        %v3648 = vpop.f32.mrb[0].mxu0
        %v3649 = vadd.f32 %v3488, %v3648
        %v3650 = vpop.f32.mrb[0].mxu0
        %v3651 = vpop.f32.mrb[0].mxu0
        %v3652 = vadd.f32 %v3491, %v3651
        %v3653 = vpop.f32.mrb[0].mxu0
        %3654 = vmatprep.mubr.bf16.mxu0 0
        %3655 = vmatmul.mubr.bf16.gmra.mrb[0].mxu0 %v1825
        %v3656 = vpop.f32.mrb[0].mxu0
        %v3657 = vadd.f32 %v3496, %v3656
        %v3658 = vpop.f32.mrb[0].mxu0
        %v3659 = vpop.f32.mrb[0].mxu0
        %v3660 = vadd.f32 %v3499, %v3659
        %v3661 = vpop.f32.mrb[0].mxu0
        %3662 = vmatprep.mubr.bf16.mxu0 0
        %3663 = vmatmul.mubr.bf16.gmra.mrb[0].mxu0 %v1828
        %v3664 = vpop.f32.mrb[0].mxu0
        %v3665 = vadd.f32 %v3504, %v3664
        %v3666 = vpop.f32.mrb[0].mxu0
        %v3667 = vpop.f32.mrb[0].mxu0
        %v3668 = vadd.f32 %v3507, %v3667
        %v3669 = vpop.f32.mrb[0].mxu0
        %3670 = vmatprep.mubr.bf16.mxu0 0
        %3671 = vmatmul.mubr.bf16.gmra.mrb[0].mxu0 %v1831
        %v3672 = vpop.f32.mrb[0].mxu0
        %v3673 = vadd.f32 %v3512, %v3672
        %v3674 = vpop.f32.mrb[0].mxu0
        %v3675 = vpop.f32.mrb[0].mxu0
        %v3676 = vadd.f32 %v3515, %v3675
        %v3677 = vpop.f32.mrb[0].mxu0
        %3678 = vmatprep.mubr.bf16.mxu0 0
        %3679 = vmatmul.mubr.bf16.gmra.mrb[0].mxu0 %v1834
        %v3680 = vpop.f32.mrb[0].mxu0
        %v3681 = vadd.f32 %v3520, %v3680
        %v3682 = vpop.f32.mrb[0].mxu0
        %v3683 = vpop.f32.mrb[0].mxu0
        %v3684 = vadd.f32 %v3523, %v3683
        %v3685 = vpop.f32.mrb[0].mxu0
        %3686 = vmatprep.mubr.bf16.mxu0 0
        %3687 = vmatmul.mubr.bf16.gmra.mrb[0].mxu0 %v1837
        %v3688 = vpop.f32.mrb[0].mxu0
        %v3689 = vadd.f32 %v3528, %v3688
        %v3690 = vpop.f32.mrb[0].mxu0
        %v3691 = vpop.f32.mrb[0].mxu0
        %v3692 = vadd.f32 %v3531, %v3691
        %v3693 = vpop.f32.mrb[0].mxu0
        %3694 = vmatprep.mubr.bf16.mxu0 0
        %3695 = vmatmul.mubr.bf16.gmra.mrb[0].mxu0 %v1840
        %v3696 = vpop.f32.mrb[0].mxu0
        %v3697 = vadd.f32 %v3536, %v3696
        %v3698 = vpop.f32.mrb[0].mxu0
        %v3699 = vpop.f32.mrb[0].mxu0
        %v3700 = vadd.f32 %v3539, %v3699
        %v3701 = vpop.f32.mrb[0].mxu0
        %3702 = vmatprep.mubr.bf16.mxu0 0
        %3703 = vmatmul.mubr.bf16.gmra.mrb[0].mxu0 %v1843
        %v3704 = vpop.f32.mrb[0].mxu0
        %v3705 = vadd.f32 %v3544, %v3704
        %v3706 = vpop.f32.mrb[0].mxu0
        %v3707 = vpop.f32.mrb[0].mxu0
        %v3708 = vadd.f32 %v3547, %v3707
        %v3709 = vpop.f32.mrb[0].mxu0
        %3710 = vmatprep.mubr.bf16.mxu0 0
        %3711 = vmatmul.mubr.bf16.gmra.mrb[0].mxu0 %v1846
        %v3712 = vpop.f32.mrb[0].mxu0
        %v3713 = vadd.f32 %v3552, %v3712
        %v3714 = vpop.f32.mrb[0].mxu0
        %v3715 = vpop.f32.mrb[0].mxu0
        %v3716 = vadd.f32 %v3555, %v3715
        %v3717 = vpop.f32.mrb[0].mxu0
        %3718 = vmatprep.mubr.bf16.mxu0 0
        %3719 = vmatmul.mubr.bf16.gmra.mrb[0].mxu0 %v1849
        %v3720 = vpop.f32.mrb[0].mxu0
        %v3721 = vadd.f32 %v3560, %v3720
        %v3722 = vpop.f32.mrb[0].mxu0
        %v3723 = vpop.f32.mrb[0].mxu0
        %v3724 = vadd.f32 %v3563, %v3723
        %v3725 = vpop.f32.mrb[0].mxu0
        %3726 = vdwg.mxu0
        %s3727 = scalar_lea.vmem [#allocation2], 24
        %v3728 = vld [vmem:[%s3727] sm:$0xf]
        %v3729 = vld [vmem:[%s3727 + $0x4] sm:$0xf]
        %v3730 = vld [vmem:[%s3727 + $0xc] sm:$0xf]
        %v3731 = vld [vmem:[%s3727 + $0x10] sm:$0xf]
        %v3732 = vld [vmem:[%s3727 + $0x18] sm:$0xf]
        %v3733 = vld [vmem:[%s3727 + $0x1c] sm:$0xf]
        %v3734 = vld [vmem:[%s3727 + $0x24] sm:$0xf]
        %v3735 = vld [vmem:[%s3727 + $0x28] sm:$0xf]
        %v3736 = vld [vmem:[%s3727 + $0x30] sm:$0xf]
        %v3737 = vld [vmem:[%s3727 + $0x34] sm:$0xf]
        %v3738 = vld [vmem:[%s3727 + $0x3c] sm:$0xf]
        %v3739 = vld [vmem:[%s3727 + $0x40] sm:$0xf]
        %v3740 = vld [vmem:[%s3727 + $0x48] sm:$0xf]
        %v3741 = vld [vmem:[%s3727 + $0x4c] sm:$0xf]
        %v3742 = vld [vmem:[%s3727 + $0x54] sm:$0xf]
        %v3743 = vld [vmem:[%s3727 + $0x58] sm:$0xf]
        %v3744 = vld [vmem:[%s3727 + $0x60] sm:$0xf]
        %v3745 = vld [vmem:[%s3727 + $0x64] sm:$0xf]
        %v3746 = vld [vmem:[%s3727 + $0x6c] sm:$0xf]
        %v3747 = vld [vmem:[%s3727 + $0x70] sm:$0xf]
        %v3748 = vld [vmem:[%s3727 + $0x78] sm:$0xf]
        %v3749 = vld [vmem:[%s3727 + $0x7c] sm:$0xf]
        %v3750 = vld [vmem:[%s3727 + $0x84] sm:$0xf]
        %v3751 = vld [vmem:[%s3727 + $0x88] sm:$0xf]
        %v3752 = vld [vmem:[%s3727 + $0x90] sm:$0xf]
        %v3753 = vld [vmem:[%s3727 + $0x94] sm:$0xf]
        %v3754 = vld [vmem:[%s3727 + $0x9c] sm:$0xf]
        %v3755 = vld [vmem:[%s3727 + $0xa0] sm:$0xf]
        %v3756 = vld [vmem:[%s3727 + $0xa8] sm:$0xf]
        %v3757 = vld [vmem:[%s3727 + $0xac] sm:$0xf]
        %v3758 = vld [vmem:[%s3727 + $0xb4] sm:$0xf]
        %v3759 = vld [vmem:[%s3727 + $0xb8] sm:$0xf]
        %v3792 = vunpack.c.l.b16 %v3728
        %v3793 = vunpack.c.l.b16 %v3729
        %v3794 = vunpack.c.l.b16 %v3730
        %v3795 = vunpack.c.l.b16 %v3731
        %v3796 = vunpack.c.l.b16 %v3732
        %v3797 = vunpack.c.l.b16 %v3733
        %v3798 = vunpack.c.l.b16 %v3734
        %v3799 = vunpack.c.l.b16 %v3735
        %v3800 = vunpack.c.l.b16 %v3736
        %v3801 = vunpack.c.l.b16 %v3737
        %v3802 = vunpack.c.l.b16 %v3738
        %v3803 = vunpack.c.l.b16 %v3739
        %v3804 = vunpack.c.l.b16 %v3740
        %v3805 = vunpack.c.l.b16 %v3741
        %v3806 = vunpack.c.l.b16 %v3742
        %v3807 = vunpack.c.l.b16 %v3743
        %v3808 = vunpack.c.l.b16 %v3744
        %v3809 = vunpack.c.l.b16 %v3745
        %v3810 = vunpack.c.l.b16 %v3746
        %v3811 = vunpack.c.l.b16 %v3747
        %v3812 = vunpack.c.l.b16 %v3748
        %v3813 = vunpack.c.l.b16 %v3749
        %v3814 = vunpack.c.l.b16 %v3750
        %v3815 = vunpack.c.l.b16 %v3751
        %v3816 = vunpack.c.l.b16 %v3752
        %v3817 = vunpack.c.l.b16 %v3753
        %v3818 = vunpack.c.l.b16 %v3754
        %v3819 = vunpack.c.l.b16 %v3755
        %v3820 = vunpack.c.l.b16 %v3756
        %v3821 = vunpack.c.l.b16 %v3757
        %v3822 = vunpack.c.l.b16 %v3758
        %v3823 = vunpack.c.l.b16 %v3759
        %v3824 = vpack.c.b16 %v3793, %v3792
        %v3825 = vpack.c.b16 %v3795, %v3794
        %v3826 = vpack.c.b16 %v3797, %v3796
        %v3827 = vpack.c.b16 %v3799, %v3798
        %v3828 = vpack.c.b16 %v3801, %v3800
        %v3829 = vpack.c.b16 %v3803, %v3802
        %v3830 = vpack.c.b16 %v3805, %v3804
        %v3831 = vpack.c.b16 %v3807, %v3806
        %v3832 = vpack.c.b16 %v3809, %v3808
        %v3833 = vpack.c.b16 %v3811, %v3810
        %v3834 = vpack.c.b16 %v3813, %v3812
        %v3835 = vpack.c.b16 %v3815, %v3814
        %v3836 = vpack.c.b16 %v3817, %v3816
        %v3837 = vpack.c.b16 %v3819, %v3818
        %v3838 = vpack.c.b16 %v3821, %v3820
        %v3839 = vpack.c.b16 %v3823, %v3822
        %3856 = vst [vmem:[#allocation3] sm:$0xff] %v3824
        %3857 = vst [vmem:[#allocation3 + $0x18] sm:$0xff] %v3825
        %3858 = vst [vmem:[#allocation3 + $0x30] sm:$0xff] %v3826
        %3859 = vst [vmem:[#allocation3 + $0x48] sm:$0xff] %v3827
        %3860 = vst [vmem:[#allocation3 + $0x60] sm:$0xff] %v3828
        %3861 = vst [vmem:[#allocation3 + $0x78] sm:$0xff] %v3829
        %3862 = vst [vmem:[#allocation3 + $0x90] sm:$0xff] %v3830
        %3863 = vst [vmem:[#allocation3 + $0xa8] sm:$0xff] %v3831
        %3864 = vst [vmem:[#allocation3 + $0xc0] sm:$0xff] %v3832
        %3865 = vst [vmem:[#allocation3 + $0xd8] sm:$0xff] %v3833
        %3866 = vst [vmem:[#allocation3 + $0xf0] sm:$0xff] %v3834
        %3867 = vst [vmem:[#allocation3 + $0x108] sm:$0xff] %v3835
        %3868 = vst [vmem:[#allocation3 + $0x120] sm:$0xff] %v3836
        %3869 = vst [vmem:[#allocation3 + $0x138] sm:$0xff] %v3837
        %3870 = vst [vmem:[#allocation3 + $0x150] sm:$0xff] %v3838
        %3871 = vst [vmem:[#allocation3 + $0x168] sm:$0xff] %v3839
        %v3872 = vld [vmem:[%s3727] sm:$0xf]
        %v3873 = vld [vmem:[%s3727 + $0x4] sm:$0xf]
        %v3874 = vld [vmem:[%s3727 + $0x8] sm:$0x1]
        %v3875 = vld [vmem:[%s3727 + $0xc] sm:$0xf]
        %v3876 = vld [vmem:[%s3727 + $0x10] sm:$0xf]
        %v3877 = vld [vmem:[%s3727 + $0x14] sm:$0x1]
        %v3878 = vld [vmem:[%s3727 + $0x18] sm:$0xf]
        %v3879 = vld [vmem:[%s3727 + $0x1c] sm:$0xf]
        %v3880 = vld [vmem:[%s3727 + $0x20] sm:$0x1]
        %v3881 = vld [vmem:[%s3727 + $0x24] sm:$0xf]
        %v3882 = vld [vmem:[%s3727 + $0x28] sm:$0xf]
        %v3883 = vld [vmem:[%s3727 + $0x2c] sm:$0x1]
        %v3884 = vld [vmem:[%s3727 + $0x30] sm:$0xf]
        %v3885 = vld [vmem:[%s3727 + $0x34] sm:$0xf]
        %v3886 = vld [vmem:[%s3727 + $0x38] sm:$0x1]
        %v3887 = vld [vmem:[%s3727 + $0x3c] sm:$0xf]
        %v3888 = vld [vmem:[%s3727 + $0x40] sm:$0xf]
        %v3889 = vld [vmem:[%s3727 + $0x44] sm:$0x1]
        %v3890 = vld [vmem:[%s3727 + $0x48] sm:$0xf]
        %v3891 = vld [vmem:[%s3727 + $0x4c] sm:$0xf]
        %v3892 = vld [vmem:[%s3727 + $0x50] sm:$0x1]
        %v3893 = vld [vmem:[%s3727 + $0x54] sm:$0xf]
        %v3894 = vld [vmem:[%s3727 + $0x58] sm:$0xf]
        %v3895 = vld [vmem:[%s3727 + $0x5c] sm:$0x1]
        %v3896 = vld [vmem:[%s3727 + $0x60] sm:$0xf]
        %v3897 = vld [vmem:[%s3727 + $0x64] sm:$0xf]
        %v3898 = vld [vmem:[%s3727 + $0x68] sm:$0x1]
        %v3899 = vld [vmem:[%s3727 + $0x6c] sm:$0xf]
        %v3900 = vld [vmem:[%s3727 + $0x70] sm:$0xf]
        %v3901 = vld [vmem:[%s3727 + $0x74] sm:$0x1]
        %v3902 = vld [vmem:[%s3727 + $0x78] sm:$0xf]
        %v3903 = vld [vmem:[%s3727 + $0x7c] sm:$0xf]
        %v3904 = vld [vmem:[%s3727 + $0x80] sm:$0x1]
        %v3905 = vld [vmem:[%s3727 + $0x84] sm:$0xf]
        %v3906 = vld [vmem:[%s3727 + $0x88] sm:$0xf]
        %v3907 = vld [vmem:[%s3727 + $0x8c] sm:$0x1]
        %v3908 = vld [vmem:[%s3727 + $0x90] sm:$0xf]
        %v3909 = vld [vmem:[%s3727 + $0x94] sm:$0xf]
        %v3910 = vld [vmem:[%s3727 + $0x98] sm:$0x1]
        %v3911 = vld [vmem:[%s3727 + $0x9c] sm:$0xf]
        %v3912 = vld [vmem:[%s3727 + $0xa0] sm:$0xf]
        %v3913 = vld [vmem:[%s3727 + $0xa4] sm:$0x1]
        %v3914 = vld [vmem:[%s3727 + $0xa8] sm:$0xf]
        %v3915 = vld [vmem:[%s3727 + $0xac] sm:$0xf]
        %v3916 = vld [vmem:[%s3727 + $0xb0] sm:$0x1]
        %v3917 = vld [vmem:[%s3727 + $0xb4] sm:$0xf]
        %v3918 = vld [vmem:[%s3727 + $0xb8] sm:$0xf]
        %v3919 = vld [vmem:[%s3727 + $0xbc] sm:$0x1]
        %v3968 = vunpack.c.l.b16 %v3872
        %v3969 = vunpack.c.l.b16 %v3873
        %v3970 = vunpack.c.l.b16 %v3874
        %v3971 = vunpack.c.l.b16 %v3875
        %v3972 = vunpack.c.l.b16 %v3876
        %v3973 = vunpack.c.l.b16 %v3877
        %v3974 = vunpack.c.l.b16 %v3878
        %v3975 = vunpack.c.l.b16 %v3879
        %v3976 = vunpack.c.l.b16 %v3880
        %v3977 = vunpack.c.l.b16 %v3881
        %v3978 = vunpack.c.l.b16 %v3882
        %v3979 = vunpack.c.l.b16 %v3883
        %v3980 = vunpack.c.l.b16 %v3884
        %v3981 = vunpack.c.l.b16 %v3885
        %v3982 = vunpack.c.l.b16 %v3886
        %v3983 = vunpack.c.l.b16 %v3887
        %v3984 = vunpack.c.l.b16 %v3888
        %v3985 = vunpack.c.l.b16 %v3889
        %v3986 = vunpack.c.l.b16 %v3890
        %v3987 = vunpack.c.l.b16 %v3891
        %v3988 = vunpack.c.l.b16 %v3892
        %v3989 = vunpack.c.l.b16 %v3893
        %v3990 = vunpack.c.l.b16 %v3894
        %v3991 = vunpack.c.l.b16 %v3895
        %v3992 = vunpack.c.l.b16 %v3896
        %v3993 = vunpack.c.l.b16 %v3897
        %v3994 = vunpack.c.l.b16 %v3898
        %v3995 = vunpack.c.l.b16 %v3899
        %v3996 = vunpack.c.l.b16 %v3900
        %v3997 = vunpack.c.l.b16 %v3901
        %v3998 = vunpack.c.l.b16 %v3902
        %v3999 = vunpack.c.l.b16 %v3903
        %v4000 = vunpack.c.l.b16 %v3904
        %v4001 = vunpack.c.l.b16 %v3905
        %v4002 = vunpack.c.l.b16 %v3906
        %v4003 = vunpack.c.l.b16 %v3907
        %v4004 = vunpack.c.l.b16 %v3908
        %v4005 = vunpack.c.l.b16 %v3909
        %v4006 = vunpack.c.l.b16 %v3910
        %v4007 = vunpack.c.l.b16 %v3911
        %v4008 = vunpack.c.l.b16 %v3912
        %v4009 = vunpack.c.l.b16 %v3913
        %v4010 = vunpack.c.l.b16 %v3914
        %v4011 = vunpack.c.l.b16 %v3915
        %v4012 = vunpack.c.l.b16 %v3916
        %v4013 = vunpack.c.l.b16 %v3917
        %v4014 = vunpack.c.l.b16 %v3918
        %v4015 = vunpack.c.l.b16 %v3919
        %v4016 = vpack.c.b16 %v3969, %v3968
        %v4017 = vpack.c.b16 %v3970, %v3970
        %v4018 = vpack.c.b16 %v3972, %v3971
        %v4019 = vpack.c.b16 %v3973, %v3973
        %v4020 = vpack.c.b16 %v3975, %v3974
        %v4021 = vpack.c.b16 %v3976, %v3976
        %v4022 = vpack.c.b16 %v3978, %v3977
        %v4023 = vpack.c.b16 %v3979, %v3979
        %v4024 = vpack.c.b16 %v3981, %v3980
        %v4025 = vpack.c.b16 %v3982, %v3982
        %v4026 = vpack.c.b16 %v3984, %v3983
        %v4027 = vpack.c.b16 %v3985, %v3985
        %v4028 = vpack.c.b16 %v3987, %v3986
        %v4029 = vpack.c.b16 %v3988, %v3988
        %v4030 = vpack.c.b16 %v3990, %v3989
        %v4031 = vpack.c.b16 %v3991, %v3991
        %v4032 = vpack.c.b16 %v3993, %v3992
        %v4033 = vpack.c.b16 %v3994, %v3994
        %v4034 = vpack.c.b16 %v3996, %v3995
        %v4035 = vpack.c.b16 %v3997, %v3997
        %v4036 = vpack.c.b16 %v3999, %v3998
        %v4037 = vpack.c.b16 %v4000, %v4000
        %v4038 = vpack.c.b16 %v4002, %v4001
        %v4039 = vpack.c.b16 %v4003, %v4003
        %v4040 = vpack.c.b16 %v4005, %v4004
        %v4041 = vpack.c.b16 %v4006, %v4006
        %v4042 = vpack.c.b16 %v4008, %v4007
        %v4043 = vpack.c.b16 %v4009, %v4009
        %v4044 = vpack.c.b16 %v4011, %v4010
        %v4045 = vpack.c.b16 %v4012, %v4012
        %v4046 = vpack.c.b16 %v4014, %v4013
        %v4047 = vpack.c.b16 %v4015, %v4015
        %v4049 = vshrl.u32 %v4016, 16
        %v4051 = vshll.u32 %v4016, 16
        %v4053 = vrot.slane %v4051, 1
        %v4054 = vor.u32 %v4049, %v4053
        %v4056 = vshll.u32 %v4017, 16
        %v4058 = vrot.slane %v4056, 1
        %v4059 = vsel %vm1320, %v4054, %v4058
        %v4061 = vshrl.u32 %v4018, 16
        %v4063 = vshll.u32 %v4018, 16
        %v4065 = vrot.slane %v4063, 1
        %v4066 = vor.u32 %v4061, %v4065
        %v4068 = vshll.u32 %v4019, 16
        %v4070 = vrot.slane %v4068, 1
        %v4071 = vsel %vm1320, %v4066, %v4070
        %v4073 = vshrl.u32 %v4020, 16
        %v4075 = vshll.u32 %v4020, 16
        %v4077 = vrot.slane %v4075, 1
        %v4078 = vor.u32 %v4073, %v4077
        %v4080 = vshll.u32 %v4021, 16
        %v4082 = vrot.slane %v4080, 1
        %v4083 = vsel %vm1320, %v4078, %v4082
        %v4085 = vshrl.u32 %v4022, 16
        %v4087 = vshll.u32 %v4022, 16
        %v4089 = vrot.slane %v4087, 1
        %v4090 = vor.u32 %v4085, %v4089
        %v4092 = vshll.u32 %v4023, 16
        %v4094 = vrot.slane %v4092, 1
        %v4095 = vsel %vm1320, %v4090, %v4094
        %v4097 = vshrl.u32 %v4024, 16
        %v4099 = vshll.u32 %v4024, 16
        %v4101 = vrot.slane %v4099, 1
        %v4102 = vor.u32 %v4097, %v4101
        %v4104 = vshll.u32 %v4025, 16
        %v4106 = vrot.slane %v4104, 1
        %v4107 = vsel %vm1320, %v4102, %v4106
        %v4109 = vshrl.u32 %v4026, 16
        %v4111 = vshll.u32 %v4026, 16
        %v4113 = vrot.slane %v4111, 1
        %v4114 = vor.u32 %v4109, %v4113
        %v4116 = vshll.u32 %v4027, 16
        %v4118 = vrot.slane %v4116, 1
        %v4119 = vsel %vm1320, %v4114, %v4118
        %v4121 = vshrl.u32 %v4028, 16
        %v4123 = vshll.u32 %v4028, 16
        %v4125 = vrot.slane %v4123, 1
        %v4126 = vor.u32 %v4121, %v4125
        %v4128 = vshll.u32 %v4029, 16
        %v4130 = vrot.slane %v4128, 1
        %v4131 = vsel %vm1320, %v4126, %v4130
        %v4133 = vshrl.u32 %v4030, 16
        %v4135 = vshll.u32 %v4030, 16
        %v4137 = vrot.slane %v4135, 1
        %v4138 = vor.u32 %v4133, %v4137
        %v4140 = vshll.u32 %v4031, 16
        %v4142 = vrot.slane %v4140, 1
        %v4143 = vsel %vm1320, %v4138, %v4142
        %v4145 = vshrl.u32 %v4032, 16
        %v4147 = vshll.u32 %v4032, 16
        %v4149 = vrot.slane %v4147, 1
        %v4150 = vor.u32 %v4145, %v4149
        %v4152 = vshll.u32 %v4033, 16
        %v4154 = vrot.slane %v4152, 1
        %v4155 = vsel %vm1320, %v4150, %v4154
        %v4157 = vshrl.u32 %v4034, 16
        %v4159 = vshll.u32 %v4034, 16
        %v4161 = vrot.slane %v4159, 1
        %v4162 = vor.u32 %v4157, %v4161
        %v4164 = vshll.u32 %v4035, 16
        %v4166 = vrot.slane %v4164, 1
        %v4167 = vsel %vm1320, %v4162, %v4166
        %v4169 = vshrl.u32 %v4036, 16
        %v4171 = vshll.u32 %v4036, 16
        %v4173 = vrot.slane %v4171, 1
        %v4174 = vor.u32 %v4169, %v4173
        %v4176 = vshll.u32 %v4037, 16
        %v4178 = vrot.slane %v4176, 1
        %v4179 = vsel %vm1320, %v4174, %v4178
        %v4181 = vshrl.u32 %v4038, 16
        %v4183 = vshll.u32 %v4038, 16
        %v4185 = vrot.slane %v4183, 1
        %v4186 = vor.u32 %v4181, %v4185
        %v4188 = vshll.u32 %v4039, 16
        %v4190 = vrot.slane %v4188, 1
        %v4191 = vsel %vm1320, %v4186, %v4190
        %v4193 = vshrl.u32 %v4040, 16
        %v4195 = vshll.u32 %v4040, 16
        %v4197 = vrot.slane %v4195, 1
        %v4198 = vor.u32 %v4193, %v4197
        %v4200 = vshll.u32 %v4041, 16
        %v4202 = vrot.slane %v4200, 1
        %v4203 = vsel %vm1320, %v4198, %v4202
        %v4205 = vshrl.u32 %v4042, 16
        %v4207 = vshll.u32 %v4042, 16
        %v4209 = vrot.slane %v4207, 1
        %v4210 = vor.u32 %v4205, %v4209
        %v4212 = vshll.u32 %v4043, 16
        %v4214 = vrot.slane %v4212, 1
        %v4215 = vsel %vm1320, %v4210, %v4214
        %v4217 = vshrl.u32 %v4044, 16
        %v4219 = vshll.u32 %v4044, 16
        %v4221 = vrot.slane %v4219, 1
        %v4222 = vor.u32 %v4217, %v4221
        %v4224 = vshll.u32 %v4045, 16
        %v4226 = vrot.slane %v4224, 1
        %v4227 = vsel %vm1320, %v4222, %v4226
        %v4229 = vshrl.u32 %v4046, 16
        %v4231 = vshll.u32 %v4046, 16
        %v4233 = vrot.slane %v4231, 1
        %v4234 = vor.u32 %v4229, %v4233
        %v4236 = vshll.u32 %v4047, 16
        %v4238 = vrot.slane %v4236, 1
        %v4239 = vsel %vm1320, %v4234, %v4238
        %4256 = vst [vmem:[#allocation3 + $0x8] sm:$0xff] %v4059
        %4257 = vst [vmem:[#allocation3 + $0x20] sm:$0xff] %v4071
        %4258 = vst [vmem:[#allocation3 + $0x38] sm:$0xff] %v4083
        %4259 = vst [vmem:[#allocation3 + $0x50] sm:$0xff] %v4095
        %4260 = vst [vmem:[#allocation3 + $0x68] sm:$0xff] %v4107
        %4261 = vst [vmem:[#allocation3 + $0x80] sm:$0xff] %v4119
        %4262 = vst [vmem:[#allocation3 + $0x98] sm:$0xff] %v4131
        %4263 = vst [vmem:[#allocation3 + $0xb0] sm:$0xff] %v4143
        %4264 = vst [vmem:[#allocation3 + $0xc8] sm:$0xff] %v4155
        %4265 = vst [vmem:[#allocation3 + $0xe0] sm:$0xff] %v4167
        %4266 = vst [vmem:[#allocation3 + $0xf8] sm:$0xff] %v4179
        %4267 = vst [vmem:[#allocation3 + $0x110] sm:$0xff] %v4191
        %4268 = vst [vmem:[#allocation3 + $0x128] sm:$0xff] %v4203
        %4269 = vst [vmem:[#allocation3 + $0x140] sm:$0xff] %v4215
        %4270 = vst [vmem:[#allocation3 + $0x158] sm:$0xff] %v4227
        %4271 = vst [vmem:[#allocation3 + $0x170] sm:$0xff] %v4239
        %v4272 = vld [vmem:[%s3727] sm:$0xe]
        %v4273 = vld [vmem:[%s3727 + $0x4] sm:$0xf]
        %v4274 = vld [vmem:[%s3727 + $0x8] sm:$0x1]
        %v4275 = vld [vmem:[%s3727 + $0xc] sm:$0xe]
        %v4276 = vld [vmem:[%s3727 + $0x10] sm:$0xf]
        %v4277 = vld [vmem:[%s3727 + $0x14] sm:$0x1]
        %v4278 = vld [vmem:[%s3727 + $0x18] sm:$0xe]
        %v4279 = vld [vmem:[%s3727 + $0x1c] sm:$0xf]
        %v4280 = vld [vmem:[%s3727 + $0x20] sm:$0x1]
        %v4281 = vld [vmem:[%s3727 + $0x24] sm:$0xe]
        %v4282 = vld [vmem:[%s3727 + $0x28] sm:$0xf]
        %v4283 = vld [vmem:[%s3727 + $0x2c] sm:$0x1]
        %v4284 = vld [vmem:[%s3727 + $0x30] sm:$0xe]
        %v4285 = vld [vmem:[%s3727 + $0x34] sm:$0xf]
        %v4286 = vld [vmem:[%s3727 + $0x38] sm:$0x1]
        %v4287 = vld [vmem:[%s3727 + $0x3c] sm:$0xe]
        %v4288 = vld [vmem:[%s3727 + $0x40] sm:$0xf]
        %v4289 = vld [vmem:[%s3727 + $0x44] sm:$0x1]
        %v4290 = vld [vmem:[%s3727 + $0x48] sm:$0xe]
        %v4291 = vld [vmem:[%s3727 + $0x4c] sm:$0xf]
        %v4292 = vld [vmem:[%s3727 + $0x50] sm:$0x1]
        %v4293 = vld [vmem:[%s3727 + $0x54] sm:$0xe]
        %v4294 = vld [vmem:[%s3727 + $0x58] sm:$0xf]
        %v4295 = vld [vmem:[%s3727 + $0x5c] sm:$0x1]
        %v4296 = vld [vmem:[%s3727 + $0x60] sm:$0xe]
        %v4297 = vld [vmem:[%s3727 + $0x64] sm:$0xf]
        %v4298 = vld [vmem:[%s3727 + $0x68] sm:$0x1]
        %v4299 = vld [vmem:[%s3727 + $0x6c] sm:$0xe]
        %v4300 = vld [vmem:[%s3727 + $0x70] sm:$0xf]
        %v4301 = vld [vmem:[%s3727 + $0x74] sm:$0x1]
        %v4302 = vld [vmem:[%s3727 + $0x78] sm:$0xe]
        %v4303 = vld [vmem:[%s3727 + $0x7c] sm:$0xf]
        %v4304 = vld [vmem:[%s3727 + $0x80] sm:$0x1]
        %v4305 = vld [vmem:[%s3727 + $0x84] sm:$0xe]
        %v4306 = vld [vmem:[%s3727 + $0x88] sm:$0xf]
        %v4307 = vld [vmem:[%s3727 + $0x8c] sm:$0x1]
        %v4308 = vld [vmem:[%s3727 + $0x90] sm:$0xe]
        %v4309 = vld [vmem:[%s3727 + $0x94] sm:$0xf]
        %v4310 = vld [vmem:[%s3727 + $0x98] sm:$0x1]
        %v4311 = vld [vmem:[%s3727 + $0x9c] sm:$0xe]
        %v4312 = vld [vmem:[%s3727 + $0xa0] sm:$0xf]
        %v4313 = vld [vmem:[%s3727 + $0xa4] sm:$0x1]
        %v4314 = vld [vmem:[%s3727 + $0xa8] sm:$0xe]
        %v4315 = vld [vmem:[%s3727 + $0xac] sm:$0xf]
        %v4316 = vld [vmem:[%s3727 + $0xb0] sm:$0x1]
        %v4317 = vld [vmem:[%s3727 + $0xb4] sm:$0xe]
        %v4318 = vld [vmem:[%s3727 + $0xb8] sm:$0xf]
        %v4319 = vld [vmem:[%s3727 + $0xbc] sm:$0x1]
        %v4368 = vunpack.c.l.b16 %v4272
        %v4369 = vunpack.c.l.b16 %v4273
        %v4370 = vunpack.c.l.b16 %v4274
        %v4371 = vunpack.c.l.b16 %v4275
        %v4372 = vunpack.c.l.b16 %v4276
        %v4373 = vunpack.c.l.b16 %v4277
        %v4374 = vunpack.c.l.b16 %v4278
        %v4375 = vunpack.c.l.b16 %v4279
        %v4376 = vunpack.c.l.b16 %v4280
        %v4377 = vunpack.c.l.b16 %v4281
        %v4378 = vunpack.c.l.b16 %v4282
        %v4379 = vunpack.c.l.b16 %v4283
        %v4380 = vunpack.c.l.b16 %v4284
        %v4381 = vunpack.c.l.b16 %v4285
        %v4382 = vunpack.c.l.b16 %v4286
        %v4383 = vunpack.c.l.b16 %v4287
        %v4384 = vunpack.c.l.b16 %v4288
        %v4385 = vunpack.c.l.b16 %v4289
        %v4386 = vunpack.c.l.b16 %v4290
        %v4387 = vunpack.c.l.b16 %v4291
        %v4388 = vunpack.c.l.b16 %v4292
        %v4389 = vunpack.c.l.b16 %v4293
        %v4390 = vunpack.c.l.b16 %v4294
        %v4391 = vunpack.c.l.b16 %v4295
        %v4392 = vunpack.c.l.b16 %v4296
        %v4393 = vunpack.c.l.b16 %v4297
        %v4394 = vunpack.c.l.b16 %v4298
        %v4395 = vunpack.c.l.b16 %v4299
        %v4396 = vunpack.c.l.b16 %v4300
        %v4397 = vunpack.c.l.b16 %v4301
        %v4398 = vunpack.c.l.b16 %v4302
        %v4399 = vunpack.c.l.b16 %v4303
        %v4400 = vunpack.c.l.b16 %v4304
        %v4401 = vunpack.c.l.b16 %v4305
        %v4402 = vunpack.c.l.b16 %v4306
        %v4403 = vunpack.c.l.b16 %v4307
        %v4404 = vunpack.c.l.b16 %v4308
        %v4405 = vunpack.c.l.b16 %v4309
        %v4406 = vunpack.c.l.b16 %v4310
        %v4407 = vunpack.c.l.b16 %v4311
        %v4408 = vunpack.c.l.b16 %v4312
        %v4409 = vunpack.c.l.b16 %v4313
        %v4410 = vunpack.c.l.b16 %v4314
        %v4411 = vunpack.c.l.b16 %v4315
        %v4412 = vunpack.c.l.b16 %v4316
        %v4413 = vunpack.c.l.b16 %v4317
        %v4414 = vunpack.c.l.b16 %v4318
        %v4415 = vunpack.c.l.b16 %v4319
        %v4416 = vpack.c.b16 %v4369, %v4368
        %v4417 = vpack.c.b16 %v4370, %v4370
        %v4418 = vpack.c.b16 %v4372, %v4371
        %v4419 = vpack.c.b16 %v4373, %v4373
        %v4420 = vpack.c.b16 %v4375, %v4374
        %v4421 = vpack.c.b16 %v4376, %v4376
        %v4422 = vpack.c.b16 %v4378, %v4377
        %v4423 = vpack.c.b16 %v4379, %v4379
        %v4424 = vpack.c.b16 %v4381, %v4380
        %v4425 = vpack.c.b16 %v4382, %v4382
        %v4426 = vpack.c.b16 %v4384, %v4383
        %v4427 = vpack.c.b16 %v4385, %v4385
        %v4428 = vpack.c.b16 %v4387, %v4386
        %v4429 = vpack.c.b16 %v4388, %v4388
        %v4430 = vpack.c.b16 %v4390, %v4389
        %v4431 = vpack.c.b16 %v4391, %v4391
        %v4432 = vpack.c.b16 %v4393, %v4392
        %v4433 = vpack.c.b16 %v4394, %v4394
        %v4434 = vpack.c.b16 %v4396, %v4395
        %v4435 = vpack.c.b16 %v4397, %v4397
        %v4436 = vpack.c.b16 %v4399, %v4398
        %v4437 = vpack.c.b16 %v4400, %v4400
        %v4438 = vpack.c.b16 %v4402, %v4401
        %v4439 = vpack.c.b16 %v4403, %v4403
        %v4440 = vpack.c.b16 %v4405, %v4404
        %v4441 = vpack.c.b16 %v4406, %v4406
        %v4442 = vpack.c.b16 %v4408, %v4407
        %v4443 = vpack.c.b16 %v4409, %v4409
        %v4444 = vpack.c.b16 %v4411, %v4410
        %v4445 = vpack.c.b16 %v4412, %v4412
        %v4446 = vpack.c.b16 %v4414, %v4413
        %v4447 = vpack.c.b16 %v4415, %v4415
        %v4448 = vrot.slane %v4416, 1
        %v4449 = vrot.slane %v4417, 1
        %v4450 = vsel %vm1721, %v4448, %v4449
        %v4451 = vrot.slane %v4418, 1
        %v4452 = vrot.slane %v4419, 1
        %v4453 = vsel %vm1721, %v4451, %v4452
        %v4454 = vrot.slane %v4420, 1
        %v4455 = vrot.slane %v4421, 1
        %v4456 = vsel %vm1721, %v4454, %v4455
        %v4457 = vrot.slane %v4422, 1
        %v4458 = vrot.slane %v4423, 1
        %v4459 = vsel %vm1721, %v4457, %v4458
        %v4460 = vrot.slane %v4424, 1
        %v4461 = vrot.slane %v4425, 1
        %v4462 = vsel %vm1721, %v4460, %v4461
        %v4463 = vrot.slane %v4426, 1
        %v4464 = vrot.slane %v4427, 1
        %v4465 = vsel %vm1721, %v4463, %v4464
        %v4466 = vrot.slane %v4428, 1
        %v4467 = vrot.slane %v4429, 1
        %v4468 = vsel %vm1721, %v4466, %v4467
        %v4469 = vrot.slane %v4430, 1
        %v4470 = vrot.slane %v4431, 1
        %v4471 = vsel %vm1721, %v4469, %v4470
        %v4472 = vrot.slane %v4432, 1
        %v4473 = vrot.slane %v4433, 1
        %v4474 = vsel %vm1721, %v4472, %v4473
        %v4475 = vrot.slane %v4434, 1
        %v4476 = vrot.slane %v4435, 1
        %v4477 = vsel %vm1721, %v4475, %v4476
        %v4478 = vrot.slane %v4436, 1
        %v4479 = vrot.slane %v4437, 1
        %v4480 = vsel %vm1721, %v4478, %v4479
        %v4481 = vrot.slane %v4438, 1
        %v4482 = vrot.slane %v4439, 1
        %v4483 = vsel %vm1721, %v4481, %v4482
        %v4484 = vrot.slane %v4440, 1
        %v4485 = vrot.slane %v4441, 1
        %v4486 = vsel %vm1721, %v4484, %v4485
        %v4487 = vrot.slane %v4442, 1
        %v4488 = vrot.slane %v4443, 1
        %v4489 = vsel %vm1721, %v4487, %v4488
        %v4490 = vrot.slane %v4444, 1
        %v4491 = vrot.slane %v4445, 1
        %v4492 = vsel %vm1721, %v4490, %v4491
        %v4493 = vrot.slane %v4446, 1
        %v4494 = vrot.slane %v4447, 1
        %v4495 = vsel %vm1721, %v4493, %v4494
        %4512 = vst [vmem:[#allocation3 + $0x10] sm:$0xff] %v4450
        %4513 = vst [vmem:[#allocation3 + $0x28] sm:$0xff] %v4453
        %4514 = vst [vmem:[#allocation3 + $0x40] sm:$0xff] %v4456
        %4515 = vst [vmem:[#allocation3 + $0x58] sm:$0xff] %v4459
        %4516 = vst [vmem:[#allocation3 + $0x70] sm:$0xff] %v4462
        %4517 = vst [vmem:[#allocation3 + $0x88] sm:$0xff] %v4465
        %4518 = vst [vmem:[#allocation3 + $0xa0] sm:$0xff] %v4468
        %4519 = vst [vmem:[#allocation3 + $0xb8] sm:$0xff] %v4471
        %4520 = vst [vmem:[#allocation3 + $0xd0] sm:$0xff] %v4474
        %4521 = vst [vmem:[#allocation3 + $0xe8] sm:$0xff] %v4477
        %4522 = vst [vmem:[#allocation3 + $0x100] sm:$0xff] %v4480
        %4523 = vst [vmem:[#allocation3 + $0x118] sm:$0xff] %v4483
        %4524 = vst [vmem:[#allocation3 + $0x130] sm:$0xff] %v4486
        %4525 = vst [vmem:[#allocation3 + $0x148] sm:$0xff] %v4489
        %4526 = vst [vmem:[#allocation3 + $0x160] sm:$0xff] %v4492
        %4527 = vst [vmem:[#allocation3 + $0x178] sm:$0xff] %v4495
        %v4528 = vld [vmem:[#allocation3] sm:$0xff]
        %v4529 = vld [vmem:[#allocation3 + $0x8] sm:$0xff]
        %v4530 = vld [vmem:[#allocation3 + $0x10] sm:$0xff]
        %v4531 = vld [vmem:[#allocation3 + $0x18] sm:$0xff]
        %v4532 = vld [vmem:[#allocation3 + $0x20] sm:$0xff]
        %v4533 = vld [vmem:[#allocation3 + $0x28] sm:$0xff]
        %v4534 = vld [vmem:[#allocation3 + $0x30] sm:$0xff]
        %v4535 = vld [vmem:[#allocation3 + $0x38] sm:$0xff]
        %v4536 = vld [vmem:[#allocation3 + $0x40] sm:$0xff]
        %v4537 = vld [vmem:[#allocation3 + $0x48] sm:$0xff]
        %v4538 = vld [vmem:[#allocation3 + $0x50] sm:$0xff]
        %v4539 = vld [vmem:[#allocation3 + $0x58] sm:$0xff]
        %v4540 = vld [vmem:[#allocation3 + $0x60] sm:$0xff]
        %v4541 = vld [vmem:[#allocation3 + $0x68] sm:$0xff]
        %v4542 = vld [vmem:[#allocation3 + $0x70] sm:$0xff]
        %v4543 = vld [vmem:[#allocation3 + $0x78] sm:$0xff]
        %v4544 = vld [vmem:[#allocation3 + $0x80] sm:$0xff]
        %v4545 = vld [vmem:[#allocation3 + $0x88] sm:$0xff]
        %v4546 = vld [vmem:[#allocation3 + $0x90] sm:$0xff]
        %v4547 = vld [vmem:[#allocation3 + $0x98] sm:$0xff]
        %v4548 = vld [vmem:[#allocation3 + $0xa0] sm:$0xff]
        %v4549 = vld [vmem:[#allocation3 + $0xa8] sm:$0xff]
        %v4550 = vld [vmem:[#allocation3 + $0xb0] sm:$0xff]
        %v4551 = vld [vmem:[#allocation3 + $0xb8] sm:$0xff]
        %v4552 = vld [vmem:[#allocation3 + $0xc0] sm:$0xff]
        %v4553 = vld [vmem:[#allocation3 + $0xc8] sm:$0xff]
        %v4554 = vld [vmem:[#allocation3 + $0xd0] sm:$0xff]
        %v4555 = vld [vmem:[#allocation3 + $0xd8] sm:$0xff]
        %v4556 = vld [vmem:[#allocation3 + $0xe0] sm:$0xff]
        %v4557 = vld [vmem:[#allocation3 + $0xe8] sm:$0xff]
        %v4558 = vld [vmem:[#allocation3 + $0xf0] sm:$0xff]
        %v4559 = vld [vmem:[#allocation3 + $0xf8] sm:$0xff]
        %v4560 = vld [vmem:[#allocation3 + $0x100] sm:$0xff]
        %v4561 = vld [vmem:[#allocation3 + $0x108] sm:$0xff]
        %v4562 = vld [vmem:[#allocation3 + $0x110] sm:$0xff]
        %v4563 = vld [vmem:[#allocation3 + $0x118] sm:$0xff]
        %v4564 = vld [vmem:[#allocation3 + $0x120] sm:$0xff]
        %v4565 = vld [vmem:[#allocation3 + $0x128] sm:$0xff]
        %v4566 = vld [vmem:[#allocation3 + $0x130] sm:$0xff]
        %v4567 = vld [vmem:[#allocation3 + $0x138] sm:$0xff]
        %v4568 = vld [vmem:[#allocation3 + $0x140] sm:$0xff]
        %v4569 = vld [vmem:[#allocation3 + $0x148] sm:$0xff]
        %v4570 = vld [vmem:[#allocation3 + $0x150] sm:$0xff]
        %v4571 = vld [vmem:[#allocation3 + $0x158] sm:$0xff]
        %v4572 = vld [vmem:[#allocation3 + $0x160] sm:$0xff]
        %v4573 = vld [vmem:[#allocation3 + $0x168] sm:$0xff]
        %v4574 = vld [vmem:[#allocation3 + $0x170] sm:$0xff]
        %v4575 = vld [vmem:[#allocation3 + $0x178] sm:$0xff]
        %s4576 = scalar_lea.vmem [#allocation7], 384
        %v4577 = vld [vmem:[%s4576] sm:$0xf]
        %v4578 = vld [vmem:[%s4576 + $0x4] sm:$0xf]
        %v4579 = vld [vmem:[%s4576 + $0x8] sm:$0xf]
        %v4580 = vld [vmem:[%s4576 + $0xc] sm:$0xf]
        %v4581 = vld [vmem:[%s4576 + $0x10] sm:$0xf]
        %v4582 = vld [vmem:[%s4576 + $0x14] sm:$0xf]
        %v4583 = vld [vmem:[%s4576 + $0x18] sm:$0xf]
        %v4584 = vld [vmem:[%s4576 + $0x1c] sm:$0xf]
        %v4585 = vld [vmem:[%s4576 + $0x20] sm:$0xf]
        %v4586 = vld [vmem:[%s4576 + $0x24] sm:$0xf]
        %v4587 = vld [vmem:[%s4576 + $0x28] sm:$0xf]
        %v4588 = vld [vmem:[%s4576 + $0x2c] sm:$0xf]
        %v4589 = vld [vmem:[%s4576 + $0x30] sm:$0xf]
        %v4590 = vld [vmem:[%s4576 + $0x34] sm:$0xf]
        %v4591 = vld [vmem:[%s4576 + $0x38] sm:$0xf]
        %v4592 = vld [vmem:[%s4576 + $0x3c] sm:$0xf]
        %v4593 = vld [vmem:[%s4576 + $0x40] sm:$0xf]
        %v4594 = vld [vmem:[%s4576 + $0x44] sm:$0xf]
        %v4595 = vld [vmem:[%s4576 + $0x48] sm:$0xf]
        %v4596 = vld [vmem:[%s4576 + $0x4c] sm:$0xf]
        %v4597 = vld [vmem:[%s4576 + $0x50] sm:$0xf]
        %v4598 = vld [vmem:[%s4576 + $0x54] sm:$0xf]
        %v4599 = vld [vmem:[%s4576 + $0x58] sm:$0xf]
        %v4600 = vld [vmem:[%s4576 + $0x5c] sm:$0xf]
        %v4601 = vld [vmem:[%s4576 + $0x60] sm:$0xf]
        %v4602 = vld [vmem:[%s4576 + $0x64] sm:$0xf]
        %v4603 = vld [vmem:[%s4576 + $0x68] sm:$0xf]
        %v4604 = vld [vmem:[%s4576 + $0x6c] sm:$0xf]
        %v4605 = vld [vmem:[%s4576 + $0x70] sm:$0xf]
        %v4606 = vld [vmem:[%s4576 + $0x74] sm:$0xf]
        %v4607 = vld [vmem:[%s4576 + $0x78] sm:$0xf]
        %v4608 = vld [vmem:[%s4576 + $0x7c] sm:$0xf]
        %v4609 = vld [vmem:[%s4576 + $0x80] sm:$0xf]
        %v4610 = vld [vmem:[%s4576 + $0x84] sm:$0xf]
        %v4611 = vld [vmem:[%s4576 + $0x88] sm:$0xf]
        %v4612 = vld [vmem:[%s4576 + $0x8c] sm:$0xf]
        %v4613 = vld [vmem:[%s4576 + $0x90] sm:$0xf]
        %v4614 = vld [vmem:[%s4576 + $0x94] sm:$0xf]
        %v4615 = vld [vmem:[%s4576 + $0x98] sm:$0xf]
        %v4616 = vld [vmem:[%s4576 + $0x9c] sm:$0xf]
        %v4617 = vld [vmem:[%s4576 + $0xa0] sm:$0xf]
        %v4618 = vld [vmem:[%s4576 + $0xa4] sm:$0xf]
        %v4619 = vld [vmem:[%s4576 + $0xa8] sm:$0xf]
        %v4620 = vld [vmem:[%s4576 + $0xac] sm:$0xf]
        %v4621 = vld [vmem:[%s4576 + $0xb0] sm:$0xf]
        %v4622 = vld [vmem:[%s4576 + $0xb4] sm:$0xf]
        %v4623 = vld [vmem:[%s4576 + $0xb8] sm:$0xf]
        %v4624 = vld [vmem:[%s4576 + $0xbc] sm:$0xf]
        %v4673 = vunpack.c.l.b16 %v4577
        %v4674 = vunpack.c.l.b16 %v4578
        %v4675 = vunpack.c.l.b16 %v4579
        %v4676 = vunpack.c.l.b16 %v4580
        %v4677 = vunpack.c.l.b16 %v4581
        %v4678 = vunpack.c.l.b16 %v4582
        %v4679 = vunpack.c.l.b16 %v4583
        %v4680 = vunpack.c.l.b16 %v4584
        %v4681 = vunpack.c.l.b16 %v4585
        %v4682 = vunpack.c.l.b16 %v4586
        %v4683 = vunpack.c.l.b16 %v4587
        %v4684 = vunpack.c.l.b16 %v4588
        %v4685 = vunpack.c.l.b16 %v4589
        %v4686 = vunpack.c.l.b16 %v4590
        %v4687 = vunpack.c.l.b16 %v4591
        %v4688 = vunpack.c.l.b16 %v4592
        %v4689 = vunpack.c.l.b16 %v4593
        %v4690 = vunpack.c.l.b16 %v4594
        %v4691 = vunpack.c.l.b16 %v4595
        %v4692 = vunpack.c.l.b16 %v4596
        %v4693 = vunpack.c.l.b16 %v4597
        %v4694 = vunpack.c.l.b16 %v4598
        %v4695 = vunpack.c.l.b16 %v4599
        %v4696 = vunpack.c.l.b16 %v4600
        %v4697 = vunpack.c.l.b16 %v4601
        %v4698 = vunpack.c.l.b16 %v4602
        %v4699 = vunpack.c.l.b16 %v4603
        %v4700 = vunpack.c.l.b16 %v4604
        %v4701 = vunpack.c.l.b16 %v4605
        %v4702 = vunpack.c.l.b16 %v4606
        %v4703 = vunpack.c.l.b16 %v4607
        %v4704 = vunpack.c.l.b16 %v4608
        %v4705 = vunpack.c.l.b16 %v4609
        %v4706 = vunpack.c.l.b16 %v4610
        %v4707 = vunpack.c.l.b16 %v4611
        %v4708 = vunpack.c.l.b16 %v4612
        %v4709 = vunpack.c.l.b16 %v4613
        %v4710 = vunpack.c.l.b16 %v4614
        %v4711 = vunpack.c.l.b16 %v4615
        %v4712 = vunpack.c.l.b16 %v4616
        %v4713 = vunpack.c.l.b16 %v4617
        %v4714 = vunpack.c.l.b16 %v4618
        %v4715 = vunpack.c.l.b16 %v4619
        %v4716 = vunpack.c.l.b16 %v4620
        %v4717 = vunpack.c.l.b16 %v4621
        %v4718 = vunpack.c.l.b16 %v4622
        %v4719 = vunpack.c.l.b16 %v4623
        %v4720 = vunpack.c.l.b16 %v4624
        %v4721 = vpack.c.b16 %v4674, %v4673
        %v4722 = vpack.c.b16 %v4676, %v4675
        %v4723 = vpack.c.b16 %v4678, %v4677
        %v4724 = vpack.c.b16 %v4680, %v4679
        %v4725 = vpack.c.b16 %v4682, %v4681
        %v4726 = vpack.c.b16 %v4684, %v4683
        %v4727 = vpack.c.b16 %v4686, %v4685
        %v4728 = vpack.c.b16 %v4688, %v4687
        %v4729 = vpack.c.b16 %v4690, %v4689
        %v4730 = vpack.c.b16 %v4692, %v4691
        %v4731 = vpack.c.b16 %v4694, %v4693
        %v4732 = vpack.c.b16 %v4696, %v4695
        %v4733 = vpack.c.b16 %v4698, %v4697
        %v4734 = vpack.c.b16 %v4700, %v4699
        %v4735 = vpack.c.b16 %v4702, %v4701
        %v4736 = vpack.c.b16 %v4704, %v4703
        %v4737 = vpack.c.b16 %v4706, %v4705
        %v4738 = vpack.c.b16 %v4708, %v4707
        %v4739 = vpack.c.b16 %v4710, %v4709
        %v4740 = vpack.c.b16 %v4712, %v4711
        %v4741 = vpack.c.b16 %v4714, %v4713
        %v4742 = vpack.c.b16 %v4716, %v4715
        %v4743 = vpack.c.b16 %v4718, %v4717
        %v4744 = vpack.c.b16 %v4720, %v4719
        %4769 = vmatprep.subr.bf16.mxu0 0
        %4770 = vmatpush1.bf16.msra.mxu0 %v4721
        %4771 = vmatprep.subr.bf16.mxu0 0
        %4772 = vmatpush1.bf16.msra.mxu0 %v4722
        %4773 = vmatprep.subr.bf16.mxu0 0
        %4774 = vmatpush1.bf16.msra.mxu0 %v4723
        %4775 = vmatprep.subr.bf16.mxu0 0
        %4776 = vmatpush1.bf16.msra.mxu0 %v4724
        %4777 = vmatprep.subr.bf16.mxu0 0
        %4778 = vmatpush1.bf16.msra.mxu0 %v4725
        %4779 = vmatprep.subr.bf16.mxu0 0
        %4780 = vmatpush1.bf16.msra.mxu0 %v4726
        %4781 = vmatprep.subr.bf16.mxu0 0
        %4782 = vmatpush1.bf16.msra.mxu0 %v4727
        %4783 = vmatprep.subr.bf16.mxu0 0
        %4784 = vmatpush1.bf16.msra.mxu0 %v4728
        %4785 = vmatprep.subr.bf16.mxu0 0
        %4786 = vmatpush1.bf16.msra.mxu0 %v4729
        %4787 = vmatprep.subr.bf16.mxu0 0
        %4788 = vmatpush1.bf16.msra.mxu0 %v4730
        %4789 = vmatprep.subr.bf16.mxu0 0
        %4790 = vmatpush1.bf16.msra.mxu0 %v4731
        %4791 = vmatprep.subr.bf16.mxu0 0
        %4792 = vmatpush1.bf16.msra.mxu0 %v4732
        %4793 = vmatprep.subr.bf16.mxu0 0
        %4794 = vmatpush1.bf16.msra.mxu0 %v4733
        %4795 = vmatprep.subr.bf16.mxu0 0
        %4796 = vmatpush1.bf16.msra.mxu0 %v4734
        %4797 = vmatprep.subr.bf16.mxu0 0
        %4798 = vmatpush1.bf16.msra.mxu0 %v4735
        %4799 = vmatprep.subr.bf16.mxu0 0
        %4800 = vmatpush1.bf16.msra.mxu0 %v4736
        %4801 = vmatprep.mubr.bf16.mxu0 %v4529
        %4802 = vmatmul.mubr.bf16.gmra.mrb[0].mxu0 %v4528
        %v4803 = vpop.f32.mrb[0].mxu0
        %v4804 = vadd.f32 0.0, %v4803
        %v4805 = vpop.f32.mrb[0].mxu0
        %v4806 = vpop.f32.mrb[0].mxu0
        %v4807 = vadd.f32 0.0, %v4806
        %v4808 = vpop.f32.mrb[0].mxu0
        %4809 = vmatprep.mubr.bf16.mxu0 %v4532
        %4810 = vmatmul.mubr.bf16.gmra.mrb[0].mxu0 %v4531
        %v4811 = vpop.f32.mrb[0].mxu0
        %v4812 = vadd.f32 0.0, %v4811
        %v4813 = vpop.f32.mrb[0].mxu0
        %v4814 = vpop.f32.mrb[0].mxu0
        %v4815 = vadd.f32 0.0, %v4814
        %v4816 = vpop.f32.mrb[0].mxu0
        %4817 = vmatprep.mubr.bf16.mxu0 %v4535
        %4818 = vmatmul.mubr.bf16.gmra.mrb[0].mxu0 %v4534
        %v4819 = vpop.f32.mrb[0].mxu0
        %v4820 = vadd.f32 0.0, %v4819
        %v4821 = vpop.f32.mrb[0].mxu0
        %v4822 = vpop.f32.mrb[0].mxu0
        %v4823 = vadd.f32 0.0, %v4822
        %v4824 = vpop.f32.mrb[0].mxu0
        %4825 = vmatprep.mubr.bf16.mxu0 %v4538
        %4826 = vmatmul.mubr.bf16.gmra.mrb[0].mxu0 %v4537
        %v4827 = vpop.f32.mrb[0].mxu0
        %v4828 = vadd.f32 0.0, %v4827
        %v4829 = vpop.f32.mrb[0].mxu0
        %v4830 = vpop.f32.mrb[0].mxu0
        %v4831 = vadd.f32 0.0, %v4830
        %v4832 = vpop.f32.mrb[0].mxu0
        %4833 = vmatprep.mubr.bf16.mxu0 %v4541
        %4834 = vmatmul.mubr.bf16.gmra.mrb[0].mxu0 %v4540
        %v4835 = vpop.f32.mrb[0].mxu0
        %v4836 = vadd.f32 0.0, %v4835
        %v4837 = vpop.f32.mrb[0].mxu0
        %v4838 = vpop.f32.mrb[0].mxu0
        %v4839 = vadd.f32 0.0, %v4838
        %v4840 = vpop.f32.mrb[0].mxu0
        %4841 = vmatprep.mubr.bf16.mxu0 %v4544
        %4842 = vmatmul.mubr.bf16.gmra.mrb[0].mxu0 %v4543
        %v4843 = vpop.f32.mrb[0].mxu0
        %v4844 = vadd.f32 0.0, %v4843
        %v4845 = vpop.f32.mrb[0].mxu0
        %v4846 = vpop.f32.mrb[0].mxu0
        %v4847 = vadd.f32 0.0, %v4846
        %v4848 = vpop.f32.mrb[0].mxu0
        %4849 = vmatprep.mubr.bf16.mxu0 %v4547
        %4850 = vmatmul.mubr.bf16.gmra.mrb[0].mxu0 %v4546
        %v4851 = vpop.f32.mrb[0].mxu0
        %v4852 = vadd.f32 0.0, %v4851
        %v4853 = vpop.f32.mrb[0].mxu0
        %v4854 = vpop.f32.mrb[0].mxu0
        %v4855 = vadd.f32 0.0, %v4854
        %v4856 = vpop.f32.mrb[0].mxu0
        %4857 = vmatprep.mubr.bf16.mxu0 %v4550
        %4858 = vmatmul.mubr.bf16.gmra.mrb[0].mxu0 %v4549
        %v4859 = vpop.f32.mrb[0].mxu0
        %v4860 = vadd.f32 0.0, %v4859
        %v4861 = vpop.f32.mrb[0].mxu0
        %v4862 = vpop.f32.mrb[0].mxu0
        %v4863 = vadd.f32 0.0, %v4862
        %v4864 = vpop.f32.mrb[0].mxu0
        %4865 = vmatprep.mubr.bf16.mxu0 %v4553
        %4866 = vmatmul.mubr.bf16.gmra.mrb[0].mxu0 %v4552
        %v4867 = vpop.f32.mrb[0].mxu0
        %v4868 = vadd.f32 0.0, %v4867
        %v4869 = vpop.f32.mrb[0].mxu0
        %v4870 = vpop.f32.mrb[0].mxu0
        %v4871 = vadd.f32 0.0, %v4870
        %v4872 = vpop.f32.mrb[0].mxu0
        %4873 = vmatprep.mubr.bf16.mxu0 %v4556
        %4874 = vmatmul.mubr.bf16.gmra.mrb[0].mxu0 %v4555
        %v4875 = vpop.f32.mrb[0].mxu0
        %v4876 = vadd.f32 0.0, %v4875
        %v4877 = vpop.f32.mrb[0].mxu0
        %v4878 = vpop.f32.mrb[0].mxu0
        %v4879 = vadd.f32 0.0, %v4878
        %v4880 = vpop.f32.mrb[0].mxu0
        %4881 = vmatprep.mubr.bf16.mxu0 %v4559
        %4882 = vmatmul.mubr.bf16.gmra.mrb[0].mxu0 %v4558
        %v4883 = vpop.f32.mrb[0].mxu0
        %v4884 = vadd.f32 0.0, %v4883
        %v4885 = vpop.f32.mrb[0].mxu0
        %v4886 = vpop.f32.mrb[0].mxu0
        %v4887 = vadd.f32 0.0, %v4886
        %v4888 = vpop.f32.mrb[0].mxu0
        %4889 = vmatprep.mubr.bf16.mxu0 %v4562
        %4890 = vmatmul.mubr.bf16.gmra.mrb[0].mxu0 %v4561
        %v4891 = vpop.f32.mrb[0].mxu0
        %v4892 = vadd.f32 0.0, %v4891
        %v4893 = vpop.f32.mrb[0].mxu0
        %v4894 = vpop.f32.mrb[0].mxu0
        %v4895 = vadd.f32 0.0, %v4894
        %v4896 = vpop.f32.mrb[0].mxu0
        %4897 = vmatprep.mubr.bf16.mxu0 %v4565
        %4898 = vmatmul.mubr.bf16.gmra.mrb[0].mxu0 %v4564
        %v4899 = vpop.f32.mrb[0].mxu0
        %v4900 = vadd.f32 0.0, %v4899
        %v4901 = vpop.f32.mrb[0].mxu0
        %v4902 = vpop.f32.mrb[0].mxu0
        %v4903 = vadd.f32 0.0, %v4902
        %v4904 = vpop.f32.mrb[0].mxu0
        %4905 = vmatprep.mubr.bf16.mxu0 %v4568
        %4906 = vmatmul.mubr.bf16.gmra.mrb[0].mxu0 %v4567
        %v4907 = vpop.f32.mrb[0].mxu0
        %v4908 = vadd.f32 0.0, %v4907
        %v4909 = vpop.f32.mrb[0].mxu0
        %v4910 = vpop.f32.mrb[0].mxu0
        %v4911 = vadd.f32 0.0, %v4910
        %v4912 = vpop.f32.mrb[0].mxu0
        %4913 = vmatprep.mubr.bf16.mxu0 %v4571
        %4914 = vmatmul.mubr.bf16.gmra.mrb[0].mxu0 %v4570
        %v4915 = vpop.f32.mrb[0].mxu0
        %v4916 = vadd.f32 0.0, %v4915
        %v4917 = vpop.f32.mrb[0].mxu0
        %v4918 = vpop.f32.mrb[0].mxu0
        %v4919 = vadd.f32 0.0, %v4918
        %v4920 = vpop.f32.mrb[0].mxu0
        %4921 = vmatprep.mubr.bf16.mxu0 %v4574
        %4922 = vmatmul.mubr.bf16.gmra.mrb[0].mxu0 %v4573
        %v4923 = vpop.f32.mrb[0].mxu0
        %v4924 = vadd.f32 0.0, %v4923
        %v4925 = vpop.f32.mrb[0].mxu0
        %v4926 = vpop.f32.mrb[0].mxu0
        %v4927 = vadd.f32 0.0, %v4926
        %v4928 = vpop.f32.mrb[0].mxu0
        %4929 = vdwg.mxu0
        %4930 = vmatprep.subr.bf16.mxu0 0
        %4931 = vmatpush1.bf16.msra.mxu0 %v4737
        %4932 = vmatprep.subr.bf16.mxu0 0
        %4933 = vmatpush1.bf16.msra.mxu0 %v4738
        %4934 = vmatprep.subr.bf16.mxu0 0
        %4935 = vmatpush1.bf16.msra.mxu0 %v4739
        %4936 = vmatprep.subr.bf16.mxu0 0
        %4937 = vmatpush1.bf16.msra.mxu0 %v4740
        %4938 = vmatprep.subr.bf16.mxu0 0
        %4939 = vmatpush1.bf16.msra.mxu0 %v4741
        %4940 = vmatprep.subr.bf16.mxu0 0
        %4941 = vmatpush1.bf16.msra.mxu0 %v4742
        %4942 = vmatprep.subr.bf16.mxu0 0
        %4943 = vmatpush1.bf16.msra.mxu0 %v4743
        %4944 = vmatprep.subr.bf16.mxu0 0
        %4945 = vmatpush1.bf16.msra.mxu0 %v4744
        %4946 = vmatprep.subr.bf16.mxu0 0
        %4947 = vmatpush1.bf16.msra.mxu0 0
        %4948 = vmatprep.subr.bf16.mxu0 0
        %4949 = vmatpush1.bf16.msra.mxu0 0
        %4950 = vmatprep.subr.bf16.mxu0 0
        %4951 = vmatpush1.bf16.msra.mxu0 0
        %4952 = vmatprep.subr.bf16.mxu0 0
        %4953 = vmatpush1.bf16.msra.mxu0 0
        %4954 = vmatprep.subr.bf16.mxu0 0
        %4955 = vmatpush1.bf16.msra.mxu0 0
        %4956 = vmatprep.subr.bf16.mxu0 0
        %4957 = vmatpush1.bf16.msra.mxu0 0
        %4958 = vmatprep.subr.bf16.mxu0 0
        %4959 = vmatpush1.bf16.msra.mxu0 0
        %4960 = vmatprep.subr.bf16.mxu0 0
        %4961 = vmatpush1.bf16.msra.mxu0 0
        %4962 = vmatprep.mubr.bf16.mxu0 0
        %4963 = vmatmul.mubr.bf16.gmra.mrb[0].mxu0 %v4530
        %v4964 = vpop.f32.mrb[0].mxu0
        %v4965 = vadd.f32 %v4804, %v4964
        %v4966 = vpop.f32.mrb[0].mxu0
        %v4967 = vpop.f32.mrb[0].mxu0
        %v4968 = vadd.f32 %v4807, %v4967
        %v4969 = vpop.f32.mrb[0].mxu0
        %4970 = vmatprep.mubr.bf16.mxu0 0
        %4971 = vmatmul.mubr.bf16.gmra.mrb[0].mxu0 %v4533
        %v4972 = vpop.f32.mrb[0].mxu0
        %v4973 = vadd.f32 %v4812, %v4972
        %v4974 = vpop.f32.mrb[0].mxu0
        %v4975 = vpop.f32.mrb[0].mxu0
        %v4976 = vadd.f32 %v4815, %v4975
        %v4977 = vpop.f32.mrb[0].mxu0
        %4978 = vmatprep.mubr.bf16.mxu0 0
        %4979 = vmatmul.mubr.bf16.gmra.mrb[0].mxu0 %v4536
        %v4980 = vpop.f32.mrb[0].mxu0
        %v4981 = vadd.f32 %v4820, %v4980
        %v4982 = vpop.f32.mrb[0].mxu0
        %v4983 = vpop.f32.mrb[0].mxu0
        %v4984 = vadd.f32 %v4823, %v4983
        %v4985 = vpop.f32.mrb[0].mxu0
        %4986 = vmatprep.mubr.bf16.mxu0 0
        %4987 = vmatmul.mubr.bf16.gmra.mrb[0].mxu0 %v4539
        %v4988 = vpop.f32.mrb[0].mxu0
        %v4989 = vadd.f32 %v4828, %v4988
        %v4990 = vpop.f32.mrb[0].mxu0
        %v4991 = vpop.f32.mrb[0].mxu0
        %v4992 = vadd.f32 %v4831, %v4991
        %v4993 = vpop.f32.mrb[0].mxu0
        %4994 = vmatprep.mubr.bf16.mxu0 0
        %4995 = vmatmul.mubr.bf16.gmra.mrb[0].mxu0 %v4542
        %v4996 = vpop.f32.mrb[0].mxu0
        %v4997 = vadd.f32 %v4836, %v4996
        %v4998 = vpop.f32.mrb[0].mxu0
        %v4999 = vpop.f32.mrb[0].mxu0
        %v5000 = vadd.f32 %v4839, %v4999
        %v5001 = vpop.f32.mrb[0].mxu0
        %5002 = vmatprep.mubr.bf16.mxu0 0
        %5003 = vmatmul.mubr.bf16.gmra.mrb[0].mxu0 %v4545
        %v5004 = vpop.f32.mrb[0].mxu0
        %v5005 = vadd.f32 %v4844, %v5004
        %v5006 = vpop.f32.mrb[0].mxu0
        %v5007 = vpop.f32.mrb[0].mxu0
        %v5008 = vadd.f32 %v4847, %v5007
        %v5009 = vpop.f32.mrb[0].mxu0
        %5010 = vmatprep.mubr.bf16.mxu0 0
        %5011 = vmatmul.mubr.bf16.gmra.mrb[0].mxu0 %v4548
        %v5012 = vpop.f32.mrb[0].mxu0
        %v5013 = vadd.f32 %v4852, %v5012
        %v5014 = vpop.f32.mrb[0].mxu0
        %v5015 = vpop.f32.mrb[0].mxu0
        %v5016 = vadd.f32 %v4855, %v5015
        %v5017 = vpop.f32.mrb[0].mxu0
        %5018 = vmatprep.mubr.bf16.mxu0 0
        %5019 = vmatmul.mubr.bf16.gmra.mrb[0].mxu0 %v4551
        %v5020 = vpop.f32.mrb[0].mxu0
        %v5021 = vadd.f32 %v4860, %v5020
        %v5022 = vpop.f32.mrb[0].mxu0
        %v5023 = vpop.f32.mrb[0].mxu0
        %v5024 = vadd.f32 %v4863, %v5023
        %v5025 = vpop.f32.mrb[0].mxu0
        %5026 = vmatprep.mubr.bf16.mxu0 0
        %5027 = vmatmul.mubr.bf16.gmra.mrb[0].mxu0 %v4554
        %v5028 = vpop.f32.mrb[0].mxu0
        %v5029 = vadd.f32 %v4868, %v5028
        %v5030 = vpop.f32.mrb[0].mxu0
        %v5031 = vpop.f32.mrb[0].mxu0
        %v5032 = vadd.f32 %v4871, %v5031
        %v5033 = vpop.f32.mrb[0].mxu0
        %5034 = vmatprep.mubr.bf16.mxu0 0
        %5035 = vmatmul.mubr.bf16.gmra.mrb[0].mxu0 %v4557
        %v5036 = vpop.f32.mrb[0].mxu0
        %v5037 = vadd.f32 %v4876, %v5036
        %v5038 = vpop.f32.mrb[0].mxu0
        %v5039 = vpop.f32.mrb[0].mxu0
        %v5040 = vadd.f32 %v4879, %v5039
        %v5041 = vpop.f32.mrb[0].mxu0
        %5042 = vmatprep.mubr.bf16.mxu0 0
        %5043 = vmatmul.mubr.bf16.gmra.mrb[0].mxu0 %v4560
        %v5044 = vpop.f32.mrb[0].mxu0
        %v5045 = vadd.f32 %v4884, %v5044
        %v5046 = vpop.f32.mrb[0].mxu0
        %v5047 = vpop.f32.mrb[0].mxu0
        %v5048 = vadd.f32 %v4887, %v5047
        %v5049 = vpop.f32.mrb[0].mxu0
        %5050 = vmatprep.mubr.bf16.mxu0 0
        %5051 = vmatmul.mubr.bf16.gmra.mrb[0].mxu0 %v4563
        %v5052 = vpop.f32.mrb[0].mxu0
        %v5053 = vadd.f32 %v4892, %v5052
        %v5054 = vpop.f32.mrb[0].mxu0
        %v5055 = vpop.f32.mrb[0].mxu0
        %v5056 = vadd.f32 %v4895, %v5055
        %v5057 = vpop.f32.mrb[0].mxu0
        %5058 = vmatprep.mubr.bf16.mxu0 0
        %5059 = vmatmul.mubr.bf16.gmra.mrb[0].mxu0 %v4566
        %v5060 = vpop.f32.mrb[0].mxu0
        %v5061 = vadd.f32 %v4900, %v5060
        %v5062 = vpop.f32.mrb[0].mxu0
        %v5063 = vpop.f32.mrb[0].mxu0
        %v5064 = vadd.f32 %v4903, %v5063
        %v5065 = vpop.f32.mrb[0].mxu0
        %5066 = vmatprep.mubr.bf16.mxu0 0
        %5067 = vmatmul.mubr.bf16.gmra.mrb[0].mxu0 %v4569
        %v5068 = vpop.f32.mrb[0].mxu0
        %v5069 = vadd.f32 %v4908, %v5068
        %v5070 = vpop.f32.mrb[0].mxu0
        %v5071 = vpop.f32.mrb[0].mxu0
        %v5072 = vadd.f32 %v4911, %v5071
        %v5073 = vpop.f32.mrb[0].mxu0
        %5074 = vmatprep.mubr.bf16.mxu0 0
        %5075 = vmatmul.mubr.bf16.gmra.mrb[0].mxu0 %v4572
        %v5076 = vpop.f32.mrb[0].mxu0
        %v5077 = vadd.f32 %v4916, %v5076
        %v5078 = vpop.f32.mrb[0].mxu0
        %v5079 = vpop.f32.mrb[0].mxu0
        %v5080 = vadd.f32 %v4919, %v5079
        %v5081 = vpop.f32.mrb[0].mxu0
        %5082 = vmatprep.mubr.bf16.mxu0 0
        %5083 = vmatmul.mubr.bf16.gmra.mrb[0].mxu0 %v4575
        %v5084 = vpop.f32.mrb[0].mxu0
        %v5085 = vadd.f32 %v4924, %v5084
        %v5086 = vpop.f32.mrb[0].mxu0
        %v5087 = vpop.f32.mrb[0].mxu0
        %v5088 = vadd.f32 %v4927, %v5087
        %v5089 = vpop.f32.mrb[0].mxu0
        %5090 = vdwg.mxu0
        %v5091 = vadd.f32 %v3601, %v4965
        %v5092 = vadd.f32 %v3604, %v4968
        %v5093 = vadd.f32 %v3609, %v4973
        %v5094 = vadd.f32 %v3612, %v4976
        %v5095 = vadd.f32 %v3617, %v4981
        %v5096 = vadd.f32 %v3620, %v4984
        %v5097 = vadd.f32 %v3625, %v4989
        %v5098 = vadd.f32 %v3628, %v4992
        %v5099 = vadd.f32 %v3633, %v4997
        %v5100 = vadd.f32 %v3636, %v5000
        %v5101 = vadd.f32 %v3641, %v5005
        %v5102 = vadd.f32 %v3644, %v5008
        %v5103 = vadd.f32 %v3649, %v5013
        %v5104 = vadd.f32 %v3652, %v5016
        %v5105 = vadd.f32 %v3657, %v5021
        %v5106 = vadd.f32 %v3660, %v5024
        %v5107 = vadd.f32 %v3665, %v5029
        %v5108 = vadd.f32 %v3668, %v5032
        %v5109 = vadd.f32 %v3673, %v5037
        %v5110 = vadd.f32 %v3676, %v5040
        %v5111 = vadd.f32 %v3681, %v5045
        %v5112 = vadd.f32 %v3684, %v5048
        %v5113 = vadd.f32 %v3689, %v5053
        %v5114 = vadd.f32 %v3692, %v5056
        %v5115 = vadd.f32 %v3697, %v5061
        %v5116 = vadd.f32 %v3700, %v5064
        %v5117 = vadd.f32 %v3705, %v5069
        %v5118 = vadd.f32 %v3708, %v5072
        %v5119 = vadd.f32 %v3713, %v5077
        %v5120 = vadd.f32 %v3716, %v5080
        %v5121 = vadd.f32 %v3721, %v5085
        %v5122 = vadd.f32 %v3724, %v5088
        %v5123 = vld [vmem:[%s2] sm:$0x1]
        %v5125 = vlaneseq
        %v5126 = vshrl.u32 %v5125, 7
        %v5127 = vsub.s32 0, %v5126
        %v5128 = vrot.slane %v5123, %v5127
        %v5130 = vmul.f32 %v5091, %v5128
        %v5131 = vmul.f32 %v5092, %v5128
        %v5132 = vmul.f32 %v5093, %v5128
        %v5133 = vmul.f32 %v5094, %v5128
        %v5134 = vmul.f32 %v5095, %v5128
        %v5135 = vmul.f32 %v5096, %v5128
        %v5136 = vmul.f32 %v5097, %v5128
        %v5137 = vmul.f32 %v5098, %v5128
        %v5138 = vmul.f32 %v5099, %v5128
        %v5139 = vmul.f32 %v5100, %v5128
        %v5140 = vmul.f32 %v5101, %v5128
        %v5141 = vmul.f32 %v5102, %v5128
        %v5142 = vmul.f32 %v5103, %v5128
        %v5143 = vmul.f32 %v5104, %v5128
        %v5144 = vmul.f32 %v5105, %v5128
        %v5145 = vmul.f32 %v5106, %v5128
        %v5146 = vmul.f32 %v5107, %v5128
        %v5147 = vmul.f32 %v5108, %v5128
        %v5148 = vmul.f32 %v5109, %v5128
        %v5149 = vmul.f32 %v5110, %v5128
        %v5150 = vmul.f32 %v5111, %v5128
        %v5151 = vmul.f32 %v5112, %v5128
        %v5152 = vmul.f32 %v5113, %v5128
        %v5153 = vmul.f32 %v5114, %v5128
        %v5154 = vmul.f32 %v5115, %v5128
        %v5155 = vmul.f32 %v5116, %v5128
        %v5156 = vmul.f32 %v5117, %v5128
        %v5157 = vmul.f32 %v5118, %v5128
        %v5158 = vmul.f32 %v5119, %v5128
        %v5159 = vmul.f32 %v5120, %v5128
        %v5160 = vmul.f32 %v5121, %v5128
        %v5161 = vmul.f32 %v5122, %v5128
        %v5162 = vld [vmem:[%s3] sm:$0x1]
        %v5164 = vlaneseq
        %v5165 = vshrl.u32 %v5164, 7
        %v5166 = vsub.s32 0, %v5165
        %v5167 = vrot.slane %v5162, %v5166
        %v5169 = vadd.f32 %v5130, %v5167
        %v5170 = vadd.f32 %v5131, %v5167
        %v5171 = vadd.f32 %v5132, %v5167
        %v5172 = vadd.f32 %v5133, %v5167
        %v5173 = vadd.f32 %v5134, %v5167
        %v5174 = vadd.f32 %v5135, %v5167
        %v5175 = vadd.f32 %v5136, %v5167
        %v5176 = vadd.f32 %v5137, %v5167
        %v5177 = vadd.f32 %v5138, %v5167
        %v5178 = vadd.f32 %v5139, %v5167
        %v5179 = vadd.f32 %v5140, %v5167
        %v5180 = vadd.f32 %v5141, %v5167
        %v5181 = vadd.f32 %v5142, %v5167
        %v5182 = vadd.f32 %v5143, %v5167
        %v5183 = vadd.f32 %v5144, %v5167
        %v5184 = vadd.f32 %v5145, %v5167
        %v5185 = vadd.f32 %v5146, %v5167
        %v5186 = vadd.f32 %v5147, %v5167
        %v5187 = vadd.f32 %v5148, %v5167
        %v5188 = vadd.f32 %v5149, %v5167
        %v5189 = vadd.f32 %v5150, %v5167
        %v5190 = vadd.f32 %v5151, %v5167
        %v5191 = vadd.f32 %v5152, %v5167
        %v5192 = vadd.f32 %v5153, %v5167
        %v5193 = vadd.f32 %v5154, %v5167
        %v5194 = vadd.f32 %v5155, %v5167
        %v5195 = vadd.f32 %v5156, %v5167
        %v5196 = vadd.f32 %v5157, %v5167
        %v5197 = vadd.f32 %v5158, %v5167
        %v5198 = vadd.f32 %v5159, %v5167
        %v5199 = vadd.f32 %v5160, %v5167
        %v5200 = vadd.f32 %v5161, %v5167
        %v5201 = vmax.f32 %v5169, 0.0
        %v5202 = vmax.f32 %v5170, 0.0
        %v5203 = vmax.f32 %v5171, 0.0
        %v5204 = vmax.f32 %v5172, 0.0
        %v5205 = vmax.f32 %v5173, 0.0
        %v5206 = vmax.f32 %v5174, 0.0
        %v5207 = vmax.f32 %v5175, 0.0
        %v5208 = vmax.f32 %v5176, 0.0
        %v5209 = vmax.f32 %v5177, 0.0
        %v5210 = vmax.f32 %v5178, 0.0
        %v5211 = vmax.f32 %v5179, 0.0
        %v5212 = vmax.f32 %v5180, 0.0
        %v5213 = vmax.f32 %v5181, 0.0
        %v5214 = vmax.f32 %v5182, 0.0
        %v5215 = vmax.f32 %v5183, 0.0
        %v5216 = vmax.f32 %v5184, 0.0
        %v5217 = vmax.f32 %v5185, 0.0
        %v5218 = vmax.f32 %v5186, 0.0
        %v5219 = vmax.f32 %v5187, 0.0
        %v5220 = vmax.f32 %v5188, 0.0
        %v5221 = vmax.f32 %v5189, 0.0
        %v5222 = vmax.f32 %v5190, 0.0
        %v5223 = vmax.f32 %v5191, 0.0
        %v5224 = vmax.f32 %v5192, 0.0
        %v5225 = vmax.f32 %v5193, 0.0
        %v5226 = vmax.f32 %v5194, 0.0
        %v5227 = vmax.f32 %v5195, 0.0
        %v5228 = vmax.f32 %v5196, 0.0
        %v5229 = vmax.f32 %v5197, 0.0
        %v5230 = vmax.f32 %v5198, 0.0
        %v5231 = vmax.f32 %v5199, 0.0
        %v5232 = vmax.f32 %v5200, 0.0
        %v5233 = vpack.c.bf16 %v5202, %v5201
        %v5234 = vpack.c.bf16 %v5204, %v5203
        %v5235 = vpack.c.bf16 %v5206, %v5205
        %v5236 = vpack.c.bf16 %v5208, %v5207
        %v5237 = vpack.c.bf16 %v5210, %v5209
        %v5238 = vpack.c.bf16 %v5212, %v5211
        %v5239 = vpack.c.bf16 %v5214, %v5213
        %v5240 = vpack.c.bf16 %v5216, %v5215
        %v5241 = vpack.c.bf16 %v5218, %v5217
        %v5242 = vpack.c.bf16 %v5220, %v5219
        %v5243 = vpack.c.bf16 %v5222, %v5221
        %v5244 = vpack.c.bf16 %v5224, %v5223
        %v5245 = vpack.c.bf16 %v5226, %v5225
        %v5246 = vpack.c.bf16 %v5228, %v5227
        %v5247 = vpack.c.bf16 %v5230, %v5229
        %v5248 = vpack.c.bf16 %v5232, %v5231
        %v5265 = vunpack.c.l.b16 %v5233
        %v5266 = vunpack.c.h.b16 %v5233
        %v5267 = vunpack.c.l.b16 %v5234
        %v5268 = vunpack.c.h.b16 %v5234
        %v5269 = vunpack.c.l.b16 %v5235
        %v5270 = vunpack.c.h.b16 %v5235
        %v5271 = vunpack.c.l.b16 %v5236
        %v5272 = vunpack.c.h.b16 %v5236
        %v5273 = vunpack.c.l.b16 %v5237
        %v5274 = vunpack.c.h.b16 %v5237
        %v5275 = vunpack.c.l.b16 %v5238
        %v5276 = vunpack.c.h.b16 %v5238
        %v5277 = vunpack.c.l.b16 %v5239
        %v5278 = vunpack.c.h.b16 %v5239
        %v5279 = vunpack.c.l.b16 %v5240
        %v5280 = vunpack.c.h.b16 %v5240
        %v5281 = vunpack.c.l.b16 %v5241
        %v5282 = vunpack.c.h.b16 %v5241
        %v5283 = vunpack.c.l.b16 %v5242
        %v5284 = vunpack.c.h.b16 %v5242
        %v5285 = vunpack.c.l.b16 %v5243
        %v5286 = vunpack.c.h.b16 %v5243
        %v5287 = vunpack.c.l.b16 %v5244
        %v5288 = vunpack.c.h.b16 %v5244
        %v5289 = vunpack.c.l.b16 %v5245
        %v5290 = vunpack.c.h.b16 %v5245
        %v5291 = vunpack.c.l.b16 %v5246
        %v5292 = vunpack.c.h.b16 %v5246
        %v5293 = vunpack.c.l.b16 %v5247
        %v5294 = vunpack.c.h.b16 %v5247
        %v5295 = vunpack.c.l.b16 %v5248
        %v5296 = vunpack.c.h.b16 %v5248
        %v5297 = vpack.c.b16 %v5265, %v5265
        %v5298 = vpack.c.b16 %v5266, %v5266
        %v5299 = vpack.c.b16 %v5267, %v5267
        %v5300 = vpack.c.b16 %v5268, %v5268
        %v5301 = vpack.c.b16 %v5269, %v5269
        %v5302 = vpack.c.b16 %v5270, %v5270
        %v5303 = vpack.c.b16 %v5271, %v5271
        %v5304 = vpack.c.b16 %v5272, %v5272
        %v5305 = vpack.c.b16 %v5273, %v5273
        %v5306 = vpack.c.b16 %v5274, %v5274
        %v5307 = vpack.c.b16 %v5275, %v5275
        %v5308 = vpack.c.b16 %v5276, %v5276
        %v5309 = vpack.c.b16 %v5277, %v5277
        %v5310 = vpack.c.b16 %v5278, %v5278
        %v5311 = vpack.c.b16 %v5279, %v5279
        %v5312 = vpack.c.b16 %v5280, %v5280
        %v5313 = vpack.c.b16 %v5281, %v5281
        %v5314 = vpack.c.b16 %v5282, %v5282
        %v5315 = vpack.c.b16 %v5283, %v5283
        %v5316 = vpack.c.b16 %v5284, %v5284
        %v5317 = vpack.c.b16 %v5285, %v5285
        %v5318 = vpack.c.b16 %v5286, %v5286
        %v5319 = vpack.c.b16 %v5287, %v5287
        %v5320 = vpack.c.b16 %v5288, %v5288
        %v5321 = vpack.c.b16 %v5289, %v5289
        %v5322 = vpack.c.b16 %v5290, %v5290
        %v5323 = vpack.c.b16 %v5291, %v5291
        %v5324 = vpack.c.b16 %v5292, %v5292
        %v5325 = vpack.c.b16 %v5293, %v5293
        %v5326 = vpack.c.b16 %v5294, %v5294
        %v5327 = vpack.c.b16 %v5295, %v5295
        %v5328 = vpack.c.b16 %v5296, %v5296
        %v5330 = vshrl.u32 %v5297, 16
        %v5332 = vrot.slane %v5330, 7
        %v5333 = vshll.u32 %v5297, 16
        %v5335 = vor.u32 %v5332, %v5333
        %v5336 = vrot.slane %v5332, 4
        %v5338 = vshrl.u32 %v5298, 16
        %v5340 = vrot.slane %v5338, 7
        %v5341 = vshll.u32 %v5298, 16
        %v5343 = vor.u32 %v5340, %v5341
        %v5344 = vsel %vm565, %v5336, %v5343
        %v5345 = vrot.slane %v5340, 4
        %v5347 = vshrl.u32 %v5299, 16
        %v5349 = vrot.slane %v5347, 7
        %v5350 = vshll.u32 %v5299, 16
        %v5352 = vor.u32 %v5349, %v5350
        %v5353 = vrot.slane %v5349, 4
        %v5355 = vshrl.u32 %v5300, 16
        %v5357 = vrot.slane %v5355, 7
        %v5358 = vshll.u32 %v5300, 16
        %v5360 = vor.u32 %v5357, %v5358
        %v5361 = vsel %vm565, %v5353, %v5360
        %v5362 = vrot.slane %v5357, 4
        %v5364 = vshrl.u32 %v5301, 16
        %v5366 = vrot.slane %v5364, 7
        %v5367 = vshll.u32 %v5301, 16
        %v5369 = vor.u32 %v5366, %v5367
        %v5370 = vrot.slane %v5366, 4
        %v5372 = vshrl.u32 %v5302, 16
        %v5374 = vrot.slane %v5372, 7
        %v5375 = vshll.u32 %v5302, 16
        %v5377 = vor.u32 %v5374, %v5375
        %v5378 = vsel %vm565, %v5370, %v5377
        %v5379 = vrot.slane %v5374, 4
        %v5381 = vshrl.u32 %v5303, 16
        %v5383 = vrot.slane %v5381, 7
        %v5384 = vshll.u32 %v5303, 16
        %v5386 = vor.u32 %v5383, %v5384
        %v5387 = vrot.slane %v5383, 4
        %v5389 = vshrl.u32 %v5304, 16
        %v5391 = vrot.slane %v5389, 7
        %v5392 = vshll.u32 %v5304, 16
        %v5394 = vor.u32 %v5391, %v5392
        %v5395 = vsel %vm565, %v5387, %v5394
        %v5396 = vrot.slane %v5391, 4
        %v5398 = vshrl.u32 %v5305, 16
        %v5400 = vrot.slane %v5398, 7
        %v5401 = vshll.u32 %v5305, 16
        %v5403 = vor.u32 %v5400, %v5401
        %v5404 = vrot.slane %v5400, 4
        %v5406 = vshrl.u32 %v5306, 16
        %v5408 = vrot.slane %v5406, 7
        %v5409 = vshll.u32 %v5306, 16
        %v5411 = vor.u32 %v5408, %v5409
        %v5412 = vsel %vm565, %v5404, %v5411
        %v5413 = vrot.slane %v5408, 4
        %v5415 = vshrl.u32 %v5307, 16
        %v5417 = vrot.slane %v5415, 7
        %v5418 = vshll.u32 %v5307, 16
        %v5420 = vor.u32 %v5417, %v5418
        %v5421 = vrot.slane %v5417, 4
        %v5423 = vshrl.u32 %v5308, 16
        %v5425 = vrot.slane %v5423, 7
        %v5426 = vshll.u32 %v5308, 16
        %v5428 = vor.u32 %v5425, %v5426
        %v5429 = vsel %vm565, %v5421, %v5428
        %v5430 = vrot.slane %v5425, 4
        %v5432 = vshrl.u32 %v5309, 16
        %v5434 = vrot.slane %v5432, 7
        %v5435 = vshll.u32 %v5309, 16
        %v5437 = vor.u32 %v5434, %v5435
        %v5438 = vrot.slane %v5434, 4
        %v5440 = vshrl.u32 %v5310, 16
        %v5442 = vrot.slane %v5440, 7
        %v5443 = vshll.u32 %v5310, 16
        %v5445 = vor.u32 %v5442, %v5443
        %v5446 = vsel %vm565, %v5438, %v5445
        %v5447 = vrot.slane %v5442, 4
        %v5449 = vshrl.u32 %v5311, 16
        %v5451 = vrot.slane %v5449, 7
        %v5452 = vshll.u32 %v5311, 16
        %v5454 = vor.u32 %v5451, %v5452
        %v5455 = vrot.slane %v5451, 4
        %v5457 = vshrl.u32 %v5312, 16
        %v5459 = vrot.slane %v5457, 7
        %v5460 = vshll.u32 %v5312, 16
        %v5462 = vor.u32 %v5459, %v5460
        %v5463 = vsel %vm565, %v5455, %v5462
        %v5464 = vrot.slane %v5459, 4
        %v5466 = vshrl.u32 %v5313, 16
        %v5468 = vrot.slane %v5466, 7
        %v5469 = vshll.u32 %v5313, 16
        %v5471 = vor.u32 %v5468, %v5469
        %v5472 = vrot.slane %v5468, 4
        %v5474 = vshrl.u32 %v5314, 16
        %v5476 = vrot.slane %v5474, 7
        %v5477 = vshll.u32 %v5314, 16
        %v5479 = vor.u32 %v5476, %v5477
        %v5480 = vsel %vm565, %v5472, %v5479
        %v5481 = vrot.slane %v5476, 4
        %v5483 = vshrl.u32 %v5315, 16
        %v5485 = vrot.slane %v5483, 7
        %v5486 = vshll.u32 %v5315, 16
        %v5488 = vor.u32 %v5485, %v5486
        %v5489 = vrot.slane %v5485, 4
        %v5491 = vshrl.u32 %v5316, 16
        %v5493 = vrot.slane %v5491, 7
        %v5494 = vshll.u32 %v5316, 16
        %v5496 = vor.u32 %v5493, %v5494
        %v5497 = vsel %vm565, %v5489, %v5496
        %v5498 = vrot.slane %v5493, 4
        %v5500 = vshrl.u32 %v5317, 16
        %v5502 = vrot.slane %v5500, 7
        %v5503 = vshll.u32 %v5317, 16
        %v5505 = vor.u32 %v5502, %v5503
        %v5506 = vrot.slane %v5502, 4
        %v5508 = vshrl.u32 %v5318, 16
        %v5510 = vrot.slane %v5508, 7
        %v5511 = vshll.u32 %v5318, 16
        %v5513 = vor.u32 %v5510, %v5511
        %v5514 = vsel %vm565, %v5506, %v5513
        %v5515 = vrot.slane %v5510, 4
        %v5517 = vshrl.u32 %v5319, 16
        %v5519 = vrot.slane %v5517, 7
        %v5520 = vshll.u32 %v5319, 16
        %v5522 = vor.u32 %v5519, %v5520
        %v5523 = vrot.slane %v5519, 4
        %v5525 = vshrl.u32 %v5320, 16
        %v5527 = vrot.slane %v5525, 7
        %v5528 = vshll.u32 %v5320, 16
        %v5530 = vor.u32 %v5527, %v5528
        %v5531 = vsel %vm565, %v5523, %v5530
        %v5532 = vrot.slane %v5527, 4
        %v5534 = vshrl.u32 %v5321, 16
        %v5536 = vrot.slane %v5534, 7
        %v5537 = vshll.u32 %v5321, 16
        %v5539 = vor.u32 %v5536, %v5537
        %v5540 = vrot.slane %v5536, 4
        %v5542 = vshrl.u32 %v5322, 16
        %v5544 = vrot.slane %v5542, 7
        %v5545 = vshll.u32 %v5322, 16
        %v5547 = vor.u32 %v5544, %v5545
        %v5548 = vsel %vm565, %v5540, %v5547
        %v5549 = vrot.slane %v5544, 4
        %v5551 = vshrl.u32 %v5323, 16
        %v5553 = vrot.slane %v5551, 7
        %v5554 = vshll.u32 %v5323, 16
        %v5556 = vor.u32 %v5553, %v5554
        %v5557 = vrot.slane %v5553, 4
        %v5559 = vshrl.u32 %v5324, 16
        %v5561 = vrot.slane %v5559, 7
        %v5562 = vshll.u32 %v5324, 16
        %v5564 = vor.u32 %v5561, %v5562
        %v5565 = vsel %vm565, %v5557, %v5564
        %v5566 = vrot.slane %v5561, 4
        %v5568 = vshrl.u32 %v5325, 16
        %v5570 = vrot.slane %v5568, 7
        %v5571 = vshll.u32 %v5325, 16
        %v5573 = vor.u32 %v5570, %v5571
        %v5574 = vrot.slane %v5570, 4
        %v5576 = vshrl.u32 %v5326, 16
        %v5578 = vrot.slane %v5576, 7
        %v5579 = vshll.u32 %v5326, 16
        %v5581 = vor.u32 %v5578, %v5579
        %v5582 = vsel %vm565, %v5574, %v5581
        %v5583 = vrot.slane %v5578, 4
        %v5585 = vshrl.u32 %v5327, 16
        %v5587 = vrot.slane %v5585, 7
        %v5588 = vshll.u32 %v5327, 16
        %v5590 = vor.u32 %v5587, %v5588
        %v5591 = vrot.slane %v5587, 4
        %v5593 = vshrl.u32 %v5328, 16
        %v5595 = vrot.slane %v5593, 7
        %v5596 = vshll.u32 %v5328, 16
        %v5598 = vor.u32 %v5595, %v5596
        %v5599 = vsel %vm565, %v5591, %v5598
        %v5600 = vrot.slane %v5595, 4
        %v5649 = vld [vmem:[%s334] sm:$0xf]
        %v5650 = vsel %vm887, %v5335, %v5649
        %5651 = vst [vmem:[%s334] sm:$0xf] %v5650
        %5652 = vst [vmem:[%s334 + $0x4] sm:$0xf] %v5344
        %v5653 = vld [vmem:[%s334 + $0x8] sm:$0x1]
        %v5654 = vsel %vm337, %v5345, %v5653
        %5655 = vst [vmem:[%s334 + $0x8] sm:$0x1] %v5654
        %v5656 = vld [vmem:[%s334 + $0xc] sm:$0xf]
        %v5657 = vsel %vm887, %v5352, %v5656
        %5658 = vst [vmem:[%s334 + $0xc] sm:$0xf] %v5657
        %5659 = vst [vmem:[%s334 + $0x10] sm:$0xf] %v5361
        %v5660 = vld [vmem:[%s334 + $0x14] sm:$0x1]
        %v5661 = vsel %vm337, %v5362, %v5660
        %5662 = vst [vmem:[%s334 + $0x14] sm:$0x1] %v5661
        %v5663 = vld [vmem:[%s334 + $0x18] sm:$0xf]
        %v5664 = vsel %vm887, %v5369, %v5663
        %5665 = vst [vmem:[%s334 + $0x18] sm:$0xf] %v5664
        %5666 = vst [vmem:[%s334 + $0x1c] sm:$0xf] %v5378
        %v5667 = vld [vmem:[%s334 + $0x20] sm:$0x1]
        %v5668 = vsel %vm337, %v5379, %v5667
        %5669 = vst [vmem:[%s334 + $0x20] sm:$0x1] %v5668
        %v5670 = vld [vmem:[%s334 + $0x24] sm:$0xf]
        %v5671 = vsel %vm887, %v5386, %v5670
        %5672 = vst [vmem:[%s334 + $0x24] sm:$0xf] %v5671
        %5673 = vst [vmem:[%s334 + $0x28] sm:$0xf] %v5395
        %v5674 = vld [vmem:[%s334 + $0x2c] sm:$0x1]
        %v5675 = vsel %vm337, %v5396, %v5674
        %5676 = vst [vmem:[%s334 + $0x2c] sm:$0x1] %v5675
        %v5677 = vld [vmem:[%s334 + $0x30] sm:$0xf]
        %v5678 = vsel %vm887, %v5403, %v5677
        %5679 = vst [vmem:[%s334 + $0x30] sm:$0xf] %v5678
        %5680 = vst [vmem:[%s334 + $0x34] sm:$0xf] %v5412
        %v5681 = vld [vmem:[%s334 + $0x38] sm:$0x1]
        %v5682 = vsel %vm337, %v5413, %v5681
        %5683 = vst [vmem:[%s334 + $0x38] sm:$0x1] %v5682
        %v5684 = vld [vmem:[%s334 + $0x3c] sm:$0xf]
        %v5685 = vsel %vm887, %v5420, %v5684
        %5686 = vst [vmem:[%s334 + $0x3c] sm:$0xf] %v5685
        %5687 = vst [vmem:[%s334 + $0x40] sm:$0xf] %v5429
        %v5688 = vld [vmem:[%s334 + $0x44] sm:$0x1]
        %v5689 = vsel %vm337, %v5430, %v5688
        %5690 = vst [vmem:[%s334 + $0x44] sm:$0x1] %v5689
        %v5691 = vld [vmem:[%s334 + $0x48] sm:$0xf]
        %v5692 = vsel %vm887, %v5437, %v5691
        %5693 = vst [vmem:[%s334 + $0x48] sm:$0xf] %v5692
        %5694 = vst [vmem:[%s334 + $0x4c] sm:$0xf] %v5446
        %v5695 = vld [vmem:[%s334 + $0x50] sm:$0x1]
        %v5696 = vsel %vm337, %v5447, %v5695
        %5697 = vst [vmem:[%s334 + $0x50] sm:$0x1] %v5696
        %v5698 = vld [vmem:[%s334 + $0x54] sm:$0xf]
        %v5699 = vsel %vm887, %v5454, %v5698
        %5700 = vst [vmem:[%s334 + $0x54] sm:$0xf] %v5699
        %5701 = vst [vmem:[%s334 + $0x58] sm:$0xf] %v5463
        %v5702 = vld [vmem:[%s334 + $0x5c] sm:$0x1]
        %v5703 = vsel %vm337, %v5464, %v5702
        %5704 = vst [vmem:[%s334 + $0x5c] sm:$0x1] %v5703
        %v5705 = vld [vmem:[%s334 + $0x60] sm:$0xf]
        %v5706 = vsel %vm887, %v5471, %v5705
        %5707 = vst [vmem:[%s334 + $0x60] sm:$0xf] %v5706
        %5708 = vst [vmem:[%s334 + $0x64] sm:$0xf] %v5480
        %v5709 = vld [vmem:[%s334 + $0x68] sm:$0x1]
        %v5710 = vsel %vm337, %v5481, %v5709
        %5711 = vst [vmem:[%s334 + $0x68] sm:$0x1] %v5710
        %v5712 = vld [vmem:[%s334 + $0x6c] sm:$0xf]
        %v5713 = vsel %vm887, %v5488, %v5712
        %5714 = vst [vmem:[%s334 + $0x6c] sm:$0xf] %v5713
        %5715 = vst [vmem:[%s334 + $0x70] sm:$0xf] %v5497
        %v5716 = vld [vmem:[%s334 + $0x74] sm:$0x1]
        %v5717 = vsel %vm337, %v5498, %v5716
        %5718 = vst [vmem:[%s334 + $0x74] sm:$0x1] %v5717
        %v5719 = vld [vmem:[%s334 + $0x78] sm:$0xf]
        %v5720 = vsel %vm887, %v5505, %v5719
        %5721 = vst [vmem:[%s334 + $0x78] sm:$0xf] %v5720
        %5722 = vst [vmem:[%s334 + $0x7c] sm:$0xf] %v5514
        %v5723 = vld [vmem:[%s334 + $0x80] sm:$0x1]
        %v5724 = vsel %vm337, %v5515, %v5723
        %5725 = vst [vmem:[%s334 + $0x80] sm:$0x1] %v5724
        %v5726 = vld [vmem:[%s334 + $0x84] sm:$0xf]
        %v5727 = vsel %vm887, %v5522, %v5726
        %5728 = vst [vmem:[%s334 + $0x84] sm:$0xf] %v5727
        %5729 = vst [vmem:[%s334 + $0x88] sm:$0xf] %v5531
        %v5730 = vld [vmem:[%s334 + $0x8c] sm:$0x1]
        %v5731 = vsel %vm337, %v5532, %v5730
        %5732 = vst [vmem:[%s334 + $0x8c] sm:$0x1] %v5731
        %v5733 = vld [vmem:[%s334 + $0x90] sm:$0xf]
        %v5734 = vsel %vm887, %v5539, %v5733
        %5735 = vst [vmem:[%s334 + $0x90] sm:$0xf] %v5734
        %5736 = vst [vmem:[%s334 + $0x94] sm:$0xf] %v5548
        %v5737 = vld [vmem:[%s334 + $0x98] sm:$0x1]
        %v5738 = vsel %vm337, %v5549, %v5737
        %5739 = vst [vmem:[%s334 + $0x98] sm:$0x1] %v5738
        %v5740 = vld [vmem:[%s334 + $0x9c] sm:$0xf]
        %v5741 = vsel %vm887, %v5556, %v5740
        %5742 = vst [vmem:[%s334 + $0x9c] sm:$0xf] %v5741
        %5743 = vst [vmem:[%s334 + $0xa0] sm:$0xf] %v5565
        %v5744 = vld [vmem:[%s334 + $0xa4] sm:$0x1]
        %v5745 = vsel %vm337, %v5566, %v5744
        %5746 = vst [vmem:[%s334 + $0xa4] sm:$0x1] %v5745
        %v5747 = vld [vmem:[%s334 + $0xa8] sm:$0xf]
        %v5748 = vsel %vm887, %v5573, %v5747
        %5749 = vst [vmem:[%s334 + $0xa8] sm:$0xf] %v5748
        %5750 = vst [vmem:[%s334 + $0xac] sm:$0xf] %v5582
        %v5751 = vld [vmem:[%s334 + $0xb0] sm:$0x1]
        %v5752 = vsel %vm337, %v5583, %v5751
        %5753 = vst [vmem:[%s334 + $0xb0] sm:$0x1] %v5752
        %v5754 = vld [vmem:[%s334 + $0xb4] sm:$0xf]
        %v5755 = vsel %vm887, %v5590, %v5754
        %5756 = vst [vmem:[%s334 + $0xb4] sm:$0xf] %v5755
        %5757 = vst [vmem:[%s334 + $0xb8] sm:$0xf] %v5599
        %v5758 = vld [vmem:[%s334 + $0xbc] sm:$0x1]
        %v5759 = vsel %vm337, %v5600, %v5758
        %5760 = vst [vmem:[%s334 + $0xbc] sm:$0x1] %v5759
        %v5761 = vld [vmem:[#allocation2] sm:$0xf]
        %v5762 = vld [vmem:[#allocation2 + $0x4] sm:$0xf]
        %v5763 = vld [vmem:[#allocation2 + $0xc] sm:$0xf]
        %v5764 = vld [vmem:[#allocation2 + $0x10] sm:$0xf]
        %v5765 = vld [vmem:[#allocation2 + $0x18] sm:$0xf]
        %v5766 = vld [vmem:[#allocation2 + $0x1c] sm:$0xf]
        %v5767 = vld [vmem:[#allocation2 + $0x24] sm:$0xf]
        %v5768 = vld [vmem:[#allocation2 + $0x28] sm:$0xf]
        %v5769 = vld [vmem:[#allocation2 + $0x30] sm:$0xf]
        %v5770 = vld [vmem:[#allocation2 + $0x34] sm:$0xf]
        %v5771 = vld [vmem:[#allocation2 + $0x3c] sm:$0xf]
        %v5772 = vld [vmem:[#allocation2 + $0x40] sm:$0xf]
        %v5773 = vld [vmem:[#allocation2 + $0x48] sm:$0xf]
        %v5774 = vld [vmem:[#allocation2 + $0x4c] sm:$0xf]
        %v5775 = vld [vmem:[#allocation2 + $0x54] sm:$0xf]
        %v5776 = vld [vmem:[#allocation2 + $0x58] sm:$0xf]
        %v5777 = vld [vmem:[#allocation2 + $0x60] sm:$0xf]
        %v5778 = vld [vmem:[#allocation2 + $0x64] sm:$0xf]
        %v5779 = vld [vmem:[#allocation2 + $0x6c] sm:$0xf]
        %v5780 = vld [vmem:[#allocation2 + $0x70] sm:$0xf]
        %v5781 = vld [vmem:[#allocation2 + $0x78] sm:$0xf]
        %v5782 = vld [vmem:[#allocation2 + $0x7c] sm:$0xf]
        %v5783 = vld [vmem:[#allocation2 + $0x84] sm:$0xf]
        %v5784 = vld [vmem:[#allocation2 + $0x88] sm:$0xf]
        %v5785 = vld [vmem:[#allocation2 + $0x90] sm:$0xf]
        %v5786 = vld [vmem:[#allocation2 + $0x94] sm:$0xf]
        %v5787 = vld [vmem:[#allocation2 + $0x9c] sm:$0xf]
        %v5788 = vld [vmem:[#allocation2 + $0xa0] sm:$0xf]
        %v5789 = vld [vmem:[#allocation2 + $0xa8] sm:$0xf]
        %v5790 = vld [vmem:[#allocation2 + $0xac] sm:$0xf]
        %v5791 = vld [vmem:[#allocation2 + $0xb4] sm:$0xf]
        %v5792 = vld [vmem:[#allocation2 + $0xb8] sm:$0xf]
        %v5825 = vunpack.c.l.b16 %v5761
        %v5826 = vunpack.c.l.b16 %v5762
        %v5827 = vunpack.c.l.b16 %v5763
        %v5828 = vunpack.c.l.b16 %v5764
        %v5829 = vunpack.c.l.b16 %v5765
        %v5830 = vunpack.c.l.b16 %v5766
        %v5831 = vunpack.c.l.b16 %v5767
        %v5832 = vunpack.c.l.b16 %v5768
        %v5833 = vunpack.c.l.b16 %v5769
        %v5834 = vunpack.c.l.b16 %v5770
        %v5835 = vunpack.c.l.b16 %v5771
        %v5836 = vunpack.c.l.b16 %v5772
        %v5837 = vunpack.c.l.b16 %v5773
        %v5838 = vunpack.c.l.b16 %v5774
        %v5839 = vunpack.c.l.b16 %v5775
        %v5840 = vunpack.c.l.b16 %v5776
        %v5841 = vunpack.c.l.b16 %v5777
        %v5842 = vunpack.c.l.b16 %v5778
        %v5843 = vunpack.c.l.b16 %v5779
        %v5844 = vunpack.c.l.b16 %v5780
        %v5845 = vunpack.c.l.b16 %v5781
        %v5846 = vunpack.c.l.b16 %v5782
        %v5847 = vunpack.c.l.b16 %v5783
        %v5848 = vunpack.c.l.b16 %v5784
        %v5849 = vunpack.c.l.b16 %v5785
        %v5850 = vunpack.c.l.b16 %v5786
        %v5851 = vunpack.c.l.b16 %v5787
        %v5852 = vunpack.c.l.b16 %v5788
        %v5853 = vunpack.c.l.b16 %v5789
        %v5854 = vunpack.c.l.b16 %v5790
        %v5855 = vunpack.c.l.b16 %v5791
        %v5856 = vunpack.c.l.b16 %v5792
        %v5857 = vpack.c.b16 %v5826, %v5825
        %v5858 = vpack.c.b16 %v5828, %v5827
        %v5859 = vpack.c.b16 %v5830, %v5829
        %v5860 = vpack.c.b16 %v5832, %v5831
        %v5861 = vpack.c.b16 %v5834, %v5833
        %v5862 = vpack.c.b16 %v5836, %v5835
        %v5863 = vpack.c.b16 %v5838, %v5837
        %v5864 = vpack.c.b16 %v5840, %v5839
        %v5865 = vpack.c.b16 %v5842, %v5841
        %v5866 = vpack.c.b16 %v5844, %v5843
        %v5867 = vpack.c.b16 %v5846, %v5845
        %v5868 = vpack.c.b16 %v5848, %v5847
        %v5869 = vpack.c.b16 %v5850, %v5849
        %v5870 = vpack.c.b16 %v5852, %v5851
        %v5871 = vpack.c.b16 %v5854, %v5853
        %v5872 = vpack.c.b16 %v5856, %v5855
        %5889 = vst [vmem:[#allocation3] sm:$0xff] %v5857
        %5890 = vst [vmem:[#allocation3 + $0x18] sm:$0xff] %v5858
        %5891 = vst [vmem:[#allocation3 + $0x30] sm:$0xff] %v5859
        %5892 = vst [vmem:[#allocation3 + $0x48] sm:$0xff] %v5860
        %5893 = vst [vmem:[#allocation3 + $0x60] sm:$0xff] %v5861
        %5894 = vst [vmem:[#allocation3 + $0x78] sm:$0xff] %v5862
        %5895 = vst [vmem:[#allocation3 + $0x90] sm:$0xff] %v5863
        %5896 = vst [vmem:[#allocation3 + $0xa8] sm:$0xff] %v5864
        %5897 = vst [vmem:[#allocation3 + $0xc0] sm:$0xff] %v5865
        %5898 = vst [vmem:[#allocation3 + $0xd8] sm:$0xff] %v5866
        %5899 = vst [vmem:[#allocation3 + $0xf0] sm:$0xff] %v5867
        %5900 = vst [vmem:[#allocation3 + $0x108] sm:$0xff] %v5868
        %5901 = vst [vmem:[#allocation3 + $0x120] sm:$0xff] %v5869
        %5902 = vst [vmem:[#allocation3 + $0x138] sm:$0xff] %v5870
        %5903 = vst [vmem:[#allocation3 + $0x150] sm:$0xff] %v5871
        %5904 = vst [vmem:[#allocation3 + $0x168] sm:$0xff] %v5872
        %v5905 = vld [vmem:[#allocation2] sm:$0xf]
        %v5906 = vld [vmem:[#allocation2 + $0x4] sm:$0xf]
        %v5907 = vld [vmem:[#allocation2 + $0x8] sm:$0x1]
        %v5908 = vld [vmem:[#allocation2 + $0xc] sm:$0xf]
        %v5909 = vld [vmem:[#allocation2 + $0x10] sm:$0xf]
        %v5910 = vld [vmem:[#allocation2 + $0x14] sm:$0x1]
        %v5911 = vld [vmem:[#allocation2 + $0x18] sm:$0xf]
        %v5912 = vld [vmem:[#allocation2 + $0x1c] sm:$0xf]
        %v5913 = vld [vmem:[#allocation2 + $0x20] sm:$0x1]
        %v5914 = vld [vmem:[#allocation2 + $0x24] sm:$0xf]
        %v5915 = vld [vmem:[#allocation2 + $0x28] sm:$0xf]
        %v5916 = vld [vmem:[#allocation2 + $0x2c] sm:$0x1]
        %v5917 = vld [vmem:[#allocation2 + $0x30] sm:$0xf]
        %v5918 = vld [vmem:[#allocation2 + $0x34] sm:$0xf]
        %v5919 = vld [vmem:[#allocation2 + $0x38] sm:$0x1]
        %v5920 = vld [vmem:[#allocation2 + $0x3c] sm:$0xf]
        %v5921 = vld [vmem:[#allocation2 + $0x40] sm:$0xf]
        %v5922 = vld [vmem:[#allocation2 + $0x44] sm:$0x1]
        %v5923 = vld [vmem:[#allocation2 + $0x48] sm:$0xf]
        %v5924 = vld [vmem:[#allocation2 + $0x4c] sm:$0xf]
        %v5925 = vld [vmem:[#allocation2 + $0x50] sm:$0x1]
        %v5926 = vld [vmem:[#allocation2 + $0x54] sm:$0xf]
        %v5927 = vld [vmem:[#allocation2 + $0x58] sm:$0xf]
        %v5928 = vld [vmem:[#allocation2 + $0x5c] sm:$0x1]
        %v5929 = vld [vmem:[#allocation2 + $0x60] sm:$0xf]
        %v5930 = vld [vmem:[#allocation2 + $0x64] sm:$0xf]
        %v5931 = vld [vmem:[#allocation2 + $0x68] sm:$0x1]
        %v5932 = vld [vmem:[#allocation2 + $0x6c] sm:$0xf]
        %v5933 = vld [vmem:[#allocation2 + $0x70] sm:$0xf]
        %v5934 = vld [vmem:[#allocation2 + $0x74] sm:$0x1]
        %v5935 = vld [vmem:[#allocation2 + $0x78] sm:$0xf]
        %v5936 = vld [vmem:[#allocation2 + $0x7c] sm:$0xf]
        %v5937 = vld [vmem:[#allocation2 + $0x80] sm:$0x1]
        %v5938 = vld [vmem:[#allocation2 + $0x84] sm:$0xf]
        %v5939 = vld [vmem:[#allocation2 + $0x88] sm:$0xf]
        %v5940 = vld [vmem:[#allocation2 + $0x8c] sm:$0x1]
        %v5941 = vld [vmem:[#allocation2 + $0x90] sm:$0xf]
        %v5942 = vld [vmem:[#allocation2 + $0x94] sm:$0xf]
        %v5943 = vld [vmem:[#allocation2 + $0x98] sm:$0x1]
        %v5944 = vld [vmem:[#allocation2 + $0x9c] sm:$0xf]
        %v5945 = vld [vmem:[#allocation2 + $0xa0] sm:$0xf]
        %v5946 = vld [vmem:[#allocation2 + $0xa4] sm:$0x1]
        %v5947 = vld [vmem:[#allocation2 + $0xa8] sm:$0xf]
        %v5948 = vld [vmem:[#allocation2 + $0xac] sm:$0xf]
        %v5949 = vld [vmem:[#allocation2 + $0xb0] sm:$0x1]
        %v5950 = vld [vmem:[#allocation2 + $0xb4] sm:$0xf]
        %v5951 = vld [vmem:[#allocation2 + $0xb8] sm:$0xf]
        %v5952 = vld [vmem:[#allocation2 + $0xbc] sm:$0x1]
        %v6001 = vunpack.c.l.b16 %v5905
        %v6002 = vunpack.c.l.b16 %v5906
        %v6003 = vunpack.c.l.b16 %v5907
        %v6004 = vunpack.c.l.b16 %v5908
        %v6005 = vunpack.c.l.b16 %v5909
        %v6006 = vunpack.c.l.b16 %v5910
        %v6007 = vunpack.c.l.b16 %v5911
        %v6008 = vunpack.c.l.b16 %v5912
        %v6009 = vunpack.c.l.b16 %v5913
        %v6010 = vunpack.c.l.b16 %v5914
        %v6011 = vunpack.c.l.b16 %v5915
        %v6012 = vunpack.c.l.b16 %v5916
        %v6013 = vunpack.c.l.b16 %v5917
        %v6014 = vunpack.c.l.b16 %v5918
        %v6015 = vunpack.c.l.b16 %v5919
        %v6016 = vunpack.c.l.b16 %v5920
        %v6017 = vunpack.c.l.b16 %v5921
        %v6018 = vunpack.c.l.b16 %v5922
        %v6019 = vunpack.c.l.b16 %v5923
        %v6020 = vunpack.c.l.b16 %v5924
        %v6021 = vunpack.c.l.b16 %v5925
        %v6022 = vunpack.c.l.b16 %v5926
        %v6023 = vunpack.c.l.b16 %v5927
        %v6024 = vunpack.c.l.b16 %v5928
        %v6025 = vunpack.c.l.b16 %v5929
        %v6026 = vunpack.c.l.b16 %v5930
        %v6027 = vunpack.c.l.b16 %v5931
        %v6028 = vunpack.c.l.b16 %v5932
        %v6029 = vunpack.c.l.b16 %v5933
        %v6030 = vunpack.c.l.b16 %v5934
        %v6031 = vunpack.c.l.b16 %v5935
        %v6032 = vunpack.c.l.b16 %v5936
        %v6033 = vunpack.c.l.b16 %v5937
        %v6034 = vunpack.c.l.b16 %v5938
        %v6035 = vunpack.c.l.b16 %v5939
        %v6036 = vunpack.c.l.b16 %v5940
        %v6037 = vunpack.c.l.b16 %v5941
        %v6038 = vunpack.c.l.b16 %v5942
        %v6039 = vunpack.c.l.b16 %v5943
        %v6040 = vunpack.c.l.b16 %v5944
        %v6041 = vunpack.c.l.b16 %v5945
        %v6042 = vunpack.c.l.b16 %v5946
        %v6043 = vunpack.c.l.b16 %v5947
        %v6044 = vunpack.c.l.b16 %v5948
        %v6045 = vunpack.c.l.b16 %v5949
        %v6046 = vunpack.c.l.b16 %v5950
        %v6047 = vunpack.c.l.b16 %v5951
        %v6048 = vunpack.c.l.b16 %v5952
        %v6049 = vpack.c.b16 %v6002, %v6001
        %v6050 = vpack.c.b16 %v6003, %v6003
        %v6051 = vpack.c.b16 %v6005, %v6004
        %v6052 = vpack.c.b16 %v6006, %v6006
        %v6053 = vpack.c.b16 %v6008, %v6007
        %v6054 = vpack.c.b16 %v6009, %v6009
        %v6055 = vpack.c.b16 %v6011, %v6010
        %v6056 = vpack.c.b16 %v6012, %v6012
        %v6057 = vpack.c.b16 %v6014, %v6013
        %v6058 = vpack.c.b16 %v6015, %v6015
        %v6059 = vpack.c.b16 %v6017, %v6016
        %v6060 = vpack.c.b16 %v6018, %v6018
        %v6061 = vpack.c.b16 %v6020, %v6019
        %v6062 = vpack.c.b16 %v6021, %v6021
        %v6063 = vpack.c.b16 %v6023, %v6022
        %v6064 = vpack.c.b16 %v6024, %v6024
        %v6065 = vpack.c.b16 %v6026, %v6025
        %v6066 = vpack.c.b16 %v6027, %v6027
        %v6067 = vpack.c.b16 %v6029, %v6028
        %v6068 = vpack.c.b16 %v6030, %v6030
        %v6069 = vpack.c.b16 %v6032, %v6031
        %v6070 = vpack.c.b16 %v6033, %v6033
        %v6071 = vpack.c.b16 %v6035, %v6034
        %v6072 = vpack.c.b16 %v6036, %v6036
        %v6073 = vpack.c.b16 %v6038, %v6037
        %v6074 = vpack.c.b16 %v6039, %v6039
        %v6075 = vpack.c.b16 %v6041, %v6040
        %v6076 = vpack.c.b16 %v6042, %v6042
        %v6077 = vpack.c.b16 %v6044, %v6043
        %v6078 = vpack.c.b16 %v6045, %v6045
        %v6079 = vpack.c.b16 %v6047, %v6046
        %v6080 = vpack.c.b16 %v6048, %v6048
        %v6082 = vshrl.u32 %v6049, 16
        %v6084 = vshll.u32 %v6049, 16
        %v6086 = vrot.slane %v6084, 1
        %v6087 = vor.u32 %v6082, %v6086
        %v6089 = vshll.u32 %v6050, 16
        %v6091 = vrot.slane %v6089, 1
        %v6092 = vsel %vm1320, %v6087, %v6091
        %v6094 = vshrl.u32 %v6051, 16
        %v6096 = vshll.u32 %v6051, 16
        %v6098 = vrot.slane %v6096, 1
        %v6099 = vor.u32 %v6094, %v6098
        %v6101 = vshll.u32 %v6052, 16
        %v6103 = vrot.slane %v6101, 1
        %v6104 = vsel %vm1320, %v6099, %v6103
        %v6106 = vshrl.u32 %v6053, 16
        %v6108 = vshll.u32 %v6053, 16
        %v6110 = vrot.slane %v6108, 1
        %v6111 = vor.u32 %v6106, %v6110
        %v6113 = vshll.u32 %v6054, 16
        %v6115 = vrot.slane %v6113, 1
        %v6116 = vsel %vm1320, %v6111, %v6115
        %v6118 = vshrl.u32 %v6055, 16
        %v6120 = vshll.u32 %v6055, 16
        %v6122 = vrot.slane %v6120, 1
        %v6123 = vor.u32 %v6118, %v6122
        %v6125 = vshll.u32 %v6056, 16
        %v6127 = vrot.slane %v6125, 1
        %v6128 = vsel %vm1320, %v6123, %v6127
        %v6130 = vshrl.u32 %v6057, 16
        %v6132 = vshll.u32 %v6057, 16
        %v6134 = vrot.slane %v6132, 1
        %v6135 = vor.u32 %v6130, %v6134
        %v6137 = vshll.u32 %v6058, 16
        %v6139 = vrot.slane %v6137, 1
        %v6140 = vsel %vm1320, %v6135, %v6139
        %v6142 = vshrl.u32 %v6059, 16
        %v6144 = vshll.u32 %v6059, 16
        %v6146 = vrot.slane %v6144, 1
        %v6147 = vor.u32 %v6142, %v6146
        %v6149 = vshll.u32 %v6060, 16
        %v6151 = vrot.slane %v6149, 1
        %v6152 = vsel %vm1320, %v6147, %v6151
        %v6154 = vshrl.u32 %v6061, 16
        %v6156 = vshll.u32 %v6061, 16
        %v6158 = vrot.slane %v6156, 1
        %v6159 = vor.u32 %v6154, %v6158
        %v6161 = vshll.u32 %v6062, 16
        %v6163 = vrot.slane %v6161, 1
        %v6164 = vsel %vm1320, %v6159, %v6163
        %v6166 = vshrl.u32 %v6063, 16
        %v6168 = vshll.u32 %v6063, 16
        %v6170 = vrot.slane %v6168, 1
        %v6171 = vor.u32 %v6166, %v6170
        %v6173 = vshll.u32 %v6064, 16
        %v6175 = vrot.slane %v6173, 1
        %v6176 = vsel %vm1320, %v6171, %v6175
        %v6178 = vshrl.u32 %v6065, 16
        %v6180 = vshll.u32 %v6065, 16
        %v6182 = vrot.slane %v6180, 1
        %v6183 = vor.u32 %v6178, %v6182
        %v6185 = vshll.u32 %v6066, 16
        %v6187 = vrot.slane %v6185, 1
        %v6188 = vsel %vm1320, %v6183, %v6187
        %v6190 = vshrl.u32 %v6067, 16
        %v6192 = vshll.u32 %v6067, 16
        %v6194 = vrot.slane %v6192, 1
        %v6195 = vor.u32 %v6190, %v6194
        %v6197 = vshll.u32 %v6068, 16
        %v6199 = vrot.slane %v6197, 1
        %v6200 = vsel %vm1320, %v6195, %v6199
        %v6202 = vshrl.u32 %v6069, 16
        %v6204 = vshll.u32 %v6069, 16
        %v6206 = vrot.slane %v6204, 1
        %v6207 = vor.u32 %v6202, %v6206
        %v6209 = vshll.u32 %v6070, 16
        %v6211 = vrot.slane %v6209, 1
        %v6212 = vsel %vm1320, %v6207, %v6211
        %v6214 = vshrl.u32 %v6071, 16
        %v6216 = vshll.u32 %v6071, 16
        %v6218 = vrot.slane %v6216, 1
        %v6219 = vor.u32 %v6214, %v6218
        %v6221 = vshll.u32 %v6072, 16
        %v6223 = vrot.slane %v6221, 1
        %v6224 = vsel %vm1320, %v6219, %v6223
        %v6226 = vshrl.u32 %v6073, 16
        %v6228 = vshll.u32 %v6073, 16
        %v6230 = vrot.slane %v6228, 1
        %v6231 = vor.u32 %v6226, %v6230
        %v6233 = vshll.u32 %v6074, 16
        %v6235 = vrot.slane %v6233, 1
        %v6236 = vsel %vm1320, %v6231, %v6235
        %v6238 = vshrl.u32 %v6075, 16
        %v6240 = vshll.u32 %v6075, 16
        %v6242 = vrot.slane %v6240, 1
        %v6243 = vor.u32 %v6238, %v6242
        %v6245 = vshll.u32 %v6076, 16
        %v6247 = vrot.slane %v6245, 1
        %v6248 = vsel %vm1320, %v6243, %v6247
        %v6250 = vshrl.u32 %v6077, 16
        %v6252 = vshll.u32 %v6077, 16
        %v6254 = vrot.slane %v6252, 1
        %v6255 = vor.u32 %v6250, %v6254
        %v6257 = vshll.u32 %v6078, 16
        %v6259 = vrot.slane %v6257, 1
        %v6260 = vsel %vm1320, %v6255, %v6259
        %v6262 = vshrl.u32 %v6079, 16
        %v6264 = vshll.u32 %v6079, 16
        %v6266 = vrot.slane %v6264, 1
        %v6267 = vor.u32 %v6262, %v6266
        %v6269 = vshll.u32 %v6080, 16
        %v6271 = vrot.slane %v6269, 1
        %v6272 = vsel %vm1320, %v6267, %v6271
        %6289 = vst [vmem:[#allocation3 + $0x8] sm:$0xff] %v6092
        %6290 = vst [vmem:[#allocation3 + $0x20] sm:$0xff] %v6104
        %6291 = vst [vmem:[#allocation3 + $0x38] sm:$0xff] %v6116
        %6292 = vst [vmem:[#allocation3 + $0x50] sm:$0xff] %v6128
        %6293 = vst [vmem:[#allocation3 + $0x68] sm:$0xff] %v6140
        %6294 = vst [vmem:[#allocation3 + $0x80] sm:$0xff] %v6152
        %6295 = vst [vmem:[#allocation3 + $0x98] sm:$0xff] %v6164
        %6296 = vst [vmem:[#allocation3 + $0xb0] sm:$0xff] %v6176
        %6297 = vst [vmem:[#allocation3 + $0xc8] sm:$0xff] %v6188
        %6298 = vst [vmem:[#allocation3 + $0xe0] sm:$0xff] %v6200
        %6299 = vst [vmem:[#allocation3 + $0xf8] sm:$0xff] %v6212
        %6300 = vst [vmem:[#allocation3 + $0x110] sm:$0xff] %v6224
        %6301 = vst [vmem:[#allocation3 + $0x128] sm:$0xff] %v6236
        %6302 = vst [vmem:[#allocation3 + $0x140] sm:$0xff] %v6248
        %6303 = vst [vmem:[#allocation3 + $0x158] sm:$0xff] %v6260
        %6304 = vst [vmem:[#allocation3 + $0x170] sm:$0xff] %v6272
        %v6305 = vld [vmem:[#allocation2] sm:$0xe]
        %v6306 = vld [vmem:[#allocation2 + $0x4] sm:$0xf]
        %v6307 = vld [vmem:[#allocation2 + $0x8] sm:$0x1]
        %v6308 = vld [vmem:[#allocation2 + $0xc] sm:$0xe]
        %v6309 = vld [vmem:[#allocation2 + $0x10] sm:$0xf]
        %v6310 = vld [vmem:[#allocation2 + $0x14] sm:$0x1]
        %v6311 = vld [vmem:[#allocation2 + $0x18] sm:$0xe]
        %v6312 = vld [vmem:[#allocation2 + $0x1c] sm:$0xf]
        %v6313 = vld [vmem:[#allocation2 + $0x20] sm:$0x1]
        %v6314 = vld [vmem:[#allocation2 + $0x24] sm:$0xe]
        %v6315 = vld [vmem:[#allocation2 + $0x28] sm:$0xf]
        %v6316 = vld [vmem:[#allocation2 + $0x2c] sm:$0x1]
        %v6317 = vld [vmem:[#allocation2 + $0x30] sm:$0xe]
        %v6318 = vld [vmem:[#allocation2 + $0x34] sm:$0xf]
        %v6319 = vld [vmem:[#allocation2 + $0x38] sm:$0x1]
        %v6320 = vld [vmem:[#allocation2 + $0x3c] sm:$0xe]
        %v6321 = vld [vmem:[#allocation2 + $0x40] sm:$0xf]
        %v6322 = vld [vmem:[#allocation2 + $0x44] sm:$0x1]
        %v6323 = vld [vmem:[#allocation2 + $0x48] sm:$0xe]
        %v6324 = vld [vmem:[#allocation2 + $0x4c] sm:$0xf]
        %v6325 = vld [vmem:[#allocation2 + $0x50] sm:$0x1]
        %v6326 = vld [vmem:[#allocation2 + $0x54] sm:$0xe]
        %v6327 = vld [vmem:[#allocation2 + $0x58] sm:$0xf]
        %v6328 = vld [vmem:[#allocation2 + $0x5c] sm:$0x1]
        %v6329 = vld [vmem:[#allocation2 + $0x60] sm:$0xe]
        %v6330 = vld [vmem:[#allocation2 + $0x64] sm:$0xf]
        %v6331 = vld [vmem:[#allocation2 + $0x68] sm:$0x1]
        %v6332 = vld [vmem:[#allocation2 + $0x6c] sm:$0xe]
        %v6333 = vld [vmem:[#allocation2 + $0x70] sm:$0xf]
        %v6334 = vld [vmem:[#allocation2 + $0x74] sm:$0x1]
        %v6335 = vld [vmem:[#allocation2 + $0x78] sm:$0xe]
        %v6336 = vld [vmem:[#allocation2 + $0x7c] sm:$0xf]
        %v6337 = vld [vmem:[#allocation2 + $0x80] sm:$0x1]
        %v6338 = vld [vmem:[#allocation2 + $0x84] sm:$0xe]
        %v6339 = vld [vmem:[#allocation2 + $0x88] sm:$0xf]
        %v6340 = vld [vmem:[#allocation2 + $0x8c] sm:$0x1]
        %v6341 = vld [vmem:[#allocation2 + $0x90] sm:$0xe]
        %v6342 = vld [vmem:[#allocation2 + $0x94] sm:$0xf]
        %v6343 = vld [vmem:[#allocation2 + $0x98] sm:$0x1]
        %v6344 = vld [vmem:[#allocation2 + $0x9c] sm:$0xe]
        %v6345 = vld [vmem:[#allocation2 + $0xa0] sm:$0xf]
        %v6346 = vld [vmem:[#allocation2 + $0xa4] sm:$0x1]
        %v6347 = vld [vmem:[#allocation2 + $0xa8] sm:$0xe]
        %v6348 = vld [vmem:[#allocation2 + $0xac] sm:$0xf]
        %v6349 = vld [vmem:[#allocation2 + $0xb0] sm:$0x1]
        %v6350 = vld [vmem:[#allocation2 + $0xb4] sm:$0xe]
        %v6351 = vld [vmem:[#allocation2 + $0xb8] sm:$0xf]
        %v6352 = vld [vmem:[#allocation2 + $0xbc] sm:$0x1]
        %v6401 = vunpack.c.l.b16 %v6305
        %v6402 = vunpack.c.l.b16 %v6306
        %v6403 = vunpack.c.l.b16 %v6307
        %v6404 = vunpack.c.l.b16 %v6308
        %v6405 = vunpack.c.l.b16 %v6309
        %v6406 = vunpack.c.l.b16 %v6310
        %v6407 = vunpack.c.l.b16 %v6311
        %v6408 = vunpack.c.l.b16 %v6312
        %v6409 = vunpack.c.l.b16 %v6313
        %v6410 = vunpack.c.l.b16 %v6314
        %v6411 = vunpack.c.l.b16 %v6315
        %v6412 = vunpack.c.l.b16 %v6316
        %v6413 = vunpack.c.l.b16 %v6317
        %v6414 = vunpack.c.l.b16 %v6318
        %v6415 = vunpack.c.l.b16 %v6319
        %v6416 = vunpack.c.l.b16 %v6320
        %v6417 = vunpack.c.l.b16 %v6321
        %v6418 = vunpack.c.l.b16 %v6322
        %v6419 = vunpack.c.l.b16 %v6323
        %v6420 = vunpack.c.l.b16 %v6324
        %v6421 = vunpack.c.l.b16 %v6325
        %v6422 = vunpack.c.l.b16 %v6326
        %v6423 = vunpack.c.l.b16 %v6327
        %v6424 = vunpack.c.l.b16 %v6328
        %v6425 = vunpack.c.l.b16 %v6329
        %v6426 = vunpack.c.l.b16 %v6330
        %v6427 = vunpack.c.l.b16 %v6331
        %v6428 = vunpack.c.l.b16 %v6332
        %v6429 = vunpack.c.l.b16 %v6333
        %v6430 = vunpack.c.l.b16 %v6334
        %v6431 = vunpack.c.l.b16 %v6335
        %v6432 = vunpack.c.l.b16 %v6336
        %v6433 = vunpack.c.l.b16 %v6337
        %v6434 = vunpack.c.l.b16 %v6338
        %v6435 = vunpack.c.l.b16 %v6339
        %v6436 = vunpack.c.l.b16 %v6340
        %v6437 = vunpack.c.l.b16 %v6341
        %v6438 = vunpack.c.l.b16 %v6342
        %v6439 = vunpack.c.l.b16 %v6343
        %v6440 = vunpack.c.l.b16 %v6344
        %v6441 = vunpack.c.l.b16 %v6345
        %v6442 = vunpack.c.l.b16 %v6346
        %v6443 = vunpack.c.l.b16 %v6347
        %v6444 = vunpack.c.l.b16 %v6348
        %v6445 = vunpack.c.l.b16 %v6349
        %v6446 = vunpack.c.l.b16 %v6350
        %v6447 = vunpack.c.l.b16 %v6351
        %v6448 = vunpack.c.l.b16 %v6352
        %v6449 = vpack.c.b16 %v6402, %v6401
        %v6450 = vpack.c.b16 %v6403, %v6403
        %v6451 = vpack.c.b16 %v6405, %v6404
        %v6452 = vpack.c.b16 %v6406, %v6406
        %v6453 = vpack.c.b16 %v6408, %v6407
        %v6454 = vpack.c.b16 %v6409, %v6409
        %v6455 = vpack.c.b16 %v6411, %v6410
        %v6456 = vpack.c.b16 %v6412, %v6412
        %v6457 = vpack.c.b16 %v6414, %v6413
        %v6458 = vpack.c.b16 %v6415, %v6415
        %v6459 = vpack.c.b16 %v6417, %v6416
        %v6460 = vpack.c.b16 %v6418, %v6418
        %v6461 = vpack.c.b16 %v6420, %v6419
        %v6462 = vpack.c.b16 %v6421, %v6421
        %v6463 = vpack.c.b16 %v6423, %v6422
        %v6464 = vpack.c.b16 %v6424, %v6424
        %v6465 = vpack.c.b16 %v6426, %v6425
        %v6466 = vpack.c.b16 %v6427, %v6427
        %v6467 = vpack.c.b16 %v6429, %v6428
        %v6468 = vpack.c.b16 %v6430, %v6430
        %v6469 = vpack.c.b16 %v6432, %v6431
        %v6470 = vpack.c.b16 %v6433, %v6433
        %v6471 = vpack.c.b16 %v6435, %v6434
        %v6472 = vpack.c.b16 %v6436, %v6436
        %v6473 = vpack.c.b16 %v6438, %v6437
        %v6474 = vpack.c.b16 %v6439, %v6439
        %v6475 = vpack.c.b16 %v6441, %v6440
        %v6476 = vpack.c.b16 %v6442, %v6442
        %v6477 = vpack.c.b16 %v6444, %v6443
        %v6478 = vpack.c.b16 %v6445, %v6445
        %v6479 = vpack.c.b16 %v6447, %v6446
        %v6480 = vpack.c.b16 %v6448, %v6448
        %v6481 = vrot.slane %v6449, 1
        %v6482 = vrot.slane %v6450, 1
        %v6483 = vsel %vm1721, %v6481, %v6482
        %v6484 = vrot.slane %v6451, 1
        %v6485 = vrot.slane %v6452, 1
        %v6486 = vsel %vm1721, %v6484, %v6485
        %v6487 = vrot.slane %v6453, 1
        %v6488 = vrot.slane %v6454, 1
        %v6489 = vsel %vm1721, %v6487, %v6488
        %v6490 = vrot.slane %v6455, 1
        %v6491 = vrot.slane %v6456, 1
        %v6492 = vsel %vm1721, %v6490, %v6491
        %v6493 = vrot.slane %v6457, 1
        %v6494 = vrot.slane %v6458, 1
        %v6495 = vsel %vm1721, %v6493, %v6494
        %v6496 = vrot.slane %v6459, 1
        %v6497 = vrot.slane %v6460, 1
        %v6498 = vsel %vm1721, %v6496, %v6497
        %v6499 = vrot.slane %v6461, 1
        %v6500 = vrot.slane %v6462, 1
        %v6501 = vsel %vm1721, %v6499, %v6500
        %v6502 = vrot.slane %v6463, 1
        %v6503 = vrot.slane %v6464, 1
        %v6504 = vsel %vm1721, %v6502, %v6503
        %v6505 = vrot.slane %v6465, 1
        %v6506 = vrot.slane %v6466, 1
        %v6507 = vsel %vm1721, %v6505, %v6506
        %v6508 = vrot.slane %v6467, 1
        %v6509 = vrot.slane %v6468, 1
        %v6510 = vsel %vm1721, %v6508, %v6509
        %v6511 = vrot.slane %v6469, 1
        %v6512 = vrot.slane %v6470, 1
        %v6513 = vsel %vm1721, %v6511, %v6512
        %v6514 = vrot.slane %v6471, 1
        %v6515 = vrot.slane %v6472, 1
        %v6516 = vsel %vm1721, %v6514, %v6515
        %v6517 = vrot.slane %v6473, 1
        %v6518 = vrot.slane %v6474, 1
        %v6519 = vsel %vm1721, %v6517, %v6518
        %v6520 = vrot.slane %v6475, 1
        %v6521 = vrot.slane %v6476, 1
        %v6522 = vsel %vm1721, %v6520, %v6521
        %v6523 = vrot.slane %v6477, 1
        %v6524 = vrot.slane %v6478, 1
        %v6525 = vsel %vm1721, %v6523, %v6524
        %v6526 = vrot.slane %v6479, 1
        %v6527 = vrot.slane %v6480, 1
        %v6528 = vsel %vm1721, %v6526, %v6527
        %6545 = vst [vmem:[#allocation3 + $0x10] sm:$0xff] %v6483
        %6546 = vst [vmem:[#allocation3 + $0x28] sm:$0xff] %v6486
        %6547 = vst [vmem:[#allocation3 + $0x40] sm:$0xff] %v6489
        %6548 = vst [vmem:[#allocation3 + $0x58] sm:$0xff] %v6492
        %6549 = vst [vmem:[#allocation3 + $0x70] sm:$0xff] %v6495
        %6550 = vst [vmem:[#allocation3 + $0x88] sm:$0xff] %v6498
        %6551 = vst [vmem:[#allocation3 + $0xa0] sm:$0xff] %v6501
        %6552 = vst [vmem:[#allocation3 + $0xb8] sm:$0xff] %v6504
        %6553 = vst [vmem:[#allocation3 + $0xd0] sm:$0xff] %v6507
        %6554 = vst [vmem:[#allocation3 + $0xe8] sm:$0xff] %v6510
        %6555 = vst [vmem:[#allocation3 + $0x100] sm:$0xff] %v6513
        %6556 = vst [vmem:[#allocation3 + $0x118] sm:$0xff] %v6516
        %6557 = vst [vmem:[#allocation3 + $0x130] sm:$0xff] %v6519
        %6558 = vst [vmem:[#allocation3 + $0x148] sm:$0xff] %v6522
        %6559 = vst [vmem:[#allocation3 + $0x160] sm:$0xff] %v6525
        %6560 = vst [vmem:[#allocation3 + $0x178] sm:$0xff] %v6528
        %v6561 = vld [vmem:[#allocation3] sm:$0xff]
        %v6562 = vld [vmem:[#allocation3 + $0x8] sm:$0xff]
        %v6563 = vld [vmem:[#allocation3 + $0x10] sm:$0xff]
        %v6564 = vld [vmem:[#allocation3 + $0x18] sm:$0xff]
        %v6565 = vld [vmem:[#allocation3 + $0x20] sm:$0xff]
        %v6566 = vld [vmem:[#allocation3 + $0x28] sm:$0xff]
        %v6567 = vld [vmem:[#allocation3 + $0x30] sm:$0xff]
        %v6568 = vld [vmem:[#allocation3 + $0x38] sm:$0xff]
        %v6569 = vld [vmem:[#allocation3 + $0x40] sm:$0xff]
        %v6570 = vld [vmem:[#allocation3 + $0x48] sm:$0xff]
        %v6571 = vld [vmem:[#allocation3 + $0x50] sm:$0xff]
        %v6572 = vld [vmem:[#allocation3 + $0x58] sm:$0xff]
        %v6573 = vld [vmem:[#allocation3 + $0x60] sm:$0xff]
        %v6574 = vld [vmem:[#allocation3 + $0x68] sm:$0xff]
        %v6575 = vld [vmem:[#allocation3 + $0x70] sm:$0xff]
        %v6576 = vld [vmem:[#allocation3 + $0x78] sm:$0xff]
        %v6577 = vld [vmem:[#allocation3 + $0x80] sm:$0xff]
        %v6578 = vld [vmem:[#allocation3 + $0x88] sm:$0xff]
        %v6579 = vld [vmem:[#allocation3 + $0x90] sm:$0xff]
        %v6580 = vld [vmem:[#allocation3 + $0x98] sm:$0xff]
        %v6581 = vld [vmem:[#allocation3 + $0xa0] sm:$0xff]
        %v6582 = vld [vmem:[#allocation3 + $0xa8] sm:$0xff]
        %v6583 = vld [vmem:[#allocation3 + $0xb0] sm:$0xff]
        %v6584 = vld [vmem:[#allocation3 + $0xb8] sm:$0xff]
        %v6585 = vld [vmem:[#allocation3 + $0xc0] sm:$0xff]
        %v6586 = vld [vmem:[#allocation3 + $0xc8] sm:$0xff]
        %v6587 = vld [vmem:[#allocation3 + $0xd0] sm:$0xff]
        %v6588 = vld [vmem:[#allocation3 + $0xd8] sm:$0xff]
        %v6589 = vld [vmem:[#allocation3 + $0xe0] sm:$0xff]
        %v6590 = vld [vmem:[#allocation3 + $0xe8] sm:$0xff]
        %v6591 = vld [vmem:[#allocation3 + $0xf0] sm:$0xff]
        %v6592 = vld [vmem:[#allocation3 + $0xf8] sm:$0xff]
        %v6593 = vld [vmem:[#allocation3 + $0x100] sm:$0xff]
        %v6594 = vld [vmem:[#allocation3 + $0x108] sm:$0xff]
        %v6595 = vld [vmem:[#allocation3 + $0x110] sm:$0xff]
        %v6596 = vld [vmem:[#allocation3 + $0x118] sm:$0xff]
        %v6597 = vld [vmem:[#allocation3 + $0x120] sm:$0xff]
        %v6598 = vld [vmem:[#allocation3 + $0x128] sm:$0xff]
        %v6599 = vld [vmem:[#allocation3 + $0x130] sm:$0xff]
        %v6600 = vld [vmem:[#allocation3 + $0x138] sm:$0xff]
        %v6601 = vld [vmem:[#allocation3 + $0x140] sm:$0xff]
        %v6602 = vld [vmem:[#allocation3 + $0x148] sm:$0xff]
        %v6603 = vld [vmem:[#allocation3 + $0x150] sm:$0xff]
        %v6604 = vld [vmem:[#allocation3 + $0x158] sm:$0xff]
        %v6605 = vld [vmem:[#allocation3 + $0x160] sm:$0xff]
        %v6606 = vld [vmem:[#allocation3 + $0x168] sm:$0xff]
        %v6607 = vld [vmem:[#allocation3 + $0x170] sm:$0xff]
        %v6608 = vld [vmem:[#allocation3 + $0x178] sm:$0xff]
        %v6609 = vld [vmem:[#allocation9] sm:$0xf]
        %v6610 = vld [vmem:[#allocation9 + $0x4] sm:$0xf]
        %v6611 = vld [vmem:[#allocation9 + $0x8] sm:$0xf]
        %v6612 = vld [vmem:[#allocation9 + $0xc] sm:$0xf]
        %v6613 = vld [vmem:[#allocation9 + $0x10] sm:$0xf]
        %v6614 = vld [vmem:[#allocation9 + $0x14] sm:$0xf]
        %v6615 = vld [vmem:[#allocation9 + $0x18] sm:$0xf]
        %v6616 = vld [vmem:[#allocation9 + $0x1c] sm:$0xf]
        %v6617 = vld [vmem:[#allocation9 + $0x20] sm:$0xf]
        %v6618 = vld [vmem:[#allocation9 + $0x24] sm:$0xf]
        %v6619 = vld [vmem:[#allocation9 + $0x28] sm:$0xf]
        %v6620 = vld [vmem:[#allocation9 + $0x2c] sm:$0xf]
        %v6621 = vld [vmem:[#allocation9 + $0x30] sm:$0xf]
        %v6622 = vld [vmem:[#allocation9 + $0x34] sm:$0xf]
        %v6623 = vld [vmem:[#allocation9 + $0x38] sm:$0xf]
        %v6624 = vld [vmem:[#allocation9 + $0x3c] sm:$0xf]
        %v6625 = vld [vmem:[#allocation9 + $0x40] sm:$0xf]
        %v6626 = vld [vmem:[#allocation9 + $0x44] sm:$0xf]
        %v6627 = vld [vmem:[#allocation9 + $0x48] sm:$0xf]
        %v6628 = vld [vmem:[#allocation9 + $0x4c] sm:$0xf]
        %v6629 = vld [vmem:[#allocation9 + $0x50] sm:$0xf]
        %v6630 = vld [vmem:[#allocation9 + $0x54] sm:$0xf]
        %v6631 = vld [vmem:[#allocation9 + $0x58] sm:$0xf]
        %v6632 = vld [vmem:[#allocation9 + $0x5c] sm:$0xf]
        %v6633 = vld [vmem:[#allocation9 + $0x60] sm:$0xf]
        %v6634 = vld [vmem:[#allocation9 + $0x64] sm:$0xf]
        %v6635 = vld [vmem:[#allocation9 + $0x68] sm:$0xf]
        %v6636 = vld [vmem:[#allocation9 + $0x6c] sm:$0xf]
        %v6637 = vld [vmem:[#allocation9 + $0x70] sm:$0xf]
        %v6638 = vld [vmem:[#allocation9 + $0x74] sm:$0xf]
        %v6639 = vld [vmem:[#allocation9 + $0x78] sm:$0xf]
        %v6640 = vld [vmem:[#allocation9 + $0x7c] sm:$0xf]
        %v6641 = vld [vmem:[#allocation9 + $0x80] sm:$0xf]
        %v6642 = vld [vmem:[#allocation9 + $0x84] sm:$0xf]
        %v6643 = vld [vmem:[#allocation9 + $0x88] sm:$0xf]
        %v6644 = vld [vmem:[#allocation9 + $0x8c] sm:$0xf]
        %v6645 = vld [vmem:[#allocation9 + $0x90] sm:$0xf]
        %v6646 = vld [vmem:[#allocation9 + $0x94] sm:$0xf]
        %v6647 = vld [vmem:[#allocation9 + $0x98] sm:$0xf]
        %v6648 = vld [vmem:[#allocation9 + $0x9c] sm:$0xf]
        %v6649 = vld [vmem:[#allocation9 + $0xa0] sm:$0xf]
        %v6650 = vld [vmem:[#allocation9 + $0xa4] sm:$0xf]
        %v6651 = vld [vmem:[#allocation9 + $0xa8] sm:$0xf]
        %v6652 = vld [vmem:[#allocation9 + $0xac] sm:$0xf]
        %v6653 = vld [vmem:[#allocation9 + $0xb0] sm:$0xf]
        %v6654 = vld [vmem:[#allocation9 + $0xb4] sm:$0xf]
        %v6655 = vld [vmem:[#allocation9 + $0xb8] sm:$0xf]
        %v6656 = vld [vmem:[#allocation9 + $0xbc] sm:$0xf]
        %v6657 = vld [vmem:[%s334] sm:$0xf]
        %v6658 = vld [vmem:[%s334 + $0x4] sm:$0xf]
        %v6659 = vld [vmem:[%s334 + $0xc] sm:$0xf]
        %v6660 = vld [vmem:[%s334 + $0x10] sm:$0xf]
        %v6661 = vld [vmem:[%s334 + $0x18] sm:$0xf]
        %v6662 = vld [vmem:[%s334 + $0x1c] sm:$0xf]
        %v6663 = vld [vmem:[%s334 + $0x24] sm:$0xf]
        %v6664 = vld [vmem:[%s334 + $0x28] sm:$0xf]
        %v6665 = vld [vmem:[%s334 + $0x30] sm:$0xf]
        %v6666 = vld [vmem:[%s334 + $0x34] sm:$0xf]
        %v6667 = vld [vmem:[%s334 + $0x3c] sm:$0xf]
        %v6668 = vld [vmem:[%s334 + $0x40] sm:$0xf]
        %v6669 = vld [vmem:[%s334 + $0x48] sm:$0xf]
        %v6670 = vld [vmem:[%s334 + $0x4c] sm:$0xf]
        %v6671 = vld [vmem:[%s334 + $0x54] sm:$0xf]
        %v6672 = vld [vmem:[%s334 + $0x58] sm:$0xf]
        %v6673 = vld [vmem:[%s334 + $0x60] sm:$0xf]
        %v6674 = vld [vmem:[%s334 + $0x64] sm:$0xf]
        %v6675 = vld [vmem:[%s334 + $0x6c] sm:$0xf]
        %v6676 = vld [vmem:[%s334 + $0x70] sm:$0xf]
        %v6677 = vld [vmem:[%s334 + $0x78] sm:$0xf]
        %v6678 = vld [vmem:[%s334 + $0x7c] sm:$0xf]
        %v6679 = vld [vmem:[%s334 + $0x84] sm:$0xf]
        %v6680 = vld [vmem:[%s334 + $0x88] sm:$0xf]
        %v6681 = vld [vmem:[%s334 + $0x90] sm:$0xf]
        %v6682 = vld [vmem:[%s334 + $0x94] sm:$0xf]
        %v6683 = vld [vmem:[%s334 + $0x9c] sm:$0xf]
        %v6684 = vld [vmem:[%s334 + $0xa0] sm:$0xf]
        %v6685 = vld [vmem:[%s334 + $0xa8] sm:$0xf]
        %v6686 = vld [vmem:[%s334 + $0xac] sm:$0xf]
        %v6687 = vld [vmem:[%s334 + $0xb4] sm:$0xf]
        %v6688 = vld [vmem:[%s334 + $0xb8] sm:$0xf]
        %v6721 = vunpack.c.l.b16 %v6657
        %v6722 = vunpack.c.l.b16 %v6658
        %v6723 = vunpack.c.l.b16 %v6659
        %v6724 = vunpack.c.l.b16 %v6660
        %v6725 = vunpack.c.l.b16 %v6661
        %v6726 = vunpack.c.l.b16 %v6662
        %v6727 = vunpack.c.l.b16 %v6663
        %v6728 = vunpack.c.l.b16 %v6664
        %v6729 = vunpack.c.l.b16 %v6665
        %v6730 = vunpack.c.l.b16 %v6666
        %v6731 = vunpack.c.l.b16 %v6667
        %v6732 = vunpack.c.l.b16 %v6668
        %v6733 = vunpack.c.l.b16 %v6669
        %v6734 = vunpack.c.l.b16 %v6670
        %v6735 = vunpack.c.l.b16 %v6671
        %v6736 = vunpack.c.l.b16 %v6672
        %v6737 = vunpack.c.l.b16 %v6673
        %v6738 = vunpack.c.l.b16 %v6674
        %v6739 = vunpack.c.l.b16 %v6675
        %v6740 = vunpack.c.l.b16 %v6676
        %v6741 = vunpack.c.l.b16 %v6677
        %v6742 = vunpack.c.l.b16 %v6678
        %v6743 = vunpack.c.l.b16 %v6679
        %v6744 = vunpack.c.l.b16 %v6680
        %v6745 = vunpack.c.l.b16 %v6681
        %v6746 = vunpack.c.l.b16 %v6682
        %v6747 = vunpack.c.l.b16 %v6683
        %v6748 = vunpack.c.l.b16 %v6684
        %v6749 = vunpack.c.l.b16 %v6685
        %v6750 = vunpack.c.l.b16 %v6686
        %v6751 = vunpack.c.l.b16 %v6687
        %v6752 = vunpack.c.l.b16 %v6688
        %v6753 = vpack.c.b16 %v6722, %v6721
        %v6754 = vpack.c.b16 %v6724, %v6723
        %v6755 = vpack.c.b16 %v6726, %v6725
        %v6756 = vpack.c.b16 %v6728, %v6727
        %v6757 = vpack.c.b16 %v6730, %v6729
        %v6758 = vpack.c.b16 %v6732, %v6731
        %v6759 = vpack.c.b16 %v6734, %v6733
        %v6760 = vpack.c.b16 %v6736, %v6735
        %v6761 = vpack.c.b16 %v6738, %v6737
        %v6762 = vpack.c.b16 %v6740, %v6739
        %v6763 = vpack.c.b16 %v6742, %v6741
        %v6764 = vpack.c.b16 %v6744, %v6743
        %v6765 = vpack.c.b16 %v6746, %v6745
        %v6766 = vpack.c.b16 %v6748, %v6747
        %v6767 = vpack.c.b16 %v6750, %v6749
        %v6768 = vpack.c.b16 %v6752, %v6751
        %6785 = vst [vmem:[#allocation3] sm:$0xff] %v6753
        %6786 = vst [vmem:[#allocation3 + $0x18] sm:$0xff] %v6754
        %6787 = vst [vmem:[#allocation3 + $0x30] sm:$0xff] %v6755
        %6788 = vst [vmem:[#allocation3 + $0x48] sm:$0xff] %v6756
        %6789 = vst [vmem:[#allocation3 + $0x60] sm:$0xff] %v6757
        %6790 = vst [vmem:[#allocation3 + $0x78] sm:$0xff] %v6758
        %6791 = vst [vmem:[#allocation3 + $0x90] sm:$0xff] %v6759
        %6792 = vst [vmem:[#allocation3 + $0xa8] sm:$0xff] %v6760
        %6793 = vst [vmem:[#allocation3 + $0xc0] sm:$0xff] %v6761
        %6794 = vst [vmem:[#allocation3 + $0xd8] sm:$0xff] %v6762
        %6795 = vst [vmem:[#allocation3 + $0xf0] sm:$0xff] %v6763
        %6796 = vst [vmem:[#allocation3 + $0x108] sm:$0xff] %v6764
        %6797 = vst [vmem:[#allocation3 + $0x120] sm:$0xff] %v6765
        %6798 = vst [vmem:[#allocation3 + $0x138] sm:$0xff] %v6766
        %6799 = vst [vmem:[#allocation3 + $0x150] sm:$0xff] %v6767
        %6800 = vst [vmem:[#allocation3 + $0x168] sm:$0xff] %v6768
        %v6801 = vld [vmem:[%s334] sm:$0xf]
        %v6802 = vld [vmem:[%s334 + $0x4] sm:$0xf]
        %v6803 = vld [vmem:[%s334 + $0x8] sm:$0x1]
        %v6804 = vld [vmem:[%s334 + $0xc] sm:$0xf]
        %v6805 = vld [vmem:[%s334 + $0x10] sm:$0xf]
        %v6806 = vld [vmem:[%s334 + $0x14] sm:$0x1]
        %v6807 = vld [vmem:[%s334 + $0x18] sm:$0xf]
        %v6808 = vld [vmem:[%s334 + $0x1c] sm:$0xf]
        %v6809 = vld [vmem:[%s334 + $0x20] sm:$0x1]
        %v6810 = vld [vmem:[%s334 + $0x24] sm:$0xf]
        %v6811 = vld [vmem:[%s334 + $0x28] sm:$0xf]
        %v6812 = vld [vmem:[%s334 + $0x2c] sm:$0x1]
        %v6813 = vld [vmem:[%s334 + $0x30] sm:$0xf]
        %v6814 = vld [vmem:[%s334 + $0x34] sm:$0xf]
        %v6815 = vld [vmem:[%s334 + $0x38] sm:$0x1]
        %v6816 = vld [vmem:[%s334 + $0x3c] sm:$0xf]
        %v6817 = vld [vmem:[%s334 + $0x40] sm:$0xf]
        %v6818 = vld [vmem:[%s334 + $0x44] sm:$0x1]
        %v6819 = vld [vmem:[%s334 + $0x48] sm:$0xf]
        %v6820 = vld [vmem:[%s334 + $0x4c] sm:$0xf]
        %v6821 = vld [vmem:[%s334 + $0x50] sm:$0x1]
        %v6822 = vld [vmem:[%s334 + $0x54] sm:$0xf]
        %v6823 = vld [vmem:[%s334 + $0x58] sm:$0xf]
        %v6824 = vld [vmem:[%s334 + $0x5c] sm:$0x1]
        %v6825 = vld [vmem:[%s334 + $0x60] sm:$0xf]
        %v6826 = vld [vmem:[%s334 + $0x64] sm:$0xf]
        %v6827 = vld [vmem:[%s334 + $0x68] sm:$0x1]
        %v6828 = vld [vmem:[%s334 + $0x6c] sm:$0xf]
        %v6829 = vld [vmem:[%s334 + $0x70] sm:$0xf]
        %v6830 = vld [vmem:[%s334 + $0x74] sm:$0x1]
        %v6831 = vld [vmem:[%s334 + $0x78] sm:$0xf]
        %v6832 = vld [vmem:[%s334 + $0x7c] sm:$0xf]
        %v6833 = vld [vmem:[%s334 + $0x80] sm:$0x1]
        %v6834 = vld [vmem:[%s334 + $0x84] sm:$0xf]
        %v6835 = vld [vmem:[%s334 + $0x88] sm:$0xf]
        %v6836 = vld [vmem:[%s334 + $0x8c] sm:$0x1]
        %v6837 = vld [vmem:[%s334 + $0x90] sm:$0xf]
        %v6838 = vld [vmem:[%s334 + $0x94] sm:$0xf]
        %v6839 = vld [vmem:[%s334 + $0x98] sm:$0x1]
        %v6840 = vld [vmem:[%s334 + $0x9c] sm:$0xf]
        %v6841 = vld [vmem:[%s334 + $0xa0] sm:$0xf]
        %v6842 = vld [vmem:[%s334 + $0xa4] sm:$0x1]
        %v6843 = vld [vmem:[%s334 + $0xa8] sm:$0xf]
        %v6844 = vld [vmem:[%s334 + $0xac] sm:$0xf]
        %v6845 = vld [vmem:[%s334 + $0xb0] sm:$0x1]
        %v6846 = vld [vmem:[%s334 + $0xb4] sm:$0xf]
        %v6847 = vld [vmem:[%s334 + $0xb8] sm:$0xf]
        %v6848 = vld [vmem:[%s334 + $0xbc] sm:$0x1]
        %v6897 = vunpack.c.l.b16 %v6801
        %v6898 = vunpack.c.l.b16 %v6802
        %v6899 = vunpack.c.l.b16 %v6803
        %v6900 = vunpack.c.l.b16 %v6804
        %v6901 = vunpack.c.l.b16 %v6805
        %v6902 = vunpack.c.l.b16 %v6806
        %v6903 = vunpack.c.l.b16 %v6807
        %v6904 = vunpack.c.l.b16 %v6808
        %v6905 = vunpack.c.l.b16 %v6809
        %v6906 = vunpack.c.l.b16 %v6810
        %v6907 = vunpack.c.l.b16 %v6811
        %v6908 = vunpack.c.l.b16 %v6812
        %v6909 = vunpack.c.l.b16 %v6813
        %v6910 = vunpack.c.l.b16 %v6814
        %v6911 = vunpack.c.l.b16 %v6815
        %v6912 = vunpack.c.l.b16 %v6816
        %v6913 = vunpack.c.l.b16 %v6817
        %v6914 = vunpack.c.l.b16 %v6818
        %v6915 = vunpack.c.l.b16 %v6819
        %v6916 = vunpack.c.l.b16 %v6820
        %v6917 = vunpack.c.l.b16 %v6821
        %v6918 = vunpack.c.l.b16 %v6822
        %v6919 = vunpack.c.l.b16 %v6823
        %v6920 = vunpack.c.l.b16 %v6824
        %v6921 = vunpack.c.l.b16 %v6825
        %v6922 = vunpack.c.l.b16 %v6826
        %v6923 = vunpack.c.l.b16 %v6827
        %v6924 = vunpack.c.l.b16 %v6828
        %v6925 = vunpack.c.l.b16 %v6829
        %v6926 = vunpack.c.l.b16 %v6830
        %v6927 = vunpack.c.l.b16 %v6831
        %v6928 = vunpack.c.l.b16 %v6832
        %v6929 = vunpack.c.l.b16 %v6833
        %v6930 = vunpack.c.l.b16 %v6834
        %v6931 = vunpack.c.l.b16 %v6835
        %v6932 = vunpack.c.l.b16 %v6836
        %v6933 = vunpack.c.l.b16 %v6837
        %v6934 = vunpack.c.l.b16 %v6838
        %v6935 = vunpack.c.l.b16 %v6839
        %v6936 = vunpack.c.l.b16 %v6840
        %v6937 = vunpack.c.l.b16 %v6841
        %v6938 = vunpack.c.l.b16 %v6842
        %v6939 = vunpack.c.l.b16 %v6843
        %v6940 = vunpack.c.l.b16 %v6844
        %v6941 = vunpack.c.l.b16 %v6845
        %v6942 = vunpack.c.l.b16 %v6846
        %v6943 = vunpack.c.l.b16 %v6847
        %v6944 = vunpack.c.l.b16 %v6848
        %v6945 = vpack.c.b16 %v6898, %v6897
        %v6946 = vpack.c.b16 %v6899, %v6899
        %v6947 = vpack.c.b16 %v6901, %v6900
        %v6948 = vpack.c.b16 %v6902, %v6902
        %v6949 = vpack.c.b16 %v6904, %v6903
        %v6950 = vpack.c.b16 %v6905, %v6905
        %v6951 = vpack.c.b16 %v6907, %v6906
        %v6952 = vpack.c.b16 %v6908, %v6908
        %v6953 = vpack.c.b16 %v6910, %v6909
        %v6954 = vpack.c.b16 %v6911, %v6911
        %v6955 = vpack.c.b16 %v6913, %v6912
        %v6956 = vpack.c.b16 %v6914, %v6914
        %v6957 = vpack.c.b16 %v6916, %v6915
        %v6958 = vpack.c.b16 %v6917, %v6917
        %v6959 = vpack.c.b16 %v6919, %v6918
        %v6960 = vpack.c.b16 %v6920, %v6920
        %v6961 = vpack.c.b16 %v6922, %v6921
        %v6962 = vpack.c.b16 %v6923, %v6923
        %v6963 = vpack.c.b16 %v6925, %v6924
        %v6964 = vpack.c.b16 %v6926, %v6926
        %v6965 = vpack.c.b16 %v6928, %v6927
        %v6966 = vpack.c.b16 %v6929, %v6929
        %v6967 = vpack.c.b16 %v6931, %v6930
        %v6968 = vpack.c.b16 %v6932, %v6932
        %v6969 = vpack.c.b16 %v6934, %v6933
        %v6970 = vpack.c.b16 %v6935, %v6935
        %v6971 = vpack.c.b16 %v6937, %v6936
        %v6972 = vpack.c.b16 %v6938, %v6938
        %v6973 = vpack.c.b16 %v6940, %v6939
        %v6974 = vpack.c.b16 %v6941, %v6941
        %v6975 = vpack.c.b16 %v6943, %v6942
        %v6976 = vpack.c.b16 %v6944, %v6944
        %v6978 = vshrl.u32 %v6945, 16
        %v6980 = vshll.u32 %v6945, 16
        %v6982 = vrot.slane %v6980, 1
        %v6983 = vor.u32 %v6978, %v6982
        %v6985 = vshll.u32 %v6946, 16
        %v6987 = vrot.slane %v6985, 1
        %v6988 = vsel %vm1320, %v6983, %v6987
        %v6990 = vshrl.u32 %v6947, 16
        %v6992 = vshll.u32 %v6947, 16
        %v6994 = vrot.slane %v6992, 1
        %v6995 = vor.u32 %v6990, %v6994
        %v6997 = vshll.u32 %v6948, 16
        %v6999 = vrot.slane %v6997, 1
        %v7000 = vsel %vm1320, %v6995, %v6999
        %v7002 = vshrl.u32 %v6949, 16
        %v7004 = vshll.u32 %v6949, 16
        %v7006 = vrot.slane %v7004, 1
        %v7007 = vor.u32 %v7002, %v7006
        %v7009 = vshll.u32 %v6950, 16
        %v7011 = vrot.slane %v7009, 1
        %v7012 = vsel %vm1320, %v7007, %v7011
        %v7014 = vshrl.u32 %v6951, 16
        %v7016 = vshll.u32 %v6951, 16
        %v7018 = vrot.slane %v7016, 1
        %v7019 = vor.u32 %v7014, %v7018
        %v7021 = vshll.u32 %v6952, 16
        %v7023 = vrot.slane %v7021, 1
        %v7024 = vsel %vm1320, %v7019, %v7023
        %v7026 = vshrl.u32 %v6953, 16
        %v7028 = vshll.u32 %v6953, 16
        %v7030 = vrot.slane %v7028, 1
        %v7031 = vor.u32 %v7026, %v7030
        %v7033 = vshll.u32 %v6954, 16
        %v7035 = vrot.slane %v7033, 1
        %v7036 = vsel %vm1320, %v7031, %v7035
        %v7038 = vshrl.u32 %v6955, 16
        %v7040 = vshll.u32 %v6955, 16
        %v7042 = vrot.slane %v7040, 1
        %v7043 = vor.u32 %v7038, %v7042
        %v7045 = vshll.u32 %v6956, 16
        %v7047 = vrot.slane %v7045, 1
        %v7048 = vsel %vm1320, %v7043, %v7047
        %v7050 = vshrl.u32 %v6957, 16
        %v7052 = vshll.u32 %v6957, 16
        %v7054 = vrot.slane %v7052, 1
        %v7055 = vor.u32 %v7050, %v7054
        %v7057 = vshll.u32 %v6958, 16
        %v7059 = vrot.slane %v7057, 1
        %v7060 = vsel %vm1320, %v7055, %v7059
        %v7062 = vshrl.u32 %v6959, 16
        %v7064 = vshll.u32 %v6959, 16
        %v7066 = vrot.slane %v7064, 1
        %v7067 = vor.u32 %v7062, %v7066
        %v7069 = vshll.u32 %v6960, 16
        %v7071 = vrot.slane %v7069, 1
        %v7072 = vsel %vm1320, %v7067, %v7071
        %v7074 = vshrl.u32 %v6961, 16
        %v7076 = vshll.u32 %v6961, 16
        %v7078 = vrot.slane %v7076, 1
        %v7079 = vor.u32 %v7074, %v7078
        %v7081 = vshll.u32 %v6962, 16
        %v7083 = vrot.slane %v7081, 1
        %v7084 = vsel %vm1320, %v7079, %v7083
        %v7086 = vshrl.u32 %v6963, 16
        %v7088 = vshll.u32 %v6963, 16
        %v7090 = vrot.slane %v7088, 1
        %v7091 = vor.u32 %v7086, %v7090
        %v7093 = vshll.u32 %v6964, 16
        %v7095 = vrot.slane %v7093, 1
        %v7096 = vsel %vm1320, %v7091, %v7095
        %v7098 = vshrl.u32 %v6965, 16
        %v7100 = vshll.u32 %v6965, 16
        %v7102 = vrot.slane %v7100, 1
        %v7103 = vor.u32 %v7098, %v7102
        %v7105 = vshll.u32 %v6966, 16
        %v7107 = vrot.slane %v7105, 1
        %v7108 = vsel %vm1320, %v7103, %v7107
        %v7110 = vshrl.u32 %v6967, 16
        %v7112 = vshll.u32 %v6967, 16
        %v7114 = vrot.slane %v7112, 1
        %v7115 = vor.u32 %v7110, %v7114
        %v7117 = vshll.u32 %v6968, 16
        %v7119 = vrot.slane %v7117, 1
        %v7120 = vsel %vm1320, %v7115, %v7119
        %v7122 = vshrl.u32 %v6969, 16
        %v7124 = vshll.u32 %v6969, 16
        %v7126 = vrot.slane %v7124, 1
        %v7127 = vor.u32 %v7122, %v7126
        %v7129 = vshll.u32 %v6970, 16
        %v7131 = vrot.slane %v7129, 1
        %v7132 = vsel %vm1320, %v7127, %v7131
        %v7134 = vshrl.u32 %v6971, 16
        %v7136 = vshll.u32 %v6971, 16
        %v7138 = vrot.slane %v7136, 1
        %v7139 = vor.u32 %v7134, %v7138
        %v7141 = vshll.u32 %v6972, 16
        %v7143 = vrot.slane %v7141, 1
        %v7144 = vsel %vm1320, %v7139, %v7143
        %v7146 = vshrl.u32 %v6973, 16
        %v7148 = vshll.u32 %v6973, 16
        %v7150 = vrot.slane %v7148, 1
        %v7151 = vor.u32 %v7146, %v7150
        %v7153 = vshll.u32 %v6974, 16
        %v7155 = vrot.slane %v7153, 1
        %v7156 = vsel %vm1320, %v7151, %v7155
        %v7158 = vshrl.u32 %v6975, 16
        %v7160 = vshll.u32 %v6975, 16
        %v7162 = vrot.slane %v7160, 1
        %v7163 = vor.u32 %v7158, %v7162
        %v7165 = vshll.u32 %v6976, 16
        %v7167 = vrot.slane %v7165, 1
        %v7168 = vsel %vm1320, %v7163, %v7167
        %7185 = vst [vmem:[#allocation3 + $0x8] sm:$0xff] %v6988
        %7186 = vst [vmem:[#allocation3 + $0x20] sm:$0xff] %v7000
        %7187 = vst [vmem:[#allocation3 + $0x38] sm:$0xff] %v7012
        %7188 = vst [vmem:[#allocation3 + $0x50] sm:$0xff] %v7024
        %7189 = vst [vmem:[#allocation3 + $0x68] sm:$0xff] %v7036
        %7190 = vst [vmem:[#allocation3 + $0x80] sm:$0xff] %v7048
        %7191 = vst [vmem:[#allocation3 + $0x98] sm:$0xff] %v7060
        %7192 = vst [vmem:[#allocation3 + $0xb0] sm:$0xff] %v7072
        %7193 = vst [vmem:[#allocation3 + $0xc8] sm:$0xff] %v7084
        %7194 = vst [vmem:[#allocation3 + $0xe0] sm:$0xff] %v7096
        %7195 = vst [vmem:[#allocation3 + $0xf8] sm:$0xff] %v7108
        %7196 = vst [vmem:[#allocation3 + $0x110] sm:$0xff] %v7120
        %7197 = vst [vmem:[#allocation3 + $0x128] sm:$0xff] %v7132
        %7198 = vst [vmem:[#allocation3 + $0x140] sm:$0xff] %v7144
        %7199 = vst [vmem:[#allocation3 + $0x158] sm:$0xff] %v7156
        %7200 = vst [vmem:[#allocation3 + $0x170] sm:$0xff] %v7168
        %v7201 = vld [vmem:[%s334] sm:$0xe]
        %v7202 = vld [vmem:[%s334 + $0x4] sm:$0xf]
        %v7203 = vld [vmem:[%s334 + $0x8] sm:$0x1]
        %v7204 = vld [vmem:[%s334 + $0xc] sm:$0xe]
        %v7205 = vld [vmem:[%s334 + $0x10] sm:$0xf]
        %v7206 = vld [vmem:[%s334 + $0x14] sm:$0x1]
        %v7207 = vld [vmem:[%s334 + $0x18] sm:$0xe]
        %v7208 = vld [vmem:[%s334 + $0x1c] sm:$0xf]
        %v7209 = vld [vmem:[%s334 + $0x20] sm:$0x1]
        %v7210 = vld [vmem:[%s334 + $0x24] sm:$0xe]
        %v7211 = vld [vmem:[%s334 + $0x28] sm:$0xf]
        %v7212 = vld [vmem:[%s334 + $0x2c] sm:$0x1]
        %v7213 = vld [vmem:[%s334 + $0x30] sm:$0xe]
        %v7214 = vld [vmem:[%s334 + $0x34] sm:$0xf]
        %v7215 = vld [vmem:[%s334 + $0x38] sm:$0x1]
        %v7216 = vld [vmem:[%s334 + $0x3c] sm:$0xe]
        %v7217 = vld [vmem:[%s334 + $0x40] sm:$0xf]
        %v7218 = vld [vmem:[%s334 + $0x44] sm:$0x1]
        %v7219 = vld [vmem:[%s334 + $0x48] sm:$0xe]
        %v7220 = vld [vmem:[%s334 + $0x4c] sm:$0xf]
        %v7221 = vld [vmem:[%s334 + $0x50] sm:$0x1]
        %v7222 = vld [vmem:[%s334 + $0x54] sm:$0xe]
        %v7223 = vld [vmem:[%s334 + $0x58] sm:$0xf]
        %v7224 = vld [vmem:[%s334 + $0x5c] sm:$0x1]
        %v7225 = vld [vmem:[%s334 + $0x60] sm:$0xe]
        %v7226 = vld [vmem:[%s334 + $0x64] sm:$0xf]
        %v7227 = vld [vmem:[%s334 + $0x68] sm:$0x1]
        %v7228 = vld [vmem:[%s334 + $0x6c] sm:$0xe]
        %v7229 = vld [vmem:[%s334 + $0x70] sm:$0xf]
        %v7230 = vld [vmem:[%s334 + $0x74] sm:$0x1]
        %v7231 = vld [vmem:[%s334 + $0x78] sm:$0xe]
        %v7232 = vld [vmem:[%s334 + $0x7c] sm:$0xf]
        %v7233 = vld [vmem:[%s334 + $0x80] sm:$0x1]
        %v7234 = vld [vmem:[%s334 + $0x84] sm:$0xe]
        %v7235 = vld [vmem:[%s334 + $0x88] sm:$0xf]
        %v7236 = vld [vmem:[%s334 + $0x8c] sm:$0x1]
        %v7237 = vld [vmem:[%s334 + $0x90] sm:$0xe]
        %v7238 = vld [vmem:[%s334 + $0x94] sm:$0xf]
        %v7239 = vld [vmem:[%s334 + $0x98] sm:$0x1]
        %v7240 = vld [vmem:[%s334 + $0x9c] sm:$0xe]
        %v7241 = vld [vmem:[%s334 + $0xa0] sm:$0xf]
        %v7242 = vld [vmem:[%s334 + $0xa4] sm:$0x1]
        %v7243 = vld [vmem:[%s334 + $0xa8] sm:$0xe]
        %v7244 = vld [vmem:[%s334 + $0xac] sm:$0xf]
        %v7245 = vld [vmem:[%s334 + $0xb0] sm:$0x1]
        %v7246 = vld [vmem:[%s334 + $0xb4] sm:$0xe]
        %v7247 = vld [vmem:[%s334 + $0xb8] sm:$0xf]
        %v7248 = vld [vmem:[%s334 + $0xbc] sm:$0x1]
        %v7297 = vunpack.c.l.b16 %v7201
        %v7298 = vunpack.c.l.b16 %v7202
        %v7299 = vunpack.c.l.b16 %v7203
        %v7300 = vunpack.c.l.b16 %v7204
        %v7301 = vunpack.c.l.b16 %v7205
        %v7302 = vunpack.c.l.b16 %v7206
        %v7303 = vunpack.c.l.b16 %v7207
        %v7304 = vunpack.c.l.b16 %v7208
        %v7305 = vunpack.c.l.b16 %v7209
        %v7306 = vunpack.c.l.b16 %v7210
        %v7307 = vunpack.c.l.b16 %v7211
        %v7308 = vunpack.c.l.b16 %v7212
        %v7309 = vunpack.c.l.b16 %v7213
        %v7310 = vunpack.c.l.b16 %v7214
        %v7311 = vunpack.c.l.b16 %v7215
        %v7312 = vunpack.c.l.b16 %v7216
        %v7313 = vunpack.c.l.b16 %v7217
        %v7314 = vunpack.c.l.b16 %v7218
        %v7315 = vunpack.c.l.b16 %v7219
        %v7316 = vunpack.c.l.b16 %v7220
        %v7317 = vunpack.c.l.b16 %v7221
        %v7318 = vunpack.c.l.b16 %v7222
        %v7319 = vunpack.c.l.b16 %v7223
        %v7320 = vunpack.c.l.b16 %v7224
        %v7321 = vunpack.c.l.b16 %v7225
        %v7322 = vunpack.c.l.b16 %v7226
        %v7323 = vunpack.c.l.b16 %v7227
        %v7324 = vunpack.c.l.b16 %v7228
        %v7325 = vunpack.c.l.b16 %v7229
        %v7326 = vunpack.c.l.b16 %v7230
        %v7327 = vunpack.c.l.b16 %v7231
        %v7328 = vunpack.c.l.b16 %v7232
        %v7329 = vunpack.c.l.b16 %v7233
        %v7330 = vunpack.c.l.b16 %v7234
        %v7331 = vunpack.c.l.b16 %v7235
        %v7332 = vunpack.c.l.b16 %v7236
        %v7333 = vunpack.c.l.b16 %v7237
        %v7334 = vunpack.c.l.b16 %v7238
        %v7335 = vunpack.c.l.b16 %v7239
        %v7336 = vunpack.c.l.b16 %v7240
        %v7337 = vunpack.c.l.b16 %v7241
        %v7338 = vunpack.c.l.b16 %v7242
        %v7339 = vunpack.c.l.b16 %v7243
        %v7340 = vunpack.c.l.b16 %v7244
        %v7341 = vunpack.c.l.b16 %v7245
        %v7342 = vunpack.c.l.b16 %v7246
        %v7343 = vunpack.c.l.b16 %v7247
        %v7344 = vunpack.c.l.b16 %v7248
        %v7345 = vpack.c.b16 %v7298, %v7297
        %v7346 = vpack.c.b16 %v7299, %v7299
        %v7347 = vpack.c.b16 %v7301, %v7300
        %v7348 = vpack.c.b16 %v7302, %v7302
        %v7349 = vpack.c.b16 %v7304, %v7303
        %v7350 = vpack.c.b16 %v7305, %v7305
        %v7351 = vpack.c.b16 %v7307, %v7306
        %v7352 = vpack.c.b16 %v7308, %v7308
        %v7353 = vpack.c.b16 %v7310, %v7309
        %v7354 = vpack.c.b16 %v7311, %v7311
        %v7355 = vpack.c.b16 %v7313, %v7312
        %v7356 = vpack.c.b16 %v7314, %v7314
        %v7357 = vpack.c.b16 %v7316, %v7315
        %v7358 = vpack.c.b16 %v7317, %v7317
        %v7359 = vpack.c.b16 %v7319, %v7318
        %v7360 = vpack.c.b16 %v7320, %v7320
        %v7361 = vpack.c.b16 %v7322, %v7321
        %v7362 = vpack.c.b16 %v7323, %v7323
        %v7363 = vpack.c.b16 %v7325, %v7324
        %v7364 = vpack.c.b16 %v7326, %v7326
        %v7365 = vpack.c.b16 %v7328, %v7327
        %v7366 = vpack.c.b16 %v7329, %v7329
        %v7367 = vpack.c.b16 %v7331, %v7330
        %v7368 = vpack.c.b16 %v7332, %v7332
        %v7369 = vpack.c.b16 %v7334, %v7333
        %v7370 = vpack.c.b16 %v7335, %v7335
        %v7371 = vpack.c.b16 %v7337, %v7336
        %v7372 = vpack.c.b16 %v7338, %v7338
        %v7373 = vpack.c.b16 %v7340, %v7339
        %v7374 = vpack.c.b16 %v7341, %v7341
        %v7375 = vpack.c.b16 %v7343, %v7342
        %v7376 = vpack.c.b16 %v7344, %v7344
        %v7377 = vrot.slane %v7345, 1
        %v7378 = vrot.slane %v7346, 1
        %v7379 = vsel %vm1721, %v7377, %v7378
        %v7380 = vrot.slane %v7347, 1
        %v7381 = vrot.slane %v7348, 1
        %v7382 = vsel %vm1721, %v7380, %v7381
        %v7383 = vrot.slane %v7349, 1
        %v7384 = vrot.slane %v7350, 1
        %v7385 = vsel %vm1721, %v7383, %v7384
        %v7386 = vrot.slane %v7351, 1
        %v7387 = vrot.slane %v7352, 1
        %v7388 = vsel %vm1721, %v7386, %v7387
        %v7389 = vrot.slane %v7353, 1
        %v7390 = vrot.slane %v7354, 1
        %v7391 = vsel %vm1721, %v7389, %v7390
        %v7392 = vrot.slane %v7355, 1
        %v7393 = vrot.slane %v7356, 1
        %v7394 = vsel %vm1721, %v7392, %v7393
        %v7395 = vrot.slane %v7357, 1
        %v7396 = vrot.slane %v7358, 1
        %v7397 = vsel %vm1721, %v7395, %v7396
        %v7398 = vrot.slane %v7359, 1
        %v7399 = vrot.slane %v7360, 1
        %v7400 = vsel %vm1721, %v7398, %v7399
        %v7401 = vrot.slane %v7361, 1
        %v7402 = vrot.slane %v7362, 1
        %v7403 = vsel %vm1721, %v7401, %v7402
        %v7404 = vrot.slane %v7363, 1
        %v7405 = vrot.slane %v7364, 1
        %v7406 = vsel %vm1721, %v7404, %v7405
        %v7407 = vrot.slane %v7365, 1
        %v7408 = vrot.slane %v7366, 1
        %v7409 = vsel %vm1721, %v7407, %v7408
        %v7410 = vrot.slane %v7367, 1
        %v7411 = vrot.slane %v7368, 1
        %v7412 = vsel %vm1721, %v7410, %v7411
        %v7413 = vrot.slane %v7369, 1
        %v7414 = vrot.slane %v7370, 1
        %v7415 = vsel %vm1721, %v7413, %v7414
        %v7416 = vrot.slane %v7371, 1
        %v7417 = vrot.slane %v7372, 1
        %v7418 = vsel %vm1721, %v7416, %v7417
        %v7419 = vrot.slane %v7373, 1
        %v7420 = vrot.slane %v7374, 1
        %v7421 = vsel %vm1721, %v7419, %v7420
        %v7422 = vrot.slane %v7375, 1
        %v7423 = vrot.slane %v7376, 1
        %v7424 = vsel %vm1721, %v7422, %v7423
        %7441 = vst [vmem:[#allocation3 + $0x10] sm:$0xff] %v7379
        %7442 = vst [vmem:[#allocation3 + $0x28] sm:$0xff] %v7382
        %7443 = vst [vmem:[#allocation3 + $0x40] sm:$0xff] %v7385
        %7444 = vst [vmem:[#allocation3 + $0x58] sm:$0xff] %v7388
        %7445 = vst [vmem:[#allocation3 + $0x70] sm:$0xff] %v7391
        %7446 = vst [vmem:[#allocation3 + $0x88] sm:$0xff] %v7394
        %7447 = vst [vmem:[#allocation3 + $0xa0] sm:$0xff] %v7397
        %7448 = vst [vmem:[#allocation3 + $0xb8] sm:$0xff] %v7400
        %7449 = vst [vmem:[#allocation3 + $0xd0] sm:$0xff] %v7403
        %7450 = vst [vmem:[#allocation3 + $0xe8] sm:$0xff] %v7406
        %7451 = vst [vmem:[#allocation3 + $0x100] sm:$0xff] %v7409
        %7452 = vst [vmem:[#allocation3 + $0x118] sm:$0xff] %v7412
        %7453 = vst [vmem:[#allocation3 + $0x130] sm:$0xff] %v7415
        %7454 = vst [vmem:[#allocation3 + $0x148] sm:$0xff] %v7418
        %7455 = vst [vmem:[#allocation3 + $0x160] sm:$0xff] %v7421
        %7456 = vst [vmem:[#allocation3 + $0x178] sm:$0xff] %v7424
        %v7457 = vld [vmem:[#allocation3] sm:$0xff]
        %v7458 = vld [vmem:[#allocation3 + $0x8] sm:$0xff]
        %v7459 = vld [vmem:[#allocation3 + $0x10] sm:$0xff]
        %v7460 = vld [vmem:[#allocation3 + $0x18] sm:$0xff]
        %v7461 = vld [vmem:[#allocation3 + $0x20] sm:$0xff]
        %v7462 = vld [vmem:[#allocation3 + $0x28] sm:$0xff]
        %v7463 = vld [vmem:[#allocation3 + $0x30] sm:$0xff]
        %v7464 = vld [vmem:[#allocation3 + $0x38] sm:$0xff]
        %v7465 = vld [vmem:[#allocation3 + $0x40] sm:$0xff]
        %v7466 = vld [vmem:[#allocation3 + $0x48] sm:$0xff]
        %v7467 = vld [vmem:[#allocation3 + $0x50] sm:$0xff]
        %v7468 = vld [vmem:[#allocation3 + $0x58] sm:$0xff]
        %v7469 = vld [vmem:[#allocation3 + $0x60] sm:$0xff]
        %v7470 = vld [vmem:[#allocation3 + $0x68] sm:$0xff]
        %v7471 = vld [vmem:[#allocation3 + $0x70] sm:$0xff]
        %v7472 = vld [vmem:[#allocation3 + $0x78] sm:$0xff]
        %v7473 = vld [vmem:[#allocation3 + $0x80] sm:$0xff]
        %v7474 = vld [vmem:[#allocation3 + $0x88] sm:$0xff]
        %v7475 = vld [vmem:[#allocation3 + $0x90] sm:$0xff]
        %v7476 = vld [vmem:[#allocation3 + $0x98] sm:$0xff]
        %v7477 = vld [vmem:[#allocation3 + $0xa0] sm:$0xff]
        %v7478 = vld [vmem:[#allocation3 + $0xa8] sm:$0xff]
        %v7479 = vld [vmem:[#allocation3 + $0xb0] sm:$0xff]
        %v7480 = vld [vmem:[#allocation3 + $0xb8] sm:$0xff]
        %v7481 = vld [vmem:[#allocation3 + $0xc0] sm:$0xff]
        %v7482 = vld [vmem:[#allocation3 + $0xc8] sm:$0xff]
        %v7483 = vld [vmem:[#allocation3 + $0xd0] sm:$0xff]
        %v7484 = vld [vmem:[#allocation3 + $0xd8] sm:$0xff]
        %v7485 = vld [vmem:[#allocation3 + $0xe0] sm:$0xff]
        %v7486 = vld [vmem:[#allocation3 + $0xe8] sm:$0xff]
        %v7487 = vld [vmem:[#allocation3 + $0xf0] sm:$0xff]
        %v7488 = vld [vmem:[#allocation3 + $0xf8] sm:$0xff]
        %v7489 = vld [vmem:[#allocation3 + $0x100] sm:$0xff]
        %v7490 = vld [vmem:[#allocation3 + $0x108] sm:$0xff]
        %v7491 = vld [vmem:[#allocation3 + $0x110] sm:$0xff]
        %v7492 = vld [vmem:[#allocation3 + $0x118] sm:$0xff]
        %v7493 = vld [vmem:[#allocation3 + $0x120] sm:$0xff]
        %v7494 = vld [vmem:[#allocation3 + $0x128] sm:$0xff]
        %v7495 = vld [vmem:[#allocation3 + $0x130] sm:$0xff]
        %v7496 = vld [vmem:[#allocation3 + $0x138] sm:$0xff]
        %v7497 = vld [vmem:[#allocation3 + $0x140] sm:$0xff]
        %v7498 = vld [vmem:[#allocation3 + $0x148] sm:$0xff]
        %v7499 = vld [vmem:[#allocation3 + $0x150] sm:$0xff]
        %v7500 = vld [vmem:[#allocation3 + $0x158] sm:$0xff]
        %v7501 = vld [vmem:[#allocation3 + $0x160] sm:$0xff]
        %v7502 = vld [vmem:[#allocation3 + $0x168] sm:$0xff]
        %v7503 = vld [vmem:[#allocation3 + $0x170] sm:$0xff]
        %v7504 = vld [vmem:[#allocation3 + $0x178] sm:$0xff]
        %s7505 = scalar_lea.vmem [#allocation9], 192
        %v7506 = vld [vmem:[%s7505] sm:$0xf]
        %v7507 = vld [vmem:[%s7505 + $0x4] sm:$0xf]
        %v7508 = vld [vmem:[%s7505 + $0x8] sm:$0xf]
        %v7509 = vld [vmem:[%s7505 + $0xc] sm:$0xf]
        %v7510 = vld [vmem:[%s7505 + $0x10] sm:$0xf]
        %v7511 = vld [vmem:[%s7505 + $0x14] sm:$0xf]
        %v7512 = vld [vmem:[%s7505 + $0x18] sm:$0xf]
        %v7513 = vld [vmem:[%s7505 + $0x1c] sm:$0xf]
        %v7514 = vld [vmem:[%s7505 + $0x20] sm:$0xf]
        %v7515 = vld [vmem:[%s7505 + $0x24] sm:$0xf]
        %v7516 = vld [vmem:[%s7505 + $0x28] sm:$0xf]
        %v7517 = vld [vmem:[%s7505 + $0x2c] sm:$0xf]
        %v7518 = vld [vmem:[%s7505 + $0x30] sm:$0xf]
        %v7519 = vld [vmem:[%s7505 + $0x34] sm:$0xf]
        %v7520 = vld [vmem:[%s7505 + $0x38] sm:$0xf]
        %v7521 = vld [vmem:[%s7505 + $0x3c] sm:$0xf]
        %v7522 = vld [vmem:[%s7505 + $0x40] sm:$0xf]
        %v7523 = vld [vmem:[%s7505 + $0x44] sm:$0xf]
        %v7524 = vld [vmem:[%s7505 + $0x48] sm:$0xf]
        %v7525 = vld [vmem:[%s7505 + $0x4c] sm:$0xf]
        %v7526 = vld [vmem:[%s7505 + $0x50] sm:$0xf]
        %v7527 = vld [vmem:[%s7505 + $0x54] sm:$0xf]
        %v7528 = vld [vmem:[%s7505 + $0x58] sm:$0xf]
        %v7529 = vld [vmem:[%s7505 + $0x5c] sm:$0xf]
        %v7530 = vld [vmem:[%s7505 + $0x60] sm:$0xf]
        %v7531 = vld [vmem:[%s7505 + $0x64] sm:$0xf]
        %v7532 = vld [vmem:[%s7505 + $0x68] sm:$0xf]
        %v7533 = vld [vmem:[%s7505 + $0x6c] sm:$0xf]
        %v7534 = vld [vmem:[%s7505 + $0x70] sm:$0xf]
        %v7535 = vld [vmem:[%s7505 + $0x74] sm:$0xf]
        %v7536 = vld [vmem:[%s7505 + $0x78] sm:$0xf]
        %v7537 = vld [vmem:[%s7505 + $0x7c] sm:$0xf]
        %v7538 = vld [vmem:[%s7505 + $0x80] sm:$0xf]
        %v7539 = vld [vmem:[%s7505 + $0x84] sm:$0xf]
        %v7540 = vld [vmem:[%s7505 + $0x88] sm:$0xf]
        %v7541 = vld [vmem:[%s7505 + $0x8c] sm:$0xf]
        %v7542 = vld [vmem:[%s7505 + $0x90] sm:$0xf]
        %v7543 = vld [vmem:[%s7505 + $0x94] sm:$0xf]
        %v7544 = vld [vmem:[%s7505 + $0x98] sm:$0xf]
        %v7545 = vld [vmem:[%s7505 + $0x9c] sm:$0xf]
        %v7546 = vld [vmem:[%s7505 + $0xa0] sm:$0xf]
        %v7547 = vld [vmem:[%s7505 + $0xa4] sm:$0xf]
        %v7548 = vld [vmem:[%s7505 + $0xa8] sm:$0xf]
        %v7549 = vld [vmem:[%s7505 + $0xac] sm:$0xf]
        %v7550 = vld [vmem:[%s7505 + $0xb0] sm:$0xf]
        %v7551 = vld [vmem:[%s7505 + $0xb4] sm:$0xf]
        %v7552 = vld [vmem:[%s7505 + $0xb8] sm:$0xf]
        %v7553 = vld [vmem:[%s7505 + $0xbc] sm:$0xf]
        %v7602 = vunpack.c.l.b16 %v7506
        %v7603 = vunpack.c.l.b16 %v7507
        %v7604 = vunpack.c.l.b16 %v7508
        %v7605 = vunpack.c.l.b16 %v7509
        %v7606 = vunpack.c.l.b16 %v7510
        %v7607 = vunpack.c.l.b16 %v7511
        %v7608 = vunpack.c.l.b16 %v7512
        %v7609 = vunpack.c.l.b16 %v7513
        %v7610 = vunpack.c.l.b16 %v7514
        %v7611 = vunpack.c.l.b16 %v7515
        %v7612 = vunpack.c.l.b16 %v7516
        %v7613 = vunpack.c.l.b16 %v7517
        %v7614 = vunpack.c.l.b16 %v7518
        %v7615 = vunpack.c.l.b16 %v7519
        %v7616 = vunpack.c.l.b16 %v7520
        %v7617 = vunpack.c.l.b16 %v7521
        %v7618 = vunpack.c.l.b16 %v7522
        %v7619 = vunpack.c.l.b16 %v7523
        %v7620 = vunpack.c.l.b16 %v7524
        %v7621 = vunpack.c.l.b16 %v7525
        %v7622 = vunpack.c.l.b16 %v7526
        %v7623 = vunpack.c.l.b16 %v7527
        %v7624 = vunpack.c.l.b16 %v7528
        %v7625 = vunpack.c.l.b16 %v7529
        %v7626 = vunpack.c.l.b16 %v7530
        %v7627 = vunpack.c.l.b16 %v7531
        %v7628 = vunpack.c.l.b16 %v7532
        %v7629 = vunpack.c.l.b16 %v7533
        %v7630 = vunpack.c.l.b16 %v7534
        %v7631 = vunpack.c.l.b16 %v7535
        %v7632 = vunpack.c.l.b16 %v7536
        %v7633 = vunpack.c.l.b16 %v7537
        %v7634 = vunpack.c.l.b16 %v7538
        %v7635 = vunpack.c.l.b16 %v7539
        %v7636 = vunpack.c.l.b16 %v7540
        %v7637 = vunpack.c.l.b16 %v7541
        %v7638 = vunpack.c.l.b16 %v7542
        %v7639 = vunpack.c.l.b16 %v7543
        %v7640 = vunpack.c.l.b16 %v7544
        %v7641 = vunpack.c.l.b16 %v7545
        %v7642 = vunpack.c.l.b16 %v7546
        %v7643 = vunpack.c.l.b16 %v7547
        %v7644 = vunpack.c.l.b16 %v7548
        %v7645 = vunpack.c.l.b16 %v7549
        %v7646 = vunpack.c.l.b16 %v7550
        %v7647 = vunpack.c.l.b16 %v7551
        %v7648 = vunpack.c.l.b16 %v7552
        %v7649 = vunpack.c.l.b16 %v7553
        %v7650 = vpack.c.b16 %v7603, %v7602
        %v7651 = vpack.c.b16 %v7605, %v7604
        %v7652 = vpack.c.b16 %v7607, %v7606
        %v7653 = vpack.c.b16 %v7609, %v7608
        %v7654 = vpack.c.b16 %v7611, %v7610
        %v7655 = vpack.c.b16 %v7613, %v7612
        %v7656 = vpack.c.b16 %v7615, %v7614
        %v7657 = vpack.c.b16 %v7617, %v7616
        %v7658 = vpack.c.b16 %v7619, %v7618
        %v7659 = vpack.c.b16 %v7621, %v7620
        %v7660 = vpack.c.b16 %v7623, %v7622
        %v7661 = vpack.c.b16 %v7625, %v7624
        %v7662 = vpack.c.b16 %v7627, %v7626
        %v7663 = vpack.c.b16 %v7629, %v7628
        %v7664 = vpack.c.b16 %v7631, %v7630
        %v7665 = vpack.c.b16 %v7633, %v7632
        %v7666 = vpack.c.b16 %v7635, %v7634
        %v7667 = vpack.c.b16 %v7637, %v7636
        %v7668 = vpack.c.b16 %v7639, %v7638
        %v7669 = vpack.c.b16 %v7641, %v7640
        %v7670 = vpack.c.b16 %v7643, %v7642
        %v7671 = vpack.c.b16 %v7645, %v7644
        %v7672 = vpack.c.b16 %v7647, %v7646
        %v7673 = vpack.c.b16 %v7649, %v7648
        %7698 = vmatprep.subr.bf16.mxu0 0
        %7699 = vmatpush1.bf16.msra.mxu0 %v7650
        %7700 = vmatprep.subr.bf16.mxu0 0
        %7701 = vmatpush1.bf16.msra.mxu0 %v7651
        %7702 = vmatprep.subr.bf16.mxu0 0
        %7703 = vmatpush1.bf16.msra.mxu0 %v7652
        %7704 = vmatprep.subr.bf16.mxu0 0
        %7705 = vmatpush1.bf16.msra.mxu0 %v7653
        %7706 = vmatprep.subr.bf16.mxu0 0
        %7707 = vmatpush1.bf16.msra.mxu0 %v7654
        %7708 = vmatprep.subr.bf16.mxu0 0
        %7709 = vmatpush1.bf16.msra.mxu0 %v7655
        %7710 = vmatprep.subr.bf16.mxu0 0
        %7711 = vmatpush1.bf16.msra.mxu0 %v7656
        %7712 = vmatprep.subr.bf16.mxu0 0
        %7713 = vmatpush1.bf16.msra.mxu0 %v7657
        %7714 = vmatprep.subr.bf16.mxu0 0
        %7715 = vmatpush1.bf16.msra.mxu0 %v7658
        %7716 = vmatprep.subr.bf16.mxu0 0
        %7717 = vmatpush1.bf16.msra.mxu0 %v7659
        %7718 = vmatprep.subr.bf16.mxu0 0
        %7719 = vmatpush1.bf16.msra.mxu0 %v7660
        %7720 = vmatprep.subr.bf16.mxu0 0
        %7721 = vmatpush1.bf16.msra.mxu0 %v7661
        %7722 = vmatprep.subr.bf16.mxu0 0
        %7723 = vmatpush1.bf16.msra.mxu0 %v7662
        %7724 = vmatprep.subr.bf16.mxu0 0
        %7725 = vmatpush1.bf16.msra.mxu0 %v7663
        %7726 = vmatprep.subr.bf16.mxu0 0
        %7727 = vmatpush1.bf16.msra.mxu0 %v7664
        %7728 = vmatprep.subr.bf16.mxu0 0
        %7729 = vmatpush1.bf16.msra.mxu0 %v7665
        %7730 = vmatprep.mubr.bf16.mxu0 %v7458
        %7731 = vmatmul.mubr.bf16.gmra.mrb[0].mxu0 %v7457
        %v7732 = vpop.f32.mrb[0].mxu0
        %v7733 = vadd.f32 0.0, %v7732
        %v7734 = vpop.f32.mrb[0].mxu0
        %v7735 = vpop.f32.mrb[0].mxu0
        %v7736 = vadd.f32 0.0, %v7735
        %v7737 = vpop.f32.mrb[0].mxu0
        %7738 = vmatprep.mubr.bf16.mxu0 %v7461
        %7739 = vmatmul.mubr.bf16.gmra.mrb[0].mxu0 %v7460
        %v7740 = vpop.f32.mrb[0].mxu0
        %v7741 = vadd.f32 0.0, %v7740
        %v7742 = vpop.f32.mrb[0].mxu0
        %v7743 = vpop.f32.mrb[0].mxu0
        %v7744 = vadd.f32 0.0, %v7743
        %v7745 = vpop.f32.mrb[0].mxu0
        %7746 = vmatprep.mubr.bf16.mxu0 %v7464
        %7747 = vmatmul.mubr.bf16.gmra.mrb[0].mxu0 %v7463
        %v7748 = vpop.f32.mrb[0].mxu0
        %v7749 = vadd.f32 0.0, %v7748
        %v7750 = vpop.f32.mrb[0].mxu0
        %v7751 = vpop.f32.mrb[0].mxu0
        %v7752 = vadd.f32 0.0, %v7751
        %v7753 = vpop.f32.mrb[0].mxu0
        %7754 = vmatprep.mubr.bf16.mxu0 %v7467
        %7755 = vmatmul.mubr.bf16.gmra.mrb[0].mxu0 %v7466
        %v7756 = vpop.f32.mrb[0].mxu0
        %v7757 = vadd.f32 0.0, %v7756
        %v7758 = vpop.f32.mrb[0].mxu0
        %v7759 = vpop.f32.mrb[0].mxu0
        %v7760 = vadd.f32 0.0, %v7759
        %v7761 = vpop.f32.mrb[0].mxu0
        %7762 = vmatprep.mubr.bf16.mxu0 %v7470
        %7763 = vmatmul.mubr.bf16.gmra.mrb[0].mxu0 %v7469
        %v7764 = vpop.f32.mrb[0].mxu0
        %v7765 = vadd.f32 0.0, %v7764
        %v7766 = vpop.f32.mrb[0].mxu0
        %v7767 = vpop.f32.mrb[0].mxu0
        %v7768 = vadd.f32 0.0, %v7767
        %v7769 = vpop.f32.mrb[0].mxu0
        %7770 = vmatprep.mubr.bf16.mxu0 %v7473
        %7771 = vmatmul.mubr.bf16.gmra.mrb[0].mxu0 %v7472
        %v7772 = vpop.f32.mrb[0].mxu0
        %v7773 = vadd.f32 0.0, %v7772
        %v7774 = vpop.f32.mrb[0].mxu0
        %v7775 = vpop.f32.mrb[0].mxu0
        %v7776 = vadd.f32 0.0, %v7775
        %v7777 = vpop.f32.mrb[0].mxu0
        %7778 = vmatprep.mubr.bf16.mxu0 %v7476
        %7779 = vmatmul.mubr.bf16.gmra.mrb[0].mxu0 %v7475
        %v7780 = vpop.f32.mrb[0].mxu0
        %v7781 = vadd.f32 0.0, %v7780
        %v7782 = vpop.f32.mrb[0].mxu0
        %v7783 = vpop.f32.mrb[0].mxu0
        %v7784 = vadd.f32 0.0, %v7783
        %v7785 = vpop.f32.mrb[0].mxu0
        %7786 = vmatprep.mubr.bf16.mxu0 %v7479
        %7787 = vmatmul.mubr.bf16.gmra.mrb[0].mxu0 %v7478
        %v7788 = vpop.f32.mrb[0].mxu0
        %v7789 = vadd.f32 0.0, %v7788
        %v7790 = vpop.f32.mrb[0].mxu0
        %v7791 = vpop.f32.mrb[0].mxu0
        %v7792 = vadd.f32 0.0, %v7791
        %v7793 = vpop.f32.mrb[0].mxu0
        %7794 = vmatprep.mubr.bf16.mxu0 %v7482
        %7795 = vmatmul.mubr.bf16.gmra.mrb[0].mxu0 %v7481
        %v7796 = vpop.f32.mrb[0].mxu0
        %v7797 = vadd.f32 0.0, %v7796
        %v7798 = vpop.f32.mrb[0].mxu0
        %v7799 = vpop.f32.mrb[0].mxu0
        %v7800 = vadd.f32 0.0, %v7799
        %v7801 = vpop.f32.mrb[0].mxu0
        %7802 = vmatprep.mubr.bf16.mxu0 %v7485
        %7803 = vmatmul.mubr.bf16.gmra.mrb[0].mxu0 %v7484
        %v7804 = vpop.f32.mrb[0].mxu0
        %v7805 = vadd.f32 0.0, %v7804
        %v7806 = vpop.f32.mrb[0].mxu0
        %v7807 = vpop.f32.mrb[0].mxu0
        %v7808 = vadd.f32 0.0, %v7807
        %v7809 = vpop.f32.mrb[0].mxu0
        %7810 = vmatprep.mubr.bf16.mxu0 %v7488
        %7811 = vmatmul.mubr.bf16.gmra.mrb[0].mxu0 %v7487
        %v7812 = vpop.f32.mrb[0].mxu0
        %v7813 = vadd.f32 0.0, %v7812
        %v7814 = vpop.f32.mrb[0].mxu0
        %v7815 = vpop.f32.mrb[0].mxu0
        %v7816 = vadd.f32 0.0, %v7815
        %v7817 = vpop.f32.mrb[0].mxu0
        %7818 = vmatprep.mubr.bf16.mxu0 %v7491
        %7819 = vmatmul.mubr.bf16.gmra.mrb[0].mxu0 %v7490
        %v7820 = vpop.f32.mrb[0].mxu0
        %v7821 = vadd.f32 0.0, %v7820
        %v7822 = vpop.f32.mrb[0].mxu0
        %v7823 = vpop.f32.mrb[0].mxu0
        %v7824 = vadd.f32 0.0, %v7823
        %v7825 = vpop.f32.mrb[0].mxu0
        %7826 = vmatprep.mubr.bf16.mxu0 %v7494
        %7827 = vmatmul.mubr.bf16.gmra.mrb[0].mxu0 %v7493
        %v7828 = vpop.f32.mrb[0].mxu0
        %v7829 = vadd.f32 0.0, %v7828
        %v7830 = vpop.f32.mrb[0].mxu0
        %v7831 = vpop.f32.mrb[0].mxu0
        %v7832 = vadd.f32 0.0, %v7831
        %v7833 = vpop.f32.mrb[0].mxu0
        %7834 = vmatprep.mubr.bf16.mxu0 %v7497
        %7835 = vmatmul.mubr.bf16.gmra.mrb[0].mxu0 %v7496
        %v7836 = vpop.f32.mrb[0].mxu0
        %v7837 = vadd.f32 0.0, %v7836
        %v7838 = vpop.f32.mrb[0].mxu0
        %v7839 = vpop.f32.mrb[0].mxu0
        %v7840 = vadd.f32 0.0, %v7839
        %v7841 = vpop.f32.mrb[0].mxu0
        %7842 = vmatprep.mubr.bf16.mxu0 %v7500
        %7843 = vmatmul.mubr.bf16.gmra.mrb[0].mxu0 %v7499
        %v7844 = vpop.f32.mrb[0].mxu0
        %v7845 = vadd.f32 0.0, %v7844
        %v7846 = vpop.f32.mrb[0].mxu0
        %v7847 = vpop.f32.mrb[0].mxu0
        %v7848 = vadd.f32 0.0, %v7847
        %v7849 = vpop.f32.mrb[0].mxu0
        %7850 = vmatprep.mubr.bf16.mxu0 %v7503
        %7851 = vmatmul.mubr.bf16.gmra.mrb[0].mxu0 %v7502
        %v7852 = vpop.f32.mrb[0].mxu0
        %v7853 = vadd.f32 0.0, %v7852
        %v7854 = vpop.f32.mrb[0].mxu0
        %v7855 = vpop.f32.mrb[0].mxu0
        %v7856 = vadd.f32 0.0, %v7855
        %v7857 = vpop.f32.mrb[0].mxu0
        %7858 = vdwg.mxu0
        %7859 = vmatprep.subr.bf16.mxu0 0
        %7860 = vmatpush1.bf16.msra.mxu0 %v7666
        %7861 = vmatprep.subr.bf16.mxu0 0
        %7862 = vmatpush1.bf16.msra.mxu0 %v7667
        %7863 = vmatprep.subr.bf16.mxu0 0
        %7864 = vmatpush1.bf16.msra.mxu0 %v7668
        %7865 = vmatprep.subr.bf16.mxu0 0
        %7866 = vmatpush1.bf16.msra.mxu0 %v7669
        %7867 = vmatprep.subr.bf16.mxu0 0
        %7868 = vmatpush1.bf16.msra.mxu0 %v7670
        %7869 = vmatprep.subr.bf16.mxu0 0
        %7870 = vmatpush1.bf16.msra.mxu0 %v7671
        %7871 = vmatprep.subr.bf16.mxu0 0
        %7872 = vmatpush1.bf16.msra.mxu0 %v7672
        %7873 = vmatprep.subr.bf16.mxu0 0
        %7874 = vmatpush1.bf16.msra.mxu0 %v7673
        %7875 = vmatprep.subr.bf16.mxu0 0
        %7876 = vmatpush1.bf16.msra.mxu0 0
        %7877 = vmatprep.subr.bf16.mxu0 0
        %7878 = vmatpush1.bf16.msra.mxu0 0
        %7879 = vmatprep.subr.bf16.mxu0 0
        %7880 = vmatpush1.bf16.msra.mxu0 0
        %7881 = vmatprep.subr.bf16.mxu0 0
        %7882 = vmatpush1.bf16.msra.mxu0 0
        %7883 = vmatprep.subr.bf16.mxu0 0
        %7884 = vmatpush1.bf16.msra.mxu0 0
        %7885 = vmatprep.subr.bf16.mxu0 0
        %7886 = vmatpush1.bf16.msra.mxu0 0
        %7887 = vmatprep.subr.bf16.mxu0 0
        %7888 = vmatpush1.bf16.msra.mxu0 0
        %7889 = vmatprep.subr.bf16.mxu0 0
        %7890 = vmatpush1.bf16.msra.mxu0 0
        %7891 = vmatprep.mubr.bf16.mxu0 0
        %7892 = vmatmul.mubr.bf16.gmra.mrb[0].mxu0 %v7459
        %v7893 = vpop.f32.mrb[0].mxu0
        %v7894 = vadd.f32 %v7733, %v7893
        %v7895 = vpop.f32.mrb[0].mxu0
        %v7896 = vpop.f32.mrb[0].mxu0
        %v7897 = vadd.f32 %v7736, %v7896
        %v7898 = vpop.f32.mrb[0].mxu0
        %7899 = vmatprep.mubr.bf16.mxu0 0
        %7900 = vmatmul.mubr.bf16.gmra.mrb[0].mxu0 %v7462
        %v7901 = vpop.f32.mrb[0].mxu0
        %v7902 = vadd.f32 %v7741, %v7901
        %v7903 = vpop.f32.mrb[0].mxu0
        %v7904 = vpop.f32.mrb[0].mxu0
        %v7905 = vadd.f32 %v7744, %v7904
        %v7906 = vpop.f32.mrb[0].mxu0
        %7907 = vmatprep.mubr.bf16.mxu0 0
        %7908 = vmatmul.mubr.bf16.gmra.mrb[0].mxu0 %v7465
        %v7909 = vpop.f32.mrb[0].mxu0
        %v7910 = vadd.f32 %v7749, %v7909
        %v7911 = vpop.f32.mrb[0].mxu0
        %v7912 = vpop.f32.mrb[0].mxu0
        %v7913 = vadd.f32 %v7752, %v7912
        %v7914 = vpop.f32.mrb[0].mxu0
        %7915 = vmatprep.mubr.bf16.mxu0 0
        %7916 = vmatmul.mubr.bf16.gmra.mrb[0].mxu0 %v7468
        %v7917 = vpop.f32.mrb[0].mxu0
        %v7918 = vadd.f32 %v7757, %v7917
        %v7919 = vpop.f32.mrb[0].mxu0
        %v7920 = vpop.f32.mrb[0].mxu0
        %v7921 = vadd.f32 %v7760, %v7920
        %v7922 = vpop.f32.mrb[0].mxu0
        %7923 = vmatprep.mubr.bf16.mxu0 0
        %7924 = vmatmul.mubr.bf16.gmra.mrb[0].mxu0 %v7471
        %v7925 = vpop.f32.mrb[0].mxu0
        %v7926 = vadd.f32 %v7765, %v7925
        %v7927 = vpop.f32.mrb[0].mxu0
        %v7928 = vpop.f32.mrb[0].mxu0
        %v7929 = vadd.f32 %v7768, %v7928
        %v7930 = vpop.f32.mrb[0].mxu0
        %7931 = vmatprep.mubr.bf16.mxu0 0
        %7932 = vmatmul.mubr.bf16.gmra.mrb[0].mxu0 %v7474
        %v7933 = vpop.f32.mrb[0].mxu0
        %v7934 = vadd.f32 %v7773, %v7933
        %v7935 = vpop.f32.mrb[0].mxu0
        %v7936 = vpop.f32.mrb[0].mxu0
        %v7937 = vadd.f32 %v7776, %v7936
        %v7938 = vpop.f32.mrb[0].mxu0
        %7939 = vmatprep.mubr.bf16.mxu0 0
        %7940 = vmatmul.mubr.bf16.gmra.mrb[0].mxu0 %v7477
        %v7941 = vpop.f32.mrb[0].mxu0
        %v7942 = vadd.f32 %v7781, %v7941
        %v7943 = vpop.f32.mrb[0].mxu0
        %v7944 = vpop.f32.mrb[0].mxu0
        %v7945 = vadd.f32 %v7784, %v7944
        %v7946 = vpop.f32.mrb[0].mxu0
        %7947 = vmatprep.mubr.bf16.mxu0 0
        %7948 = vmatmul.mubr.bf16.gmra.mrb[0].mxu0 %v7480
        %v7949 = vpop.f32.mrb[0].mxu0
        %v7950 = vadd.f32 %v7789, %v7949
        %v7951 = vpop.f32.mrb[0].mxu0
        %v7952 = vpop.f32.mrb[0].mxu0
        %v7953 = vadd.f32 %v7792, %v7952
        %v7954 = vpop.f32.mrb[0].mxu0
        %7955 = vmatprep.mubr.bf16.mxu0 0
        %7956 = vmatmul.mubr.bf16.gmra.mrb[0].mxu0 %v7483
        %v7957 = vpop.f32.mrb[0].mxu0
        %v7958 = vadd.f32 %v7797, %v7957
        %v7959 = vpop.f32.mrb[0].mxu0
        %v7960 = vpop.f32.mrb[0].mxu0
        %v7961 = vadd.f32 %v7800, %v7960
        %v7962 = vpop.f32.mrb[0].mxu0
        %7963 = vmatprep.mubr.bf16.mxu0 0
        %7964 = vmatmul.mubr.bf16.gmra.mrb[0].mxu0 %v7486
        %v7965 = vpop.f32.mrb[0].mxu0
        %v7966 = vadd.f32 %v7805, %v7965
        %v7967 = vpop.f32.mrb[0].mxu0
        %v7968 = vpop.f32.mrb[0].mxu0
        %v7969 = vadd.f32 %v7808, %v7968
        %v7970 = vpop.f32.mrb[0].mxu0
        %7971 = vmatprep.mubr.bf16.mxu0 0
        %7972 = vmatmul.mubr.bf16.gmra.mrb[0].mxu0 %v7489
        %v7973 = vpop.f32.mrb[0].mxu0
        %v7974 = vadd.f32 %v7813, %v7973
        %v7975 = vpop.f32.mrb[0].mxu0
        %v7976 = vpop.f32.mrb[0].mxu0
        %v7977 = vadd.f32 %v7816, %v7976
        %v7978 = vpop.f32.mrb[0].mxu0
        %7979 = vmatprep.mubr.bf16.mxu0 0
        %7980 = vmatmul.mubr.bf16.gmra.mrb[0].mxu0 %v7492
        %v7981 = vpop.f32.mrb[0].mxu0
        %v7982 = vadd.f32 %v7821, %v7981
        %v7983 = vpop.f32.mrb[0].mxu0
        %v7984 = vpop.f32.mrb[0].mxu0
        %v7985 = vadd.f32 %v7824, %v7984
        %v7986 = vpop.f32.mrb[0].mxu0
        %7987 = vmatprep.mubr.bf16.mxu0 0
        %7988 = vmatmul.mubr.bf16.gmra.mrb[0].mxu0 %v7495
        %v7989 = vpop.f32.mrb[0].mxu0
        %v7990 = vadd.f32 %v7829, %v7989
        %v7991 = vpop.f32.mrb[0].mxu0
        %v7992 = vpop.f32.mrb[0].mxu0
        %v7993 = vadd.f32 %v7832, %v7992
        %v7994 = vpop.f32.mrb[0].mxu0
        %7995 = vmatprep.mubr.bf16.mxu0 0
        %7996 = vmatmul.mubr.bf16.gmra.mrb[0].mxu0 %v7498
        %v7997 = vpop.f32.mrb[0].mxu0
        %v7998 = vadd.f32 %v7837, %v7997
        %v7999 = vpop.f32.mrb[0].mxu0
        %v8000 = vpop.f32.mrb[0].mxu0
        %v8001 = vadd.f32 %v7840, %v8000
        %v8002 = vpop.f32.mrb[0].mxu0
        %8003 = vmatprep.mubr.bf16.mxu0 0
        %8004 = vmatmul.mubr.bf16.gmra.mrb[0].mxu0 %v7501
        %v8005 = vpop.f32.mrb[0].mxu0
        %v8006 = vadd.f32 %v7845, %v8005
        %v8007 = vpop.f32.mrb[0].mxu0
        %v8008 = vpop.f32.mrb[0].mxu0
        %v8009 = vadd.f32 %v7848, %v8008
        %v8010 = vpop.f32.mrb[0].mxu0
        %8011 = vmatprep.mubr.bf16.mxu0 0
        %8012 = vmatmul.mubr.bf16.gmra.mrb[0].mxu0 %v7504
        %v8013 = vpop.f32.mrb[0].mxu0
        %v8014 = vadd.f32 %v7853, %v8013
        %v8015 = vpop.f32.mrb[0].mxu0
        %v8016 = vpop.f32.mrb[0].mxu0
        %v8017 = vadd.f32 %v7856, %v8016
        %v8018 = vpop.f32.mrb[0].mxu0
        %8019 = vdwg.mxu0
        %v8068 = vunpack.c.l.b16 %v6609
        %v8069 = vunpack.c.l.b16 %v6610
        %v8070 = vunpack.c.l.b16 %v6611
        %v8071 = vunpack.c.l.b16 %v6612
        %v8072 = vunpack.c.l.b16 %v6613
        %v8073 = vunpack.c.l.b16 %v6614
        %v8074 = vunpack.c.l.b16 %v6615
        %v8075 = vunpack.c.l.b16 %v6616
        %v8076 = vunpack.c.l.b16 %v6617
        %v8077 = vunpack.c.l.b16 %v6618
        %v8078 = vunpack.c.l.b16 %v6619
        %v8079 = vunpack.c.l.b16 %v6620
        %v8080 = vunpack.c.l.b16 %v6621
        %v8081 = vunpack.c.l.b16 %v6622
        %v8082 = vunpack.c.l.b16 %v6623
        %v8083 = vunpack.c.l.b16 %v6624
        %v8084 = vunpack.c.l.b16 %v6625
        %v8085 = vunpack.c.l.b16 %v6626
        %v8086 = vunpack.c.l.b16 %v6627
        %v8087 = vunpack.c.l.b16 %v6628
        %v8088 = vunpack.c.l.b16 %v6629
        %v8089 = vunpack.c.l.b16 %v6630
        %v8090 = vunpack.c.l.b16 %v6631
        %v8091 = vunpack.c.l.b16 %v6632
        %v8092 = vunpack.c.l.b16 %v6633
        %v8093 = vunpack.c.l.b16 %v6634
        %v8094 = vunpack.c.l.b16 %v6635
        %v8095 = vunpack.c.l.b16 %v6636
        %v8096 = vunpack.c.l.b16 %v6637
        %v8097 = vunpack.c.l.b16 %v6638
        %v8098 = vunpack.c.l.b16 %v6639
        %v8099 = vunpack.c.l.b16 %v6640
        %v8100 = vunpack.c.l.b16 %v6641
        %v8101 = vunpack.c.l.b16 %v6642
        %v8102 = vunpack.c.l.b16 %v6643
        %v8103 = vunpack.c.l.b16 %v6644
        %v8104 = vunpack.c.l.b16 %v6645
        %v8105 = vunpack.c.l.b16 %v6646
        %v8106 = vunpack.c.l.b16 %v6647
        %v8107 = vunpack.c.l.b16 %v6648
        %v8108 = vunpack.c.l.b16 %v6649
        %v8109 = vunpack.c.l.b16 %v6650
        %v8110 = vunpack.c.l.b16 %v6651
        %v8111 = vunpack.c.l.b16 %v6652
        %v8112 = vunpack.c.l.b16 %v6653
        %v8113 = vunpack.c.l.b16 %v6654
        %v8114 = vunpack.c.l.b16 %v6655
        %v8115 = vunpack.c.l.b16 %v6656
        %v8116 = vpack.c.b16 %v8069, %v8068
        %v8117 = vpack.c.b16 %v8071, %v8070
        %v8118 = vpack.c.b16 %v8073, %v8072
        %v8119 = vpack.c.b16 %v8075, %v8074
        %v8120 = vpack.c.b16 %v8077, %v8076
        %v8121 = vpack.c.b16 %v8079, %v8078
        %v8122 = vpack.c.b16 %v8081, %v8080
        %v8123 = vpack.c.b16 %v8083, %v8082
        %v8124 = vpack.c.b16 %v8085, %v8084
        %v8125 = vpack.c.b16 %v8087, %v8086
        %v8126 = vpack.c.b16 %v8089, %v8088
        %v8127 = vpack.c.b16 %v8091, %v8090
        %v8128 = vpack.c.b16 %v8093, %v8092
        %v8129 = vpack.c.b16 %v8095, %v8094
        %v8130 = vpack.c.b16 %v8097, %v8096
        %v8131 = vpack.c.b16 %v8099, %v8098
        %v8132 = vpack.c.b16 %v8101, %v8100
        %v8133 = vpack.c.b16 %v8103, %v8102
        %v8134 = vpack.c.b16 %v8105, %v8104
        %v8135 = vpack.c.b16 %v8107, %v8106
        %v8136 = vpack.c.b16 %v8109, %v8108
        %v8137 = vpack.c.b16 %v8111, %v8110
        %v8138 = vpack.c.b16 %v8113, %v8112
        %v8139 = vpack.c.b16 %v8115, %v8114
        %8164 = vmatprep.subr.bf16.mxu0 0
        %8165 = vmatpush1.bf16.msra.mxu0 %v8116
        %8166 = vmatprep.subr.bf16.mxu0 0
        %8167 = vmatpush1.bf16.msra.mxu0 %v8117
        %8168 = vmatprep.subr.bf16.mxu0 0
        %8169 = vmatpush1.bf16.msra.mxu0 %v8118
        %8170 = vmatprep.subr.bf16.mxu0 0
        %8171 = vmatpush1.bf16.msra.mxu0 %v8119
        %8172 = vmatprep.subr.bf16.mxu0 0
        %8173 = vmatpush1.bf16.msra.mxu0 %v8120
        %8174 = vmatprep.subr.bf16.mxu0 0
        %8175 = vmatpush1.bf16.msra.mxu0 %v8121
        %8176 = vmatprep.subr.bf16.mxu0 0
        %8177 = vmatpush1.bf16.msra.mxu0 %v8122
        %8178 = vmatprep.subr.bf16.mxu0 0
        %8179 = vmatpush1.bf16.msra.mxu0 %v8123
        %8180 = vmatprep.subr.bf16.mxu0 0
        %8181 = vmatpush1.bf16.msra.mxu0 %v8124
        %8182 = vmatprep.subr.bf16.mxu0 0
        %8183 = vmatpush1.bf16.msra.mxu0 %v8125
        %8184 = vmatprep.subr.bf16.mxu0 0
        %8185 = vmatpush1.bf16.msra.mxu0 %v8126
        %8186 = vmatprep.subr.bf16.mxu0 0
        %8187 = vmatpush1.bf16.msra.mxu0 %v8127
        %8188 = vmatprep.subr.bf16.mxu0 0
        %8189 = vmatpush1.bf16.msra.mxu0 %v8128
        %8190 = vmatprep.subr.bf16.mxu0 0
        %8191 = vmatpush1.bf16.msra.mxu0 %v8129
        %8192 = vmatprep.subr.bf16.mxu0 0
        %8193 = vmatpush1.bf16.msra.mxu0 %v8130
        %8194 = vmatprep.subr.bf16.mxu0 0
        %8195 = vmatpush1.bf16.msra.mxu0 %v8131
        %8196 = vmatprep.mubr.bf16.mxu0 %v6562
        %8197 = vmatmul.mubr.bf16.gmra.mrb[0].mxu0 %v6561
        %v8198 = vpop.f32.mrb[0].mxu0
        %v8199 = vadd.f32 %v7894, %v8198
        %v8200 = vpop.f32.mrb[0].mxu0
        %v8201 = vpop.f32.mrb[0].mxu0
        %v8202 = vadd.f32 %v7897, %v8201
        %v8203 = vpop.f32.mrb[0].mxu0
        %8204 = vmatprep.mubr.bf16.mxu0 %v6565
        %8205 = vmatmul.mubr.bf16.gmra.mrb[0].mxu0 %v6564
        %v8206 = vpop.f32.mrb[0].mxu0
        %v8207 = vadd.f32 %v7902, %v8206
        %v8208 = vpop.f32.mrb[0].mxu0
        %v8209 = vpop.f32.mrb[0].mxu0
        %v8210 = vadd.f32 %v7905, %v8209
        %v8211 = vpop.f32.mrb[0].mxu0
        %8212 = vmatprep.mubr.bf16.mxu0 %v6568
        %8213 = vmatmul.mubr.bf16.gmra.mrb[0].mxu0 %v6567
        %v8214 = vpop.f32.mrb[0].mxu0
        %v8215 = vadd.f32 %v7910, %v8214
        %v8216 = vpop.f32.mrb[0].mxu0
        %v8217 = vpop.f32.mrb[0].mxu0
        %v8218 = vadd.f32 %v7913, %v8217
        %v8219 = vpop.f32.mrb[0].mxu0
        %8220 = vmatprep.mubr.bf16.mxu0 %v6571
        %8221 = vmatmul.mubr.bf16.gmra.mrb[0].mxu0 %v6570
        %v8222 = vpop.f32.mrb[0].mxu0
        %v8223 = vadd.f32 %v7918, %v8222
        %v8224 = vpop.f32.mrb[0].mxu0
        %v8225 = vpop.f32.mrb[0].mxu0
        %v8226 = vadd.f32 %v7921, %v8225
        %v8227 = vpop.f32.mrb[0].mxu0
        %8228 = vmatprep.mubr.bf16.mxu0 %v6574
        %8229 = vmatmul.mubr.bf16.gmra.mrb[0].mxu0 %v6573
        %v8230 = vpop.f32.mrb[0].mxu0
        %v8231 = vadd.f32 %v7926, %v8230
        %v8232 = vpop.f32.mrb[0].mxu0
        %v8233 = vpop.f32.mrb[0].mxu0
        %v8234 = vadd.f32 %v7929, %v8233
        %v8235 = vpop.f32.mrb[0].mxu0
        %8236 = vmatprep.mubr.bf16.mxu0 %v6577
        %8237 = vmatmul.mubr.bf16.gmra.mrb[0].mxu0 %v6576
        %v8238 = vpop.f32.mrb[0].mxu0
        %v8239 = vadd.f32 %v7934, %v8238
        %v8240 = vpop.f32.mrb[0].mxu0
        %v8241 = vpop.f32.mrb[0].mxu0
        %v8242 = vadd.f32 %v7937, %v8241
        %v8243 = vpop.f32.mrb[0].mxu0
        %8244 = vmatprep.mubr.bf16.mxu0 %v6580
        %8245 = vmatmul.mubr.bf16.gmra.mrb[0].mxu0 %v6579
        %v8246 = vpop.f32.mrb[0].mxu0
        %v8247 = vadd.f32 %v7942, %v8246
        %v8248 = vpop.f32.mrb[0].mxu0
        %v8249 = vpop.f32.mrb[0].mxu0
        %v8250 = vadd.f32 %v7945, %v8249
        %v8251 = vpop.f32.mrb[0].mxu0
        %8252 = vmatprep.mubr.bf16.mxu0 %v6583
        %8253 = vmatmul.mubr.bf16.gmra.mrb[0].mxu0 %v6582
        %v8254 = vpop.f32.mrb[0].mxu0
        %v8255 = vadd.f32 %v7950, %v8254
        %v8256 = vpop.f32.mrb[0].mxu0
        %v8257 = vpop.f32.mrb[0].mxu0
        %v8258 = vadd.f32 %v7953, %v8257
        %v8259 = vpop.f32.mrb[0].mxu0
        %8260 = vmatprep.mubr.bf16.mxu0 %v6586
        %8261 = vmatmul.mubr.bf16.gmra.mrb[0].mxu0 %v6585
        %v8262 = vpop.f32.mrb[0].mxu0
        %v8263 = vadd.f32 %v7958, %v8262
        %v8264 = vpop.f32.mrb[0].mxu0
        %v8265 = vpop.f32.mrb[0].mxu0
        %v8266 = vadd.f32 %v7961, %v8265
        %v8267 = vpop.f32.mrb[0].mxu0
        %8268 = vmatprep.mubr.bf16.mxu0 %v6589
        %8269 = vmatmul.mubr.bf16.gmra.mrb[0].mxu0 %v6588
        %v8270 = vpop.f32.mrb[0].mxu0
        %v8271 = vadd.f32 %v7966, %v8270
        %v8272 = vpop.f32.mrb[0].mxu0
        %v8273 = vpop.f32.mrb[0].mxu0
        %v8274 = vadd.f32 %v7969, %v8273
        %v8275 = vpop.f32.mrb[0].mxu0
        %8276 = vmatprep.mubr.bf16.mxu0 %v6592
        %8277 = vmatmul.mubr.bf16.gmra.mrb[0].mxu0 %v6591
        %v8278 = vpop.f32.mrb[0].mxu0
        %v8279 = vadd.f32 %v7974, %v8278
        %v8280 = vpop.f32.mrb[0].mxu0
        %v8281 = vpop.f32.mrb[0].mxu0
        %v8282 = vadd.f32 %v7977, %v8281
        %v8283 = vpop.f32.mrb[0].mxu0
        %8284 = vmatprep.mubr.bf16.mxu0 %v6595
        %8285 = vmatmul.mubr.bf16.gmra.mrb[0].mxu0 %v6594
        %v8286 = vpop.f32.mrb[0].mxu0
        %v8287 = vadd.f32 %v7982, %v8286
        %v8288 = vpop.f32.mrb[0].mxu0
        %v8289 = vpop.f32.mrb[0].mxu0
        %v8290 = vadd.f32 %v7985, %v8289
        %v8291 = vpop.f32.mrb[0].mxu0
        %8292 = vmatprep.mubr.bf16.mxu0 %v6598
        %8293 = vmatmul.mubr.bf16.gmra.mrb[0].mxu0 %v6597
        %v8294 = vpop.f32.mrb[0].mxu0
        %v8295 = vadd.f32 %v7990, %v8294
        %v8296 = vpop.f32.mrb[0].mxu0
        %v8297 = vpop.f32.mrb[0].mxu0
        %v8298 = vadd.f32 %v7993, %v8297
        %v8299 = vpop.f32.mrb[0].mxu0
        %8300 = vmatprep.mubr.bf16.mxu0 %v6601
        %8301 = vmatmul.mubr.bf16.gmra.mrb[0].mxu0 %v6600
        %v8302 = vpop.f32.mrb[0].mxu0
        %v8303 = vadd.f32 %v7998, %v8302
        %v8304 = vpop.f32.mrb[0].mxu0
        %v8305 = vpop.f32.mrb[0].mxu0
        %v8306 = vadd.f32 %v8001, %v8305
        %v8307 = vpop.f32.mrb[0].mxu0
        %8308 = vmatprep.mubr.bf16.mxu0 %v6604
        %8309 = vmatmul.mubr.bf16.gmra.mrb[0].mxu0 %v6603
        %v8310 = vpop.f32.mrb[0].mxu0
        %v8311 = vadd.f32 %v8006, %v8310
        %v8312 = vpop.f32.mrb[0].mxu0
        %v8313 = vpop.f32.mrb[0].mxu0
        %v8314 = vadd.f32 %v8009, %v8313
        %v8315 = vpop.f32.mrb[0].mxu0
        %8316 = vmatprep.mubr.bf16.mxu0 %v6607
        %8317 = vmatmul.mubr.bf16.gmra.mrb[0].mxu0 %v6606
        %v8318 = vpop.f32.mrb[0].mxu0
        %v8319 = vadd.f32 %v8014, %v8318
        %v8320 = vpop.f32.mrb[0].mxu0
        %v8321 = vpop.f32.mrb[0].mxu0
        %v8322 = vadd.f32 %v8017, %v8321
        %v8323 = vpop.f32.mrb[0].mxu0
        %8324 = vdwg.mxu0
        %8325 = vmatprep.subr.bf16.mxu0 0
        %8326 = vmatpush1.bf16.msra.mxu0 %v8132
        %8327 = vmatprep.subr.bf16.mxu0 0
        %8328 = vmatpush1.bf16.msra.mxu0 %v8133
        %8329 = vmatprep.subr.bf16.mxu0 0
        %8330 = vmatpush1.bf16.msra.mxu0 %v8134
        %8331 = vmatprep.subr.bf16.mxu0 0
        %8332 = vmatpush1.bf16.msra.mxu0 %v8135
        %8333 = vmatprep.subr.bf16.mxu0 0
        %8334 = vmatpush1.bf16.msra.mxu0 %v8136
        %8335 = vmatprep.subr.bf16.mxu0 0
        %8336 = vmatpush1.bf16.msra.mxu0 %v8137
        %8337 = vmatprep.subr.bf16.mxu0 0
        %8338 = vmatpush1.bf16.msra.mxu0 %v8138
        %8339 = vmatprep.subr.bf16.mxu0 0
        %8340 = vmatpush1.bf16.msra.mxu0 %v8139
        %8341 = vmatprep.subr.bf16.mxu0 0
        %8342 = vmatpush1.bf16.msra.mxu0 0
        %8343 = vmatprep.subr.bf16.mxu0 0
        %8344 = vmatpush1.bf16.msra.mxu0 0
        %8345 = vmatprep.subr.bf16.mxu0 0
        %8346 = vmatpush1.bf16.msra.mxu0 0
        %8347 = vmatprep.subr.bf16.mxu0 0
        %8348 = vmatpush1.bf16.msra.mxu0 0
        %8349 = vmatprep.subr.bf16.mxu0 0
        %8350 = vmatpush1.bf16.msra.mxu0 0
        %8351 = vmatprep.subr.bf16.mxu0 0
        %8352 = vmatpush1.bf16.msra.mxu0 0
        %8353 = vmatprep.subr.bf16.mxu0 0
        %8354 = vmatpush1.bf16.msra.mxu0 0
        %8355 = vmatprep.subr.bf16.mxu0 0
        %8356 = vmatpush1.bf16.msra.mxu0 0
        %8357 = vmatprep.mubr.bf16.mxu0 0
        %8358 = vmatmul.mubr.bf16.gmra.mrb[0].mxu0 %v6563
        %v8359 = vpop.f32.mrb[0].mxu0
        %v8360 = vadd.f32 %v8199, %v8359
        %v8361 = vpop.f32.mrb[0].mxu0
        %v8362 = vpop.f32.mrb[0].mxu0
        %v8363 = vadd.f32 %v8202, %v8362
        %v8364 = vpop.f32.mrb[0].mxu0
        %8365 = vmatprep.mubr.bf16.mxu0 0
        %8366 = vmatmul.mubr.bf16.gmra.mrb[0].mxu0 %v6566
        %v8367 = vpop.f32.mrb[0].mxu0
        %v8368 = vadd.f32 %v8207, %v8367
        %v8369 = vpop.f32.mrb[0].mxu0
        %v8370 = vpop.f32.mrb[0].mxu0
        %v8371 = vadd.f32 %v8210, %v8370
        %v8372 = vpop.f32.mrb[0].mxu0
        %8373 = vmatprep.mubr.bf16.mxu0 0
        %8374 = vmatmul.mubr.bf16.gmra.mrb[0].mxu0 %v6569
        %v8375 = vpop.f32.mrb[0].mxu0
        %v8376 = vadd.f32 %v8215, %v8375
        %v8377 = vpop.f32.mrb[0].mxu0
        %v8378 = vpop.f32.mrb[0].mxu0
        %v8379 = vadd.f32 %v8218, %v8378
        %v8380 = vpop.f32.mrb[0].mxu0
        %8381 = vmatprep.mubr.bf16.mxu0 0
        %8382 = vmatmul.mubr.bf16.gmra.mrb[0].mxu0 %v6572
        %v8383 = vpop.f32.mrb[0].mxu0
        %v8384 = vadd.f32 %v8223, %v8383
        %v8385 = vpop.f32.mrb[0].mxu0
        %v8386 = vpop.f32.mrb[0].mxu0
        %v8387 = vadd.f32 %v8226, %v8386
        %v8388 = vpop.f32.mrb[0].mxu0
        %8389 = vmatprep.mubr.bf16.mxu0 0
        %8390 = vmatmul.mubr.bf16.gmra.mrb[0].mxu0 %v6575
        %v8391 = vpop.f32.mrb[0].mxu0
        %v8392 = vadd.f32 %v8231, %v8391
        %v8393 = vpop.f32.mrb[0].mxu0
        %v8394 = vpop.f32.mrb[0].mxu0
        %v8395 = vadd.f32 %v8234, %v8394
        %v8396 = vpop.f32.mrb[0].mxu0
        %8397 = vmatprep.mubr.bf16.mxu0 0
        %8398 = vmatmul.mubr.bf16.gmra.mrb[0].mxu0 %v6578
        %v8399 = vpop.f32.mrb[0].mxu0
        %v8400 = vadd.f32 %v8239, %v8399
        %v8401 = vpop.f32.mrb[0].mxu0
        %v8402 = vpop.f32.mrb[0].mxu0
        %v8403 = vadd.f32 %v8242, %v8402
        %v8404 = vpop.f32.mrb[0].mxu0
        %8405 = vmatprep.mubr.bf16.mxu0 0
        %8406 = vmatmul.mubr.bf16.gmra.mrb[0].mxu0 %v6581
        %v8407 = vpop.f32.mrb[0].mxu0
        %v8408 = vadd.f32 %v8247, %v8407
        %v8409 = vpop.f32.mrb[0].mxu0
        %v8410 = vpop.f32.mrb[0].mxu0
        %v8411 = vadd.f32 %v8250, %v8410
        %v8412 = vpop.f32.mrb[0].mxu0
        %8413 = vmatprep.mubr.bf16.mxu0 0
        %8414 = vmatmul.mubr.bf16.gmra.mrb[0].mxu0 %v6584
        %v8415 = vpop.f32.mrb[0].mxu0
        %v8416 = vadd.f32 %v8255, %v8415
        %v8417 = vpop.f32.mrb[0].mxu0
        %v8418 = vpop.f32.mrb[0].mxu0
        %v8419 = vadd.f32 %v8258, %v8418
        %v8420 = vpop.f32.mrb[0].mxu0
        %8421 = vmatprep.mubr.bf16.mxu0 0
        %8422 = vmatmul.mubr.bf16.gmra.mrb[0].mxu0 %v6587
        %v8423 = vpop.f32.mrb[0].mxu0
        %v8424 = vadd.f32 %v8263, %v8423
        %v8425 = vpop.f32.mrb[0].mxu0
        %v8426 = vpop.f32.mrb[0].mxu0
        %v8427 = vadd.f32 %v8266, %v8426
        %v8428 = vpop.f32.mrb[0].mxu0
        %8429 = vmatprep.mubr.bf16.mxu0 0
        %8430 = vmatmul.mubr.bf16.gmra.mrb[0].mxu0 %v6590
        %v8431 = vpop.f32.mrb[0].mxu0
        %v8432 = vadd.f32 %v8271, %v8431
        %v8433 = vpop.f32.mrb[0].mxu0
        %v8434 = vpop.f32.mrb[0].mxu0
        %v8435 = vadd.f32 %v8274, %v8434
        %v8436 = vpop.f32.mrb[0].mxu0
        %8437 = vmatprep.mubr.bf16.mxu0 0
        %8438 = vmatmul.mubr.bf16.gmra.mrb[0].mxu0 %v6593
        %v8439 = vpop.f32.mrb[0].mxu0
        %v8440 = vadd.f32 %v8279, %v8439
        %v8441 = vpop.f32.mrb[0].mxu0
        %v8442 = vpop.f32.mrb[0].mxu0
        %v8443 = vadd.f32 %v8282, %v8442
        %v8444 = vpop.f32.mrb[0].mxu0
        %8445 = vmatprep.mubr.bf16.mxu0 0
        %8446 = vmatmul.mubr.bf16.gmra.mrb[0].mxu0 %v6596
        %v8447 = vpop.f32.mrb[0].mxu0
        %v8448 = vadd.f32 %v8287, %v8447
        %v8449 = vpop.f32.mrb[0].mxu0
        %v8450 = vpop.f32.mrb[0].mxu0
        %v8451 = vadd.f32 %v8290, %v8450
        %v8452 = vpop.f32.mrb[0].mxu0
        %8453 = vmatprep.mubr.bf16.mxu0 0
        %8454 = vmatmul.mubr.bf16.gmra.mrb[0].mxu0 %v6599
        %v8455 = vpop.f32.mrb[0].mxu0
        %v8456 = vadd.f32 %v8295, %v8455
        %v8457 = vpop.f32.mrb[0].mxu0
        %v8458 = vpop.f32.mrb[0].mxu0
        %v8459 = vadd.f32 %v8298, %v8458
        %v8460 = vpop.f32.mrb[0].mxu0
        %8461 = vmatprep.mubr.bf16.mxu0 0
        %8462 = vmatmul.mubr.bf16.gmra.mrb[0].mxu0 %v6602
        %v8463 = vpop.f32.mrb[0].mxu0
        %v8464 = vadd.f32 %v8303, %v8463
        %v8465 = vpop.f32.mrb[0].mxu0
        %v8466 = vpop.f32.mrb[0].mxu0
        %v8467 = vadd.f32 %v8306, %v8466
        %v8468 = vpop.f32.mrb[0].mxu0
        %8469 = vmatprep.mubr.bf16.mxu0 0
        %8470 = vmatmul.mubr.bf16.gmra.mrb[0].mxu0 %v6605
        %v8471 = vpop.f32.mrb[0].mxu0
        %v8472 = vadd.f32 %v8311, %v8471
        %v8473 = vpop.f32.mrb[0].mxu0
        %v8474 = vpop.f32.mrb[0].mxu0
        %v8475 = vadd.f32 %v8314, %v8474
        %v8476 = vpop.f32.mrb[0].mxu0
        %8477 = vmatprep.mubr.bf16.mxu0 0
        %8478 = vmatmul.mubr.bf16.gmra.mrb[0].mxu0 %v6608
        %v8479 = vpop.f32.mrb[0].mxu0
        %v8480 = vadd.f32 %v8319, %v8479
        %v8481 = vpop.f32.mrb[0].mxu0
        %v8482 = vpop.f32.mrb[0].mxu0
        %v8483 = vadd.f32 %v8322, %v8482
        %v8484 = vpop.f32.mrb[0].mxu0
        %8485 = vdwg.mxu0
        %v8486 = vld [vmem:[%s3727] sm:$0xf]
        %v8487 = vld [vmem:[%s3727 + $0x4] sm:$0xf]
        %v8488 = vld [vmem:[%s3727 + $0xc] sm:$0xf]
        %v8489 = vld [vmem:[%s3727 + $0x10] sm:$0xf]
        %v8490 = vld [vmem:[%s3727 + $0x18] sm:$0xf]
        %v8491 = vld [vmem:[%s3727 + $0x1c] sm:$0xf]
        %v8492 = vld [vmem:[%s3727 + $0x24] sm:$0xf]
        %v8493 = vld [vmem:[%s3727 + $0x28] sm:$0xf]
        %v8494 = vld [vmem:[%s3727 + $0x30] sm:$0xf]
        %v8495 = vld [vmem:[%s3727 + $0x34] sm:$0xf]
        %v8496 = vld [vmem:[%s3727 + $0x3c] sm:$0xf]
        %v8497 = vld [vmem:[%s3727 + $0x40] sm:$0xf]
        %v8498 = vld [vmem:[%s3727 + $0x48] sm:$0xf]
        %v8499 = vld [vmem:[%s3727 + $0x4c] sm:$0xf]
        %v8500 = vld [vmem:[%s3727 + $0x54] sm:$0xf]
        %v8501 = vld [vmem:[%s3727 + $0x58] sm:$0xf]
        %v8502 = vld [vmem:[%s3727 + $0x60] sm:$0xf]
        %v8503 = vld [vmem:[%s3727 + $0x64] sm:$0xf]
        %v8504 = vld [vmem:[%s3727 + $0x6c] sm:$0xf]
        %v8505 = vld [vmem:[%s3727 + $0x70] sm:$0xf]
        %v8506 = vld [vmem:[%s3727 + $0x78] sm:$0xf]
        %v8507 = vld [vmem:[%s3727 + $0x7c] sm:$0xf]
        %v8508 = vld [vmem:[%s3727 + $0x84] sm:$0xf]
        %v8509 = vld [vmem:[%s3727 + $0x88] sm:$0xf]
        %v8510 = vld [vmem:[%s3727 + $0x90] sm:$0xf]
        %v8511 = vld [vmem:[%s3727 + $0x94] sm:$0xf]
        %v8512 = vld [vmem:[%s3727 + $0x9c] sm:$0xf]
        %v8513 = vld [vmem:[%s3727 + $0xa0] sm:$0xf]
        %v8514 = vld [vmem:[%s3727 + $0xa8] sm:$0xf]
        %v8515 = vld [vmem:[%s3727 + $0xac] sm:$0xf]
        %v8516 = vld [vmem:[%s3727 + $0xb4] sm:$0xf]
        %v8517 = vld [vmem:[%s3727 + $0xb8] sm:$0xf]
        %v8550 = vunpack.c.l.b16 %v8486
        %v8551 = vunpack.c.l.b16 %v8487
        %v8552 = vunpack.c.l.b16 %v8488
        %v8553 = vunpack.c.l.b16 %v8489
        %v8554 = vunpack.c.l.b16 %v8490
        %v8555 = vunpack.c.l.b16 %v8491
        %v8556 = vunpack.c.l.b16 %v8492
        %v8557 = vunpack.c.l.b16 %v8493
        %v8558 = vunpack.c.l.b16 %v8494
        %v8559 = vunpack.c.l.b16 %v8495
        %v8560 = vunpack.c.l.b16 %v8496
        %v8561 = vunpack.c.l.b16 %v8497
        %v8562 = vunpack.c.l.b16 %v8498
        %v8563 = vunpack.c.l.b16 %v8499
        %v8564 = vunpack.c.l.b16 %v8500
        %v8565 = vunpack.c.l.b16 %v8501
        %v8566 = vunpack.c.l.b16 %v8502
        %v8567 = vunpack.c.l.b16 %v8503
        %v8568 = vunpack.c.l.b16 %v8504
        %v8569 = vunpack.c.l.b16 %v8505
        %v8570 = vunpack.c.l.b16 %v8506
        %v8571 = vunpack.c.l.b16 %v8507
        %v8572 = vunpack.c.l.b16 %v8508
        %v8573 = vunpack.c.l.b16 %v8509
        %v8574 = vunpack.c.l.b16 %v8510
        %v8575 = vunpack.c.l.b16 %v8511
        %v8576 = vunpack.c.l.b16 %v8512
        %v8577 = vunpack.c.l.b16 %v8513
        %v8578 = vunpack.c.l.b16 %v8514
        %v8579 = vunpack.c.l.b16 %v8515
        %v8580 = vunpack.c.l.b16 %v8516
        %v8581 = vunpack.c.l.b16 %v8517
        %v8582 = vpack.c.b16 %v8551, %v8550
        %v8583 = vpack.c.b16 %v8553, %v8552
        %v8584 = vpack.c.b16 %v8555, %v8554
        %v8585 = vpack.c.b16 %v8557, %v8556
        %v8586 = vpack.c.b16 %v8559, %v8558
        %v8587 = vpack.c.b16 %v8561, %v8560
        %v8588 = vpack.c.b16 %v8563, %v8562
        %v8589 = vpack.c.b16 %v8565, %v8564
        %v8590 = vpack.c.b16 %v8567, %v8566
        %v8591 = vpack.c.b16 %v8569, %v8568
        %v8592 = vpack.c.b16 %v8571, %v8570
        %v8593 = vpack.c.b16 %v8573, %v8572
        %v8594 = vpack.c.b16 %v8575, %v8574
        %v8595 = vpack.c.b16 %v8577, %v8576
        %v8596 = vpack.c.b16 %v8579, %v8578
        %v8597 = vpack.c.b16 %v8581, %v8580
        %8614 = vst [vmem:[#allocation3] sm:$0xff] %v8582
        %8615 = vst [vmem:[#allocation3 + $0x18] sm:$0xff] %v8583
        %8616 = vst [vmem:[#allocation3 + $0x30] sm:$0xff] %v8584
        %8617 = vst [vmem:[#allocation3 + $0x48] sm:$0xff] %v8585
        %8618 = vst [vmem:[#allocation3 + $0x60] sm:$0xff] %v8586
        %8619 = vst [vmem:[#allocation3 + $0x78] sm:$0xff] %v8587
        %8620 = vst [vmem:[#allocation3 + $0x90] sm:$0xff] %v8588
        %8621 = vst [vmem:[#allocation3 + $0xa8] sm:$0xff] %v8589
        %8622 = vst [vmem:[#allocation3 + $0xc0] sm:$0xff] %v8590
        %8623 = vst [vmem:[#allocation3 + $0xd8] sm:$0xff] %v8591
        %8624 = vst [vmem:[#allocation3 + $0xf0] sm:$0xff] %v8592
        %8625 = vst [vmem:[#allocation3 + $0x108] sm:$0xff] %v8593
        %8626 = vst [vmem:[#allocation3 + $0x120] sm:$0xff] %v8594
        %8627 = vst [vmem:[#allocation3 + $0x138] sm:$0xff] %v8595
        %8628 = vst [vmem:[#allocation3 + $0x150] sm:$0xff] %v8596
        %8629 = vst [vmem:[#allocation3 + $0x168] sm:$0xff] %v8597
        %v8630 = vld [vmem:[%s3727] sm:$0xf]
        %v8631 = vld [vmem:[%s3727 + $0x4] sm:$0xf]
        %v8632 = vld [vmem:[%s3727 + $0x8] sm:$0x1]
        %v8633 = vld [vmem:[%s3727 + $0xc] sm:$0xf]
        %v8634 = vld [vmem:[%s3727 + $0x10] sm:$0xf]
        %v8635 = vld [vmem:[%s3727 + $0x14] sm:$0x1]
        %v8636 = vld [vmem:[%s3727 + $0x18] sm:$0xf]
        %v8637 = vld [vmem:[%s3727 + $0x1c] sm:$0xf]
        %v8638 = vld [vmem:[%s3727 + $0x20] sm:$0x1]
        %v8639 = vld [vmem:[%s3727 + $0x24] sm:$0xf]
        %v8640 = vld [vmem:[%s3727 + $0x28] sm:$0xf]
        %v8641 = vld [vmem:[%s3727 + $0x2c] sm:$0x1]
        %v8642 = vld [vmem:[%s3727 + $0x30] sm:$0xf]
        %v8643 = vld [vmem:[%s3727 + $0x34] sm:$0xf]
        %v8644 = vld [vmem:[%s3727 + $0x38] sm:$0x1]
        %v8645 = vld [vmem:[%s3727 + $0x3c] sm:$0xf]
        %v8646 = vld [vmem:[%s3727 + $0x40] sm:$0xf]
        %v8647 = vld [vmem:[%s3727 + $0x44] sm:$0x1]
        %v8648 = vld [vmem:[%s3727 + $0x48] sm:$0xf]
        %v8649 = vld [vmem:[%s3727 + $0x4c] sm:$0xf]
        %v8650 = vld [vmem:[%s3727 + $0x50] sm:$0x1]
        %v8651 = vld [vmem:[%s3727 + $0x54] sm:$0xf]
        %v8652 = vld [vmem:[%s3727 + $0x58] sm:$0xf]
        %v8653 = vld [vmem:[%s3727 + $0x5c] sm:$0x1]
        %v8654 = vld [vmem:[%s3727 + $0x60] sm:$0xf]
        %v8655 = vld [vmem:[%s3727 + $0x64] sm:$0xf]
        %v8656 = vld [vmem:[%s3727 + $0x68] sm:$0x1]
        %v8657 = vld [vmem:[%s3727 + $0x6c] sm:$0xf]
        %v8658 = vld [vmem:[%s3727 + $0x70] sm:$0xf]
        %v8659 = vld [vmem:[%s3727 + $0x74] sm:$0x1]
        %v8660 = vld [vmem:[%s3727 + $0x78] sm:$0xf]
        %v8661 = vld [vmem:[%s3727 + $0x7c] sm:$0xf]
        %v8662 = vld [vmem:[%s3727 + $0x80] sm:$0x1]
        %v8663 = vld [vmem:[%s3727 + $0x84] sm:$0xf]
        %v8664 = vld [vmem:[%s3727 + $0x88] sm:$0xf]
        %v8665 = vld [vmem:[%s3727 + $0x8c] sm:$0x1]
        %v8666 = vld [vmem:[%s3727 + $0x90] sm:$0xf]
        %v8667 = vld [vmem:[%s3727 + $0x94] sm:$0xf]
        %v8668 = vld [vmem:[%s3727 + $0x98] sm:$0x1]
        %v8669 = vld [vmem:[%s3727 + $0x9c] sm:$0xf]
        %v8670 = vld [vmem:[%s3727 + $0xa0] sm:$0xf]
        %v8671 = vld [vmem:[%s3727 + $0xa4] sm:$0x1]
        %v8672 = vld [vmem:[%s3727 + $0xa8] sm:$0xf]
        %v8673 = vld [vmem:[%s3727 + $0xac] sm:$0xf]
        %v8674 = vld [vmem:[%s3727 + $0xb0] sm:$0x1]
        %v8675 = vld [vmem:[%s3727 + $0xb4] sm:$0xf]
        %v8676 = vld [vmem:[%s3727 + $0xb8] sm:$0xf]
        %v8677 = vld [vmem:[%s3727 + $0xbc] sm:$0x1]
        %v8726 = vunpack.c.l.b16 %v8630
        %v8727 = vunpack.c.l.b16 %v8631
        %v8728 = vunpack.c.l.b16 %v8632
        %v8729 = vunpack.c.l.b16 %v8633
        %v8730 = vunpack.c.l.b16 %v8634
        %v8731 = vunpack.c.l.b16 %v8635
        %v8732 = vunpack.c.l.b16 %v8636
        %v8733 = vunpack.c.l.b16 %v8637
        %v8734 = vunpack.c.l.b16 %v8638
        %v8735 = vunpack.c.l.b16 %v8639
        %v8736 = vunpack.c.l.b16 %v8640
        %v8737 = vunpack.c.l.b16 %v8641
        %v8738 = vunpack.c.l.b16 %v8642
        %v8739 = vunpack.c.l.b16 %v8643
        %v8740 = vunpack.c.l.b16 %v8644
        %v8741 = vunpack.c.l.b16 %v8645
        %v8742 = vunpack.c.l.b16 %v8646
        %v8743 = vunpack.c.l.b16 %v8647
        %v8744 = vunpack.c.l.b16 %v8648
        %v8745 = vunpack.c.l.b16 %v8649
        %v8746 = vunpack.c.l.b16 %v8650
        %v8747 = vunpack.c.l.b16 %v8651
        %v8748 = vunpack.c.l.b16 %v8652
        %v8749 = vunpack.c.l.b16 %v8653
        %v8750 = vunpack.c.l.b16 %v8654
        %v8751 = vunpack.c.l.b16 %v8655
        %v8752 = vunpack.c.l.b16 %v8656
        %v8753 = vunpack.c.l.b16 %v8657
        %v8754 = vunpack.c.l.b16 %v8658
        %v8755 = vunpack.c.l.b16 %v8659
        %v8756 = vunpack.c.l.b16 %v8660
        %v8757 = vunpack.c.l.b16 %v8661
        %v8758 = vunpack.c.l.b16 %v8662
        %v8759 = vunpack.c.l.b16 %v8663
        %v8760 = vunpack.c.l.b16 %v8664
        %v8761 = vunpack.c.l.b16 %v8665
        %v8762 = vunpack.c.l.b16 %v8666
        %v8763 = vunpack.c.l.b16 %v8667
        %v8764 = vunpack.c.l.b16 %v8668
        %v8765 = vunpack.c.l.b16 %v8669
        %v8766 = vunpack.c.l.b16 %v8670
        %v8767 = vunpack.c.l.b16 %v8671
        %v8768 = vunpack.c.l.b16 %v8672
        %v8769 = vunpack.c.l.b16 %v8673
        %v8770 = vunpack.c.l.b16 %v8674
        %v8771 = vunpack.c.l.b16 %v8675
        %v8772 = vunpack.c.l.b16 %v8676
        %v8773 = vunpack.c.l.b16 %v8677
        %v8774 = vpack.c.b16 %v8727, %v8726
        %v8775 = vpack.c.b16 %v8728, %v8728
        %v8776 = vpack.c.b16 %v8730, %v8729
        %v8777 = vpack.c.b16 %v8731, %v8731
        %v8778 = vpack.c.b16 %v8733, %v8732
        %v8779 = vpack.c.b16 %v8734, %v8734
        %v8780 = vpack.c.b16 %v8736, %v8735
        %v8781 = vpack.c.b16 %v8737, %v8737
        %v8782 = vpack.c.b16 %v8739, %v8738
        %v8783 = vpack.c.b16 %v8740, %v8740
        %v8784 = vpack.c.b16 %v8742, %v8741
        %v8785 = vpack.c.b16 %v8743, %v8743
        %v8786 = vpack.c.b16 %v8745, %v8744
        %v8787 = vpack.c.b16 %v8746, %v8746
        %v8788 = vpack.c.b16 %v8748, %v8747
        %v8789 = vpack.c.b16 %v8749, %v8749
        %v8790 = vpack.c.b16 %v8751, %v8750
        %v8791 = vpack.c.b16 %v8752, %v8752
        %v8792 = vpack.c.b16 %v8754, %v8753
        %v8793 = vpack.c.b16 %v8755, %v8755
        %v8794 = vpack.c.b16 %v8757, %v8756
        %v8795 = vpack.c.b16 %v8758, %v8758
        %v8796 = vpack.c.b16 %v8760, %v8759
        %v8797 = vpack.c.b16 %v8761, %v8761
        %v8798 = vpack.c.b16 %v8763, %v8762
        %v8799 = vpack.c.b16 %v8764, %v8764
        %v8800 = vpack.c.b16 %v8766, %v8765
        %v8801 = vpack.c.b16 %v8767, %v8767
        %v8802 = vpack.c.b16 %v8769, %v8768
        %v8803 = vpack.c.b16 %v8770, %v8770
        %v8804 = vpack.c.b16 %v8772, %v8771
        %v8805 = vpack.c.b16 %v8773, %v8773
        %v8807 = vshrl.u32 %v8774, 16
        %v8809 = vshll.u32 %v8774, 16
        %v8811 = vrot.slane %v8809, 1
        %v8812 = vor.u32 %v8807, %v8811
        %v8814 = vshll.u32 %v8775, 16
        %v8816 = vrot.slane %v8814, 1
        %v8817 = vsel %vm1320, %v8812, %v8816
        %v8819 = vshrl.u32 %v8776, 16
        %v8821 = vshll.u32 %v8776, 16
        %v8823 = vrot.slane %v8821, 1
        %v8824 = vor.u32 %v8819, %v8823
        %v8826 = vshll.u32 %v8777, 16
        %v8828 = vrot.slane %v8826, 1
        %v8829 = vsel %vm1320, %v8824, %v8828
        %v8831 = vshrl.u32 %v8778, 16
        %v8833 = vshll.u32 %v8778, 16
        %v8835 = vrot.slane %v8833, 1
        %v8836 = vor.u32 %v8831, %v8835
        %v8838 = vshll.u32 %v8779, 16
        %v8840 = vrot.slane %v8838, 1
        %v8841 = vsel %vm1320, %v8836, %v8840
        %v8843 = vshrl.u32 %v8780, 16
        %v8845 = vshll.u32 %v8780, 16
        %v8847 = vrot.slane %v8845, 1
        %v8848 = vor.u32 %v8843, %v8847
        %v8850 = vshll.u32 %v8781, 16
        %v8852 = vrot.slane %v8850, 1
        %v8853 = vsel %vm1320, %v8848, %v8852
        %v8855 = vshrl.u32 %v8782, 16
        %v8857 = vshll.u32 %v8782, 16
        %v8859 = vrot.slane %v8857, 1
        %v8860 = vor.u32 %v8855, %v8859
        %v8862 = vshll.u32 %v8783, 16
        %v8864 = vrot.slane %v8862, 1
        %v8865 = vsel %vm1320, %v8860, %v8864
        %v8867 = vshrl.u32 %v8784, 16
        %v8869 = vshll.u32 %v8784, 16
        %v8871 = vrot.slane %v8869, 1
        %v8872 = vor.u32 %v8867, %v8871
        %v8874 = vshll.u32 %v8785, 16
        %v8876 = vrot.slane %v8874, 1
        %v8877 = vsel %vm1320, %v8872, %v8876
        %v8879 = vshrl.u32 %v8786, 16
        %v8881 = vshll.u32 %v8786, 16
        %v8883 = vrot.slane %v8881, 1
        %v8884 = vor.u32 %v8879, %v8883
        %v8886 = vshll.u32 %v8787, 16
        %v8888 = vrot.slane %v8886, 1
        %v8889 = vsel %vm1320, %v8884, %v8888
        %v8891 = vshrl.u32 %v8788, 16
        %v8893 = vshll.u32 %v8788, 16
        %v8895 = vrot.slane %v8893, 1
        %v8896 = vor.u32 %v8891, %v8895
        %v8898 = vshll.u32 %v8789, 16
        %v8900 = vrot.slane %v8898, 1
        %v8901 = vsel %vm1320, %v8896, %v8900
        %v8903 = vshrl.u32 %v8790, 16
        %v8905 = vshll.u32 %v8790, 16
        %v8907 = vrot.slane %v8905, 1
        %v8908 = vor.u32 %v8903, %v8907
        %v8910 = vshll.u32 %v8791, 16
        %v8912 = vrot.slane %v8910, 1
        %v8913 = vsel %vm1320, %v8908, %v8912
        %v8915 = vshrl.u32 %v8792, 16
        %v8917 = vshll.u32 %v8792, 16
        %v8919 = vrot.slane %v8917, 1
        %v8920 = vor.u32 %v8915, %v8919
        %v8922 = vshll.u32 %v8793, 16
        %v8924 = vrot.slane %v8922, 1
        %v8925 = vsel %vm1320, %v8920, %v8924
        %v8927 = vshrl.u32 %v8794, 16
        %v8929 = vshll.u32 %v8794, 16
        %v8931 = vrot.slane %v8929, 1
        %v8932 = vor.u32 %v8927, %v8931
        %v8934 = vshll.u32 %v8795, 16
        %v8936 = vrot.slane %v8934, 1
        %v8937 = vsel %vm1320, %v8932, %v8936
        %v8939 = vshrl.u32 %v8796, 16
        %v8941 = vshll.u32 %v8796, 16
        %v8943 = vrot.slane %v8941, 1
        %v8944 = vor.u32 %v8939, %v8943
        %v8946 = vshll.u32 %v8797, 16
        %v8948 = vrot.slane %v8946, 1
        %v8949 = vsel %vm1320, %v8944, %v8948
        %v8951 = vshrl.u32 %v8798, 16
        %v8953 = vshll.u32 %v8798, 16
        %v8955 = vrot.slane %v8953, 1
        %v8956 = vor.u32 %v8951, %v8955
        %v8958 = vshll.u32 %v8799, 16
        %v8960 = vrot.slane %v8958, 1
        %v8961 = vsel %vm1320, %v8956, %v8960
        %v8963 = vshrl.u32 %v8800, 16
        %v8965 = vshll.u32 %v8800, 16
        %v8967 = vrot.slane %v8965, 1
        %v8968 = vor.u32 %v8963, %v8967
        %v8970 = vshll.u32 %v8801, 16
        %v8972 = vrot.slane %v8970, 1
        %v8973 = vsel %vm1320, %v8968, %v8972
        %v8975 = vshrl.u32 %v8802, 16
        %v8977 = vshll.u32 %v8802, 16
        %v8979 = vrot.slane %v8977, 1
        %v8980 = vor.u32 %v8975, %v8979
        %v8982 = vshll.u32 %v8803, 16
        %v8984 = vrot.slane %v8982, 1
        %v8985 = vsel %vm1320, %v8980, %v8984
        %v8987 = vshrl.u32 %v8804, 16
        %v8989 = vshll.u32 %v8804, 16
        %v8991 = vrot.slane %v8989, 1
        %v8992 = vor.u32 %v8987, %v8991
        %v8994 = vshll.u32 %v8805, 16
        %v8996 = vrot.slane %v8994, 1
        %v8997 = vsel %vm1320, %v8992, %v8996
        %9014 = vst [vmem:[#allocation3 + $0x8] sm:$0xff] %v8817
        %9015 = vst [vmem:[#allocation3 + $0x20] sm:$0xff] %v8829
        %9016 = vst [vmem:[#allocation3 + $0x38] sm:$0xff] %v8841
        %9017 = vst [vmem:[#allocation3 + $0x50] sm:$0xff] %v8853
        %9018 = vst [vmem:[#allocation3 + $0x68] sm:$0xff] %v8865
        %9019 = vst [vmem:[#allocation3 + $0x80] sm:$0xff] %v8877
        %9020 = vst [vmem:[#allocation3 + $0x98] sm:$0xff] %v8889
        %9021 = vst [vmem:[#allocation3 + $0xb0] sm:$0xff] %v8901
        %9022 = vst [vmem:[#allocation3 + $0xc8] sm:$0xff] %v8913
        %9023 = vst [vmem:[#allocation3 + $0xe0] sm:$0xff] %v8925
        %9024 = vst [vmem:[#allocation3 + $0xf8] sm:$0xff] %v8937
        %9025 = vst [vmem:[#allocation3 + $0x110] sm:$0xff] %v8949
        %9026 = vst [vmem:[#allocation3 + $0x128] sm:$0xff] %v8961
        %9027 = vst [vmem:[#allocation3 + $0x140] sm:$0xff] %v8973
        %9028 = vst [vmem:[#allocation3 + $0x158] sm:$0xff] %v8985
        %9029 = vst [vmem:[#allocation3 + $0x170] sm:$0xff] %v8997
        %v9030 = vld [vmem:[%s3727] sm:$0xe]
        %v9031 = vld [vmem:[%s3727 + $0x4] sm:$0xf]
        %v9032 = vld [vmem:[%s3727 + $0x8] sm:$0x1]
        %v9033 = vld [vmem:[%s3727 + $0xc] sm:$0xe]
        %v9034 = vld [vmem:[%s3727 + $0x10] sm:$0xf]
        %v9035 = vld [vmem:[%s3727 + $0x14] sm:$0x1]
        %v9036 = vld [vmem:[%s3727 + $0x18] sm:$0xe]
        %v9037 = vld [vmem:[%s3727 + $0x1c] sm:$0xf]
        %v9038 = vld [vmem:[%s3727 + $0x20] sm:$0x1]
        %v9039 = vld [vmem:[%s3727 + $0x24] sm:$0xe]
        %v9040 = vld [vmem:[%s3727 + $0x28] sm:$0xf]
        %v9041 = vld [vmem:[%s3727 + $0x2c] sm:$0x1]
        %v9042 = vld [vmem:[%s3727 + $0x30] sm:$0xe]
        %v9043 = vld [vmem:[%s3727 + $0x34] sm:$0xf]
        %v9044 = vld [vmem:[%s3727 + $0x38] sm:$0x1]
        %v9045 = vld [vmem:[%s3727 + $0x3c] sm:$0xe]
        %v9046 = vld [vmem:[%s3727 + $0x40] sm:$0xf]
        %v9047 = vld [vmem:[%s3727 + $0x44] sm:$0x1]
        %v9048 = vld [vmem:[%s3727 + $0x48] sm:$0xe]
        %v9049 = vld [vmem:[%s3727 + $0x4c] sm:$0xf]
        %v9050 = vld [vmem:[%s3727 + $0x50] sm:$0x1]
        %v9051 = vld [vmem:[%s3727 + $0x54] sm:$0xe]
        %v9052 = vld [vmem:[%s3727 + $0x58] sm:$0xf]
        %v9053 = vld [vmem:[%s3727 + $0x5c] sm:$0x1]
        %v9054 = vld [vmem:[%s3727 + $0x60] sm:$0xe]
        %v9055 = vld [vmem:[%s3727 + $0x64] sm:$0xf]
        %v9056 = vld [vmem:[%s3727 + $0x68] sm:$0x1]
        %v9057 = vld [vmem:[%s3727 + $0x6c] sm:$0xe]
        %v9058 = vld [vmem:[%s3727 + $0x70] sm:$0xf]
        %v9059 = vld [vmem:[%s3727 + $0x74] sm:$0x1]
        %v9060 = vld [vmem:[%s3727 + $0x78] sm:$0xe]
        %v9061 = vld [vmem:[%s3727 + $0x7c] sm:$0xf]
        %v9062 = vld [vmem:[%s3727 + $0x80] sm:$0x1]
        %v9063 = vld [vmem:[%s3727 + $0x84] sm:$0xe]
        %v9064 = vld [vmem:[%s3727 + $0x88] sm:$0xf]
        %v9065 = vld [vmem:[%s3727 + $0x8c] sm:$0x1]
        %v9066 = vld [vmem:[%s3727 + $0x90] sm:$0xe]
        %v9067 = vld [vmem:[%s3727 + $0x94] sm:$0xf]
        %v9068 = vld [vmem:[%s3727 + $0x98] sm:$0x1]
        %v9069 = vld [vmem:[%s3727 + $0x9c] sm:$0xe]
        %v9070 = vld [vmem:[%s3727 + $0xa0] sm:$0xf]
        %v9071 = vld [vmem:[%s3727 + $0xa4] sm:$0x1]
        %v9072 = vld [vmem:[%s3727 + $0xa8] sm:$0xe]
        %v9073 = vld [vmem:[%s3727 + $0xac] sm:$0xf]
        %v9074 = vld [vmem:[%s3727 + $0xb0] sm:$0x1]
        %v9075 = vld [vmem:[%s3727 + $0xb4] sm:$0xe]
        %v9076 = vld [vmem:[%s3727 + $0xb8] sm:$0xf]
        %v9077 = vld [vmem:[%s3727 + $0xbc] sm:$0x1]
        %v9126 = vunpack.c.l.b16 %v9030
        %v9127 = vunpack.c.l.b16 %v9031
        %v9128 = vunpack.c.l.b16 %v9032
        %v9129 = vunpack.c.l.b16 %v9033
        %v9130 = vunpack.c.l.b16 %v9034
        %v9131 = vunpack.c.l.b16 %v9035
        %v9132 = vunpack.c.l.b16 %v9036
        %v9133 = vunpack.c.l.b16 %v9037
        %v9134 = vunpack.c.l.b16 %v9038
        %v9135 = vunpack.c.l.b16 %v9039
        %v9136 = vunpack.c.l.b16 %v9040
        %v9137 = vunpack.c.l.b16 %v9041
        %v9138 = vunpack.c.l.b16 %v9042
        %v9139 = vunpack.c.l.b16 %v9043
        %v9140 = vunpack.c.l.b16 %v9044
        %v9141 = vunpack.c.l.b16 %v9045
        %v9142 = vunpack.c.l.b16 %v9046
        %v9143 = vunpack.c.l.b16 %v9047
        %v9144 = vunpack.c.l.b16 %v9048
        %v9145 = vunpack.c.l.b16 %v9049
        %v9146 = vunpack.c.l.b16 %v9050
        %v9147 = vunpack.c.l.b16 %v9051
        %v9148 = vunpack.c.l.b16 %v9052
        %v9149 = vunpack.c.l.b16 %v9053
        %v9150 = vunpack.c.l.b16 %v9054
        %v9151 = vunpack.c.l.b16 %v9055
        %v9152 = vunpack.c.l.b16 %v9056
        %v9153 = vunpack.c.l.b16 %v9057
        %v9154 = vunpack.c.l.b16 %v9058
        %v9155 = vunpack.c.l.b16 %v9059
        %v9156 = vunpack.c.l.b16 %v9060
        %v9157 = vunpack.c.l.b16 %v9061
        %v9158 = vunpack.c.l.b16 %v9062
        %v9159 = vunpack.c.l.b16 %v9063
        %v9160 = vunpack.c.l.b16 %v9064
        %v9161 = vunpack.c.l.b16 %v9065
        %v9162 = vunpack.c.l.b16 %v9066
        %v9163 = vunpack.c.l.b16 %v9067
        %v9164 = vunpack.c.l.b16 %v9068
        %v9165 = vunpack.c.l.b16 %v9069
        %v9166 = vunpack.c.l.b16 %v9070
        %v9167 = vunpack.c.l.b16 %v9071
        %v9168 = vunpack.c.l.b16 %v9072
        %v9169 = vunpack.c.l.b16 %v9073
        %v9170 = vunpack.c.l.b16 %v9074
        %v9171 = vunpack.c.l.b16 %v9075
        %v9172 = vunpack.c.l.b16 %v9076
        %v9173 = vunpack.c.l.b16 %v9077
        %v9174 = vpack.c.b16 %v9127, %v9126
        %v9175 = vpack.c.b16 %v9128, %v9128
        %v9176 = vpack.c.b16 %v9130, %v9129
        %v9177 = vpack.c.b16 %v9131, %v9131
        %v9178 = vpack.c.b16 %v9133, %v9132
        %v9179 = vpack.c.b16 %v9134, %v9134
        %v9180 = vpack.c.b16 %v9136, %v9135
        %v9181 = vpack.c.b16 %v9137, %v9137
        %v9182 = vpack.c.b16 %v9139, %v9138
        %v9183 = vpack.c.b16 %v9140, %v9140
        %v9184 = vpack.c.b16 %v9142, %v9141
        %v9185 = vpack.c.b16 %v9143, %v9143
        %v9186 = vpack.c.b16 %v9145, %v9144
        %v9187 = vpack.c.b16 %v9146, %v9146
        %v9188 = vpack.c.b16 %v9148, %v9147
        %v9189 = vpack.c.b16 %v9149, %v9149
        %v9190 = vpack.c.b16 %v9151, %v9150
        %v9191 = vpack.c.b16 %v9152, %v9152
        %v9192 = vpack.c.b16 %v9154, %v9153
        %v9193 = vpack.c.b16 %v9155, %v9155
        %v9194 = vpack.c.b16 %v9157, %v9156
        %v9195 = vpack.c.b16 %v9158, %v9158
        %v9196 = vpack.c.b16 %v9160, %v9159
        %v9197 = vpack.c.b16 %v9161, %v9161
        %v9198 = vpack.c.b16 %v9163, %v9162
        %v9199 = vpack.c.b16 %v9164, %v9164
        %v9200 = vpack.c.b16 %v9166, %v9165
        %v9201 = vpack.c.b16 %v9167, %v9167
        %v9202 = vpack.c.b16 %v9169, %v9168
        %v9203 = vpack.c.b16 %v9170, %v9170
        %v9204 = vpack.c.b16 %v9172, %v9171
        %v9205 = vpack.c.b16 %v9173, %v9173
        %v9206 = vrot.slane %v9174, 1
        %v9207 = vrot.slane %v9175, 1
        %v9208 = vsel %vm1721, %v9206, %v9207
        %v9209 = vrot.slane %v9176, 1
        %v9210 = vrot.slane %v9177, 1
        %v9211 = vsel %vm1721, %v9209, %v9210
        %v9212 = vrot.slane %v9178, 1
        %v9213 = vrot.slane %v9179, 1
        %v9214 = vsel %vm1721, %v9212, %v9213
        %v9215 = vrot.slane %v9180, 1
        %v9216 = vrot.slane %v9181, 1
        %v9217 = vsel %vm1721, %v9215, %v9216
        %v9218 = vrot.slane %v9182, 1
        %v9219 = vrot.slane %v9183, 1
        %v9220 = vsel %vm1721, %v9218, %v9219
        %v9221 = vrot.slane %v9184, 1
        %v9222 = vrot.slane %v9185, 1
        %v9223 = vsel %vm1721, %v9221, %v9222
        %v9224 = vrot.slane %v9186, 1
        %v9225 = vrot.slane %v9187, 1
        %v9226 = vsel %vm1721, %v9224, %v9225
        %v9227 = vrot.slane %v9188, 1
        %v9228 = vrot.slane %v9189, 1
        %v9229 = vsel %vm1721, %v9227, %v9228
        %v9230 = vrot.slane %v9190, 1
        %v9231 = vrot.slane %v9191, 1
        %v9232 = vsel %vm1721, %v9230, %v9231
        %v9233 = vrot.slane %v9192, 1
        %v9234 = vrot.slane %v9193, 1
        %v9235 = vsel %vm1721, %v9233, %v9234
        %v9236 = vrot.slane %v9194, 1
        %v9237 = vrot.slane %v9195, 1
        %v9238 = vsel %vm1721, %v9236, %v9237
        %v9239 = vrot.slane %v9196, 1
        %v9240 = vrot.slane %v9197, 1
        %v9241 = vsel %vm1721, %v9239, %v9240
        %v9242 = vrot.slane %v9198, 1
        %v9243 = vrot.slane %v9199, 1
        %v9244 = vsel %vm1721, %v9242, %v9243
        %v9245 = vrot.slane %v9200, 1
        %v9246 = vrot.slane %v9201, 1
        %v9247 = vsel %vm1721, %v9245, %v9246
        %v9248 = vrot.slane %v9202, 1
        %v9249 = vrot.slane %v9203, 1
        %v9250 = vsel %vm1721, %v9248, %v9249
        %v9251 = vrot.slane %v9204, 1
        %v9252 = vrot.slane %v9205, 1
        %v9253 = vsel %vm1721, %v9251, %v9252
        %9270 = vst [vmem:[#allocation3 + $0x10] sm:$0xff] %v9208
        %9271 = vst [vmem:[#allocation3 + $0x28] sm:$0xff] %v9211
        %9272 = vst [vmem:[#allocation3 + $0x40] sm:$0xff] %v9214
        %9273 = vst [vmem:[#allocation3 + $0x58] sm:$0xff] %v9217
        %9274 = vst [vmem:[#allocation3 + $0x70] sm:$0xff] %v9220
        %9275 = vst [vmem:[#allocation3 + $0x88] sm:$0xff] %v9223
        %9276 = vst [vmem:[#allocation3 + $0xa0] sm:$0xff] %v9226
        %9277 = vst [vmem:[#allocation3 + $0xb8] sm:$0xff] %v9229
        %9278 = vst [vmem:[#allocation3 + $0xd0] sm:$0xff] %v9232
        %9279 = vst [vmem:[#allocation3 + $0xe8] sm:$0xff] %v9235
        %9280 = vst [vmem:[#allocation3 + $0x100] sm:$0xff] %v9238
        %9281 = vst [vmem:[#allocation3 + $0x118] sm:$0xff] %v9241
        %9282 = vst [vmem:[#allocation3 + $0x130] sm:$0xff] %v9244
        %9283 = vst [vmem:[#allocation3 + $0x148] sm:$0xff] %v9247
        %9284 = vst [vmem:[#allocation3 + $0x160] sm:$0xff] %v9250
        %9285 = vst [vmem:[#allocation3 + $0x178] sm:$0xff] %v9253
        %v9286 = vld [vmem:[#allocation3] sm:$0xff]
        %v9287 = vld [vmem:[#allocation3 + $0x8] sm:$0xff]
        %v9288 = vld [vmem:[#allocation3 + $0x10] sm:$0xff]
        %v9289 = vld [vmem:[#allocation3 + $0x18] sm:$0xff]
        %v9290 = vld [vmem:[#allocation3 + $0x20] sm:$0xff]
        %v9291 = vld [vmem:[#allocation3 + $0x28] sm:$0xff]
        %v9292 = vld [vmem:[#allocation3 + $0x30] sm:$0xff]
        %v9293 = vld [vmem:[#allocation3 + $0x38] sm:$0xff]
        %v9294 = vld [vmem:[#allocation3 + $0x40] sm:$0xff]
        %v9295 = vld [vmem:[#allocation3 + $0x48] sm:$0xff]
        %v9296 = vld [vmem:[#allocation3 + $0x50] sm:$0xff]
        %v9297 = vld [vmem:[#allocation3 + $0x58] sm:$0xff]
        %v9298 = vld [vmem:[#allocation3 + $0x60] sm:$0xff]
        %v9299 = vld [vmem:[#allocation3 + $0x68] sm:$0xff]
        %v9300 = vld [vmem:[#allocation3 + $0x70] sm:$0xff]
        %v9301 = vld [vmem:[#allocation3 + $0x78] sm:$0xff]
        %v9302 = vld [vmem:[#allocation3 + $0x80] sm:$0xff]
        %v9303 = vld [vmem:[#allocation3 + $0x88] sm:$0xff]
        %v9304 = vld [vmem:[#allocation3 + $0x90] sm:$0xff]
        %v9305 = vld [vmem:[#allocation3 + $0x98] sm:$0xff]
        %v9306 = vld [vmem:[#allocation3 + $0xa0] sm:$0xff]
        %v9307 = vld [vmem:[#allocation3 + $0xa8] sm:$0xff]
        %v9308 = vld [vmem:[#allocation3 + $0xb0] sm:$0xff]
        %v9309 = vld [vmem:[#allocation3 + $0xb8] sm:$0xff]
        %v9310 = vld [vmem:[#allocation3 + $0xc0] sm:$0xff]
        %v9311 = vld [vmem:[#allocation3 + $0xc8] sm:$0xff]
        %v9312 = vld [vmem:[#allocation3 + $0xd0] sm:$0xff]
        %v9313 = vld [vmem:[#allocation3 + $0xd8] sm:$0xff]
        %v9314 = vld [vmem:[#allocation3 + $0xe0] sm:$0xff]
        %v9315 = vld [vmem:[#allocation3 + $0xe8] sm:$0xff]
        %v9316 = vld [vmem:[#allocation3 + $0xf0] sm:$0xff]
        %v9317 = vld [vmem:[#allocation3 + $0xf8] sm:$0xff]
        %v9318 = vld [vmem:[#allocation3 + $0x100] sm:$0xff]
        %v9319 = vld [vmem:[#allocation3 + $0x108] sm:$0xff]
        %v9320 = vld [vmem:[#allocation3 + $0x110] sm:$0xff]
        %v9321 = vld [vmem:[#allocation3 + $0x118] sm:$0xff]
        %v9322 = vld [vmem:[#allocation3 + $0x120] sm:$0xff]
        %v9323 = vld [vmem:[#allocation3 + $0x128] sm:$0xff]
        %v9324 = vld [vmem:[#allocation3 + $0x130] sm:$0xff]
        %v9325 = vld [vmem:[#allocation3 + $0x138] sm:$0xff]
        %v9326 = vld [vmem:[#allocation3 + $0x140] sm:$0xff]
        %v9327 = vld [vmem:[#allocation3 + $0x148] sm:$0xff]
        %v9328 = vld [vmem:[#allocation3 + $0x150] sm:$0xff]
        %v9329 = vld [vmem:[#allocation3 + $0x158] sm:$0xff]
        %v9330 = vld [vmem:[#allocation3 + $0x160] sm:$0xff]
        %v9331 = vld [vmem:[#allocation3 + $0x168] sm:$0xff]
        %v9332 = vld [vmem:[#allocation3 + $0x170] sm:$0xff]
        %v9333 = vld [vmem:[#allocation3 + $0x178] sm:$0xff]
        %s9334 = scalar_lea.vmem [#allocation9], 384
        %v9335 = vld [vmem:[%s9334] sm:$0xf]
        %v9336 = vld [vmem:[%s9334 + $0x4] sm:$0xf]
        %v9337 = vld [vmem:[%s9334 + $0x8] sm:$0xf]
        %v9338 = vld [vmem:[%s9334 + $0xc] sm:$0xf]
        %v9339 = vld [vmem:[%s9334 + $0x10] sm:$0xf]
        %v9340 = vld [vmem:[%s9334 + $0x14] sm:$0xf]
        %v9341 = vld [vmem:[%s9334 + $0x18] sm:$0xf]
        %v9342 = vld [vmem:[%s9334 + $0x1c] sm:$0xf]
        %v9343 = vld [vmem:[%s9334 + $0x20] sm:$0xf]
        %v9344 = vld [vmem:[%s9334 + $0x24] sm:$0xf]
        %v9345 = vld [vmem:[%s9334 + $0x28] sm:$0xf]
        %v9346 = vld [vmem:[%s9334 + $0x2c] sm:$0xf]
        %v9347 = vld [vmem:[%s9334 + $0x30] sm:$0xf]
        %v9348 = vld [vmem:[%s9334 + $0x34] sm:$0xf]
        %v9349 = vld [vmem:[%s9334 + $0x38] sm:$0xf]
        %v9350 = vld [vmem:[%s9334 + $0x3c] sm:$0xf]
        %v9351 = vld [vmem:[%s9334 + $0x40] sm:$0xf]
        %v9352 = vld [vmem:[%s9334 + $0x44] sm:$0xf]
        %v9353 = vld [vmem:[%s9334 + $0x48] sm:$0xf]
        %v9354 = vld [vmem:[%s9334 + $0x4c] sm:$0xf]
        %v9355 = vld [vmem:[%s9334 + $0x50] sm:$0xf]
        %v9356 = vld [vmem:[%s9334 + $0x54] sm:$0xf]
        %v9357 = vld [vmem:[%s9334 + $0x58] sm:$0xf]
        %v9358 = vld [vmem:[%s9334 + $0x5c] sm:$0xf]
        %v9359 = vld [vmem:[%s9334 + $0x60] sm:$0xf]
        %v9360 = vld [vmem:[%s9334 + $0x64] sm:$0xf]
        %v9361 = vld [vmem:[%s9334 + $0x68] sm:$0xf]
        %v9362 = vld [vmem:[%s9334 + $0x6c] sm:$0xf]
        %v9363 = vld [vmem:[%s9334 + $0x70] sm:$0xf]
        %v9364 = vld [vmem:[%s9334 + $0x74] sm:$0xf]
        %v9365 = vld [vmem:[%s9334 + $0x78] sm:$0xf]
        %v9366 = vld [vmem:[%s9334 + $0x7c] sm:$0xf]
        %v9367 = vld [vmem:[%s9334 + $0x80] sm:$0xf]
        %v9368 = vld [vmem:[%s9334 + $0x84] sm:$0xf]
        %v9369 = vld [vmem:[%s9334 + $0x88] sm:$0xf]
        %v9370 = vld [vmem:[%s9334 + $0x8c] sm:$0xf]
        %v9371 = vld [vmem:[%s9334 + $0x90] sm:$0xf]
        %v9372 = vld [vmem:[%s9334 + $0x94] sm:$0xf]
        %v9373 = vld [vmem:[%s9334 + $0x98] sm:$0xf]
        %v9374 = vld [vmem:[%s9334 + $0x9c] sm:$0xf]
        %v9375 = vld [vmem:[%s9334 + $0xa0] sm:$0xf]
        %v9376 = vld [vmem:[%s9334 + $0xa4] sm:$0xf]
        %v9377 = vld [vmem:[%s9334 + $0xa8] sm:$0xf]
        %v9378 = vld [vmem:[%s9334 + $0xac] sm:$0xf]
        %v9379 = vld [vmem:[%s9334 + $0xb0] sm:$0xf]
        %v9380 = vld [vmem:[%s9334 + $0xb4] sm:$0xf]
        %v9381 = vld [vmem:[%s9334 + $0xb8] sm:$0xf]
        %v9382 = vld [vmem:[%s9334 + $0xbc] sm:$0xf]
        %v9431 = vunpack.c.l.b16 %v9335
        %v9432 = vunpack.c.l.b16 %v9336
        %v9433 = vunpack.c.l.b16 %v9337
        %v9434 = vunpack.c.l.b16 %v9338
        %v9435 = vunpack.c.l.b16 %v9339
        %v9436 = vunpack.c.l.b16 %v9340
        %v9437 = vunpack.c.l.b16 %v9341
        %v9438 = vunpack.c.l.b16 %v9342
        %v9439 = vunpack.c.l.b16 %v9343
        %v9440 = vunpack.c.l.b16 %v9344
        %v9441 = vunpack.c.l.b16 %v9345
        %v9442 = vunpack.c.l.b16 %v9346
        %v9443 = vunpack.c.l.b16 %v9347
        %v9444 = vunpack.c.l.b16 %v9348
        %v9445 = vunpack.c.l.b16 %v9349
        %v9446 = vunpack.c.l.b16 %v9350
        %v9447 = vunpack.c.l.b16 %v9351
        %v9448 = vunpack.c.l.b16 %v9352
        %v9449 = vunpack.c.l.b16 %v9353
        %v9450 = vunpack.c.l.b16 %v9354
        %v9451 = vunpack.c.l.b16 %v9355
        %v9452 = vunpack.c.l.b16 %v9356
        %v9453 = vunpack.c.l.b16 %v9357
        %v9454 = vunpack.c.l.b16 %v9358
        %v9455 = vunpack.c.l.b16 %v9359
        %v9456 = vunpack.c.l.b16 %v9360
        %v9457 = vunpack.c.l.b16 %v9361
        %v9458 = vunpack.c.l.b16 %v9362
        %v9459 = vunpack.c.l.b16 %v9363
        %v9460 = vunpack.c.l.b16 %v9364
        %v9461 = vunpack.c.l.b16 %v9365
        %v9462 = vunpack.c.l.b16 %v9366
        %v9463 = vunpack.c.l.b16 %v9367
        %v9464 = vunpack.c.l.b16 %v9368
        %v9465 = vunpack.c.l.b16 %v9369
        %v9466 = vunpack.c.l.b16 %v9370
        %v9467 = vunpack.c.l.b16 %v9371
        %v9468 = vunpack.c.l.b16 %v9372
        %v9469 = vunpack.c.l.b16 %v9373
        %v9470 = vunpack.c.l.b16 %v9374
        %v9471 = vunpack.c.l.b16 %v9375
        %v9472 = vunpack.c.l.b16 %v9376
        %v9473 = vunpack.c.l.b16 %v9377
        %v9474 = vunpack.c.l.b16 %v9378
        %v9475 = vunpack.c.l.b16 %v9379
        %v9476 = vunpack.c.l.b16 %v9380
        %v9477 = vunpack.c.l.b16 %v9381
        %v9478 = vunpack.c.l.b16 %v9382
        %v9479 = vpack.c.b16 %v9432, %v9431
        %v9480 = vpack.c.b16 %v9434, %v9433
        %v9481 = vpack.c.b16 %v9436, %v9435
        %v9482 = vpack.c.b16 %v9438, %v9437
        %v9483 = vpack.c.b16 %v9440, %v9439
        %v9484 = vpack.c.b16 %v9442, %v9441
        %v9485 = vpack.c.b16 %v9444, %v9443
        %v9486 = vpack.c.b16 %v9446, %v9445
        %v9487 = vpack.c.b16 %v9448, %v9447
        %v9488 = vpack.c.b16 %v9450, %v9449
        %v9489 = vpack.c.b16 %v9452, %v9451
        %v9490 = vpack.c.b16 %v9454, %v9453
        %v9491 = vpack.c.b16 %v9456, %v9455
        %v9492 = vpack.c.b16 %v9458, %v9457
        %v9493 = vpack.c.b16 %v9460, %v9459
        %v9494 = vpack.c.b16 %v9462, %v9461
        %v9495 = vpack.c.b16 %v9464, %v9463
        %v9496 = vpack.c.b16 %v9466, %v9465
        %v9497 = vpack.c.b16 %v9468, %v9467
        %v9498 = vpack.c.b16 %v9470, %v9469
        %v9499 = vpack.c.b16 %v9472, %v9471
        %v9500 = vpack.c.b16 %v9474, %v9473
        %v9501 = vpack.c.b16 %v9476, %v9475
        %v9502 = vpack.c.b16 %v9478, %v9477
        %9527 = vmatprep.subr.bf16.mxu0 0
        %9528 = vmatpush1.bf16.msra.mxu0 %v9479
        %9529 = vmatprep.subr.bf16.mxu0 0
        %9530 = vmatpush1.bf16.msra.mxu0 %v9480
        %9531 = vmatprep.subr.bf16.mxu0 0
        %9532 = vmatpush1.bf16.msra.mxu0 %v9481
        %9533 = vmatprep.subr.bf16.mxu0 0
        %9534 = vmatpush1.bf16.msra.mxu0 %v9482
        %9535 = vmatprep.subr.bf16.mxu0 0
        %9536 = vmatpush1.bf16.msra.mxu0 %v9483
        %9537 = vmatprep.subr.bf16.mxu0 0
        %9538 = vmatpush1.bf16.msra.mxu0 %v9484
        %9539 = vmatprep.subr.bf16.mxu0 0
        %9540 = vmatpush1.bf16.msra.mxu0 %v9485
        %9541 = vmatprep.subr.bf16.mxu0 0
        %9542 = vmatpush1.bf16.msra.mxu0 %v9486
        %9543 = vmatprep.subr.bf16.mxu0 0
        %9544 = vmatpush1.bf16.msra.mxu0 %v9487
        %9545 = vmatprep.subr.bf16.mxu0 0
        %9546 = vmatpush1.bf16.msra.mxu0 %v9488
        %9547 = vmatprep.subr.bf16.mxu0 0
        %9548 = vmatpush1.bf16.msra.mxu0 %v9489
        %9549 = vmatprep.subr.bf16.mxu0 0
        %9550 = vmatpush1.bf16.msra.mxu0 %v9490
        %9551 = vmatprep.subr.bf16.mxu0 0
        %9552 = vmatpush1.bf16.msra.mxu0 %v9491
        %9553 = vmatprep.subr.bf16.mxu0 0
        %9554 = vmatpush1.bf16.msra.mxu0 %v9492
        %9555 = vmatprep.subr.bf16.mxu0 0
        %9556 = vmatpush1.bf16.msra.mxu0 %v9493
        %9557 = vmatprep.subr.bf16.mxu0 0
        %9558 = vmatpush1.bf16.msra.mxu0 %v9494
        %9559 = vmatprep.mubr.bf16.mxu0 %v9287
        %9560 = vmatmul.mubr.bf16.gmra.mrb[0].mxu0 %v9286
        %v9561 = vpop.f32.mrb[0].mxu0
        %v9562 = vadd.f32 0.0, %v9561
        %v9563 = vpop.f32.mrb[0].mxu0
        %v9564 = vpop.f32.mrb[0].mxu0
        %v9565 = vadd.f32 0.0, %v9564
        %v9566 = vpop.f32.mrb[0].mxu0
        %9567 = vmatprep.mubr.bf16.mxu0 %v9290
        %9568 = vmatmul.mubr.bf16.gmra.mrb[0].mxu0 %v9289
        %v9569 = vpop.f32.mrb[0].mxu0
        %v9570 = vadd.f32 0.0, %v9569
        %v9571 = vpop.f32.mrb[0].mxu0
        %v9572 = vpop.f32.mrb[0].mxu0
        %v9573 = vadd.f32 0.0, %v9572
        %v9574 = vpop.f32.mrb[0].mxu0
        %9575 = vmatprep.mubr.bf16.mxu0 %v9293
        %9576 = vmatmul.mubr.bf16.gmra.mrb[0].mxu0 %v9292
        %v9577 = vpop.f32.mrb[0].mxu0
        %v9578 = vadd.f32 0.0, %v9577
        %v9579 = vpop.f32.mrb[0].mxu0
        %v9580 = vpop.f32.mrb[0].mxu0
        %v9581 = vadd.f32 0.0, %v9580
        %v9582 = vpop.f32.mrb[0].mxu0
        %9583 = vmatprep.mubr.bf16.mxu0 %v9296
        %9584 = vmatmul.mubr.bf16.gmra.mrb[0].mxu0 %v9295
        %v9585 = vpop.f32.mrb[0].mxu0
        %v9586 = vadd.f32 0.0, %v9585
        %v9587 = vpop.f32.mrb[0].mxu0
        %v9588 = vpop.f32.mrb[0].mxu0
        %v9589 = vadd.f32 0.0, %v9588
        %v9590 = vpop.f32.mrb[0].mxu0
        %9591 = vmatprep.mubr.bf16.mxu0 %v9299
        %9592 = vmatmul.mubr.bf16.gmra.mrb[0].mxu0 %v9298
        %v9593 = vpop.f32.mrb[0].mxu0
        %v9594 = vadd.f32 0.0, %v9593
        %v9595 = vpop.f32.mrb[0].mxu0
        %v9596 = vpop.f32.mrb[0].mxu0
        %v9597 = vadd.f32 0.0, %v9596
        %v9598 = vpop.f32.mrb[0].mxu0
        %9599 = vmatprep.mubr.bf16.mxu0 %v9302
        %9600 = vmatmul.mubr.bf16.gmra.mrb[0].mxu0 %v9301
        %v9601 = vpop.f32.mrb[0].mxu0
        %v9602 = vadd.f32 0.0, %v9601
        %v9603 = vpop.f32.mrb[0].mxu0
        %v9604 = vpop.f32.mrb[0].mxu0
        %v9605 = vadd.f32 0.0, %v9604
        %v9606 = vpop.f32.mrb[0].mxu0
        %9607 = vmatprep.mubr.bf16.mxu0 %v9305
        %9608 = vmatmul.mubr.bf16.gmra.mrb[0].mxu0 %v9304
        %v9609 = vpop.f32.mrb[0].mxu0
        %v9610 = vadd.f32 0.0, %v9609
        %v9611 = vpop.f32.mrb[0].mxu0
        %v9612 = vpop.f32.mrb[0].mxu0
        %v9613 = vadd.f32 0.0, %v9612
        %v9614 = vpop.f32.mrb[0].mxu0
        %9615 = vmatprep.mubr.bf16.mxu0 %v9308
        %9616 = vmatmul.mubr.bf16.gmra.mrb[0].mxu0 %v9307
        %v9617 = vpop.f32.mrb[0].mxu0
        %v9618 = vadd.f32 0.0, %v9617
        %v9619 = vpop.f32.mrb[0].mxu0
        %v9620 = vpop.f32.mrb[0].mxu0
        %v9621 = vadd.f32 0.0, %v9620
        %v9622 = vpop.f32.mrb[0].mxu0
        %9623 = vmatprep.mubr.bf16.mxu0 %v9311
        %9624 = vmatmul.mubr.bf16.gmra.mrb[0].mxu0 %v9310
        %v9625 = vpop.f32.mrb[0].mxu0
        %v9626 = vadd.f32 0.0, %v9625
        %v9627 = vpop.f32.mrb[0].mxu0
        %v9628 = vpop.f32.mrb[0].mxu0
        %v9629 = vadd.f32 0.0, %v9628
        %v9630 = vpop.f32.mrb[0].mxu0
        %9631 = vmatprep.mubr.bf16.mxu0 %v9314
        %9632 = vmatmul.mubr.bf16.gmra.mrb[0].mxu0 %v9313
        %v9633 = vpop.f32.mrb[0].mxu0
        %v9634 = vadd.f32 0.0, %v9633
        %v9635 = vpop.f32.mrb[0].mxu0
        %v9636 = vpop.f32.mrb[0].mxu0
        %v9637 = vadd.f32 0.0, %v9636
        %v9638 = vpop.f32.mrb[0].mxu0
        %9639 = vmatprep.mubr.bf16.mxu0 %v9317
        %9640 = vmatmul.mubr.bf16.gmra.mrb[0].mxu0 %v9316
        %v9641 = vpop.f32.mrb[0].mxu0
        %v9642 = vadd.f32 0.0, %v9641
        %v9643 = vpop.f32.mrb[0].mxu0
        %v9644 = vpop.f32.mrb[0].mxu0
        %v9645 = vadd.f32 0.0, %v9644
        %v9646 = vpop.f32.mrb[0].mxu0
        %9647 = vmatprep.mubr.bf16.mxu0 %v9320
        %9648 = vmatmul.mubr.bf16.gmra.mrb[0].mxu0 %v9319
        %v9649 = vpop.f32.mrb[0].mxu0
        %v9650 = vadd.f32 0.0, %v9649
        %v9651 = vpop.f32.mrb[0].mxu0
        %v9652 = vpop.f32.mrb[0].mxu0
        %v9653 = vadd.f32 0.0, %v9652
        %v9654 = vpop.f32.mrb[0].mxu0
        %9655 = vmatprep.mubr.bf16.mxu0 %v9323
        %9656 = vmatmul.mubr.bf16.gmra.mrb[0].mxu0 %v9322
        %v9657 = vpop.f32.mrb[0].mxu0
        %v9658 = vadd.f32 0.0, %v9657
        %v9659 = vpop.f32.mrb[0].mxu0
        %v9660 = vpop.f32.mrb[0].mxu0
        %v9661 = vadd.f32 0.0, %v9660
        %v9662 = vpop.f32.mrb[0].mxu0
        %9663 = vmatprep.mubr.bf16.mxu0 %v9326
        %9664 = vmatmul.mubr.bf16.gmra.mrb[0].mxu0 %v9325
        %v9665 = vpop.f32.mrb[0].mxu0
        %v9666 = vadd.f32 0.0, %v9665
        %v9667 = vpop.f32.mrb[0].mxu0
        %v9668 = vpop.f32.mrb[0].mxu0
        %v9669 = vadd.f32 0.0, %v9668
        %v9670 = vpop.f32.mrb[0].mxu0
        %9671 = vmatprep.mubr.bf16.mxu0 %v9329
        %9672 = vmatmul.mubr.bf16.gmra.mrb[0].mxu0 %v9328
        %v9673 = vpop.f32.mrb[0].mxu0
        %v9674 = vadd.f32 0.0, %v9673
        %v9675 = vpop.f32.mrb[0].mxu0
        %v9676 = vpop.f32.mrb[0].mxu0
        %v9677 = vadd.f32 0.0, %v9676
        %v9678 = vpop.f32.mrb[0].mxu0
        %9679 = vmatprep.mubr.bf16.mxu0 %v9332
        %9680 = vmatmul.mubr.bf16.gmra.mrb[0].mxu0 %v9331
        %v9681 = vpop.f32.mrb[0].mxu0
        %v9682 = vadd.f32 0.0, %v9681
        %v9683 = vpop.f32.mrb[0].mxu0
        %v9684 = vpop.f32.mrb[0].mxu0
        %v9685 = vadd.f32 0.0, %v9684
        %v9686 = vpop.f32.mrb[0].mxu0
        %9687 = vdwg.mxu0
        %9688 = vmatprep.subr.bf16.mxu0 0
        %9689 = vmatpush1.bf16.msra.mxu0 %v9495
        %9690 = vmatprep.subr.bf16.mxu0 0
        %9691 = vmatpush1.bf16.msra.mxu0 %v9496
        %9692 = vmatprep.subr.bf16.mxu0 0
        %9693 = vmatpush1.bf16.msra.mxu0 %v9497
        %9694 = vmatprep.subr.bf16.mxu0 0
        %9695 = vmatpush1.bf16.msra.mxu0 %v9498
        %9696 = vmatprep.subr.bf16.mxu0 0
        %9697 = vmatpush1.bf16.msra.mxu0 %v9499
        %9698 = vmatprep.subr.bf16.mxu0 0
        %9699 = vmatpush1.bf16.msra.mxu0 %v9500
        %9700 = vmatprep.subr.bf16.mxu0 0
        %9701 = vmatpush1.bf16.msra.mxu0 %v9501
        %9702 = vmatprep.subr.bf16.mxu0 0
        %9703 = vmatpush1.bf16.msra.mxu0 %v9502
        %9704 = vmatprep.subr.bf16.mxu0 0
        %9705 = vmatpush1.bf16.msra.mxu0 0
        %9706 = vmatprep.subr.bf16.mxu0 0
        %9707 = vmatpush1.bf16.msra.mxu0 0
        %9708 = vmatprep.subr.bf16.mxu0 0
        %9709 = vmatpush1.bf16.msra.mxu0 0
        %9710 = vmatprep.subr.bf16.mxu0 0
        %9711 = vmatpush1.bf16.msra.mxu0 0
        %9712 = vmatprep.subr.bf16.mxu0 0
        %9713 = vmatpush1.bf16.msra.mxu0 0
        %9714 = vmatprep.subr.bf16.mxu0 0
        %9715 = vmatpush1.bf16.msra.mxu0 0
        %9716 = vmatprep.subr.bf16.mxu0 0
        %9717 = vmatpush1.bf16.msra.mxu0 0
        %9718 = vmatprep.subr.bf16.mxu0 0
        %9719 = vmatpush1.bf16.msra.mxu0 0
        %9720 = vmatprep.mubr.bf16.mxu0 0
        %9721 = vmatmul.mubr.bf16.gmra.mrb[0].mxu0 %v9288
        %v9722 = vpop.f32.mrb[0].mxu0
        %v9723 = vadd.f32 %v9562, %v9722
        %v9724 = vpop.f32.mrb[0].mxu0
        %v9725 = vpop.f32.mrb[0].mxu0
        %v9726 = vadd.f32 %v9565, %v9725
        %v9727 = vpop.f32.mrb[0].mxu0
        %9728 = vmatprep.mubr.bf16.mxu0 0
        %9729 = vmatmul.mubr.bf16.gmra.mrb[0].mxu0 %v9291
        %v9730 = vpop.f32.mrb[0].mxu0
        %v9731 = vadd.f32 %v9570, %v9730
        %v9732 = vpop.f32.mrb[0].mxu0
        %v9733 = vpop.f32.mrb[0].mxu0
        %v9734 = vadd.f32 %v9573, %v9733
        %v9735 = vpop.f32.mrb[0].mxu0
        %9736 = vmatprep.mubr.bf16.mxu0 0
        %9737 = vmatmul.mubr.bf16.gmra.mrb[0].mxu0 %v9294
        %v9738 = vpop.f32.mrb[0].mxu0
        %v9739 = vadd.f32 %v9578, %v9738
        %v9740 = vpop.f32.mrb[0].mxu0
        %v9741 = vpop.f32.mrb[0].mxu0
        %v9742 = vadd.f32 %v9581, %v9741
        %v9743 = vpop.f32.mrb[0].mxu0
        %9744 = vmatprep.mubr.bf16.mxu0 0
        %9745 = vmatmul.mubr.bf16.gmra.mrb[0].mxu0 %v9297
        %v9746 = vpop.f32.mrb[0].mxu0
        %v9747 = vadd.f32 %v9586, %v9746
        %v9748 = vpop.f32.mrb[0].mxu0
        %v9749 = vpop.f32.mrb[0].mxu0
        %v9750 = vadd.f32 %v9589, %v9749
        %v9751 = vpop.f32.mrb[0].mxu0
        %9752 = vmatprep.mubr.bf16.mxu0 0
        %9753 = vmatmul.mubr.bf16.gmra.mrb[0].mxu0 %v9300
        %v9754 = vpop.f32.mrb[0].mxu0
        %v9755 = vadd.f32 %v9594, %v9754
        %v9756 = vpop.f32.mrb[0].mxu0
        %v9757 = vpop.f32.mrb[0].mxu0
        %v9758 = vadd.f32 %v9597, %v9757
        %v9759 = vpop.f32.mrb[0].mxu0
        %9760 = vmatprep.mubr.bf16.mxu0 0
        %9761 = vmatmul.mubr.bf16.gmra.mrb[0].mxu0 %v9303
        %v9762 = vpop.f32.mrb[0].mxu0
        %v9763 = vadd.f32 %v9602, %v9762
        %v9764 = vpop.f32.mrb[0].mxu0
        %v9765 = vpop.f32.mrb[0].mxu0
        %v9766 = vadd.f32 %v9605, %v9765
        %v9767 = vpop.f32.mrb[0].mxu0
        %9768 = vmatprep.mubr.bf16.mxu0 0
        %9769 = vmatmul.mubr.bf16.gmra.mrb[0].mxu0 %v9306
        %v9770 = vpop.f32.mrb[0].mxu0
        %v9771 = vadd.f32 %v9610, %v9770
        %v9772 = vpop.f32.mrb[0].mxu0
        %v9773 = vpop.f32.mrb[0].mxu0
        %v9774 = vadd.f32 %v9613, %v9773
        %v9775 = vpop.f32.mrb[0].mxu0
        %9776 = vmatprep.mubr.bf16.mxu0 0
        %9777 = vmatmul.mubr.bf16.gmra.mrb[0].mxu0 %v9309
        %v9778 = vpop.f32.mrb[0].mxu0
        %v9779 = vadd.f32 %v9618, %v9778
        %v9780 = vpop.f32.mrb[0].mxu0
        %v9781 = vpop.f32.mrb[0].mxu0
        %v9782 = vadd.f32 %v9621, %v9781
        %v9783 = vpop.f32.mrb[0].mxu0
        %9784 = vmatprep.mubr.bf16.mxu0 0
        %9785 = vmatmul.mubr.bf16.gmra.mrb[0].mxu0 %v9312
        %v9786 = vpop.f32.mrb[0].mxu0
        %v9787 = vadd.f32 %v9626, %v9786
        %v9788 = vpop.f32.mrb[0].mxu0
        %v9789 = vpop.f32.mrb[0].mxu0
        %v9790 = vadd.f32 %v9629, %v9789
        %v9791 = vpop.f32.mrb[0].mxu0
        %9792 = vmatprep.mubr.bf16.mxu0 0
        %9793 = vmatmul.mubr.bf16.gmra.mrb[0].mxu0 %v9315
        %v9794 = vpop.f32.mrb[0].mxu0
        %v9795 = vadd.f32 %v9634, %v9794
        %v9796 = vpop.f32.mrb[0].mxu0
        %v9797 = vpop.f32.mrb[0].mxu0
        %v9798 = vadd.f32 %v9637, %v9797
        %v9799 = vpop.f32.mrb[0].mxu0
        %9800 = vmatprep.mubr.bf16.mxu0 0
        %9801 = vmatmul.mubr.bf16.gmra.mrb[0].mxu0 %v9318
        %v9802 = vpop.f32.mrb[0].mxu0
        %v9803 = vadd.f32 %v9642, %v9802
        %v9804 = vpop.f32.mrb[0].mxu0
        %v9805 = vpop.f32.mrb[0].mxu0
        %v9806 = vadd.f32 %v9645, %v9805
        %v9807 = vpop.f32.mrb[0].mxu0
        %9808 = vmatprep.mubr.bf16.mxu0 0
        %9809 = vmatmul.mubr.bf16.gmra.mrb[0].mxu0 %v9321
        %v9810 = vpop.f32.mrb[0].mxu0
        %v9811 = vadd.f32 %v9650, %v9810
        %v9812 = vpop.f32.mrb[0].mxu0
        %v9813 = vpop.f32.mrb[0].mxu0
        %v9814 = vadd.f32 %v9653, %v9813
        %v9815 = vpop.f32.mrb[0].mxu0
        %9816 = vmatprep.mubr.bf16.mxu0 0
        %9817 = vmatmul.mubr.bf16.gmra.mrb[0].mxu0 %v9324
        %v9818 = vpop.f32.mrb[0].mxu0
        %v9819 = vadd.f32 %v9658, %v9818
        %v9820 = vpop.f32.mrb[0].mxu0
        %v9821 = vpop.f32.mrb[0].mxu0
        %v9822 = vadd.f32 %v9661, %v9821
        %v9823 = vpop.f32.mrb[0].mxu0
        %9824 = vmatprep.mubr.bf16.mxu0 0
        %9825 = vmatmul.mubr.bf16.gmra.mrb[0].mxu0 %v9327
        %v9826 = vpop.f32.mrb[0].mxu0
        %v9827 = vadd.f32 %v9666, %v9826
        %v9828 = vpop.f32.mrb[0].mxu0
        %v9829 = vpop.f32.mrb[0].mxu0
        %v9830 = vadd.f32 %v9669, %v9829
        %v9831 = vpop.f32.mrb[0].mxu0
        %9832 = vmatprep.mubr.bf16.mxu0 0
        %9833 = vmatmul.mubr.bf16.gmra.mrb[0].mxu0 %v9330
        %v9834 = vpop.f32.mrb[0].mxu0
        %v9835 = vadd.f32 %v9674, %v9834
        %v9836 = vpop.f32.mrb[0].mxu0
        %v9837 = vpop.f32.mrb[0].mxu0
        %v9838 = vadd.f32 %v9677, %v9837
        %v9839 = vpop.f32.mrb[0].mxu0
        %9840 = vmatprep.mubr.bf16.mxu0 0
        %9841 = vmatmul.mubr.bf16.gmra.mrb[0].mxu0 %v9333
        %v9842 = vpop.f32.mrb[0].mxu0
        %v9843 = vadd.f32 %v9682, %v9842
        %v9844 = vpop.f32.mrb[0].mxu0
        %v9845 = vpop.f32.mrb[0].mxu0
        %v9846 = vadd.f32 %v9685, %v9845
        %v9847 = vpop.f32.mrb[0].mxu0
        %9848 = vdwg.mxu0
        %v9849 = vadd.f32 %v8360, %v9723
        %v9850 = vadd.f32 %v8363, %v9726
        %v9851 = vadd.f32 %v8368, %v9731
        %v9852 = vadd.f32 %v8371, %v9734
        %v9853 = vadd.f32 %v8376, %v9739
        %v9854 = vadd.f32 %v8379, %v9742
        %v9855 = vadd.f32 %v8384, %v9747
        %v9856 = vadd.f32 %v8387, %v9750
        %v9857 = vadd.f32 %v8392, %v9755
        %v9858 = vadd.f32 %v8395, %v9758
        %v9859 = vadd.f32 %v8400, %v9763
        %v9860 = vadd.f32 %v8403, %v9766
        %v9861 = vadd.f32 %v8408, %v9771
        %v9862 = vadd.f32 %v8411, %v9774
        %v9863 = vadd.f32 %v8416, %v9779
        %v9864 = vadd.f32 %v8419, %v9782
        %v9865 = vadd.f32 %v8424, %v9787
        %v9866 = vadd.f32 %v8427, %v9790
        %v9867 = vadd.f32 %v8432, %v9795
        %v9868 = vadd.f32 %v8435, %v9798
        %v9869 = vadd.f32 %v8440, %v9803
        %v9870 = vadd.f32 %v8443, %v9806
        %v9871 = vadd.f32 %v8448, %v9811
        %v9872 = vadd.f32 %v8451, %v9814
        %v9873 = vadd.f32 %v8456, %v9819
        %v9874 = vadd.f32 %v8459, %v9822
        %v9875 = vadd.f32 %v8464, %v9827
        %v9876 = vadd.f32 %v8467, %v9830
        %v9877 = vadd.f32 %v8472, %v9835
        %v9878 = vadd.f32 %v8475, %v9838
        %v9879 = vadd.f32 %v8480, %v9843
        %v9880 = vadd.f32 %v8483, %v9846
        %v9881 = vld [vmem:[%s5] sm:$0x1]
        %v9883 = vlaneseq
        %v9884 = vshrl.u32 %v9883, 7
        %v9885 = vsub.s32 0, %v9884
        %v9886 = vrot.slane %v9881, %v9885
        %v9888 = vmul.f32 %v9849, %v9886
        %v9889 = vmul.f32 %v9850, %v9886
        %v9890 = vmul.f32 %v9851, %v9886
        %v9891 = vmul.f32 %v9852, %v9886
        %v9892 = vmul.f32 %v9853, %v9886
        %v9893 = vmul.f32 %v9854, %v9886
        %v9894 = vmul.f32 %v9855, %v9886
        %v9895 = vmul.f32 %v9856, %v9886
        %v9896 = vmul.f32 %v9857, %v9886
        %v9897 = vmul.f32 %v9858, %v9886
        %v9898 = vmul.f32 %v9859, %v9886
        %v9899 = vmul.f32 %v9860, %v9886
        %v9900 = vmul.f32 %v9861, %v9886
        %v9901 = vmul.f32 %v9862, %v9886
        %v9902 = vmul.f32 %v9863, %v9886
        %v9903 = vmul.f32 %v9864, %v9886
        %v9904 = vmul.f32 %v9865, %v9886
        %v9905 = vmul.f32 %v9866, %v9886
        %v9906 = vmul.f32 %v9867, %v9886
        %v9907 = vmul.f32 %v9868, %v9886
        %v9908 = vmul.f32 %v9869, %v9886
        %v9909 = vmul.f32 %v9870, %v9886
        %v9910 = vmul.f32 %v9871, %v9886
        %v9911 = vmul.f32 %v9872, %v9886
        %v9912 = vmul.f32 %v9873, %v9886
        %v9913 = vmul.f32 %v9874, %v9886
        %v9914 = vmul.f32 %v9875, %v9886
        %v9915 = vmul.f32 %v9876, %v9886
        %v9916 = vmul.f32 %v9877, %v9886
        %v9917 = vmul.f32 %v9878, %v9886
        %v9918 = vmul.f32 %v9879, %v9886
        %v9919 = vmul.f32 %v9880, %v9886
        %v9920 = vld [vmem:[%s6] sm:$0x1]
        %v9922 = vlaneseq
        %v9923 = vshrl.u32 %v9922, 7
        %v9924 = vsub.s32 0, %v9923
        %v9925 = vrot.slane %v9920, %v9924
        %v9927 = vadd.f32 %v9888, %v9925
        %v9928 = vadd.f32 %v9889, %v9925
        %v9929 = vadd.f32 %v9890, %v9925
        %v9930 = vadd.f32 %v9891, %v9925
        %v9931 = vadd.f32 %v9892, %v9925
        %v9932 = vadd.f32 %v9893, %v9925
        %v9933 = vadd.f32 %v9894, %v9925
        %v9934 = vadd.f32 %v9895, %v9925
        %v9935 = vadd.f32 %v9896, %v9925
        %v9936 = vadd.f32 %v9897, %v9925
        %v9937 = vadd.f32 %v9898, %v9925
        %v9938 = vadd.f32 %v9899, %v9925
        %v9939 = vadd.f32 %v9900, %v9925
        %v9940 = vadd.f32 %v9901, %v9925
        %v9941 = vadd.f32 %v9902, %v9925
        %v9942 = vadd.f32 %v9903, %v9925
        %v9943 = vadd.f32 %v9904, %v9925
        %v9944 = vadd.f32 %v9905, %v9925
        %v9945 = vadd.f32 %v9906, %v9925
        %v9946 = vadd.f32 %v9907, %v9925
        %v9947 = vadd.f32 %v9908, %v9925
        %v9948 = vadd.f32 %v9909, %v9925
        %v9949 = vadd.f32 %v9910, %v9925
        %v9950 = vadd.f32 %v9911, %v9925
        %v9951 = vadd.f32 %v9912, %v9925
        %v9952 = vadd.f32 %v9913, %v9925
        %v9953 = vadd.f32 %v9914, %v9925
        %v9954 = vadd.f32 %v9915, %v9925
        %v9955 = vadd.f32 %v9916, %v9925
        %v9956 = vadd.f32 %v9917, %v9925
        %v9957 = vadd.f32 %v9918, %v9925
        %v9958 = vadd.f32 %v9919, %v9925
        %v9959 = vld [vmem:[%s287] sm:$0xff]
        %v9960 = vld [vmem:[%s287 + $0x8] sm:$0xff]
        %v9961 = vld [vmem:[%s287 + $0x10] sm:$0xff]
        %v9962 = vld [vmem:[%s287 + $0x18] sm:$0xff]
        %v9963 = vld [vmem:[%s287 + $0x20] sm:$0xff]
        %v9964 = vld [vmem:[%s287 + $0x28] sm:$0xff]
        %v9965 = vld [vmem:[%s287 + $0x30] sm:$0xff]
        %v9966 = vld [vmem:[%s287 + $0x38] sm:$0xff]
        %v9967 = vld [vmem:[%s287 + $0x40] sm:$0xff]
        %v9968 = vld [vmem:[%s287 + $0x48] sm:$0xff]
        %v9969 = vld [vmem:[%s287 + $0x50] sm:$0xff]
        %v9970 = vld [vmem:[%s287 + $0x58] sm:$0xff]
        %v9971 = vld [vmem:[%s287 + $0x60] sm:$0xff]
        %v9972 = vld [vmem:[%s287 + $0x68] sm:$0xff]
        %v9973 = vld [vmem:[%s287 + $0x70] sm:$0xff]
        %v9974 = vld [vmem:[%s287 + $0x78] sm:$0xff]
        %v9975 = vld [vmem:[%s287 + $0x80] sm:$0xff]
        %v9976 = vld [vmem:[%s287 + $0x88] sm:$0xff]
        %v9977 = vld [vmem:[%s287 + $0x90] sm:$0xff]
        %v9978 = vld [vmem:[%s287 + $0x98] sm:$0xff]
        %v9979 = vld [vmem:[%s287 + $0xa0] sm:$0xff]
        %v9980 = vld [vmem:[%s287 + $0xa8] sm:$0xff]
        %v9981 = vld [vmem:[%s287 + $0xb0] sm:$0xff]
        %v9982 = vld [vmem:[%s287 + $0xb8] sm:$0xff]
        %v9983 = vld [vmem:[%s287 + $0xc0] sm:$0xff]
        %v9984 = vld [vmem:[%s287 + $0xc8] sm:$0xff]
        %v9985 = vld [vmem:[%s287 + $0xd0] sm:$0xff]
        %v9986 = vld [vmem:[%s287 + $0xd8] sm:$0xff]
        %v9987 = vld [vmem:[%s287 + $0xe0] sm:$0xff]
        %v9988 = vld [vmem:[%s287 + $0xe8] sm:$0xff]
        %v9989 = vld [vmem:[%s287 + $0xf0] sm:$0xff]
        %v9990 = vld [vmem:[%s287 + $0xf8] sm:$0xff]
        %v9991 = vadd.f32 %v9927, %v9959
        %v9992 = vadd.f32 %v9928, %v9960
        %v9993 = vadd.f32 %v9929, %v9961
        %v9994 = vadd.f32 %v9930, %v9962
        %v9995 = vadd.f32 %v9931, %v9963
        %v9996 = vadd.f32 %v9932, %v9964
        %v9997 = vadd.f32 %v9933, %v9965
        %v9998 = vadd.f32 %v9934, %v9966
        %v9999 = vadd.f32 %v9935, %v9967
        %v10000 = vadd.f32 %v9936, %v9968
        %v10001 = vadd.f32 %v9937, %v9969
        %v10002 = vadd.f32 %v9938, %v9970
        %v10003 = vadd.f32 %v9939, %v9971
        %v10004 = vadd.f32 %v9940, %v9972
        %v10005 = vadd.f32 %v9941, %v9973
        %v10006 = vadd.f32 %v9942, %v9974
        %v10007 = vadd.f32 %v9943, %v9975
        %v10008 = vadd.f32 %v9944, %v9976
        %v10009 = vadd.f32 %v9945, %v9977
        %v10010 = vadd.f32 %v9946, %v9978
        %v10011 = vadd.f32 %v9947, %v9979
        %v10012 = vadd.f32 %v9948, %v9980
        %v10013 = vadd.f32 %v9949, %v9981
        %v10014 = vadd.f32 %v9950, %v9982
        %v10015 = vadd.f32 %v9951, %v9983
        %v10016 = vadd.f32 %v9952, %v9984
        %v10017 = vadd.f32 %v9953, %v9985
        %v10018 = vadd.f32 %v9954, %v9986
        %v10019 = vadd.f32 %v9955, %v9987
        %v10020 = vadd.f32 %v9956, %v9988
        %v10021 = vadd.f32 %v9957, %v9989
        %v10022 = vadd.f32 %v9958, %v9990
        %10023 = vst [vmem:[%s325] sm:$0xff] %v9991
        %10024 = vst [vmem:[%s325 + $0x8] sm:$0xff] %v9992
        %10025 = vst [vmem:[%s325 + $0x10] sm:$0xff] %v9993
        %10026 = vst [vmem:[%s325 + $0x18] sm:$0xff] %v9994
        %10027 = vst [vmem:[%s325 + $0x20] sm:$0xff] %v9995
        %10028 = vst [vmem:[%s325 + $0x28] sm:$0xff] %v9996
        %10029 = vst [vmem:[%s325 + $0x30] sm:$0xff] %v9997
        %10030 = vst [vmem:[%s325 + $0x38] sm:$0xff] %v9998
        %10031 = vst [vmem:[%s325 + $0x40] sm:$0xff] %v9999
        %10032 = vst [vmem:[%s325 + $0x48] sm:$0xff] %v10000
        %10033 = vst [vmem:[%s325 + $0x50] sm:$0xff] %v10001
        %10034 = vst [vmem:[%s325 + $0x58] sm:$0xff] %v10002
        %10035 = vst [vmem:[%s325 + $0x60] sm:$0xff] %v10003
        %10036 = vst [vmem:[%s325 + $0x68] sm:$0xff] %v10004
        %10037 = vst [vmem:[%s325 + $0x70] sm:$0xff] %v10005
        %10038 = vst [vmem:[%s325 + $0x78] sm:$0xff] %v10006
        %10039 = vst [vmem:[%s325 + $0x80] sm:$0xff] %v10007
        %10040 = vst [vmem:[%s325 + $0x88] sm:$0xff] %v10008
        %10041 = vst [vmem:[%s325 + $0x90] sm:$0xff] %v10009
        %10042 = vst [vmem:[%s325 + $0x98] sm:$0xff] %v10010
        %10043 = vst [vmem:[%s325 + $0xa0] sm:$0xff] %v10011
        %10044 = vst [vmem:[%s325 + $0xa8] sm:$0xff] %v10012
        %10045 = vst [vmem:[%s325 + $0xb0] sm:$0xff] %v10013
        %10046 = vst [vmem:[%s325 + $0xb8] sm:$0xff] %v10014
        %10047 = vst [vmem:[%s325 + $0xc0] sm:$0xff] %v10015
        %10048 = vst [vmem:[%s325 + $0xc8] sm:$0xff] %v10016
        %10049 = vst [vmem:[%s325 + $0xd0] sm:$0xff] %v10017
        %10050 = vst [vmem:[%s325 + $0xd8] sm:$0xff] %v10018
        %10051 = vst [vmem:[%s325 + $0xe0] sm:$0xff] %v10019
        %10052 = vst [vmem:[%s325 + $0xe8] sm:$0xff] %v10020
        %10053 = vst [vmem:[%s325 + $0xf0] sm:$0xff] %v10021
        %10054 = vst [vmem:[%s325 + $0xf8] sm:$0xff] %v10022
        %s10055 = sand.u32 %s185, 1
        %s10056 = scalar_lea.sflag [#allocation6], %s10055
        %s10057 = sand.u32 %s185, 1
        %s10058 = smul.addr %s10057, 256
        %s10059 = scalar_lea.vmem [#allocation10], %s10058
        // Predicated region
        $region61: #{tpu_custom_call.1} parent=47 // pred_check
          %p10060 = pneg %p195
        $region62: #{tpu_custom_call.1} parent=47 // pred_check_branch
          %10062 = sbr.rel (%p10060) target = $region64
        $region63: #{tpu_custom_call.1} parent=47 // pred_region
          %s10064 = ssub.s32 4096, 4096
          %10065 = vsyncadd %s10056, %s10064
          %s10066 = smul.addr %s25, 32
          %s10067 = smul.addr %s10066, 128
          %s10068 = scalar_lea.hbm %s7, %s10067
          %s10069 = sshll.u32 %s10059, 4
          %s10070 = int_to_ptr.vmem [resolvable:$true] %s10069
          %10075 = dma.vmem_to_hbm [thread:$0]  %s10070, 4096, %s10068, %s10056, 128, 128, 8
        $region64: #{tpu_custom_call.1} parent=47 // pred_fallthru
          _
      $region48: #{tpu_custom_call.1} parent=5 // pred_fallthru
        _
      %p10076 = scmp.le.s32.totalorder 2, %s20
      // Predicated region
      $region65: #{tpu_custom_call.1} parent=5 // pred_check
        %p10077 = pneg %p10076
      $region66: #{tpu_custom_call.1} parent=5 // pred_check_branch
        %10079 = sbr.rel (%p10077) target = $region68
      $region67: #{tpu_custom_call.1} parent=5 // pred_region
        %s10080 = ssub.s32 %s20, 2
        // Predicated region
        $region69: #{tpu_custom_call.1} parent=67 // pred_check
          %p10081 = pneg %p201
        $region70: #{tpu_custom_call.1} parent=67 // pred_check_branch
          %10083 = sbr.rel (%p10081) target = $region72
        $region71: #{tpu_custom_call.1} parent=67 // pred_region
          %s10084 = sand.u32 %s186, 1
          %s10085 = scalar_lea.sflag [#allocation6], %s10084
          %s10086 = sand.u32 %s186, 1
          %s10087 = smul.addr %s10086, 256
          %s10088 = scalar_lea.vmem [#allocation10], %s10087
          %10089 = dma.done %s10085, 4096
        $region72: #{tpu_custom_call.1} parent=67 // pred_fallthru
          _
      $region68: #{tpu_custom_call.1} parent=5 // pred_fallthru
        _
    $region6: #{tpu_custom_call.1} parent=1 // loop_footer
      %s24 = sadd.s32 1, %s20
    $region7: #{tpu_custom_call.1} parent=1 // loop_footer_branch
      %19 = sbr.rel target = $region3
    $region8: #{tpu_custom_call.1} parent=1 // loop_exit
      _
    %10090 = vsyncpa [#allocation5], 1
    %s10091 = scalar_lea.sflag [#allocation5], 1
    %10092 = vsyncpa %s10091, 1
    %10093 = vsyncpa [#allocation8], 1
    %10094 = vsyncpa [#allocation6], 1
    %s10095 = scalar_lea.sflag [#allocation6], 1
    %10096 = vsyncpa %s10095, 1

</llo_original>
